<compile_context>
chip_gen: v7x
topology: tpu7x:2x2x1
jax: 0.10.0
libtpu: 0.0.40
codegen_flags: <defaults>
</compile_context>

<pallas_src>
import jax
import jax.numpy as jnp
from jax import lax
from jax.experimental import pallas as pl
from jax.experimental.pallas import tpu as pltpu

K = 7          # depthwise kernel size
PAD = 3        # spatial padding
EPS = 1e-6     # LayerNorm eps


def convnext_block_kernel(xpad_ref, wdw_ref, bdw_ref, w1_ref, b1_ref,
                          w2_ref, b2_ref, out_ref, sc_ref):
    # xpad_ref: (1, Hp, Wp, C)  zero-padded NHWC image (Wp rounded up to mult. of 8)
    # wdw_ref:  (K*K, C)        depthwise conv weights, row dh*K+dw
    # bdw_ref:  (1, C)          depthwise conv bias
    # w1_ref:   (C, 4C) bf16    pwconv1 weight with LN scale folded in
    # b1_ref:   (1, 4C) f32     pwconv1 bias with LN shift folded in
    # w2_ref:   (4C, C) bf16    pwconv2 weight with gamma folded in
    # b2_ref:   (1, C)  f32     pwconv2 bias with gamma folded in
    # out_ref:  (1, TH, W, C)   output row tile
    # sc_ref:   (TH, W, C) f32  VMEM scratch holding the residual shortcut
    TH, W, C = out_ref.shape[1], out_ref.shape[2], out_ref.shape[3]
    Wp = xpad_ref.shape[2]
    t = pl.program_id(1)

    # Halo window of padded rows for this output row tile.
    row0 = pl.multiple_of(t * TH, TH)
    xr = xpad_ref[0, pl.ds(row0, TH + K - 1)].astype(jnp.float32)   # (TH+6, Wp, C)

    wdw = wdw_ref[...].astype(jnp.float32)                          # (K*K, C)
    bias = bdw_ref[...].astype(jnp.float32)                         # (1, C)

    # Depthwise 7x7 conv.  W-shift via an *incremental* sublane roll (XLU; only one
    # halo copy live), H-shift via outer-dim slices (free).  Two partial accumulators
    # break the serial add chain; the first starts at the conv bias.
    acc0 = jnp.broadcast_to(bias, (TH, W, C))
    acc1 = jnp.zeros((TH, W, C), jnp.float32)
    for dw in range(K):
        if dw > 0:
            # After dw applications: xr[h, w, :] == xpad[row0 + h, w + dw, :]  (w < W)
            xr = pltpu.roll(xr, shift=Wp - 1, axis=1)
        if dw == PAD:
            # Residual = unpadded input = centre of the padded block, already W-shifted
            # into sublane alignment by the roll.  Park it in VMEM scratch so it is not
            # live in vregs across the MXU / GELU phase.
            sc_ref[...] = xr[PAD:PAD + TH, :W, :]
        for dh in range(K):
            tap = xr[dh:dh + TH, :W, :] * wdw[dh * K + dw]
            if dw % 2 == 0:
                acc0 = acc0 + tap
            else:
                acc1 = acc1 + tap
    acc = acc0 + acc1

    # LayerNorm over channels, two-pass statistics (affine folded into w1/b1).
    mean = jnp.mean(acc, axis=-1, keepdims=True)
    xc = acc - mean
    var = jnp.mean(xc * xc, axis=-1, keepdims=True)
    xn = xc * lax.rsqrt(var + EPS)

    # Pointwise MLP on the MXU: bf16 operands, f32 accumulation.  tanh-GELU runs on
    # the EUP slot instead of an erf VPU polynomial over the (TH*W, 4C) hidden.
    x2 = xn.reshape(TH * W, C).astype(jnp.bfloat16)
    h = jnp.dot(x2, w1_ref[...], preferred_element_type=jnp.float32) + b1_ref[...]
    h = jax.nn.gelu(h, approximate=True)
    y = jnp.dot(h.astype(jnp.bfloat16), w2_ref[...],
                preferred_element_type=jnp.float32) + b2_ref[...]

    out_ref[0] = (sc_ref[...] + y.reshape(TH, W, C)).astype(out_ref.dtype)


def _pick_row_tile(h, w, c):
    """Row-tile height: make the matmul M dim (TH*W) >= 256 (fills the 256-wide MXU on
    v6e/v7x), keep the (TH*W, 4C) f32 hidden under ~8 MiB, and prefer exact divisors
    of h so no padded tail rows are computed."""
    th_min = max(1, -(-256 // w))                              # ceil(256 / w)
    max_th = max(th_min, (8 << 20) // max(1, w * 16 * c))      # hidden <= 8 MiB
    th_cap = max(1, min(h, max(th_min, min(4 * th_min, max_th))))
    for th in range(th_cap, th_min - 1, -1):                   # largest divisor first
        if th <= h and h % th == 0:
            return th
    return th_cap                                              # padded tail in wrapper


def _vmem_limit_bytes():
    """~80% of the chip's VMEM (capped at 100 MiB); safe fallback if query fails."""
    cap = None
    try:
        cap = getattr(pltpu.get_tpu_info(), "vmem_capacity_bytes", None)
    except Exception:
        cap = None
    if not cap:
        cap = 64 << 20            # conservative (v7x physical size) fallback
    return int(min(100 << 20, max(32 << 20, int(cap * 0.8))))


@jax.jit
def convnext_block(x_nchw, params):
    """x_nchw: (B, C, H, W) float32. params: tuple of parameter arrays (PyTorch layout)."""
    wdw, bdw, lnw, lnb, w1, b1, w2, b2, gamma = params
    B, C, H, W = x_nchw.shape
    C4 = 4 * C

    TH = _pick_row_tile(H, W, C)
    Hr = ((H + TH - 1) // TH) * TH             # H rounded up to a multiple of TH
    nT = Hr // TH
    Hp = Hr + 2 * PAD
    Wp = ((W + 2 * PAD + 7) // 8) * 8          # sublane-aligned padded width

    # NCHW -> NHWC + zero pad (incl. the row-tile tail); fused into one XLA pass.
    x_nhwc = jnp.transpose(x_nchw, (0, 2, 3, 1))
    x_pad = jnp.pad(x_nhwc, ((0, 0), (PAD, PAD + Hr - H), (PAD, Wp - W - PAD), (0, 0)))

    # Fold LN affine into pwconv1 and gamma into pwconv2; cast matmul weights to bf16.
    lnw_v = lnw.reshape(C)
    lnb_v = lnb.reshape(C)
    g_v = gamma.reshape(C)
    w1f = (lnw_v[:, None] * w1).astype(jnp.bfloat16)                       # (C, 4C)
    b1f = (b1.reshape(1, C4) + (lnb_v @ w1)[None, :]).astype(jnp.float32)  # (1, 4C)
    w2f = (w2 * g_v[None, :]).astype(jnp.bfloat16)                         # (4C, C)
    b2f = (b2.reshape(1, C) * g_v[None, :]).astype(jnp.float32)            # (1, C)
    wdw49 = wdw.reshape(K * K, C)
    bdw2 = bdw.reshape(1, C)

    out_nhwc = pl.pallas_call(
        convnext_block_kernel,
        out_shape=jax.ShapeDtypeStruct((B, Hr, W, C), x_nchw.dtype),
        grid=(B, nT),
        in_specs=[
            pl.BlockSpec((1, Hp, Wp, C), lambda b, t: (b, 0, 0, 0)),   # re-used across t
            pl.BlockSpec((K * K, C), lambda b, t: (0, 0)),
            pl.BlockSpec((1, C), lambda b, t: (0, 0)),
            pl.BlockSpec((C, C4), lambda b, t: (0, 0)),
            pl.BlockSpec((1, C4), lambda b, t: (0, 0)),
            pl.BlockSpec((C4, C), lambda b, t: (0, 0)),
            pl.BlockSpec((1, C), lambda b, t: (0, 0)),
        ],
        out_specs=pl.BlockSpec((1, TH, W, C), lambda b, t: (b, t, 0, 0)),
        scratch_shapes=[pltpu.VMEM((TH, W, C), jnp.float32)],
        compiler_params=pltpu.CompilerParams(
            # batch axis parallel, row-tile axis arbitrary -> v7x megacore splits on
            # batch, keeping the "image fetched once per image" property per core.
            dimension_semantics=("parallel", "arbitrary"),
            vmem_limit_bytes=_vmem_limit_bytes()),
    )(x_pad, wdw49, bdw2, w1f, b1f, w2f, b2f)

    out_nhwc = out_nhwc[:, :H]                 # drop padded tail rows (if any)
    return jnp.transpose(out_nhwc, (0, 3, 1, 2))


def reference_block(x_nchw, params):
    """Pure-JAX (f32) reference mirroring the PyTorch forward (exact erf GELU)."""
    wdw, bdw, lnw, lnb, w1, b1, w2, b2, gamma = params
    B, C, H, W = x_nchw.shape
    w_oihw = jnp.transpose(wdw, (2, 0, 1))[:, None, :, :]
    y = lax.conv_general_dilated(
        x_nchw, w_oihw, window_strides=(1, 1),
        padding=[(PAD, PAD), (PAD, PAD)],
        feature_group_count=C,
        dimension_numbers=("NCHW", "OIHW", "NCHW"))
    y = y + bdw.reshape(1, C, 1, 1)
    y = jnp.transpose(y, (0, 2, 3, 1))
    mean = y.mean(-1, keepdims=True)
    var = ((y - mean) ** 2).mean(-1, keepdims=True)
    y = (y - mean) / jnp.sqrt(var + EPS)
    y = y * lnw.reshape(-1) + lnb.reshape(-1)
    y = jnp.dot(y, w1) + b1.reshape(-1)
    y = jax.nn.gelu(y, approximate=False)
    y = jnp.dot(y, w2) + b2.reshape(-1)
    y = y * gamma.reshape(-1)
    y = jnp.transpose(y, (0, 3, 1, 2))
    return x_nchw + y


def make_params(key, dim, layer_scale_init_value=1e-6):
    ks = jax.random.split(key, 8)
    wdw = 0.1 * jax.random.normal(ks[0], (K, K, dim), jnp.float32)
    bdw = 0.1 * jax.random.normal(ks[1], (1, dim), jnp.float32)
    lnw = jnp.ones((1, dim), jnp.float32)
    lnb = jnp.zeros((1, dim), jnp.float32)
    w1 = 0.05 * jax.random.normal(ks[2], (dim, 4 * dim), jnp.float32)
    b1 = 0.05 * jax.random.normal(ks[3], (1, 4 * dim), jnp.float32)
    w2 = 0.05 * jax.random.normal(ks[4], (4 * dim, dim), jnp.float32)
    b2 = 0.05 * jax.random.normal(ks[5], (1, dim), jnp.float32)
    gamma = layer_scale_init_value * jnp.ones((1, dim), jnp.float32)
    return (wdw, bdw, lnw, lnb, w1, b1, w2, b2, gamma)


if __name__ == "__main__":
    key = jax.random.PRNGKey(0)
    kx, kp = jax.random.split(key)

    B, dim, H, W = 2, 64, 16, 16
    x = jax.random.normal(kx, (B, dim, H, W), jnp.float32)   # NCHW like PyTorch
    params = make_params(kp, dim)

    out = convnext_block(x, params)
    out = jax.block_until_ready(out)

    ref = reference_block(x, params)
    assert out.shape == x.shape and out.dtype == x.dtype
    assert jnp.allclose(out, ref, atol=1e-4, rtol=1e-4), "mismatch vs JAX reference"

    print("KERNEL_OK")
</pallas_src>

<mosaic_0001>
module attributes {stable_mosaic.version = 11 : i64} {
  func.func @convnext_block_kernel(%arg0: i32, %arg1: i32, %arg2: memref<1x22x24x64xf32, #tpu.memory_space<vmem>>, %arg3: memref<49x64xf32, #tpu.memory_space<vmem>>, %arg4: memref<1x64xf32, #tpu.memory_space<vmem>>, %arg5: memref<64x256xbf16, #tpu.memory_space<vmem>>, %arg6: memref<1x256xf32, #tpu.memory_space<vmem>>, %arg7: memref<256x64xbf16, #tpu.memory_space<vmem>>, %arg8: memref<1x64xf32, #tpu.memory_space<vmem>>, %arg9: memref<1x16x16x64xf32, #tpu.memory_space<vmem>>, %arg10: memref<16x16x64xf32, #tpu.memory_space<vmem>>) attributes {dimension_semantics = [#tpu.dimension_semantics<parallel>, #tpu.dimension_semantics<arbitrary>], iteration_bounds = array<i64: 2, 1>, scalar_prefetch = 0 : i64, scratch_operands = 1 : i64, tpu.core_type = #tpu.core_type<tc>, window_params = [{transform_indices = @transform_0, window_bounds = array<i64: 1, 22, 24, 64>}, {pipeline_mode = #tpu.pipeline_mode<synchronous>, transform_indices = @transform_1, window_bounds = array<i64: 49, 64>}, {pipeline_mode = #tpu.pipeline_mode<synchronous>, transform_indices = @transform_2, window_bounds = array<i64: 1, 64>}, {pipeline_mode = #tpu.pipeline_mode<synchronous>, transform_indices = @transform_3, window_bounds = array<i64: 64, 256>}, {pipeline_mode = #tpu.pipeline_mode<synchronous>, transform_indices = @transform_4, window_bounds = array<i64: 1, 256>}, {pipeline_mode = #tpu.pipeline_mode<synchronous>, transform_indices = @transform_5, window_bounds = array<i64: 256, 64>}, {pipeline_mode = #tpu.pipeline_mode<synchronous>, transform_indices = @transform_6, window_bounds = array<i64: 1, 64>}, {transform_indices = @transform_7, window_bounds = array<i64: 1, 16, 16, 64>}]} {
    %c16_i32 = arith.constant 16 : i32
    %0 = arith.muli %arg1, %c16_i32 : i32
    %1 = tpu.assume_multiple %0, 16 : i32
    %c0 = arith.constant 0 : index
    %2 = arith.index_cast %1 : i32 to index
    %c0_0 = arith.constant 0 : index
    %c0_1 = arith.constant 0 : index
    %3 = vector.load %arg2[%c0, %2, %c0_0, %c0_1] : memref<1x22x24x64xf32, #tpu.memory_space<vmem>>, vector<1x22x24x64xf32>
    %4 = vector.shape_cast %3 : vector<1x22x24x64xf32> to vector<22x24x64xf32>
    %c0_2 = arith.constant 0 : index
    %c0_3 = arith.constant 0 : index
    %5 = vector.load %arg3[%c0_2, %c0_3] : memref<49x64xf32, #tpu.memory_space<vmem>>, vector<49x64xf32>
    %c0_4 = arith.constant 0 : index
    %c0_5 = arith.constant 0 : index
    %6 = vector.load %arg4[%c0_4, %c0_5] : memref<1x64xf32, #tpu.memory_space<vmem>>, vector<1x64xf32>
    %7 = vector.shape_cast %6 : vector<1x64xf32> to vector<1x1x64xf32>
    %8 = vector.broadcast %7 : vector<1x1x64xf32> to vector<16x16x64xf32>
    %cst = arith.constant 0.000000e+00 : f32
    %9 = vector.broadcast %cst : f32 to vector<16x16x64xf32>
    %10 = vector.extract_strided_slice %4 {offsets = [0, 0, 0], sizes = [16, 16, 64], strides = [1, 1, 1]} : vector<22x24x64xf32> to vector<16x16x64xf32>
    %11 = vector.extract_strided_slice %5 {offsets = [0, 0], sizes = [1, 64], strides = [1, 1]} : vector<49x64xf32> to vector<1x64xf32>
    %12 = vector.shape_cast %11 : vector<1x64xf32> to vector<64xf32>
    %13 = vector.shape_cast %12 : vector<64xf32> to vector<1x1x64xf32>
    %14 = vector.broadcast %13 : vector<1x1x64xf32> to vector<16x16x64xf32>
    %15 = arith.mulf %10, %14 : vector<16x16x64xf32>
    %16 = arith.addf %8, %15 : vector<16x16x64xf32>
    %17 = vector.extract_strided_slice %4 {offsets = [1, 0, 0], sizes = [16, 16, 64], strides = [1, 1, 1]} : vector<22x24x64xf32> to vector<16x16x64xf32>
    %18 = vector.extract_strided_slice %5 {offsets = [7, 0], sizes = [1, 64], strides = [1, 1]} : vector<49x64xf32> to vector<1x64xf32>
    %19 = vector.shape_cast %18 : vector<1x64xf32> to vector<64xf32>
    %20 = vector.shape_cast %19 : vector<64xf32> to vector<1x1x64xf32>
    %21 = vector.broadcast %20 : vector<1x1x64xf32> to vector<16x16x64xf32>
    %22 = arith.mulf %17, %21 : vector<16x16x64xf32>
    %23 = arith.addf %16, %22 : vector<16x16x64xf32>
    %24 = vector.extract_strided_slice %4 {offsets = [2, 0, 0], sizes = [16, 16, 64], strides = [1, 1, 1]} : vector<22x24x64xf32> to vector<16x16x64xf32>
    %25 = vector.extract_strided_slice %5 {offsets = [14, 0], sizes = [1, 64], strides = [1, 1]} : vector<49x64xf32> to vector<1x64xf32>
    %26 = vector.shape_cast %25 : vector<1x64xf32> to vector<64xf32>
    %27 = vector.shape_cast %26 : vector<64xf32> to vector<1x1x64xf32>
    %28 = vector.broadcast %27 : vector<1x1x64xf32> to vector<16x16x64xf32>
    %29 = arith.mulf %24, %28 : vector<16x16x64xf32>
    %30 = arith.addf %23, %29 : vector<16x16x64xf32>
    %31 = vector.extract_strided_slice %4 {offsets = [3, 0, 0], sizes = [16, 16, 64], strides = [1, 1, 1]} : vector<22x24x64xf32> to vector<16x16x64xf32>
    %32 = vector.extract_strided_slice %5 {offsets = [21, 0], sizes = [1, 64], strides = [1, 1]} : vector<49x64xf32> to vector<1x64xf32>
    %33 = vector.shape_cast %32 : vector<1x64xf32> to vector<64xf32>
    %34 = vector.shape_cast %33 : vector<64xf32> to vector<1x1x64xf32>
    %35 = vector.broadcast %34 : vector<1x1x64xf32> to vector<16x16x64xf32>
    %36 = arith.mulf %31, %35 : vector<16x16x64xf32>
    %37 = arith.addf %30, %36 : vector<16x16x64xf32>
    %38 = vector.extract_strided_slice %4 {offsets = [4, 0, 0], sizes = [16, 16, 64], strides = [1, 1, 1]} : vector<22x24x64xf32> to vector<16x16x64xf32>
    %39 = vector.extract_strided_slice %5 {offsets = [28, 0], sizes = [1, 64], strides = [1, 1]} : vector<49x64xf32> to vector<1x64xf32>
    %40 = vector.shape_cast %39 : vector<1x64xf32> to vector<64xf32>
    %41 = vector.shape_cast %40 : vector<64xf32> to vector<1x1x64xf32>
    %42 = vector.broadcast %41 : vector<1x1x64xf32> to vector<16x16x64xf32>
    %43 = arith.mulf %38, %42 : vector<16x16x64xf32>
    %44 = arith.addf %37, %43 : vector<16x16x64xf32>
    %45 = vector.extract_strided_slice %4 {offsets = [5, 0, 0], sizes = [16, 16, 64], strides = [1, 1, 1]} : vector<22x24x64xf32> to vector<16x16x64xf32>
    %46 = vector.extract_strided_slice %5 {offsets = [35, 0], sizes = [1, 64], strides = [1, 1]} : vector<49x64xf32> to vector<1x64xf32>
    %47 = vector.shape_cast %46 : vector<1x64xf32> to vector<64xf32>
    %48 = vector.shape_cast %47 : vector<64xf32> to vector<1x1x64xf32>
    %49 = vector.broadcast %48 : vector<1x1x64xf32> to vector<16x16x64xf32>
    %50 = arith.mulf %45, %49 : vector<16x16x64xf32>
    %51 = arith.addf %44, %50 : vector<16x16x64xf32>
    %52 = vector.extract_strided_slice %4 {offsets = [6, 0, 0], sizes = [16, 16, 64], strides = [1, 1, 1]} : vector<22x24x64xf32> to vector<16x16x64xf32>
    %53 = vector.extract_strided_slice %5 {offsets = [42, 0], sizes = [1, 64], strides = [1, 1]} : vector<49x64xf32> to vector<1x64xf32>
    %54 = vector.shape_cast %53 : vector<1x64xf32> to vector<64xf32>
    %55 = vector.shape_cast %54 : vector<64xf32> to vector<1x1x64xf32>
    %56 = vector.broadcast %55 : vector<1x1x64xf32> to vector<16x16x64xf32>
    %57 = arith.mulf %52, %56 : vector<16x16x64xf32>
    %58 = arith.addf %51, %57 : vector<16x16x64xf32>
    %c23_i32 = arith.constant 23 : i32
    %59 = tpu.dynamic_rotate %4 by %c23_i32 dim 1 : vector<22x24x64xf32>, i32 -> vector<22x24x64xf32>
    %60 = vector.extract_strided_slice %59 {offsets = [0, 0, 0], sizes = [16, 16, 64], strides = [1, 1, 1]} : vector<22x24x64xf32> to vector<16x16x64xf32>
    %61 = vector.extract_strided_slice %5 {offsets = [1, 0], sizes = [1, 64], strides = [1, 1]} : vector<49x64xf32> to vector<1x64xf32>
    %62 = vector.shape_cast %61 : vector<1x64xf32> to vector<64xf32>
    %63 = vector.shape_cast %62 : vector<64xf32> to vector<1x1x64xf32>
    %64 = vector.broadcast %63 : vector<1x1x64xf32> to vector<16x16x64xf32>
    %65 = arith.mulf %60, %64 : vector<16x16x64xf32>
    %66 = arith.addf %9, %65 : vector<16x16x64xf32>
    %67 = vector.extract_strided_slice %59 {offsets = [1, 0, 0], sizes = [16, 16, 64], strides = [1, 1, 1]} : vector<22x24x64xf32> to vector<16x16x64xf32>
    %68 = vector.extract_strided_slice %5 {offsets = [8, 0], sizes = [1, 64], strides = [1, 1]} : vector<49x64xf32> to vector<1x64xf32>
    %69 = vector.shape_cast %68 : vector<1x64xf32> to vector<64xf32>
    %70 = vector.shape_cast %69 : vector<64xf32> to vector<1x1x64xf32>
    %71 = vector.broadcast %70 : vector<1x1x64xf32> to vector<16x16x64xf32>
    %72 = arith.mulf %67, %71 : vector<16x16x64xf32>
    %73 = arith.addf %66, %72 : vector<16x16x64xf32>
    %74 = vector.extract_strided_slice %59 {offsets = [2, 0, 0], sizes = [16, 16, 64], strides = [1, 1, 1]} : vector<22x24x64xf32> to vector<16x16x64xf32>
    %75 = vector.extract_strided_slice %5 {offsets = [15, 0], sizes = [1, 64], strides = [1, 1]} : vector<49x64xf32> to vector<1x64xf32>
    %76 = vector.shape_cast %75 : vector<1x64xf32> to vector<64xf32>
    %77 = vector.shape_cast %76 : vector<64xf32> to vector<1x1x64xf32>
    %78 = vector.broadcast %77 : vector<1x1x64xf32> to vector<16x16x64xf32>
    %79 = arith.mulf %74, %78 : vector<16x16x64xf32>
    %80 = arith.addf %73, %79 : vector<16x16x64xf32>
    %81 = vector.extract_strided_slice %59 {offsets = [3, 0, 0], sizes = [16, 16, 64], strides = [1, 1, 1]} : vector<22x24x64xf32> to vector<16x16x64xf32>
    %82 = vector.extract_strided_slice %5 {offsets = [22, 0], sizes = [1, 64], strides = [1, 1]} : vector<49x64xf32> to vector<1x64xf32>
    %83 = vector.shape_cast %82 : vector<1x64xf32> to vector<64xf32>
    %84 = vector.shape_cast %83 : vector<64xf32> to vector<1x1x64xf32>
    %85 = vector.broadcast %84 : vector<1x1x64xf32> to vector<16x16x64xf32>
    %86 = arith.mulf %81, %85 : vector<16x16x64xf32>
    %87 = arith.addf %80, %86 : vector<16x16x64xf32>
    %88 = vector.extract_strided_slice %59 {offsets = [4, 0, 0], sizes = [16, 16, 64], strides = [1, 1, 1]} : vector<22x24x64xf32> to vector<16x16x64xf32>
    %89 = vector.extract_strided_slice %5 {offsets = [29, 0], sizes = [1, 64], strides = [1, 1]} : vector<49x64xf32> to vector<1x64xf32>
    %90 = vector.shape_cast %89 : vector<1x64xf32> to vector<64xf32>
    %91 = vector.shape_cast %90 : vector<64xf32> to vector<1x1x64xf32>
    %92 = vector.broadcast %91 : vector<1x1x64xf32> to vector<16x16x64xf32>
    %93 = arith.mulf %88, %92 : vector<16x16x64xf32>
    %94 = arith.addf %87, %93 : vector<16x16x64xf32>
    %95 = vector.extract_strided_slice %59 {offsets = [5, 0, 0], sizes = [16, 16, 64], strides = [1, 1, 1]} : vector<22x24x64xf32> to vector<16x16x64xf32>
    %96 = vector.extract_strided_slice %5 {offsets = [36, 0], sizes = [1, 64], strides = [1, 1]} : vector<49x64xf32> to vector<1x64xf32>
    %97 = vector.shape_cast %96 : vector<1x64xf32> to vector<64xf32>
    %98 = vector.shape_cast %97 : vector<64xf32> to vector<1x1x64xf32>
    %99 = vector.broadcast %98 : vector<1x1x64xf32> to vector<16x16x64xf32>
    %100 = arith.mulf %95, %99 : vector<16x16x64xf32>
    %101 = arith.addf %94, %100 : vector<16x16x64xf32>
    %102 = vector.extract_strided_slice %59 {offsets = [6, 0, 0], sizes = [16, 16, 64], strides = [1, 1, 1]} : vector<22x24x64xf32> to vector<16x16x64xf32>
    %103 = vector.extract_strided_slice %5 {offsets = [43, 0], sizes = [1, 64], strides = [1, 1]} : vector<49x64xf32> to vector<1x64xf32>
    %104 = vector.shape_cast %103 : vector<1x64xf32> to vector<64xf32>
    %105 = vector.shape_cast %104 : vector<64xf32> to vector<1x1x64xf32>
    %106 = vector.broadcast %105 : vector<1x1x64xf32> to vector<16x16x64xf32>
    %107 = arith.mulf %102, %106 : vector<16x16x64xf32>
    %108 = arith.addf %101, %107 : vector<16x16x64xf32>
    %c23_i32_6 = arith.constant 23 : i32
    %109 = tpu.dynamic_rotate %59 by %c23_i32_6 dim 1 : vector<22x24x64xf32>, i32 -> vector<22x24x64xf32>
    %110 = vector.extract_strided_slice %109 {offsets = [0, 0, 0], sizes = [16, 16, 64], strides = [1, 1, 1]} : vector<22x24x64xf32> to vector<16x16x64xf32>
    %111 = vector.extract_strided_slice %5 {offsets = [2, 0], sizes = [1, 64], strides = [1, 1]} : vector<49x64xf32> to vector<1x64xf32>
    %112 = vector.shape_cast %111 : vector<1x64xf32> to vector<64xf32>
    %113 = vector.shape_cast %112 : vector<64xf32> to vector<1x1x64xf32>
    %114 = vector.broadcast %113 : vector<1x1x64xf32> to vector<16x16x64xf32>
    %115 = arith.mulf %110, %114 : vector<16x16x64xf32>
    %116 = arith.addf %58, %115 : vector<16x16x64xf32>
    %117 = vector.extract_strided_slice %109 {offsets = [1, 0, 0], sizes = [16, 16, 64], strides = [1, 1, 1]} : vector<22x24x64xf32> to vector<16x16x64xf32>
    %118 = vector.extract_strided_slice %5 {offsets = [9, 0], sizes = [1, 64], strides = [1, 1]} : vector<49x64xf32> to vector<1x64xf32>
    %119 = vector.shape_cast %118 : vector<1x64xf32> to vector<64xf32>
    %120 = vector.shape_cast %119 : vector<64xf32> to vector<1x1x64xf32>
    %121 = vector.broadcast %120 : vector<1x1x64xf32> to vector<16x16x64xf32>
    %122 = arith.mulf %117, %121 : vector<16x16x64xf32>
    %123 = arith.addf %116, %122 : vector<16x16x64xf32>
    %124 = vector.extract_strided_slice %109 {offsets = [2, 0, 0], sizes = [16, 16, 64], strides = [1, 1, 1]} : vector<22x24x64xf32> to vector<16x16x64xf32>
    %125 = vector.extract_strided_slice %5 {offsets = [16, 0], sizes = [1, 64], strides = [1, 1]} : vector<49x64xf32> to vector<1x64xf32>
    %126 = vector.shape_cast %125 : vector<1x64xf32> to vector<64xf32>
    %127 = vector.shape_cast %126 : vector<64xf32> to vector<1x1x64xf32>
    %128 = vector.broadcast %127 : vector<1x1x64xf32> to vector<16x16x64xf32>
    %129 = arith.mulf %124, %128 : vector<16x16x64xf32>
    %130 = arith.addf %123, %129 : vector<16x16x64xf32>
    %131 = vector.extract_strided_slice %109 {offsets = [3, 0, 0], sizes = [16, 16, 64], strides = [1, 1, 1]} : vector<22x24x64xf32> to vector<16x16x64xf32>
    %132 = vector.extract_strided_slice %5 {offsets = [23, 0], sizes = [1, 64], strides = [1, 1]} : vector<49x64xf32> to vector<1x64xf32>
    %133 = vector.shape_cast %132 : vector<1x64xf32> to vector<64xf32>
    %134 = vector.shape_cast %133 : vector<64xf32> to vector<1x1x64xf32>
    %135 = vector.broadcast %134 : vector<1x1x64xf32> to vector<16x16x64xf32>
    %136 = arith.mulf %131, %135 : vector<16x16x64xf32>
    %137 = arith.addf %130, %136 : vector<16x16x64xf32>
    %138 = vector.extract_strided_slice %109 {offsets = [4, 0, 0], sizes = [16, 16, 64], strides = [1, 1, 1]} : vector<22x24x64xf32> to vector<16x16x64xf32>
    %139 = vector.extract_strided_slice %5 {offsets = [30, 0], sizes = [1, 64], strides = [1, 1]} : vector<49x64xf32> to vector<1x64xf32>
    %140 = vector.shape_cast %139 : vector<1x64xf32> to vector<64xf32>
    %141 = vector.shape_cast %140 : vector<64xf32> to vector<1x1x64xf32>
    %142 = vector.broadcast %141 : vector<1x1x64xf32> to vector<16x16x64xf32>
    %143 = arith.mulf %138, %142 : vector<16x16x64xf32>
    %144 = arith.addf %137, %143 : vector<16x16x64xf32>
    %145 = vector.extract_strided_slice %109 {offsets = [5, 0, 0], sizes = [16, 16, 64], strides = [1, 1, 1]} : vector<22x24x64xf32> to vector<16x16x64xf32>
    %146 = vector.extract_strided_slice %5 {offsets = [37, 0], sizes = [1, 64], strides = [1, 1]} : vector<49x64xf32> to vector<1x64xf32>
    %147 = vector.shape_cast %146 : vector<1x64xf32> to vector<64xf32>
    %148 = vector.shape_cast %147 : vector<64xf32> to vector<1x1x64xf32>
    %149 = vector.broadcast %148 : vector<1x1x64xf32> to vector<16x16x64xf32>
    %150 = arith.mulf %145, %149 : vector<16x16x64xf32>
    %151 = arith.addf %144, %150 : vector<16x16x64xf32>
    %152 = vector.extract_strided_slice %109 {offsets = [6, 0, 0], sizes = [16, 16, 64], strides = [1, 1, 1]} : vector<22x24x64xf32> to vector<16x16x64xf32>
    %153 = vector.extract_strided_slice %5 {offsets = [44, 0], sizes = [1, 64], strides = [1, 1]} : vector<49x64xf32> to vector<1x64xf32>
    %154 = vector.shape_cast %153 : vector<1x64xf32> to vector<64xf32>
    %155 = vector.shape_cast %154 : vector<64xf32> to vector<1x1x64xf32>
    %156 = vector.broadcast %155 : vector<1x1x64xf32> to vector<16x16x64xf32>
    %157 = arith.mulf %152, %156 : vector<16x16x64xf32>
    %158 = arith.addf %151, %157 : vector<16x16x64xf32>
    %c23_i32_7 = arith.constant 23 : i32
    %159 = tpu.dynamic_rotate %109 by %c23_i32_7 dim 1 : vector<22x24x64xf32>, i32 -> vector<22x24x64xf32>
    %160 = vector.extract_strided_slice %159 {offsets = [3, 0, 0], sizes = [16, 16, 64], strides = [1, 1, 1]} : vector<22x24x64xf32> to vector<16x16x64xf32>
    %c0_8 = arith.constant 0 : index
    %c0_9 = arith.constant 0 : index
    %c0_10 = arith.constant 0 : index
    %161 = vector.load %arg10[%c0_8, %c0_9, %c0_10] : memref<16x16x64xf32, #tpu.memory_space<vmem>>, vector<16x16x64xf32>
    tpu.vector_store %arg10[%c0_8, %c0_9, %c0_10], %160 {strides = array<i32>} : memref<16x16x64xf32, #tpu.memory_space<vmem>>, vector<16x16x64xf32>,
    %162 = vector.extract_strided_slice %159 {offsets = [0, 0, 0], sizes = [16, 16, 64], strides = [1, 1, 1]} : vector<22x24x64xf32> to vector<16x16x64xf32>
    %163 = vector.extract_strided_slice %5 {offsets = [3, 0], sizes = [1, 64], strides = [1, 1]} : vector<49x64xf32> to vector<1x64xf32>
    %164 = vector.shape_cast %163 : vector<1x64xf32> to vector<64xf32>
    %165 = vector.shape_cast %164 : vector<64xf32> to vector<1x1x64xf32>
    %166 = vector.broadcast %165 : vector<1x1x64xf32> to vector<16x16x64xf32>
    %167 = arith.mulf %162, %166 : vector<16x16x64xf32>
    %168 = arith.addf %108, %167 : vector<16x16x64xf32>
    %169 = vector.extract_strided_slice %159 {offsets = [1, 0, 0], sizes = [16, 16, 64], strides = [1, 1, 1]} : vector<22x24x64xf32> to vector<16x16x64xf32>
    %170 = vector.extract_strided_slice %5 {offsets = [10, 0], sizes = [1, 64], strides = [1, 1]} : vector<49x64xf32> to vector<1x64xf32>
    %171 = vector.shape_cast %170 : vector<1x64xf32> to vector<64xf32>
    %172 = vector.shape_cast %171 : vector<64xf32> to vector<1x1x64xf32>
    %173 = vector.broadcast %172 : vector<1x1x64xf32> to vector<16x16x64xf32>
    %174 = arith.mulf %169, %173 : vector<16x16x64xf32>
    %175 = arith.addf %168, %174 : vector<16x16x64xf32>
    %176 = vector.extract_strided_slice %159 {offsets = [2, 0, 0], sizes = [16, 16, 64], strides = [1, 1, 1]} : vector<22x24x64xf32> to vector<16x16x64xf32>
    %177 = vector.extract_strided_slice %5 {offsets = [17, 0], sizes = [1, 64], strides = [1, 1]} : vector<49x64xf32> to vector<1x64xf32>
    %178 = vector.shape_cast %177 : vector<1x64xf32> to vector<64xf32>
    %179 = vector.shape_cast %178 : vector<64xf32> to vector<1x1x64xf32>
    %180 = vector.broadcast %179 : vector<1x1x64xf32> to vector<16x16x64xf32>
    %181 = arith.mulf %176, %180 : vector<16x16x64xf32>
    %182 = arith.addf %175, %181 : vector<16x16x64xf32>
    %183 = vector.extract_strided_slice %159 {offsets = [3, 0, 0], sizes = [16, 16, 64], strides = [1, 1, 1]} : vector<22x24x64xf32> to vector<16x16x64xf32>
    %184 = vector.extract_strided_slice %5 {offsets = [24, 0], sizes = [1, 64], strides = [1, 1]} : vector<49x64xf32> to vector<1x64xf32>
    %185 = vector.shape_cast %184 : vector<1x64xf32> to vector<64xf32>
    %186 = vector.shape_cast %185 : vector<64xf32> to vector<1x1x64xf32>
    %187 = vector.broadcast %186 : vector<1x1x64xf32> to vector<16x16x64xf32>
    %188 = arith.mulf %183, %187 : vector<16x16x64xf32>
    %189 = arith.addf %182, %188 : vector<16x16x64xf32>
    %190 = vector.extract_strided_slice %159 {offsets = [4, 0, 0], sizes = [16, 16, 64], strides = [1, 1, 1]} : vector<22x24x64xf32> to vector<16x16x64xf32>
    %191 = vector.extract_strided_slice %5 {offsets = [31, 0], sizes = [1, 64], strides = [1, 1]} : vector<49x64xf32> to vector<1x64xf32>
    %192 = vector.shape_cast %191 : vector<1x64xf32> to vector<64xf32>
    %193 = vector.shape_cast %192 : vector<64xf32> to vector<1x1x64xf32>
    %194 = vector.broadcast %193 : vector<1x1x64xf32> to vector<16x16x64xf32>
    %195 = arith.mulf %190, %194 : vector<16x16x64xf32>
    %196 = arith.addf %189, %195 : vector<16x16x64xf32>
    %197 = vector.extract_strided_slice %159 {offsets = [5, 0, 0], sizes = [16, 16, 64], strides = [1, 1, 1]} : vector<22x24x64xf32> to vector<16x16x64xf32>
    %198 = vector.extract_strided_slice %5 {offsets = [38, 0], sizes = [1, 64], strides = [1, 1]} : vector<49x64xf32> to vector<1x64xf32>
    %199 = vector.shape_cast %198 : vector<1x64xf32> to vector<64xf32>
    %200 = vector.shape_cast %199 : vector<64xf32> to vector<1x1x64xf32>
    %201 = vector.broadcast %200 : vector<1x1x64xf32> to vector<16x16x64xf32>
    %202 = arith.mulf %197, %201 : vector<16x16x64xf32>
    %203 = arith.addf %196, %202 : vector<16x16x64xf32>
    %204 = vector.extract_strided_slice %159 {offsets = [6, 0, 0], sizes = [16, 16, 64], strides = [1, 1, 1]} : vector<22x24x64xf32> to vector<16x16x64xf32>
    %205 = vector.extract_strided_slice %5 {offsets = [45, 0], sizes = [1, 64], strides = [1, 1]} : vector<49x64xf32> to vector<1x64xf32>
    %206 = vector.shape_cast %205 : vector<1x64xf32> to vector<64xf32>
    %207 = vector.shape_cast %206 : vector<64xf32> to vector<1x1x64xf32>
    %208 = vector.broadcast %207 : vector<1x1x64xf32> to vector<16x16x64xf32>
    %209 = arith.mulf %204, %208 : vector<16x16x64xf32>
    %210 = arith.addf %203, %209 : vector<16x16x64xf32>
    %c23_i32_11 = arith.constant 23 : i32
    %211 = tpu.dynamic_rotate %159 by %c23_i32_11 dim 1 : vector<22x24x64xf32>, i32 -> vector<22x24x64xf32>
    %212 = vector.extract_strided_slice %211 {offsets = [0, 0, 0], sizes = [16, 16, 64], strides = [1, 1, 1]} : vector<22x24x64xf32> to vector<16x16x64xf32>
    %213 = vector.extract_strided_slice %5 {offsets = [4, 0], sizes = [1, 64], strides = [1, 1]} : vector<49x64xf32> to vector<1x64xf32>
    %214 = vector.shape_cast %213 : vector<1x64xf32> to vector<64xf32>
    %215 = vector.shape_cast %214 : vector<64xf32> to vector<1x1x64xf32>
    %216 = vector.broadcast %215 : vector<1x1x64xf32> to vector<16x16x64xf32>
    %217 = arith.mulf %212, %216 : vector<16x16x64xf32>
    %218 = arith.addf %158, %217 : vector<16x16x64xf32>
    %219 = vector.extract_strided_slice %211 {offsets = [1, 0, 0], sizes = [16, 16, 64], strides = [1, 1, 1]} : vector<22x24x64xf32> to vector<16x16x64xf32>
    %220 = vector.extract_strided_slice %5 {offsets = [11, 0], sizes = [1, 64], strides = [1, 1]} : vector<49x64xf32> to vector<1x64xf32>
    %221 = vector.shape_cast %220 : vector<1x64xf32> to vector<64xf32>
    %222 = vector.shape_cast %221 : vector<64xf32> to vector<1x1x64xf32>
    %223 = vector.broadcast %222 : vector<1x1x64xf32> to vector<16x16x64xf32>
    %224 = arith.mulf %219, %223 : vector<16x16x64xf32>
    %225 = arith.addf %218, %224 : vector<16x16x64xf32>
    %226 = vector.extract_strided_slice %211 {offsets = [2, 0, 0], sizes = [16, 16, 64], strides = [1, 1, 1]} : vector<22x24x64xf32> to vector<16x16x64xf32>
    %227 = vector.extract_strided_slice %5 {offsets = [18, 0], sizes = [1, 64], strides = [1, 1]} : vector<49x64xf32> to vector<1x64xf32>
    %228 = vector.shape_cast %227 : vector<1x64xf32> to vector<64xf32>
    %229 = vector.shape_cast %228 : vector<64xf32> to vector<1x1x64xf32>
    %230 = vector.broadcast %229 : vector<1x1x64xf32> to vector<16x16x64xf32>
    %231 = arith.mulf %226, %230 : vector<16x16x64xf32>
    %232 = arith.addf %225, %231 : vector<16x16x64xf32>
    %233 = vector.extract_strided_slice %211 {offsets = [3, 0, 0], sizes = [16, 16, 64], strides = [1, 1, 1]} : vector<22x24x64xf32> to vector<16x16x64xf32>
    %234 = vector.extract_strided_slice %5 {offsets = [25, 0], sizes = [1, 64], strides = [1, 1]} : vector<49x64xf32> to vector<1x64xf32>
    %235 = vector.shape_cast %234 : vector<1x64xf32> to vector<64xf32>
    %236 = vector.shape_cast %235 : vector<64xf32> to vector<1x1x64xf32>
    %237 = vector.broadcast %236 : vector<1x1x64xf32> to vector<16x16x64xf32>
    %238 = arith.mulf %233, %237 : vector<16x16x64xf32>
    %239 = arith.addf %232, %238 : vector<16x16x64xf32>
    %240 = vector.extract_strided_slice %211 {offsets = [4, 0, 0], sizes = [16, 16, 64], strides = [1, 1, 1]} : vector<22x24x64xf32> to vector<16x16x64xf32>
    %241 = vector.extract_strided_slice %5 {offsets = [32, 0], sizes = [1, 64], strides = [1, 1]} : vector<49x64xf32> to vector<1x64xf32>
    %242 = vector.shape_cast %241 : vector<1x64xf32> to vector<64xf32>
    %243 = vector.shape_cast %242 : vector<64xf32> to vector<1x1x64xf32>
    %244 = vector.broadcast %243 : vector<1x1x64xf32> to vector<16x16x64xf32>
    %245 = arith.mulf %240, %244 : vector<16x16x64xf32>
    %246 = arith.addf %239, %245 : vector<16x16x64xf32>
    %247 = vector.extract_strided_slice %211 {offsets = [5, 0, 0], sizes = [16, 16, 64], strides = [1, 1, 1]} : vector<22x24x64xf32> to vector<16x16x64xf32>
    %248 = vector.extract_strided_slice %5 {offsets = [39, 0], sizes = [1, 64], strides = [1, 1]} : vector<49x64xf32> to vector<1x64xf32>
    %249 = vector.shape_cast %248 : vector<1x64xf32> to vector<64xf32>
    %250 = vector.shape_cast %249 : vector<64xf32> to vector<1x1x64xf32>
    %251 = vector.broadcast %250 : vector<1x1x64xf32> to vector<16x16x64xf32>
    %252 = arith.mulf %247, %251 : vector<16x16x64xf32>
    %253 = arith.addf %246, %252 : vector<16x16x64xf32>
    %254 = vector.extract_strided_slice %211 {offsets = [6, 0, 0], sizes = [16, 16, 64], strides = [1, 1, 1]} : vector<22x24x64xf32> to vector<16x16x64xf32>
    %255 = vector.extract_strided_slice %5 {offsets = [46, 0], sizes = [1, 64], strides = [1, 1]} : vector<49x64xf32> to vector<1x64xf32>
    %256 = vector.shape_cast %255 : vector<1x64xf32> to vector<64xf32>
    %257 = vector.shape_cast %256 : vector<64xf32> to vector<1x1x64xf32>
    %258 = vector.broadcast %257 : vector<1x1x64xf32> to vector<16x16x64xf32>
    %259 = arith.mulf %254, %258 : vector<16x16x64xf32>
    %260 = arith.addf %253, %259 : vector<16x16x64xf32>
    %c23_i32_12 = arith.constant 23 : i32
    %261 = tpu.dynamic_rotate %211 by %c23_i32_12 dim 1 : vector<22x24x64xf32>, i32 -> vector<22x24x64xf32>
    %262 = vector.extract_strided_slice %261 {offsets = [0, 0, 0], sizes = [16, 16, 64], strides = [1, 1, 1]} : vector<22x24x64xf32> to vector<16x16x64xf32>
    %263 = vector.extract_strided_slice %5 {offsets = [5, 0], sizes = [1, 64], strides = [1, 1]} : vector<49x64xf32> to vector<1x64xf32>
    %264 = vector.shape_cast %263 : vector<1x64xf32> to vector<64xf32>
    %265 = vector.shape_cast %264 : vector<64xf32> to vector<1x1x64xf32>
    %266 = vector.broadcast %265 : vector<1x1x64xf32> to vector<16x16x64xf32>
    %267 = arith.mulf %262, %266 : vector<16x16x64xf32>
    %268 = arith.addf %210, %267 : vector<16x16x64xf32>
    %269 = vector.extract_strided_slice %261 {offsets = [1, 0, 0], sizes = [16, 16, 64], strides = [1, 1, 1]} : vector<22x24x64xf32> to vector<16x16x64xf32>
    %270 = vector.extract_strided_slice %5 {offsets = [12, 0], sizes = [1, 64], strides = [1, 1]} : vector<49x64xf32> to vector<1x64xf32>
    %271 = vector.shape_cast %270 : vector<1x64xf32> to vector<64xf32>
    %272 = vector.shape_cast %271 : vector<64xf32> to vector<1x1x64xf32>
    %273 = vector.broadcast %272 : vector<1x1x64xf32> to vector<16x16x64xf32>
    %274 = arith.mulf %269, %273 : vector<16x16x64xf32>
    %275 = arith.addf %268, %274 : vector<16x16x64xf32>
    %276 = vector.extract_strided_slice %261 {offsets = [2, 0, 0], sizes = [16, 16, 64], strides = [1, 1, 1]} : vector<22x24x64xf32> to vector<16x16x64xf32>
    %277 = vector.extract_strided_slice %5 {offsets = [19, 0], sizes = [1, 64], strides = [1, 1]} : vector<49x64xf32> to vector<1x64xf32>
    %278 = vector.shape_cast %277 : vector<1x64xf32> to vector<64xf32>
    %279 = vector.shape_cast %278 : vector<64xf32> to vector<1x1x64xf32>
    %280 = vector.broadcast %279 : vector<1x1x64xf32> to vector<16x16x64xf32>
    %281 = arith.mulf %276, %280 : vector<16x16x64xf32>
    %282 = arith.addf %275, %281 : vector<16x16x64xf32>
    %283 = vector.extract_strided_slice %261 {offsets = [3, 0, 0], sizes = [16, 16, 64], strides = [1, 1, 1]} : vector<22x24x64xf32> to vector<16x16x64xf32>
    %284 = vector.extract_strided_slice %5 {offsets = [26, 0], sizes = [1, 64], strides = [1, 1]} : vector<49x64xf32> to vector<1x64xf32>
    %285 = vector.shape_cast %284 : vector<1x64xf32> to vector<64xf32>
    %286 = vector.shape_cast %285 : vector<64xf32> to vector<1x1x64xf32>
    %287 = vector.broadcast %286 : vector<1x1x64xf32> to vector<16x16x64xf32>
    %288 = arith.mulf %283, %287 : vector<16x16x64xf32>
    %289 = arith.addf %282, %288 : vector<16x16x64xf32>
    %290 = vector.extract_strided_slice %261 {offsets = [4, 0, 0], sizes = [16, 16, 64], strides = [1, 1, 1]} : vector<22x24x64xf32> to vector<16x16x64xf32>
    %291 = vector.extract_strided_slice %5 {offsets = [33, 0], sizes = [1, 64], strides = [1, 1]} : vector<49x64xf32> to vector<1x64xf32>
    %292 = vector.shape_cast %291 : vector<1x64xf32> to vector<64xf32>
    %293 = vector.shape_cast %292 : vector<64xf32> to vector<1x1x64xf32>
    %294 = vector.broadcast %293 : vector<1x1x64xf32> to vector<16x16x64xf32>
    %295 = arith.mulf %290, %294 : vector<16x16x64xf32>
    %296 = arith.addf %289, %295 : vector<16x16x64xf32>
    %297 = vector.extract_strided_slice %261 {offsets = [5, 0, 0], sizes = [16, 16, 64], strides = [1, 1, 1]} : vector<22x24x64xf32> to vector<16x16x64xf32>
    %298 = vector.extract_strided_slice %5 {offsets = [40, 0], sizes = [1, 64], strides = [1, 1]} : vector<49x64xf32> to vector<1x64xf32>
    %299 = vector.shape_cast %298 : vector<1x64xf32> to vector<64xf32>
    %300 = vector.shape_cast %299 : vector<64xf32> to vector<1x1x64xf32>
    %301 = vector.broadcast %300 : vector<1x1x64xf32> to vector<16x16x64xf32>
    %302 = arith.mulf %297, %301 : vector<16x16x64xf32>
    %303 = arith.addf %296, %302 : vector<16x16x64xf32>
    %304 = vector.extract_strided_slice %261 {offsets = [6, 0, 0], sizes = [16, 16, 64], strides = [1, 1, 1]} : vector<22x24x64xf32> to vector<16x16x64xf32>
    %305 = vector.extract_strided_slice %5 {offsets = [47, 0], sizes = [1, 64], strides = [1, 1]} : vector<49x64xf32> to vector<1x64xf32>
    %306 = vector.shape_cast %305 : vector<1x64xf32> to vector<64xf32>
    %307 = vector.shape_cast %306 : vector<64xf32> to vector<1x1x64xf32>
    %308 = vector.broadcast %307 : vector<1x1x64xf32> to vector<16x16x64xf32>
    %309 = arith.mulf %304, %308 : vector<16x16x64xf32>
    %310 = arith.addf %303, %309 : vector<16x16x64xf32>
    %c23_i32_13 = arith.constant 23 : i32
    %311 = tpu.dynamic_rotate %261 by %c23_i32_13 dim 1 : vector<22x24x64xf32>, i32 -> vector<22x24x64xf32>
    %312 = vector.extract_strided_slice %311 {offsets = [0, 0, 0], sizes = [16, 16, 64], strides = [1, 1, 1]} : vector<22x24x64xf32> to vector<16x16x64xf32>
    %313 = vector.extract_strided_slice %5 {offsets = [6, 0], sizes = [1, 64], strides = [1, 1]} : vector<49x64xf32> to vector<1x64xf32>
    %314 = vector.shape_cast %313 : vector<1x64xf32> to vector<64xf32>
    %315 = vector.shape_cast %314 : vector<64xf32> to vector<1x1x64xf32>
    %316 = vector.broadcast %315 : vector<1x1x64xf32> to vector<16x16x64xf32>
    %317 = arith.mulf %312, %316 : vector<16x16x64xf32>
    %318 = arith.addf %260, %317 : vector<16x16x64xf32>
    %319 = vector.extract_strided_slice %311 {offsets = [1, 0, 0], sizes = [16, 16, 64], strides = [1, 1, 1]} : vector<22x24x64xf32> to vector<16x16x64xf32>
    %320 = vector.extract_strided_slice %5 {offsets = [13, 0], sizes = [1, 64], strides = [1, 1]} : vector<49x64xf32> to vector<1x64xf32>
    %321 = vector.shape_cast %320 : vector<1x64xf32> to vector<64xf32>
    %322 = vector.shape_cast %321 : vector<64xf32> to vector<1x1x64xf32>
    %323 = vector.broadcast %322 : vector<1x1x64xf32> to vector<16x16x64xf32>
    %324 = arith.mulf %319, %323 : vector<16x16x64xf32>
    %325 = arith.addf %318, %324 : vector<16x16x64xf32>
    %326 = vector.extract_strided_slice %311 {offsets = [2, 0, 0], sizes = [16, 16, 64], strides = [1, 1, 1]} : vector<22x24x64xf32> to vector<16x16x64xf32>
    %327 = vector.extract_strided_slice %5 {offsets = [20, 0], sizes = [1, 64], strides = [1, 1]} : vector<49x64xf32> to vector<1x64xf32>
    %328 = vector.shape_cast %327 : vector<1x64xf32> to vector<64xf32>
    %329 = vector.shape_cast %328 : vector<64xf32> to vector<1x1x64xf32>
    %330 = vector.broadcast %329 : vector<1x1x64xf32> to vector<16x16x64xf32>
    %331 = arith.mulf %326, %330 : vector<16x16x64xf32>
    %332 = arith.addf %325, %331 : vector<16x16x64xf32>
    %333 = vector.extract_strided_slice %311 {offsets = [3, 0, 0], sizes = [16, 16, 64], strides = [1, 1, 1]} : vector<22x24x64xf32> to vector<16x16x64xf32>
    %334 = vector.extract_strided_slice %5 {offsets = [27, 0], sizes = [1, 64], strides = [1, 1]} : vector<49x64xf32> to vector<1x64xf32>
    %335 = vector.shape_cast %334 : vector<1x64xf32> to vector<64xf32>
    %336 = vector.shape_cast %335 : vector<64xf32> to vector<1x1x64xf32>
    %337 = vector.broadcast %336 : vector<1x1x64xf32> to vector<16x16x64xf32>
    %338 = arith.mulf %333, %337 : vector<16x16x64xf32>
    %339 = arith.addf %332, %338 : vector<16x16x64xf32>
    %340 = vector.extract_strided_slice %311 {offsets = [4, 0, 0], sizes = [16, 16, 64], strides = [1, 1, 1]} : vector<22x24x64xf32> to vector<16x16x64xf32>
    %341 = vector.extract_strided_slice %5 {offsets = [34, 0], sizes = [1, 64], strides = [1, 1]} : vector<49x64xf32> to vector<1x64xf32>
    %342 = vector.shape_cast %341 : vector<1x64xf32> to vector<64xf32>
    %343 = vector.shape_cast %342 : vector<64xf32> to vector<1x1x64xf32>
    %344 = vector.broadcast %343 : vector<1x1x64xf32> to vector<16x16x64xf32>
    %345 = arith.mulf %340, %344 : vector<16x16x64xf32>
    %346 = arith.addf %339, %345 : vector<16x16x64xf32>
    %347 = vector.extract_strided_slice %311 {offsets = [5, 0, 0], sizes = [16, 16, 64], strides = [1, 1, 1]} : vector<22x24x64xf32> to vector<16x16x64xf32>
    %348 = vector.extract_strided_slice %5 {offsets = [41, 0], sizes = [1, 64], strides = [1, 1]} : vector<49x64xf32> to vector<1x64xf32>
    %349 = vector.shape_cast %348 : vector<1x64xf32> to vector<64xf32>
    %350 = vector.shape_cast %349 : vector<64xf32> to vector<1x1x64xf32>
    %351 = vector.broadcast %350 : vector<1x1x64xf32> to vector<16x16x64xf32>
    %352 = arith.mulf %347, %351 : vector<16x16x64xf32>
    %353 = arith.addf %346, %352 : vector<16x16x64xf32>
    %354 = vector.extract_strided_slice %311 {offsets = [6, 0, 0], sizes = [16, 16, 64], strides = [1, 1, 1]} : vector<22x24x64xf32> to vector<16x16x64xf32>
    %355 = vector.extract_strided_slice %5 {offsets = [48, 0], sizes = [1, 64], strides = [1, 1]} : vector<49x64xf32> to vector<1x64xf32>
    %356 = vector.shape_cast %355 : vector<1x64xf32> to vector<64xf32>
    %357 = vector.shape_cast %356 : vector<64xf32> to vector<1x1x64xf32>
    %358 = vector.broadcast %357 : vector<1x1x64xf32> to vector<16x16x64xf32>
    %359 = arith.mulf %354, %358 : vector<16x16x64xf32>
    %360 = arith.addf %353, %359 : vector<16x16x64xf32>
    %361 = arith.addf %360, %310 : vector<16x16x64xf32>
    %cst_14 = arith.constant dense<0.000000e+00> : vector<16x16xf32>
    %362 = vector.multi_reduction <add>, %361, %cst_14 [2] : vector<16x16x64xf32> to vector<16x16xf32>
    %363 = vector.shape_cast %362 : vector<16x16xf32> to vector<16x16x1xf32>
    %cst_15 = arith.constant 6.400000e+01 : f32
    %364 = vector.broadcast %cst_15 : f32 to vector<16x16x1xf32>
    %365 = arith.divf %363, %364 : vector<16x16x1xf32>
    %366 = vector.broadcast %365 : vector<16x16x1xf32> to vector<16x16x64xf32>
    %367 = arith.subf %361, %366 : vector<16x16x64xf32>
    %368 = arith.mulf %367, %367 : vector<16x16x64xf32>
    %cst_16 = arith.constant dense<0.000000e+00> : vector<16x16xf32>
    %369 = vector.multi_reduction <add>, %368, %cst_16 [2] : vector<16x16x64xf32> to vector<16x16xf32>
    %370 = vector.shape_cast %369 : vector<16x16xf32> to vector<16x16x1xf32>
    %cst_17 = arith.constant 6.400000e+01 : f32
    %371 = vector.broadcast %cst_17 : f32 to vector<16x16x1xf32>
    %372 = arith.divf %370, %371 : vector<16x16x1xf32>
    %cst_18 = arith.constant 9.99999997E-7 : f32
    %373 = vector.broadcast %cst_18 : f32 to vector<16x16x1xf32>
    %374 = arith.addf %372, %373 : vector<16x16x1xf32>
    %375 = math.rsqrt %374 : vector<16x16x1xf32>
    %376 = vector.broadcast %375 : vector<16x16x1xf32> to vector<16x16x64xf32>
    %377 = arith.mulf %367, %376 : vector<16x16x64xf32>
    %378 = vector.shape_cast %377 : vector<16x16x64xf32> to vector<256x64xf32>
    %379 = arith.truncf %378 : vector<256x64xf32> to vector<256x64xbf16>
    %c0_19 = arith.constant 0 : index
    %c0_20 = arith.constant 0 : index
    %380 = vector.load %arg5[%c0_19, %c0_20] : memref<64x256xbf16, #tpu.memory_space<vmem>>, vector<64x256xbf16>
    %cst_21 = arith.constant dense<0.000000e+00> : vector<256x256xf32>
    %381 = tpu.matmul %379, %380, %cst_21 {dimension_numbers = #tpu.dot_dimension_numbers<[1], [0], [0], [1], [0, 0, 1, 1], [], []>} : vector<256x64xbf16>, vector<64x256xbf16>, vector<256x256xf32> -> vector<256x256xf32>
    %c0_22 = arith.constant 0 : index
    %c0_23 = arith.constant 0 : index
    %382 = vector.load %arg6[%c0_22, %c0_23] : memref<1x256xf32, #tpu.memory_space<vmem>>, vector<1x256xf32>
    %383 = vector.broadcast %382 : vector<1x256xf32> to vector<256x256xf32>
    %384 = arith.addf %381, %383 : vector<256x256xf32>
    %385 = arith.mulf %384, %384 : vector<256x256xf32>
    %386 = arith.mulf %384, %385 : vector<256x256xf32>
    %cst_24 = arith.constant 4.471500e-02 : f32
    %387 = vector.broadcast %cst_24 : f32 to vector<256x256xf32>
    %388 = arith.mulf %387, %386 : vector<256x256xf32>
    %389 = arith.addf %384, %388 : vector<256x256xf32>
    %cst_25 = arith.constant 0.797884583 : f32
    %390 = vector.broadcast %cst_25 : f32 to vector<256x256xf32>
    %391 = arith.mulf %390, %389 : vector<256x256xf32>
    %392 = math.tanh %391 : vector<256x256xf32>
    %cst_26 = arith.constant 1.000000e+00 : f32
    %393 = vector.broadcast %cst_26 : f32 to vector<256x256xf32>
    %394 = arith.addf %393, %392 : vector<256x256xf32>
    %cst_27 = arith.constant 5.000000e-01 : f32
    %395 = vector.broadcast %cst_27 : f32 to vector<256x256xf32>
    %396 = arith.mulf %395, %394 : vector<256x256xf32>
    %397 = arith.mulf %384, %396 : vector<256x256xf32>
    %398 = arith.truncf %397 : vector<256x256xf32> to vector<256x256xbf16>
    %c0_28 = arith.constant 0 : index
    %c0_29 = arith.constant 0 : index
    %399 = vector.load %arg7[%c0_28, %c0_29] : memref<256x64xbf16, #tpu.memory_space<vmem>>, vector<256x64xbf16>
    %cst_30 = arith.constant dense<0.000000e+00> : vector<256x64xf32>
    %400 = tpu.matmul %398, %399, %cst_30 {dimension_numbers = #tpu.dot_dimension_numbers<[1], [0], [0], [1], [0, 0, 1, 1], [], []>} : vector<256x256xbf16>, vector<256x64xbf16>, vector<256x64xf32> -> vector<256x64xf32>
    %c0_31 = arith.constant 0 : index
    %c0_32 = arith.constant 0 : index
    %401 = vector.load %arg8[%c0_31, %c0_32] : memref<1x64xf32, #tpu.memory_space<vmem>>, vector<1x64xf32>
    %402 = vector.broadcast %401 : vector<1x64xf32> to vector<256x64xf32>
    %403 = arith.addf %400, %402 : vector<256x64xf32>
    %c0_33 = arith.constant 0 : index
    %c0_34 = arith.constant 0 : index
    %c0_35 = arith.constant 0 : index
    %404 = vector.load %arg10[%c0_33, %c0_34, %c0_35] : memref<16x16x64xf32, #tpu.memory_space<vmem>>, vector<16x16x64xf32>
    %405 = vector.shape_cast %403 : vector<256x64xf32> to vector<16x16x64xf32>
    %406 = arith.addf %404, %405 : vector<16x16x64xf32>
    %c0_36 = arith.constant 0 : index
    %c0_37 = arith.constant 0 : index
    %c0_38 = arith.constant 0 : index
    %c0_39 = arith.constant 0 : index
    %407 = vector.load %arg9[%c0_36, %c0_37, %c0_38, %c0_39] : memref<1x16x16x64xf32, #tpu.memory_space<vmem>>, vector<1x16x16x64xf32>
    %408 = vector.shape_cast %407 : vector<1x16x16x64xf32> to vector<16x16x64xf32>
    %409 = vector.shape_cast %406 : vector<16x16x64xf32> to vector<1x16x16x64xf32>
    tpu.vector_store %arg9[%c0_36, %c0_37, %c0_38, %c0_39], %409 {strides = array<i32>} : memref<1x16x16x64xf32, #tpu.memory_space<vmem>>, vector<1x16x16x64xf32>,
    return
  }
  func.func @transform_0(%arg0: i32, %arg1: i32) -> (i32, i32, i32, i32) {
    %c0_i32 = arith.constant 0 : i32
    %c0_i32_0 = arith.constant 0 : i32
    %c0_i32_1 = arith.constant 0 : i32
    %c0_i32_2 = arith.constant 0 : i32
    return %arg0, %c0_i32, %c0_i32_0, %c0_i32_1 : i32, i32, i32, i32
  }
  func.func @transform_1(%arg0: i32, %arg1: i32) -> (i32, i32) {
    %c0_i32 = arith.constant 0 : i32
    %c0_i32_0 = arith.constant 0 : i32
    %c0_i32_1 = arith.constant 0 : i32
    return %c0_i32, %c0_i32_0 : i32, i32
  }
  func.func @transform_2(%arg0: i32, %arg1: i32) -> (i32, i32) {
    %c0_i32 = arith.constant 0 : i32
    %c0_i32_0 = arith.constant 0 : i32
    %c0_i32_1 = arith.constant 0 : i32
    return %c0_i32, %c0_i32_0 : i32, i32
  }
  func.func @transform_3(%arg0: i32, %arg1: i32) -> (i32, i32) {
    %c0_i32 = arith.constant 0 : i32
    %c0_i32_0 = arith.constant 0 : i32
    %c0_i32_1 = arith.constant 0 : i32
    return %c0_i32, %c0_i32_0 : i32, i32
  }
  func.func @transform_4(%arg0: i32, %arg1: i32) -> (i32, i32) {
    %c0_i32 = arith.constant 0 : i32
    %c0_i32_0 = arith.constant 0 : i32
    %c0_i32_1 = arith.constant 0 : i32
    return %c0_i32, %c0_i32_0 : i32, i32
  }
  func.func @transform_5(%arg0: i32, %arg1: i32) -> (i32, i32) {
    %c0_i32 = arith.constant 0 : i32
    %c0_i32_0 = arith.constant 0 : i32
    %c0_i32_1 = arith.constant 0 : i32
    return %c0_i32, %c0_i32_0 : i32, i32
  }
  func.func @transform_6(%arg0: i32, %arg1: i32) -> (i32, i32) {
    %c0_i32 = arith.constant 0 : i32
    %c0_i32_0 = arith.constant 0 : i32
    %c0_i32_1 = arith.constant 0 : i32
    return %c0_i32, %c0_i32_0 : i32, i32
  }
  func.func @transform_7(%arg0: i32, %arg1: i32) -> (i32, i32, i32, i32) {
    %c0_i32 = arith.constant 0 : i32
    %c0_i32_0 = arith.constant 0 : i32
    %c0_i32_1 = arith.constant 0 : i32
    return %arg0, %arg1, %c0_i32, %c0_i32_0 : i32, i32, i32, i32
  }
}

</mosaic_0001>

<llo_original>
// kernel: mul.17
$region0: #{mul.17}
  #allocation0 [shape = 's32[1]{0}', space=sflag, size = 0x4, scoped, tag = 'scoped memory for mul.17']
  %s0 = inlined_call_operand.vmem [shape: f32[1,64], index: 0, kind: input, shape index: {}]
  %s1 = inlined_call_operand.vmem [shape: f32[1,64], index: 1, kind: input, shape index: {}]
  %s2 = inlined_call_operand.vmem [shape: f32[1,64], index: 2, kind: output, shape index: {}]
  %v3 = vld [vmem:[%s0] sm:$0x1]
  %v4 = vld [vmem:[%s1] sm:$0x1]
  %5 = xla_tuple %v3, %v4
  %6 = xla_tuple %5
  %v7 = vmul.f32 %v3, %v4
  %8 = xla_tuple %v7
  %9 = vst [vmem:[%s2] sm:$0x1] %v7

// kernel: convnext_block.1
$region0: #{convnext_block.1}
  #allocation0 [shape = 'u32[]', space=smem, size = 0x4, offset = 0x4, fixed_abs, tag = 'smem constant byte address 0x4 - core index']
  #allocation1 [shape = 'u32[144,128]{1,0:T(1,128)}', space=vmem, size = 0x12000, scoped, tag = 'internal scratch']
  #allocation2 [shape = 'f32[16,16,64]{2,1,0:T(8,128)}', space=vmem, size = 0x20000, scoped, tag = 'scratch operand']
  %s0 = inlined_call_operand.vmem [shape: f32[2,22,24,64], index: 0, kind: input, shape index: {}]
  %s1 = inlined_call_operand.vmem [shape: f32[49,64], index: 1, kind: input, shape index: {}]
  %s2 = inlined_call_operand.vmem [shape: f32[1,64], index: 2, kind: input, shape index: {}]
  %s3 = inlined_call_operand.vmem [shape: bf16[64,256], index: 3, kind: input, shape index: {}]
  %s4 = inlined_call_operand.vmem [shape: f32[1,256], index: 4, kind: input, shape index: {}]
  %s5 = inlined_call_operand.vmem [shape: bf16[256,64], index: 5, kind: input, shape index: {}]
  %s6 = inlined_call_operand.vmem [shape: f32[1,64], index: 6, kind: input, shape index: {}]
  %s7 = inlined_call_operand.hbm [shape: f32[2,16,16,64], index: 7, kind: output, shape index: {}]
  %s8 = sld [smem:[#allocation0]]
  $region61: #{convnext_block.1} parent=0
    _
  %s10 = ssub.s32 1, %s8
  %s11 = scalar_select 0, %s10, %s8
  $region1: #{convnext_block.1} parent=0
    #allocation3 [shape = 'u8[262144]{0}', space=vmem, size = 0x40000, scoped, tag = 'output window, operand 0']
    #allocation4 [shape = 's32[2]{0}', space=sflag, size = 0x8, scoped, tag = 'scoped memory for convnext_block.1']
    %12 = vsyncpa [#allocation4], 0
    %s13 = scalar_lea.sflag [#allocation4], 1
    %14 = vsyncpa %s13, 0
    loop: start=0, step=1, limit=4
    $region2: #{convnext_block.1} parent=1 // loop_pre_header
      _
    $region3: #{convnext_block.1} parent=1 // loop_header
      %s16 = sphi 0, %s20
      %p17 = scmp.ge.s32.totalorder %s16, 4
      %s23 = sphi 0, %s35
      %s24 = sphi 0, %s31
      %s25 = sphi 0, %s23
      %s26 = sphi 0, %s24
      %s27 = sphi 0, %s25
      %s28 = sphi 0, %s26
      %s38 = sphi 0, %s40
      %s41 = sphi 0, %s38
      %s42 = sphi 0, %s41
      %s58 = sphi 0, %s42
      %s62 = sphi 0, %s62
      %s64 = sphi 0, %s62
      %s65 = sphi 0, %s64
      %s79 = sphi 0, %s65
      %s83 = sphi 0, %s83
      %s85 = sphi 0, %s83
      %s86 = sphi 0, %s85
      %s100 = sphi 0, %s86
      %s104 = sphi 0, %s104
      %s106 = sphi 0, %s104
      %s107 = sphi 0, %s106
      %s121 = sphi 0, %s107
      %s125 = sphi 0, %s125
      %s127 = sphi 0, %s125
      %s128 = sphi 0, %s127
      %s142 = sphi 0, %s128
      %s146 = sphi 0, %s146
      %s148 = sphi 0, %s146
      %s149 = sphi 0, %s148
      %s163 = sphi 0, %s149
      %s167 = sphi 0, %s167
      %s169 = sphi 0, %s167
      %s170 = sphi 0, %s169
      %s184 = sphi 0, %s170
      %s192 = sphi 0, %s194
      %s195 = sphi 0, %s192
      %s196 = sphi 0, %s195
      %s212 = sphi 0, %s196
    $region4: #{convnext_block.1} parent=1 // loop_header_branch
      %19 = sbr.rel (%p17) target = $region8
    $region5: #{convnext_block.1} parent=1 // loop_body
      %s21 = ssub.s32 %s16, 1
      %s22 = ssub.s32 %s16, 2
      %s29 = sadd.s32 1, %s24
      %p30 = scmp.ge.s32.totalorder %s29, 1
      %s31 = scalar_select %p30, 0, %s29
      %s32 = sadd.s32 1, %s23
      %s33 = scalar_select %p30, %s32, %s23
      %p34 = scmp.ge.s32.totalorder %s33, 2
      %s35 = scalar_select %p34, 0, %s33
      %s36 = ssub.s32 %s23, %s35
      %p37 = scmp.eq.s32.totalorder %s36, 0
      %s39 = sadd.s32 %s38, 1
      %s40 = scalar_select %p37, %s38, %s39
      %p43 = pneg %p37
      %p44 = scmp.eq.s32.totalorder %s16, 1
      %p45 = por %p43, %p44
      %p46 = scmp.ne.s32.totalorder %s38, %s41
      %p47 = scmp.eq.s32.totalorder %s16, 0
      %p48 = por %p46, %p47
      %p49 = scmp.ne.s32.totalorder %s38, %s41
      %p50 = scmp.eq.s32.totalorder %s21, 1
      %p51 = por %p49, %p50
      %p52 = scmp.ne.s32.totalorder %s41, %s42
      %p53 = scmp.eq.s32.totalorder %s21, 0
      %p54 = por %p52, %p53
      %p55 = scmp.ne.s32.totalorder %s41, %s42
      %p56 = scmp.eq.s32.totalorder %s22, 1
      %p57 = por %p55, %p56
      %p59 = scmp.ne.s32.totalorder %s42, %s58
      %p60 = scmp.eq.s32.totalorder %s22, 0
      %p61 = por %p59, %p60
      %s63 = sadd.s32 %s62, 1
      %p66 = scmp.eq.s32.totalorder %s16, 1
      %p67 = scmp.ne.s32.totalorder %s62, %s64
      %p68 = scmp.eq.s32.totalorder %s16, 0
      %p69 = por %p67, %p68
      %p70 = scmp.ne.s32.totalorder %s62, %s64
      %p71 = scmp.eq.s32.totalorder %s21, 1
      %p72 = por %p70, %p71
      %p73 = scmp.ne.s32.totalorder %s64, %s65
      %p74 = scmp.eq.s32.totalorder %s21, 0
      %p75 = por %p73, %p74
      %p76 = scmp.ne.s32.totalorder %s64, %s65
      %p77 = scmp.eq.s32.totalorder %s22, 1
      %p78 = por %p76, %p77
      %p80 = scmp.ne.s32.totalorder %s65, %s79
      %p81 = scmp.eq.s32.totalorder %s22, 0
      %p82 = por %p80, %p81
      %s84 = sadd.s32 %s83, 1
      %p87 = scmp.eq.s32.totalorder %s16, 1
      %p88 = scmp.ne.s32.totalorder %s83, %s85
      %p89 = scmp.eq.s32.totalorder %s16, 0
      %p90 = por %p88, %p89
      %p91 = scmp.ne.s32.totalorder %s83, %s85
      %p92 = scmp.eq.s32.totalorder %s21, 1
      %p93 = por %p91, %p92
      %p94 = scmp.ne.s32.totalorder %s85, %s86
      %p95 = scmp.eq.s32.totalorder %s21, 0
      %p96 = por %p94, %p95
      %p97 = scmp.ne.s32.totalorder %s85, %s86
      %p98 = scmp.eq.s32.totalorder %s22, 1
      %p99 = por %p97, %p98
      %p101 = scmp.ne.s32.totalorder %s86, %s100
      %p102 = scmp.eq.s32.totalorder %s22, 0
      %p103 = por %p101, %p102
      %s105 = sadd.s32 %s104, 1
      %p108 = scmp.eq.s32.totalorder %s16, 1
      %p109 = scmp.ne.s32.totalorder %s104, %s106
      %p110 = scmp.eq.s32.totalorder %s16, 0
      %p111 = por %p109, %p110
      %p112 = scmp.ne.s32.totalorder %s104, %s106
      %p113 = scmp.eq.s32.totalorder %s21, 1
      %p114 = por %p112, %p113
      %p115 = scmp.ne.s32.totalorder %s106, %s107
      %p116 = scmp.eq.s32.totalorder %s21, 0
      %p117 = por %p115, %p116
      %p118 = scmp.ne.s32.totalorder %s106, %s107
      %p119 = scmp.eq.s32.totalorder %s22, 1
      %p120 = por %p118, %p119
      %p122 = scmp.ne.s32.totalorder %s107, %s121
      %p123 = scmp.eq.s32.totalorder %s22, 0
      %p124 = por %p122, %p123
      %s126 = sadd.s32 %s125, 1
      %p129 = scmp.eq.s32.totalorder %s16, 1
      %p130 = scmp.ne.s32.totalorder %s125, %s127
      %p131 = scmp.eq.s32.totalorder %s16, 0
      %p132 = por %p130, %p131
      %p133 = scmp.ne.s32.totalorder %s125, %s127
      %p134 = scmp.eq.s32.totalorder %s21, 1
      %p135 = por %p133, %p134
      %p136 = scmp.ne.s32.totalorder %s127, %s128
      %p137 = scmp.eq.s32.totalorder %s21, 0
      %p138 = por %p136, %p137
      %p139 = scmp.ne.s32.totalorder %s127, %s128
      %p140 = scmp.eq.s32.totalorder %s22, 1
      %p141 = por %p139, %p140
      %p143 = scmp.ne.s32.totalorder %s128, %s142
      %p144 = scmp.eq.s32.totalorder %s22, 0
      %p145 = por %p143, %p144
      %s147 = sadd.s32 %s146, 1
      %p150 = scmp.eq.s32.totalorder %s16, 1
      %p151 = scmp.ne.s32.totalorder %s146, %s148
      %p152 = scmp.eq.s32.totalorder %s16, 0
      %p153 = por %p151, %p152
      %p154 = scmp.ne.s32.totalorder %s146, %s148
      %p155 = scmp.eq.s32.totalorder %s21, 1
      %p156 = por %p154, %p155
      %p157 = scmp.ne.s32.totalorder %s148, %s149
      %p158 = scmp.eq.s32.totalorder %s21, 0
      %p159 = por %p157, %p158
      %p160 = scmp.ne.s32.totalorder %s148, %s149
      %p161 = scmp.eq.s32.totalorder %s22, 1
      %p162 = por %p160, %p161
      %p164 = scmp.ne.s32.totalorder %s149, %s163
      %p165 = scmp.eq.s32.totalorder %s22, 0
      %p166 = por %p164, %p165
      %s168 = sadd.s32 %s167, 1
      %p171 = scmp.eq.s32.totalorder %s16, 1
      %p172 = scmp.ne.s32.totalorder %s167, %s169
      %p173 = scmp.eq.s32.totalorder %s16, 0
      %p174 = por %p172, %p173
      %p175 = scmp.ne.s32.totalorder %s167, %s169
      %p176 = scmp.eq.s32.totalorder %s21, 1
      %p177 = por %p175, %p176
      %p178 = scmp.ne.s32.totalorder %s169, %s170
      %p179 = scmp.eq.s32.totalorder %s21, 0
      %p180 = por %p178, %p179
      %p181 = scmp.ne.s32.totalorder %s169, %s170
      %p182 = scmp.eq.s32.totalorder %s22, 1
      %p183 = por %p181, %p182
      %p185 = scmp.ne.s32.totalorder %s170, %s184
      %p186 = scmp.eq.s32.totalorder %s22, 0
      %p187 = por %p185, %p186
      %s188 = ssub.s32 %s23, %s35
      %s189 = ssub.s32 %s24, %s31
      %s190 = sor.u32 %s188, %s189
      %p191 = scmp.eq.s32.totalorder %s190, 0
      %s193 = sadd.s32 %s192, 1
      %s194 = scalar_select %p191, %s192, %s193
      %p197 = pneg %p191
      %p198 = scmp.eq.s32.totalorder %s16, 1
      %p199 = por %p197, %p198
      %p200 = scmp.ne.s32.totalorder %s192, %s195
      %p201 = scmp.eq.s32.totalorder %s16, 0
      %p202 = por %p200, %p201
      %p203 = scmp.ne.s32.totalorder %s192, %s195
      %p204 = scmp.eq.s32.totalorder %s21, 1
      %p205 = por %p203, %p204
      %p206 = scmp.ne.s32.totalorder %s195, %s196
      %p207 = scmp.eq.s32.totalorder %s21, 0
      %p208 = por %p206, %p207
      %p209 = scmp.ne.s32.totalorder %s195, %s196
      %p210 = scmp.eq.s32.totalorder %s22, 1
      %p211 = por %p209, %p210
      %p213 = scmp.ne.s32.totalorder %s196, %s212
      %p214 = scmp.eq.s32.totalorder %s22, 0
      %p215 = por %p213, %p214
      %p216 = scmp.le.s32.totalorder 1, %s16
      %p217 = scmp.lt.s32.totalorder %s16, 3
      %p218 = pnand %p216, %p217
      %p219 = pneg %p218
      // Predicated region
      $region9: #{convnext_block.1} parent=5 // pred_check
        _
      $region10: #{convnext_block.1} parent=5 // pred_check_branch
        %221 = sbr.rel (%p218) target = $region12
      $region11: #{convnext_block.1} parent=5 // pred_region
        %s222 = ssub.s32 %s16, 1
        // Predicated region
        $region13: #{convnext_block.1} parent=11 // pred_check
          %p223 = pneg %p75
        $region14: #{convnext_block.1} parent=11 // pred_check_branch
          %225 = sbr.rel (%p223) target = $region16
        $region15: #{convnext_block.1} parent=11 // pred_region
          _
        $region16: #{convnext_block.1} parent=11 // pred_fallthru
          _
        // Predicated region
        $region17: #{convnext_block.1} parent=11 // pred_check
          %p226 = pneg %p96
        $region18: #{convnext_block.1} parent=11 // pred_check_branch
          %228 = sbr.rel (%p226) target = $region20
        $region19: #{convnext_block.1} parent=11 // pred_region
          _
        $region20: #{convnext_block.1} parent=11 // pred_fallthru
          _
        // Predicated region
        $region21: #{convnext_block.1} parent=11 // pred_check
          %p229 = pneg %p117
        $region22: #{convnext_block.1} parent=11 // pred_check_branch
          %231 = sbr.rel (%p229) target = $region24
        $region23: #{convnext_block.1} parent=11 // pred_region
          _
        $region24: #{convnext_block.1} parent=11 // pred_fallthru
          _
        // Predicated region
        $region25: #{convnext_block.1} parent=11 // pred_check
          %p232 = pneg %p138
        $region26: #{convnext_block.1} parent=11 // pred_check_branch
          %234 = sbr.rel (%p232) target = $region28
        $region27: #{convnext_block.1} parent=11 // pred_region
          _
        $region28: #{convnext_block.1} parent=11 // pred_fallthru
          _
        // Predicated region
        $region29: #{convnext_block.1} parent=11 // pred_check
          %p235 = pneg %p159
        $region30: #{convnext_block.1} parent=11 // pred_check_branch
          %237 = sbr.rel (%p235) target = $region32
        $region31: #{convnext_block.1} parent=11 // pred_region
          _
        $region32: #{convnext_block.1} parent=11 // pred_fallthru
          _
        // Predicated region
        $region33: #{convnext_block.1} parent=11 // pred_check
          %p238 = pneg %p180
        $region34: #{convnext_block.1} parent=11 // pred_check_branch
          %240 = sbr.rel (%p238) target = $region36
        $region35: #{convnext_block.1} parent=11 // pred_region
          _
        $region36: #{convnext_block.1} parent=11 // pred_fallthru
          _
      $region12: #{convnext_block.1} parent=5 // pred_fallthru
        _
      %p241 = scmp.lt.s32.totalorder %s16, 2
      // Predicated region
      $region37: #{convnext_block.1} parent=5 // pred_check
        %p242 = pneg %p241
      $region38: #{convnext_block.1} parent=5 // pred_check_branch
        %244 = sbr.rel (%p242) target = $region40
      $region39: #{convnext_block.1} parent=5 // pred_region
        // Predicated region
        $region41: #{convnext_block.1} parent=39 // pred_check
          %p245 = pneg %p48
        $region42: #{convnext_block.1} parent=39 // pred_check_branch
          %247 = sbr.rel (%p245) target = $region44
        $region43: #{convnext_block.1} parent=39 // pred_region
          %p248 = scmp.lt.s32.totalorder %s23, 1
          %s249 = scalar_select %p248, %s23, 1
          %s250 = smul.addr %s249, 66
          %s251 = smul.addr %s250, 8
          %s252 = scalar_lea.vmem %s0, %s251
        $region44: #{convnext_block.1} parent=39 // pred_fallthru
          _
      $region40: #{convnext_block.1} parent=5 // pred_fallthru
        _
      %p253 = scmp.le.s32.totalorder 1, %s16
      %p254 = scmp.lt.s32.totalorder %s16, 3
      %p255 = pnand %p253, %p254
      %p256 = pneg %p255
      // Predicated region
      $region45: #{convnext_block.1} parent=5 // pred_check
        _
      $region46: #{convnext_block.1} parent=5 // pred_check_branch
        %258 = sbr.rel (%p255) target = $region48
      $region47: #{convnext_block.1} parent=5 // pred_region
        %s259 = ssub.s32 %s16, 1
        %p260 = scmp.lt.s32.totalorder %s25, 1
        %s261 = scalar_select %p260, %s25, 1
        %s262 = smul.addr %s261, 66
        %s263 = smul.addr %s262, 8
        %s264 = scalar_lea.vmem %s0, %s263
        %p265 = pneg %p54
        %p266 = pneg %p51
        %p267 = pneg %p75
        %p268 = pneg %p72
        %p269 = pneg %p96
        %p270 = pneg %p93
        %p271 = pneg %p117
        %p272 = pneg %p114
        %p273 = pneg %p138
        %p274 = pneg %p135
        %p275 = pneg %p159
        %p276 = pneg %p156
        %p277 = pneg %p180
        %p278 = pneg %p177
        %p279 = pneg %p208
        %p280 = pneg %p205
        %s281 = sand.u32 %s195, 1
        %s282 = scalar_lea.sflag [#allocation4], %s281
        %s283 = sand.u32 %s195, 1
        %s284 = smul.addr %s283, 256
        %s285 = scalar_lea.vmem [#allocation3], %s284
        %p286 = scmp.lt.s32.totalorder %s25, 1
        %s287 = scalar_select %p286, %s25, 1
        %s288 = smul.addr %s287, 66
        %s289 = smul.addr %s288, 8
        %s290 = scalar_lea.vmem %s0, %s289
        %s291 = smul.u32 16, %s26
        %s293 = smul.u32 %s26, 16
        %s294 = smul.u32 %s293, 24
        %s295 = scalar_lea.vmem %s290, %s294
        %v296 = vld [vmem:[%s295] sm:$0xff]
        %v297 = vld [vmem:[%s295 + $0x8] sm:$0xff]
        %v298 = vld [vmem:[%s295 + $0x10] sm:$0xff]
        %v299 = vld [vmem:[%s295 + $0x18] sm:$0xff]
        %v300 = vld [vmem:[%s295 + $0x20] sm:$0xff]
        %v301 = vld [vmem:[%s295 + $0x28] sm:$0xff]
        %v302 = vld [vmem:[%s295 + $0x30] sm:$0xff]
        %v303 = vld [vmem:[%s295 + $0x38] sm:$0xff]
        %v304 = vld [vmem:[%s295 + $0x40] sm:$0xff]
        %v305 = vld [vmem:[%s295 + $0x48] sm:$0xff]
        %v306 = vld [vmem:[%s295 + $0x50] sm:$0xff]
        %v307 = vld [vmem:[%s295 + $0x58] sm:$0xff]
        %v308 = vld [vmem:[%s295 + $0x60] sm:$0xff]
        %v309 = vld [vmem:[%s295 + $0x68] sm:$0xff]
        %v310 = vld [vmem:[%s295 + $0x70] sm:$0xff]
        %v311 = vld [vmem:[%s295 + $0x78] sm:$0xff]
        %v312 = vld [vmem:[%s295 + $0x80] sm:$0xff]
        %v313 = vld [vmem:[%s295 + $0x88] sm:$0xff]
        %v314 = vld [vmem:[%s295 + $0x90] sm:$0xff]
        %v315 = vld [vmem:[%s295 + $0x98] sm:$0xff]
        %v316 = vld [vmem:[%s295 + $0xa0] sm:$0xff]
        %v317 = vld [vmem:[%s295 + $0xa8] sm:$0xff]
        %v318 = vld [vmem:[%s295 + $0xb0] sm:$0xff]
        %v319 = vld [vmem:[%s295 + $0xb8] sm:$0xff]
        %v320 = vld [vmem:[%s295 + $0xc0] sm:$0xff]
        %v321 = vld [vmem:[%s295 + $0xc8] sm:$0xff]
        %v322 = vld [vmem:[%s295 + $0xd0] sm:$0xff]
        %v323 = vld [vmem:[%s295 + $0xd8] sm:$0xff]
        %v324 = vld [vmem:[%s295 + $0xe0] sm:$0xff]
        %v325 = vld [vmem:[%s295 + $0xe8] sm:$0xff]
        %v326 = vld [vmem:[%s295 + $0xf0] sm:$0xff]
        %v327 = vld [vmem:[%s295 + $0xf8] sm:$0xff]
        %v328 = vld [vmem:[%s295 + $0x100] sm:$0xff]
        %v329 = vld [vmem:[%s295 + $0x108] sm:$0xff]
        %v330 = vld [vmem:[%s295 + $0x110] sm:$0xff]
        %v331 = vld [vmem:[%s295 + $0x118] sm:$0xff]
        %v332 = vld [vmem:[%s295 + $0x120] sm:$0xff]
        %v333 = vld [vmem:[%s295 + $0x128] sm:$0xff]
        %v334 = vld [vmem:[%s295 + $0x130] sm:$0xff]
        %v335 = vld [vmem:[%s295 + $0x138] sm:$0xff]
        %v336 = vld [vmem:[%s295 + $0x140] sm:$0xff]
        %v337 = vld [vmem:[%s295 + $0x148] sm:$0xff]
        %v338 = vld [vmem:[%s295 + $0x150] sm:$0xff]
        %v339 = vld [vmem:[%s295 + $0x158] sm:$0xff]
        %v340 = vld [vmem:[%s295 + $0x160] sm:$0xff]
        %v341 = vld [vmem:[%s295 + $0x168] sm:$0xff]
        %v342 = vld [vmem:[%s295 + $0x170] sm:$0xff]
        %v343 = vld [vmem:[%s295 + $0x178] sm:$0xff]
        %v344 = vld [vmem:[%s295 + $0x180] sm:$0xff]
        %v345 = vld [vmem:[%s295 + $0x188] sm:$0xff]
        %v346 = vld [vmem:[%s295 + $0x190] sm:$0xff]
        %v347 = vld [vmem:[%s295 + $0x198] sm:$0xff]
        %v348 = vld [vmem:[%s295 + $0x1a0] sm:$0xff]
        %v349 = vld [vmem:[%s295 + $0x1a8] sm:$0xff]
        %v350 = vld [vmem:[%s295 + $0x1b0] sm:$0xff]
        %v351 = vld [vmem:[%s295 + $0x1b8] sm:$0xff]
        %v352 = vld [vmem:[%s295 + $0x1c0] sm:$0xff]
        %v353 = vld [vmem:[%s295 + $0x1c8] sm:$0xff]
        %v354 = vld [vmem:[%s295 + $0x1d0] sm:$0xff]
        %v355 = vld [vmem:[%s295 + $0x1d8] sm:$0xff]
        %v356 = vld [vmem:[%s295 + $0x1e0] sm:$0xff]
        %v357 = vld [vmem:[%s295 + $0x1e8] sm:$0xff]
        %v358 = vld [vmem:[%s295 + $0x1f0] sm:$0xff]
        %v359 = vld [vmem:[%s295 + $0x1f8] sm:$0xff]
        %v360 = vld [vmem:[%s295 + $0x200] sm:$0xff]
        %v361 = vld [vmem:[%s295 + $0x208] sm:$0xff]
        %v362 = vld [vmem:[%s1] sm:$0xff]
        %v363 = vld [vmem:[%s1 + $0x8] sm:$0xff]
        %v364 = vld [vmem:[%s1 + $0x10] sm:$0xff]
        %v365 = vld [vmem:[%s1 + $0x18] sm:$0xff]
        %v366 = vld [vmem:[%s1 + $0x20] sm:$0xff]
        %v367 = vld [vmem:[%s1 + $0x28] sm:$0xff]
        %v368 = vld [vmem:[%s1 + $0x30] sm:$0x1]
        %v369 = vld [vmem:[%s2] sm:$0x1]
        %v371 = vlaneseq
        %v372 = vshrl.u32 %v371, 7
        %v373 = vsub.s32 0, %v372
        %v374 = vrot.slane %v369, %v373
        %v376 = vlaneseq
        %v377 = vshrl.u32 %v376, 7
        %v378 = vsub.s32 0, %v377
        %v379 = vrot.slane %v362, %v378
        %v380 = vmul.f32 %v296, %v379
        %v381 = vmul.f32 %v297, %v379
        %v382 = vmul.f32 %v299, %v379
        %v383 = vmul.f32 %v300, %v379
        %v384 = vmul.f32 %v302, %v379
        %v385 = vmul.f32 %v303, %v379
        %v386 = vmul.f32 %v305, %v379
        %v387 = vmul.f32 %v306, %v379
        %v388 = vmul.f32 %v308, %v379
        %v389 = vmul.f32 %v309, %v379
        %v390 = vmul.f32 %v311, %v379
        %v391 = vmul.f32 %v312, %v379
        %v392 = vmul.f32 %v314, %v379
        %v393 = vmul.f32 %v315, %v379
        %v394 = vmul.f32 %v317, %v379
        %v395 = vmul.f32 %v318, %v379
        %v396 = vmul.f32 %v320, %v379
        %v397 = vmul.f32 %v321, %v379
        %v398 = vmul.f32 %v323, %v379
        %v399 = vmul.f32 %v324, %v379
        %v400 = vmul.f32 %v326, %v379
        %v401 = vmul.f32 %v327, %v379
        %v402 = vmul.f32 %v329, %v379
        %v403 = vmul.f32 %v330, %v379
        %v404 = vmul.f32 %v332, %v379
        %v405 = vmul.f32 %v333, %v379
        %v406 = vmul.f32 %v335, %v379
        %v407 = vmul.f32 %v336, %v379
        %v408 = vmul.f32 %v338, %v379
        %v409 = vmul.f32 %v339, %v379
        %v410 = vmul.f32 %v341, %v379
        %v411 = vmul.f32 %v342, %v379
        %v412 = vadd.f32 %v374, %v380
        %v413 = vadd.f32 %v374, %v381
        %v414 = vadd.f32 %v374, %v382
        %v415 = vadd.f32 %v374, %v383
        %v416 = vadd.f32 %v374, %v384
        %v417 = vadd.f32 %v374, %v385
        %v418 = vadd.f32 %v374, %v386
        %v419 = vadd.f32 %v374, %v387
        %v420 = vadd.f32 %v374, %v388
        %v421 = vadd.f32 %v374, %v389
        %v422 = vadd.f32 %v374, %v390
        %v423 = vadd.f32 %v374, %v391
        %v424 = vadd.f32 %v374, %v392
        %v425 = vadd.f32 %v374, %v393
        %v426 = vadd.f32 %v374, %v394
        %v427 = vadd.f32 %v374, %v395
        %v428 = vadd.f32 %v374, %v396
        %v429 = vadd.f32 %v374, %v397
        %v430 = vadd.f32 %v374, %v398
        %v431 = vadd.f32 %v374, %v399
        %v432 = vadd.f32 %v374, %v400
        %v433 = vadd.f32 %v374, %v401
        %v434 = vadd.f32 %v374, %v402
        %v435 = vadd.f32 %v374, %v403
        %v436 = vadd.f32 %v374, %v404
        %v437 = vadd.f32 %v374, %v405
        %v438 = vadd.f32 %v374, %v406
        %v439 = vadd.f32 %v374, %v407
        %v440 = vadd.f32 %v374, %v408
        %v441 = vadd.f32 %v374, %v409
        %v442 = vadd.f32 %v374, %v410
        %v443 = vadd.f32 %v374, %v411
        %v444 = vlaneseq
        %v445 = vshrl.u32 %v444, 7
        %v446 = vsub.s32 7, %v445
        %v447 = vrot.slane %v362, %v446
        %v448 = vmul.f32 %v299, %v447
        %v449 = vmul.f32 %v300, %v447
        %v450 = vmul.f32 %v302, %v447
        %v451 = vmul.f32 %v303, %v447
        %v452 = vmul.f32 %v305, %v447
        %v453 = vmul.f32 %v306, %v447
        %v454 = vmul.f32 %v308, %v447
        %v455 = vmul.f32 %v309, %v447
        %v456 = vmul.f32 %v311, %v447
        %v457 = vmul.f32 %v312, %v447
        %v458 = vmul.f32 %v314, %v447
        %v459 = vmul.f32 %v315, %v447
        %v460 = vmul.f32 %v317, %v447
        %v461 = vmul.f32 %v318, %v447
        %v462 = vmul.f32 %v320, %v447
        %v463 = vmul.f32 %v321, %v447
        %v464 = vmul.f32 %v323, %v447
        %v465 = vmul.f32 %v324, %v447
        %v466 = vmul.f32 %v326, %v447
        %v467 = vmul.f32 %v327, %v447
        %v468 = vmul.f32 %v329, %v447
        %v469 = vmul.f32 %v330, %v447
        %v470 = vmul.f32 %v332, %v447
        %v471 = vmul.f32 %v333, %v447
        %v472 = vmul.f32 %v335, %v447
        %v473 = vmul.f32 %v336, %v447
        %v474 = vmul.f32 %v338, %v447
        %v475 = vmul.f32 %v339, %v447
        %v476 = vmul.f32 %v341, %v447
        %v477 = vmul.f32 %v342, %v447
        %v478 = vmul.f32 %v344, %v447
        %v479 = vmul.f32 %v345, %v447
        %v480 = vadd.f32 %v412, %v448
        %v481 = vadd.f32 %v413, %v449
        %v482 = vadd.f32 %v414, %v450
        %v483 = vadd.f32 %v415, %v451
        %v484 = vadd.f32 %v416, %v452
        %v485 = vadd.f32 %v417, %v453
        %v486 = vadd.f32 %v418, %v454
        %v487 = vadd.f32 %v419, %v455
        %v488 = vadd.f32 %v420, %v456
        %v489 = vadd.f32 %v421, %v457
        %v490 = vadd.f32 %v422, %v458
        %v491 = vadd.f32 %v423, %v459
        %v492 = vadd.f32 %v424, %v460
        %v493 = vadd.f32 %v425, %v461
        %v494 = vadd.f32 %v426, %v462
        %v495 = vadd.f32 %v427, %v463
        %v496 = vadd.f32 %v428, %v464
        %v497 = vadd.f32 %v429, %v465
        %v498 = vadd.f32 %v430, %v466
        %v499 = vadd.f32 %v431, %v467
        %v500 = vadd.f32 %v432, %v468
        %v501 = vadd.f32 %v433, %v469
        %v502 = vadd.f32 %v434, %v470
        %v503 = vadd.f32 %v435, %v471
        %v504 = vadd.f32 %v436, %v472
        %v505 = vadd.f32 %v437, %v473
        %v506 = vadd.f32 %v438, %v474
        %v507 = vadd.f32 %v439, %v475
        %v508 = vadd.f32 %v440, %v476
        %v509 = vadd.f32 %v441, %v477
        %v510 = vadd.f32 %v442, %v478
        %v511 = vadd.f32 %v443, %v479
        %v512 = vlaneseq
        %v513 = vshrl.u32 %v512, 7
        %v514 = vsub.s32 6, %v513
        %v515 = vrot.slane %v363, %v514
        %v516 = vmul.f32 %v302, %v515
        %v517 = vmul.f32 %v303, %v515
        %v518 = vmul.f32 %v305, %v515
        %v519 = vmul.f32 %v306, %v515
        %v520 = vmul.f32 %v308, %v515
        %v521 = vmul.f32 %v309, %v515
        %v522 = vmul.f32 %v311, %v515
        %v523 = vmul.f32 %v312, %v515
        %v524 = vmul.f32 %v314, %v515
        %v525 = vmul.f32 %v315, %v515
        %v526 = vmul.f32 %v317, %v515
        %v527 = vmul.f32 %v318, %v515
        %v528 = vmul.f32 %v320, %v515
        %v529 = vmul.f32 %v321, %v515
        %v530 = vmul.f32 %v323, %v515
        %v531 = vmul.f32 %v324, %v515
        %v532 = vmul.f32 %v326, %v515
        %v533 = vmul.f32 %v327, %v515
        %v534 = vmul.f32 %v329, %v515
        %v535 = vmul.f32 %v330, %v515
        %v536 = vmul.f32 %v332, %v515
        %v537 = vmul.f32 %v333, %v515
        %v538 = vmul.f32 %v335, %v515
        %v539 = vmul.f32 %v336, %v515
        %v540 = vmul.f32 %v338, %v515
        %v541 = vmul.f32 %v339, %v515
        %v542 = vmul.f32 %v341, %v515
        %v543 = vmul.f32 %v342, %v515
        %v544 = vmul.f32 %v344, %v515
        %v545 = vmul.f32 %v345, %v515
        %v546 = vmul.f32 %v347, %v515
        %v547 = vmul.f32 %v348, %v515
        %v548 = vadd.f32 %v480, %v516
        %v549 = vadd.f32 %v481, %v517
        %v550 = vadd.f32 %v482, %v518
        %v551 = vadd.f32 %v483, %v519
        %v552 = vadd.f32 %v484, %v520
        %v553 = vadd.f32 %v485, %v521
        %v554 = vadd.f32 %v486, %v522
        %v555 = vadd.f32 %v487, %v523
        %v556 = vadd.f32 %v488, %v524
        %v557 = vadd.f32 %v489, %v525
        %v558 = vadd.f32 %v490, %v526
        %v559 = vadd.f32 %v491, %v527
        %v560 = vadd.f32 %v492, %v528
        %v561 = vadd.f32 %v493, %v529
        %v562 = vadd.f32 %v494, %v530
        %v563 = vadd.f32 %v495, %v531
        %v564 = vadd.f32 %v496, %v532
        %v565 = vadd.f32 %v497, %v533
        %v566 = vadd.f32 %v498, %v534
        %v567 = vadd.f32 %v499, %v535
        %v568 = vadd.f32 %v500, %v536
        %v569 = vadd.f32 %v501, %v537
        %v570 = vadd.f32 %v502, %v538
        %v571 = vadd.f32 %v503, %v539
        %v572 = vadd.f32 %v504, %v540
        %v573 = vadd.f32 %v505, %v541
        %v574 = vadd.f32 %v506, %v542
        %v575 = vadd.f32 %v507, %v543
        %v576 = vadd.f32 %v508, %v544
        %v577 = vadd.f32 %v509, %v545
        %v578 = vadd.f32 %v510, %v546
        %v579 = vadd.f32 %v511, %v547
        %v580 = vlaneseq
        %v581 = vshrl.u32 %v580, 7
        %v582 = vsub.s32 5, %v581
        %v583 = vrot.slane %v364, %v582
        %v584 = vmul.f32 %v305, %v583
        %v585 = vmul.f32 %v306, %v583
        %v586 = vmul.f32 %v308, %v583
        %v587 = vmul.f32 %v309, %v583
        %v588 = vmul.f32 %v311, %v583
        %v589 = vmul.f32 %v312, %v583
        %v590 = vmul.f32 %v314, %v583
        %v591 = vmul.f32 %v315, %v583
        %v592 = vmul.f32 %v317, %v583
        %v593 = vmul.f32 %v318, %v583
        %v594 = vmul.f32 %v320, %v583
        %v595 = vmul.f32 %v321, %v583
        %v596 = vmul.f32 %v323, %v583
        %v597 = vmul.f32 %v324, %v583
        %v598 = vmul.f32 %v326, %v583
        %v599 = vmul.f32 %v327, %v583
        %v600 = vmul.f32 %v329, %v583
        %v601 = vmul.f32 %v330, %v583
        %v602 = vmul.f32 %v332, %v583
        %v603 = vmul.f32 %v333, %v583
        %v604 = vmul.f32 %v335, %v583
        %v605 = vmul.f32 %v336, %v583
        %v606 = vmul.f32 %v338, %v583
        %v607 = vmul.f32 %v339, %v583
        %v608 = vmul.f32 %v341, %v583
        %v609 = vmul.f32 %v342, %v583
        %v610 = vmul.f32 %v344, %v583
        %v611 = vmul.f32 %v345, %v583
        %v612 = vmul.f32 %v347, %v583
        %v613 = vmul.f32 %v348, %v583
        %v614 = vmul.f32 %v350, %v583
        %v615 = vmul.f32 %v351, %v583
        %v616 = vadd.f32 %v548, %v584
        %v617 = vadd.f32 %v549, %v585
        %v618 = vadd.f32 %v550, %v586
        %v619 = vadd.f32 %v551, %v587
        %v620 = vadd.f32 %v552, %v588
        %v621 = vadd.f32 %v553, %v589
        %v622 = vadd.f32 %v554, %v590
        %v623 = vadd.f32 %v555, %v591
        %v624 = vadd.f32 %v556, %v592
        %v625 = vadd.f32 %v557, %v593
        %v626 = vadd.f32 %v558, %v594
        %v627 = vadd.f32 %v559, %v595
        %v628 = vadd.f32 %v560, %v596
        %v629 = vadd.f32 %v561, %v597
        %v630 = vadd.f32 %v562, %v598
        %v631 = vadd.f32 %v563, %v599
        %v632 = vadd.f32 %v564, %v600
        %v633 = vadd.f32 %v565, %v601
        %v634 = vadd.f32 %v566, %v602
        %v635 = vadd.f32 %v567, %v603
        %v636 = vadd.f32 %v568, %v604
        %v637 = vadd.f32 %v569, %v605
        %v638 = vadd.f32 %v570, %v606
        %v639 = vadd.f32 %v571, %v607
        %v640 = vadd.f32 %v572, %v608
        %v641 = vadd.f32 %v573, %v609
        %v642 = vadd.f32 %v574, %v610
        %v643 = vadd.f32 %v575, %v611
        %v644 = vadd.f32 %v576, %v612
        %v645 = vadd.f32 %v577, %v613
        %v646 = vadd.f32 %v578, %v614
        %v647 = vadd.f32 %v579, %v615
        %v648 = vlaneseq
        %v649 = vshrl.u32 %v648, 7
        %v650 = vsub.s32 4, %v649
        %v651 = vrot.slane %v365, %v650
        %v652 = vmul.f32 %v308, %v651
        %v653 = vmul.f32 %v309, %v651
        %v654 = vmul.f32 %v311, %v651
        %v655 = vmul.f32 %v312, %v651
        %v656 = vmul.f32 %v314, %v651
        %v657 = vmul.f32 %v315, %v651
        %v658 = vmul.f32 %v317, %v651
        %v659 = vmul.f32 %v318, %v651
        %v660 = vmul.f32 %v320, %v651
        %v661 = vmul.f32 %v321, %v651
        %v662 = vmul.f32 %v323, %v651
        %v663 = vmul.f32 %v324, %v651
        %v664 = vmul.f32 %v326, %v651
        %v665 = vmul.f32 %v327, %v651
        %v666 = vmul.f32 %v329, %v651
        %v667 = vmul.f32 %v330, %v651
        %v668 = vmul.f32 %v332, %v651
        %v669 = vmul.f32 %v333, %v651
        %v670 = vmul.f32 %v335, %v651
        %v671 = vmul.f32 %v336, %v651
        %v672 = vmul.f32 %v338, %v651
        %v673 = vmul.f32 %v339, %v651
        %v674 = vmul.f32 %v341, %v651
        %v675 = vmul.f32 %v342, %v651
        %v676 = vmul.f32 %v344, %v651
        %v677 = vmul.f32 %v345, %v651
        %v678 = vmul.f32 %v347, %v651
        %v679 = vmul.f32 %v348, %v651
        %v680 = vmul.f32 %v350, %v651
        %v681 = vmul.f32 %v351, %v651
        %v682 = vmul.f32 %v353, %v651
        %v683 = vmul.f32 %v354, %v651
        %v684 = vadd.f32 %v616, %v652
        %v685 = vadd.f32 %v617, %v653
        %v686 = vadd.f32 %v618, %v654
        %v687 = vadd.f32 %v619, %v655
        %v688 = vadd.f32 %v620, %v656
        %v689 = vadd.f32 %v621, %v657
        %v690 = vadd.f32 %v622, %v658
        %v691 = vadd.f32 %v623, %v659
        %v692 = vadd.f32 %v624, %v660
        %v693 = vadd.f32 %v625, %v661
        %v694 = vadd.f32 %v626, %v662
        %v695 = vadd.f32 %v627, %v663
        %v696 = vadd.f32 %v628, %v664
        %v697 = vadd.f32 %v629, %v665
        %v698 = vadd.f32 %v630, %v666
        %v699 = vadd.f32 %v631, %v667
        %v700 = vadd.f32 %v632, %v668
        %v701 = vadd.f32 %v633, %v669
        %v702 = vadd.f32 %v634, %v670
        %v703 = vadd.f32 %v635, %v671
        %v704 = vadd.f32 %v636, %v672
        %v705 = vadd.f32 %v637, %v673
        %v706 = vadd.f32 %v638, %v674
        %v707 = vadd.f32 %v639, %v675
        %v708 = vadd.f32 %v640, %v676
        %v709 = vadd.f32 %v641, %v677
        %v710 = vadd.f32 %v642, %v678
        %v711 = vadd.f32 %v643, %v679
        %v712 = vadd.f32 %v644, %v680
        %v713 = vadd.f32 %v645, %v681
        %v714 = vadd.f32 %v646, %v682
        %v715 = vadd.f32 %v647, %v683
        %v716 = vlaneseq
        %v717 = vshrl.u32 %v716, 7
        %v718 = vsub.s32 3, %v717
        %v719 = vrot.slane %v366, %v718
        %v720 = vmul.f32 %v311, %v719
        %v721 = vmul.f32 %v312, %v719
        %v722 = vmul.f32 %v314, %v719
        %v723 = vmul.f32 %v315, %v719
        %v724 = vmul.f32 %v317, %v719
        %v725 = vmul.f32 %v318, %v719
        %v726 = vmul.f32 %v320, %v719
        %v727 = vmul.f32 %v321, %v719
        %v728 = vmul.f32 %v323, %v719
        %v729 = vmul.f32 %v324, %v719
        %v730 = vmul.f32 %v326, %v719
        %v731 = vmul.f32 %v327, %v719
        %v732 = vmul.f32 %v329, %v719
        %v733 = vmul.f32 %v330, %v719
        %v734 = vmul.f32 %v332, %v719
        %v735 = vmul.f32 %v333, %v719
        %v736 = vmul.f32 %v335, %v719
        %v737 = vmul.f32 %v336, %v719
        %v738 = vmul.f32 %v338, %v719
        %v739 = vmul.f32 %v339, %v719
        %v740 = vmul.f32 %v341, %v719
        %v741 = vmul.f32 %v342, %v719
        %v742 = vmul.f32 %v344, %v719
        %v743 = vmul.f32 %v345, %v719
        %v744 = vmul.f32 %v347, %v719
        %v745 = vmul.f32 %v348, %v719
        %v746 = vmul.f32 %v350, %v719
        %v747 = vmul.f32 %v351, %v719
        %v748 = vmul.f32 %v353, %v719
        %v749 = vmul.f32 %v354, %v719
        %v750 = vmul.f32 %v356, %v719
        %v751 = vmul.f32 %v357, %v719
        %v752 = vadd.f32 %v684, %v720
        %v753 = vadd.f32 %v685, %v721
        %v754 = vadd.f32 %v686, %v722
        %v755 = vadd.f32 %v687, %v723
        %v756 = vadd.f32 %v688, %v724
        %v757 = vadd.f32 %v689, %v725
        %v758 = vadd.f32 %v690, %v726
        %v759 = vadd.f32 %v691, %v727
        %v760 = vadd.f32 %v692, %v728
        %v761 = vadd.f32 %v693, %v729
        %v762 = vadd.f32 %v694, %v730
        %v763 = vadd.f32 %v695, %v731
        %v764 = vadd.f32 %v696, %v732
        %v765 = vadd.f32 %v697, %v733
        %v766 = vadd.f32 %v698, %v734
        %v767 = vadd.f32 %v699, %v735
        %v768 = vadd.f32 %v700, %v736
        %v769 = vadd.f32 %v701, %v737
        %v770 = vadd.f32 %v702, %v738
        %v771 = vadd.f32 %v703, %v739
        %v772 = vadd.f32 %v704, %v740
        %v773 = vadd.f32 %v705, %v741
        %v774 = vadd.f32 %v706, %v742
        %v775 = vadd.f32 %v707, %v743
        %v776 = vadd.f32 %v708, %v744
        %v777 = vadd.f32 %v709, %v745
        %v778 = vadd.f32 %v710, %v746
        %v779 = vadd.f32 %v711, %v747
        %v780 = vadd.f32 %v712, %v748
        %v781 = vadd.f32 %v713, %v749
        %v782 = vadd.f32 %v714, %v750
        %v783 = vadd.f32 %v715, %v751
        %v784 = vlaneseq
        %v785 = vshrl.u32 %v784, 7
        %v786 = vsub.s32 2, %v785
        %v787 = vrot.slane %v367, %v786
        %v788 = vmul.f32 %v314, %v787
        %v789 = vmul.f32 %v315, %v787
        %v790 = vmul.f32 %v317, %v787
        %v791 = vmul.f32 %v318, %v787
        %v792 = vmul.f32 %v320, %v787
        %v793 = vmul.f32 %v321, %v787
        %v794 = vmul.f32 %v323, %v787
        %v795 = vmul.f32 %v324, %v787
        %v796 = vmul.f32 %v326, %v787
        %v797 = vmul.f32 %v327, %v787
        %v798 = vmul.f32 %v329, %v787
        %v799 = vmul.f32 %v330, %v787
        %v800 = vmul.f32 %v332, %v787
        %v801 = vmul.f32 %v333, %v787
        %v802 = vmul.f32 %v335, %v787
        %v803 = vmul.f32 %v336, %v787
        %v804 = vmul.f32 %v338, %v787
        %v805 = vmul.f32 %v339, %v787
        %v806 = vmul.f32 %v341, %v787
        %v807 = vmul.f32 %v342, %v787
        %v808 = vmul.f32 %v344, %v787
        %v809 = vmul.f32 %v345, %v787
        %v810 = vmul.f32 %v347, %v787
        %v811 = vmul.f32 %v348, %v787
        %v812 = vmul.f32 %v350, %v787
        %v813 = vmul.f32 %v351, %v787
        %v814 = vmul.f32 %v353, %v787
        %v815 = vmul.f32 %v354, %v787
        %v816 = vmul.f32 %v356, %v787
        %v817 = vmul.f32 %v357, %v787
        %v818 = vmul.f32 %v359, %v787
        %v819 = vmul.f32 %v360, %v787
        %v820 = vadd.f32 %v752, %v788
        %v821 = vadd.f32 %v753, %v789
        %v822 = vadd.f32 %v754, %v790
        %v823 = vadd.f32 %v755, %v791
        %v824 = vadd.f32 %v756, %v792
        %v825 = vadd.f32 %v757, %v793
        %v826 = vadd.f32 %v758, %v794
        %v827 = vadd.f32 %v759, %v795
        %v828 = vadd.f32 %v760, %v796
        %v829 = vadd.f32 %v761, %v797
        %v830 = vadd.f32 %v762, %v798
        %v831 = vadd.f32 %v763, %v799
        %v832 = vadd.f32 %v764, %v800
        %v833 = vadd.f32 %v765, %v801
        %v834 = vadd.f32 %v766, %v802
        %v835 = vadd.f32 %v767, %v803
        %v836 = vadd.f32 %v768, %v804
        %v837 = vadd.f32 %v769, %v805
        %v838 = vadd.f32 %v770, %v806
        %v839 = vadd.f32 %v771, %v807
        %v840 = vadd.f32 %v772, %v808
        %v841 = vadd.f32 %v773, %v809
        %v842 = vadd.f32 %v774, %v810
        %v843 = vadd.f32 %v775, %v811
        %v844 = vadd.f32 %v776, %v812
        %v845 = vadd.f32 %v777, %v813
        %v846 = vadd.f32 %v778, %v814
        %v847 = vadd.f32 %v779, %v815
        %v848 = vadd.f32 %v780, %v816
        %v849 = vadd.f32 %v781, %v817
        %v850 = vadd.f32 %v782, %v818
        %v851 = vadd.f32 %v783, %v819
        %v852 = vrot.slane %v296, 1
        %v853 = vrot.slane %v299, 1
        %v854 = vrot.slane %v302, 1
        %v855 = vrot.slane %v305, 1
        %v856 = vrot.slane %v308, 1
        %v857 = vrot.slane %v311, 1
        %v858 = vrot.slane %v314, 1
        %v859 = vrot.slane %v317, 1
        %v860 = vrot.slane %v320, 1
        %v861 = vrot.slane %v323, 1
        %v862 = vrot.slane %v326, 1
        %v863 = vrot.slane %v329, 1
        %v864 = vrot.slane %v332, 1
        %v865 = vrot.slane %v335, 1
        %v866 = vrot.slane %v338, 1
        %v867 = vrot.slane %v341, 1
        %v868 = vrot.slane %v344, 1
        %v869 = vrot.slane %v347, 1
        %v870 = vrot.slane %v350, 1
        %v871 = vrot.slane %v353, 1
        %v872 = vrot.slane %v356, 1
        %v873 = vrot.slane %v359, 1
        %v874 = vrot.slane %v297, 1
        %v875 = vrot.slane %v300, 1
        %v876 = vrot.slane %v303, 1
        %v877 = vrot.slane %v306, 1
        %v878 = vrot.slane %v309, 1
        %v879 = vrot.slane %v312, 1
        %v880 = vrot.slane %v315, 1
        %v881 = vrot.slane %v318, 1
        %v882 = vrot.slane %v321, 1
        %v883 = vrot.slane %v324, 1
        %v884 = vrot.slane %v327, 1
        %v885 = vrot.slane %v330, 1
        %v886 = vrot.slane %v333, 1
        %v887 = vrot.slane %v336, 1
        %v888 = vrot.slane %v339, 1
        %v889 = vrot.slane %v342, 1
        %v890 = vrot.slane %v345, 1
        %v891 = vrot.slane %v348, 1
        %v892 = vrot.slane %v351, 1
        %v893 = vrot.slane %v354, 1
        %v894 = vrot.slane %v357, 1
        %v895 = vrot.slane %v360, 1
        %v896 = vrot.slane %v298, 1
        %v897 = vrot.slane %v301, 1
        %v898 = vrot.slane %v304, 1
        %v899 = vrot.slane %v307, 1
        %v900 = vrot.slane %v310, 1
        %v901 = vrot.slane %v313, 1
        %v902 = vrot.slane %v316, 1
        %v903 = vrot.slane %v319, 1
        %v904 = vrot.slane %v322, 1
        %v905 = vrot.slane %v325, 1
        %v906 = vrot.slane %v328, 1
        %v907 = vrot.slane %v331, 1
        %v908 = vrot.slane %v334, 1
        %v909 = vrot.slane %v337, 1
        %v910 = vrot.slane %v340, 1
        %v911 = vrot.slane %v343, 1
        %v912 = vrot.slane %v346, 1
        %v913 = vrot.slane %v349, 1
        %v914 = vrot.slane %v352, 1
        %v915 = vrot.slane %v355, 1
        %v916 = vrot.slane %v358, 1
        %v917 = vrot.slane %v361, 1
        %v918 = vlaneseq
        %v919 = vshrl.u32 %v918, 7
        %vm920 = vcmp.lt.s32.totalorder %v919, 7
        %v921 = vsel %vm920, %v874, %v896
        %v922 = vsel %vm920, %v875, %v897
        %v923 = vsel %vm920, %v876, %v898
        %v924 = vsel %vm920, %v877, %v899
        %v925 = vsel %vm920, %v878, %v900
        %v926 = vsel %vm920, %v879, %v901
        %v927 = vsel %vm920, %v880, %v902
        %v928 = vsel %vm920, %v881, %v903
        %v929 = vsel %vm920, %v882, %v904
        %v930 = vsel %vm920, %v883, %v905
        %v931 = vsel %vm920, %v884, %v906
        %v932 = vsel %vm920, %v885, %v907
        %v933 = vsel %vm920, %v886, %v908
        %v934 = vsel %vm920, %v887, %v909
        %v935 = vsel %vm920, %v888, %v910
        %v936 = vsel %vm920, %v889, %v911
        %v937 = vsel %vm920, %v890, %v912
        %v938 = vsel %vm920, %v891, %v913
        %v939 = vsel %vm920, %v892, %v914
        %v940 = vsel %vm920, %v893, %v915
        %v941 = vsel %vm920, %v894, %v916
        %v942 = vsel %vm920, %v895, %v917
        %v943 = vsel %vm920, %v852, %v874
        %v944 = vsel %vm920, %v853, %v875
        %v945 = vsel %vm920, %v854, %v876
        %v946 = vsel %vm920, %v855, %v877
        %v947 = vsel %vm920, %v856, %v878
        %v948 = vsel %vm920, %v857, %v879
        %v949 = vsel %vm920, %v858, %v880
        %v950 = vsel %vm920, %v859, %v881
        %v951 = vsel %vm920, %v860, %v882
        %v952 = vsel %vm920, %v861, %v883
        %v953 = vsel %vm920, %v862, %v884
        %v954 = vsel %vm920, %v863, %v885
        %v955 = vsel %vm920, %v864, %v886
        %v956 = vsel %vm920, %v865, %v887
        %v957 = vsel %vm920, %v866, %v888
        %v958 = vsel %vm920, %v867, %v889
        %v959 = vsel %vm920, %v868, %v890
        %v960 = vsel %vm920, %v869, %v891
        %v961 = vsel %vm920, %v870, %v892
        %v962 = vsel %vm920, %v871, %v893
        %v963 = vsel %vm920, %v872, %v894
        %v964 = vsel %vm920, %v873, %v895
        %v965 = vsel %vm920, %v896, %v852
        %v966 = vsel %vm920, %v897, %v853
        %v967 = vsel %vm920, %v898, %v854
        %v968 = vsel %vm920, %v899, %v855
        %v969 = vsel %vm920, %v900, %v856
        %v970 = vsel %vm920, %v901, %v857
        %v971 = vsel %vm920, %v902, %v858
        %v972 = vsel %vm920, %v903, %v859
        %v973 = vsel %vm920, %v904, %v860
        %v974 = vsel %vm920, %v905, %v861
        %v975 = vsel %vm920, %v906, %v862
        %v976 = vsel %vm920, %v907, %v863
        %v977 = vsel %vm920, %v908, %v864
        %v978 = vsel %vm920, %v909, %v865
        %v979 = vsel %vm920, %v910, %v866
        %v980 = vsel %vm920, %v911, %v867
        %v981 = vsel %vm920, %v912, %v868
        %v982 = vsel %vm920, %v913, %v869
        %v983 = vsel %vm920, %v914, %v870
        %v984 = vsel %vm920, %v915, %v871
        %v985 = vsel %vm920, %v916, %v872
        %v986 = vsel %vm920, %v917, %v873
        %v987 = vlaneseq
        %v988 = vshrl.u32 %v987, 7
        %v989 = vsub.s32 1, %v988
        %v990 = vrot.slane %v362, %v989
        %v991 = vmul.f32 %v943, %v990
        %v992 = vmul.f32 %v921, %v990
        %v993 = vmul.f32 %v944, %v990
        %v994 = vmul.f32 %v922, %v990
        %v995 = vmul.f32 %v945, %v990
        %v996 = vmul.f32 %v923, %v990
        %v997 = vmul.f32 %v946, %v990
        %v998 = vmul.f32 %v924, %v990
        %v999 = vmul.f32 %v947, %v990
        %v1000 = vmul.f32 %v925, %v990
        %v1001 = vmul.f32 %v948, %v990
        %v1002 = vmul.f32 %v926, %v990
        %v1003 = vmul.f32 %v949, %v990
        %v1004 = vmul.f32 %v927, %v990
        %v1005 = vmul.f32 %v950, %v990
        %v1006 = vmul.f32 %v928, %v990
        %v1007 = vmul.f32 %v951, %v990
        %v1008 = vmul.f32 %v929, %v990
        %v1009 = vmul.f32 %v952, %v990
        %v1010 = vmul.f32 %v930, %v990
        %v1011 = vmul.f32 %v953, %v990
        %v1012 = vmul.f32 %v931, %v990
        %v1013 = vmul.f32 %v954, %v990
        %v1014 = vmul.f32 %v932, %v990
        %v1015 = vmul.f32 %v955, %v990
        %v1016 = vmul.f32 %v933, %v990
        %v1017 = vmul.f32 %v956, %v990
        %v1018 = vmul.f32 %v934, %v990
        %v1019 = vmul.f32 %v957, %v990
        %v1020 = vmul.f32 %v935, %v990
        %v1021 = vmul.f32 %v958, %v990
        %v1022 = vmul.f32 %v936, %v990
        %v1023 = vadd.f32 %v991, 0.0
        %v1024 = vadd.f32 %v992, 0.0
        %v1025 = vadd.f32 %v993, 0.0
        %v1026 = vadd.f32 %v994, 0.0
        %v1027 = vadd.f32 %v995, 0.0
        %v1028 = vadd.f32 %v996, 0.0
        %v1029 = vadd.f32 %v997, 0.0
        %v1030 = vadd.f32 %v998, 0.0
        %v1031 = vadd.f32 %v999, 0.0
        %v1032 = vadd.f32 %v1000, 0.0
        %v1033 = vadd.f32 %v1001, 0.0
        %v1034 = vadd.f32 %v1002, 0.0
        %v1035 = vadd.f32 %v1003, 0.0
        %v1036 = vadd.f32 %v1004, 0.0
        %v1037 = vadd.f32 %v1005, 0.0
        %v1038 = vadd.f32 %v1006, 0.0
        %v1039 = vadd.f32 %v1007, 0.0
        %v1040 = vadd.f32 %v1008, 0.0
        %v1041 = vadd.f32 %v1009, 0.0
        %v1042 = vadd.f32 %v1010, 0.0
        %v1043 = vadd.f32 %v1011, 0.0
        %v1044 = vadd.f32 %v1012, 0.0
        %v1045 = vadd.f32 %v1013, 0.0
        %v1046 = vadd.f32 %v1014, 0.0
        %v1047 = vadd.f32 %v1015, 0.0
        %v1048 = vadd.f32 %v1016, 0.0
        %v1049 = vadd.f32 %v1017, 0.0
        %v1050 = vadd.f32 %v1018, 0.0
        %v1051 = vadd.f32 %v1019, 0.0
        %v1052 = vadd.f32 %v1020, 0.0
        %v1053 = vadd.f32 %v1021, 0.0
        %v1054 = vadd.f32 %v1022, 0.0
        %v1055 = vlaneseq
        %v1056 = vshrl.u32 %v1055, 7
        %v1057 = vsub.s32 0, %v1056
        %v1058 = vrot.slane %v363, %v1057
        %v1059 = vmul.f32 %v944, %v1058
        %v1060 = vmul.f32 %v922, %v1058
        %v1061 = vmul.f32 %v945, %v1058
        %v1062 = vmul.f32 %v923, %v1058
        %v1063 = vmul.f32 %v946, %v1058
        %v1064 = vmul.f32 %v924, %v1058
        %v1065 = vmul.f32 %v947, %v1058
        %v1066 = vmul.f32 %v925, %v1058
        %v1067 = vmul.f32 %v948, %v1058
        %v1068 = vmul.f32 %v926, %v1058
        %v1069 = vmul.f32 %v949, %v1058
        %v1070 = vmul.f32 %v927, %v1058
        %v1071 = vmul.f32 %v950, %v1058
        %v1072 = vmul.f32 %v928, %v1058
        %v1073 = vmul.f32 %v951, %v1058
        %v1074 = vmul.f32 %v929, %v1058
        %v1075 = vmul.f32 %v952, %v1058
        %v1076 = vmul.f32 %v930, %v1058
        %v1077 = vmul.f32 %v953, %v1058
        %v1078 = vmul.f32 %v931, %v1058
        %v1079 = vmul.f32 %v954, %v1058
        %v1080 = vmul.f32 %v932, %v1058
        %v1081 = vmul.f32 %v955, %v1058
        %v1082 = vmul.f32 %v933, %v1058
        %v1083 = vmul.f32 %v956, %v1058
        %v1084 = vmul.f32 %v934, %v1058
        %v1085 = vmul.f32 %v957, %v1058
        %v1086 = vmul.f32 %v935, %v1058
        %v1087 = vmul.f32 %v958, %v1058
        %v1088 = vmul.f32 %v936, %v1058
        %v1089 = vmul.f32 %v959, %v1058
        %v1090 = vmul.f32 %v937, %v1058
        %v1091 = vadd.f32 %v1023, %v1059
        %v1092 = vadd.f32 %v1024, %v1060
        %v1093 = vadd.f32 %v1025, %v1061
        %v1094 = vadd.f32 %v1026, %v1062
        %v1095 = vadd.f32 %v1027, %v1063
        %v1096 = vadd.f32 %v1028, %v1064
        %v1097 = vadd.f32 %v1029, %v1065
        %v1098 = vadd.f32 %v1030, %v1066
        %v1099 = vadd.f32 %v1031, %v1067
        %v1100 = vadd.f32 %v1032, %v1068
        %v1101 = vadd.f32 %v1033, %v1069
        %v1102 = vadd.f32 %v1034, %v1070
        %v1103 = vadd.f32 %v1035, %v1071
        %v1104 = vadd.f32 %v1036, %v1072
        %v1105 = vadd.f32 %v1037, %v1073
        %v1106 = vadd.f32 %v1038, %v1074
        %v1107 = vadd.f32 %v1039, %v1075
        %v1108 = vadd.f32 %v1040, %v1076
        %v1109 = vadd.f32 %v1041, %v1077
        %v1110 = vadd.f32 %v1042, %v1078
        %v1111 = vadd.f32 %v1043, %v1079
        %v1112 = vadd.f32 %v1044, %v1080
        %v1113 = vadd.f32 %v1045, %v1081
        %v1114 = vadd.f32 %v1046, %v1082
        %v1115 = vadd.f32 %v1047, %v1083
        %v1116 = vadd.f32 %v1048, %v1084
        %v1117 = vadd.f32 %v1049, %v1085
        %v1118 = vadd.f32 %v1050, %v1086
        %v1119 = vadd.f32 %v1051, %v1087
        %v1120 = vadd.f32 %v1052, %v1088
        %v1121 = vadd.f32 %v1053, %v1089
        %v1122 = vadd.f32 %v1054, %v1090
        %v1123 = vlaneseq
        %v1124 = vshrl.u32 %v1123, 7
        %v1125 = vsub.s32 7, %v1124
        %v1126 = vrot.slane %v363, %v1125
        %v1127 = vmul.f32 %v945, %v1126
        %v1128 = vmul.f32 %v923, %v1126
        %v1129 = vmul.f32 %v946, %v1126
        %v1130 = vmul.f32 %v924, %v1126
        %v1131 = vmul.f32 %v947, %v1126
        %v1132 = vmul.f32 %v925, %v1126
        %v1133 = vmul.f32 %v948, %v1126
        %v1134 = vmul.f32 %v926, %v1126
        %v1135 = vmul.f32 %v949, %v1126
        %v1136 = vmul.f32 %v927, %v1126
        %v1137 = vmul.f32 %v950, %v1126
        %v1138 = vmul.f32 %v928, %v1126
        %v1139 = vmul.f32 %v951, %v1126
        %v1140 = vmul.f32 %v929, %v1126
        %v1141 = vmul.f32 %v952, %v1126
        %v1142 = vmul.f32 %v930, %v1126
        %v1143 = vmul.f32 %v953, %v1126
        %v1144 = vmul.f32 %v931, %v1126
        %v1145 = vmul.f32 %v954, %v1126
        %v1146 = vmul.f32 %v932, %v1126
        %v1147 = vmul.f32 %v955, %v1126
        %v1148 = vmul.f32 %v933, %v1126
        %v1149 = vmul.f32 %v956, %v1126
        %v1150 = vmul.f32 %v934, %v1126
        %v1151 = vmul.f32 %v957, %v1126
        %v1152 = vmul.f32 %v935, %v1126
        %v1153 = vmul.f32 %v958, %v1126
        %v1154 = vmul.f32 %v936, %v1126
        %v1155 = vmul.f32 %v959, %v1126
        %v1156 = vmul.f32 %v937, %v1126
        %v1157 = vmul.f32 %v960, %v1126
        %v1158 = vmul.f32 %v938, %v1126
        %v1159 = vadd.f32 %v1091, %v1127
        %v1160 = vadd.f32 %v1092, %v1128
        %v1161 = vadd.f32 %v1093, %v1129
        %v1162 = vadd.f32 %v1094, %v1130
        %v1163 = vadd.f32 %v1095, %v1131
        %v1164 = vadd.f32 %v1096, %v1132
        %v1165 = vadd.f32 %v1097, %v1133
        %v1166 = vadd.f32 %v1098, %v1134
        %v1167 = vadd.f32 %v1099, %v1135
        %v1168 = vadd.f32 %v1100, %v1136
        %v1169 = vadd.f32 %v1101, %v1137
        %v1170 = vadd.f32 %v1102, %v1138
        %v1171 = vadd.f32 %v1103, %v1139
        %v1172 = vadd.f32 %v1104, %v1140
        %v1173 = vadd.f32 %v1105, %v1141
        %v1174 = vadd.f32 %v1106, %v1142
        %v1175 = vadd.f32 %v1107, %v1143
        %v1176 = vadd.f32 %v1108, %v1144
        %v1177 = vadd.f32 %v1109, %v1145
        %v1178 = vadd.f32 %v1110, %v1146
        %v1179 = vadd.f32 %v1111, %v1147
        %v1180 = vadd.f32 %v1112, %v1148
        %v1181 = vadd.f32 %v1113, %v1149
        %v1182 = vadd.f32 %v1114, %v1150
        %v1183 = vadd.f32 %v1115, %v1151
        %v1184 = vadd.f32 %v1116, %v1152
        %v1185 = vadd.f32 %v1117, %v1153
        %v1186 = vadd.f32 %v1118, %v1154
        %v1187 = vadd.f32 %v1119, %v1155
        %v1188 = vadd.f32 %v1120, %v1156
        %v1189 = vadd.f32 %v1121, %v1157
        %v1190 = vadd.f32 %v1122, %v1158
        %v1191 = vlaneseq
        %v1192 = vshrl.u32 %v1191, 7
        %v1193 = vsub.s32 6, %v1192
        %v1194 = vrot.slane %v364, %v1193
        %v1195 = vmul.f32 %v946, %v1194
        %v1196 = vmul.f32 %v924, %v1194
        %v1197 = vmul.f32 %v947, %v1194
        %v1198 = vmul.f32 %v925, %v1194
        %v1199 = vmul.f32 %v948, %v1194
        %v1200 = vmul.f32 %v926, %v1194
        %v1201 = vmul.f32 %v949, %v1194
        %v1202 = vmul.f32 %v927, %v1194
        %v1203 = vmul.f32 %v950, %v1194
        %v1204 = vmul.f32 %v928, %v1194
        %v1205 = vmul.f32 %v951, %v1194
        %v1206 = vmul.f32 %v929, %v1194
        %v1207 = vmul.f32 %v952, %v1194
        %v1208 = vmul.f32 %v930, %v1194
        %v1209 = vmul.f32 %v953, %v1194
        %v1210 = vmul.f32 %v931, %v1194
        %v1211 = vmul.f32 %v954, %v1194
        %v1212 = vmul.f32 %v932, %v1194
        %v1213 = vmul.f32 %v955, %v1194
        %v1214 = vmul.f32 %v933, %v1194
        %v1215 = vmul.f32 %v956, %v1194
        %v1216 = vmul.f32 %v934, %v1194
        %v1217 = vmul.f32 %v957, %v1194
        %v1218 = vmul.f32 %v935, %v1194
        %v1219 = vmul.f32 %v958, %v1194
        %v1220 = vmul.f32 %v936, %v1194
        %v1221 = vmul.f32 %v959, %v1194
        %v1222 = vmul.f32 %v937, %v1194
        %v1223 = vmul.f32 %v960, %v1194
        %v1224 = vmul.f32 %v938, %v1194
        %v1225 = vmul.f32 %v961, %v1194
        %v1226 = vmul.f32 %v939, %v1194
        %v1227 = vadd.f32 %v1159, %v1195
        %v1228 = vadd.f32 %v1160, %v1196
        %v1229 = vadd.f32 %v1161, %v1197
        %v1230 = vadd.f32 %v1162, %v1198
        %v1231 = vadd.f32 %v1163, %v1199
        %v1232 = vadd.f32 %v1164, %v1200
        %v1233 = vadd.f32 %v1165, %v1201
        %v1234 = vadd.f32 %v1166, %v1202
        %v1235 = vadd.f32 %v1167, %v1203
        %v1236 = vadd.f32 %v1168, %v1204
        %v1237 = vadd.f32 %v1169, %v1205
        %v1238 = vadd.f32 %v1170, %v1206
        %v1239 = vadd.f32 %v1171, %v1207
        %v1240 = vadd.f32 %v1172, %v1208
        %v1241 = vadd.f32 %v1173, %v1209
        %v1242 = vadd.f32 %v1174, %v1210
        %v1243 = vadd.f32 %v1175, %v1211
        %v1244 = vadd.f32 %v1176, %v1212
        %v1245 = vadd.f32 %v1177, %v1213
        %v1246 = vadd.f32 %v1178, %v1214
        %v1247 = vadd.f32 %v1179, %v1215
        %v1248 = vadd.f32 %v1180, %v1216
        %v1249 = vadd.f32 %v1181, %v1217
        %v1250 = vadd.f32 %v1182, %v1218
        %v1251 = vadd.f32 %v1183, %v1219
        %v1252 = vadd.f32 %v1184, %v1220
        %v1253 = vadd.f32 %v1185, %v1221
        %v1254 = vadd.f32 %v1186, %v1222
        %v1255 = vadd.f32 %v1187, %v1223
        %v1256 = vadd.f32 %v1188, %v1224
        %v1257 = vadd.f32 %v1189, %v1225
        %v1258 = vadd.f32 %v1190, %v1226
        %v1259 = vlaneseq
        %v1260 = vshrl.u32 %v1259, 7
        %v1261 = vsub.s32 5, %v1260
        %v1262 = vrot.slane %v365, %v1261
        %v1263 = vmul.f32 %v947, %v1262
        %v1264 = vmul.f32 %v925, %v1262
        %v1265 = vmul.f32 %v948, %v1262
        %v1266 = vmul.f32 %v926, %v1262
        %v1267 = vmul.f32 %v949, %v1262
        %v1268 = vmul.f32 %v927, %v1262
        %v1269 = vmul.f32 %v950, %v1262
        %v1270 = vmul.f32 %v928, %v1262
        %v1271 = vmul.f32 %v951, %v1262
        %v1272 = vmul.f32 %v929, %v1262
        %v1273 = vmul.f32 %v952, %v1262
        %v1274 = vmul.f32 %v930, %v1262
        %v1275 = vmul.f32 %v953, %v1262
        %v1276 = vmul.f32 %v931, %v1262
        %v1277 = vmul.f32 %v954, %v1262
        %v1278 = vmul.f32 %v932, %v1262
        %v1279 = vmul.f32 %v955, %v1262
        %v1280 = vmul.f32 %v933, %v1262
        %v1281 = vmul.f32 %v956, %v1262
        %v1282 = vmul.f32 %v934, %v1262
        %v1283 = vmul.f32 %v957, %v1262
        %v1284 = vmul.f32 %v935, %v1262
        %v1285 = vmul.f32 %v958, %v1262
        %v1286 = vmul.f32 %v936, %v1262
        %v1287 = vmul.f32 %v959, %v1262
        %v1288 = vmul.f32 %v937, %v1262
        %v1289 = vmul.f32 %v960, %v1262
        %v1290 = vmul.f32 %v938, %v1262
        %v1291 = vmul.f32 %v961, %v1262
        %v1292 = vmul.f32 %v939, %v1262
        %v1293 = vmul.f32 %v962, %v1262
        %v1294 = vmul.f32 %v940, %v1262
        %v1295 = vadd.f32 %v1227, %v1263
        %v1296 = vadd.f32 %v1228, %v1264
        %v1297 = vadd.f32 %v1229, %v1265
        %v1298 = vadd.f32 %v1230, %v1266
        %v1299 = vadd.f32 %v1231, %v1267
        %v1300 = vadd.f32 %v1232, %v1268
        %v1301 = vadd.f32 %v1233, %v1269
        %v1302 = vadd.f32 %v1234, %v1270
        %v1303 = vadd.f32 %v1235, %v1271
        %v1304 = vadd.f32 %v1236, %v1272
        %v1305 = vadd.f32 %v1237, %v1273
        %v1306 = vadd.f32 %v1238, %v1274
        %v1307 = vadd.f32 %v1239, %v1275
        %v1308 = vadd.f32 %v1240, %v1276
        %v1309 = vadd.f32 %v1241, %v1277
        %v1310 = vadd.f32 %v1242, %v1278
        %v1311 = vadd.f32 %v1243, %v1279
        %v1312 = vadd.f32 %v1244, %v1280
        %v1313 = vadd.f32 %v1245, %v1281
        %v1314 = vadd.f32 %v1246, %v1282
        %v1315 = vadd.f32 %v1247, %v1283
        %v1316 = vadd.f32 %v1248, %v1284
        %v1317 = vadd.f32 %v1249, %v1285
        %v1318 = vadd.f32 %v1250, %v1286
        %v1319 = vadd.f32 %v1251, %v1287
        %v1320 = vadd.f32 %v1252, %v1288
        %v1321 = vadd.f32 %v1253, %v1289
        %v1322 = vadd.f32 %v1254, %v1290
        %v1323 = vadd.f32 %v1255, %v1291
        %v1324 = vadd.f32 %v1256, %v1292
        %v1325 = vadd.f32 %v1257, %v1293
        %v1326 = vadd.f32 %v1258, %v1294
        %v1327 = vlaneseq
        %v1328 = vshrl.u32 %v1327, 7
        %v1329 = vsub.s32 4, %v1328
        %v1330 = vrot.slane %v366, %v1329
        %v1331 = vmul.f32 %v948, %v1330
        %v1332 = vmul.f32 %v926, %v1330
        %v1333 = vmul.f32 %v949, %v1330
        %v1334 = vmul.f32 %v927, %v1330
        %v1335 = vmul.f32 %v950, %v1330
        %v1336 = vmul.f32 %v928, %v1330
        %v1337 = vmul.f32 %v951, %v1330
        %v1338 = vmul.f32 %v929, %v1330
        %v1339 = vmul.f32 %v952, %v1330
        %v1340 = vmul.f32 %v930, %v1330
        %v1341 = vmul.f32 %v953, %v1330
        %v1342 = vmul.f32 %v931, %v1330
        %v1343 = vmul.f32 %v954, %v1330
        %v1344 = vmul.f32 %v932, %v1330
        %v1345 = vmul.f32 %v955, %v1330
        %v1346 = vmul.f32 %v933, %v1330
        %v1347 = vmul.f32 %v956, %v1330
        %v1348 = vmul.f32 %v934, %v1330
        %v1349 = vmul.f32 %v957, %v1330
        %v1350 = vmul.f32 %v935, %v1330
        %v1351 = vmul.f32 %v958, %v1330
        %v1352 = vmul.f32 %v936, %v1330
        %v1353 = vmul.f32 %v959, %v1330
        %v1354 = vmul.f32 %v937, %v1330
        %v1355 = vmul.f32 %v960, %v1330
        %v1356 = vmul.f32 %v938, %v1330
        %v1357 = vmul.f32 %v961, %v1330
        %v1358 = vmul.f32 %v939, %v1330
        %v1359 = vmul.f32 %v962, %v1330
        %v1360 = vmul.f32 %v940, %v1330
        %v1361 = vmul.f32 %v963, %v1330
        %v1362 = vmul.f32 %v941, %v1330
        %v1363 = vadd.f32 %v1295, %v1331
        %v1364 = vadd.f32 %v1296, %v1332
        %v1365 = vadd.f32 %v1297, %v1333
        %v1366 = vadd.f32 %v1298, %v1334
        %v1367 = vadd.f32 %v1299, %v1335
        %v1368 = vadd.f32 %v1300, %v1336
        %v1369 = vadd.f32 %v1301, %v1337
        %v1370 = vadd.f32 %v1302, %v1338
        %v1371 = vadd.f32 %v1303, %v1339
        %v1372 = vadd.f32 %v1304, %v1340
        %v1373 = vadd.f32 %v1305, %v1341
        %v1374 = vadd.f32 %v1306, %v1342
        %v1375 = vadd.f32 %v1307, %v1343
        %v1376 = vadd.f32 %v1308, %v1344
        %v1377 = vadd.f32 %v1309, %v1345
        %v1378 = vadd.f32 %v1310, %v1346
        %v1379 = vadd.f32 %v1311, %v1347
        %v1380 = vadd.f32 %v1312, %v1348
        %v1381 = vadd.f32 %v1313, %v1349
        %v1382 = vadd.f32 %v1314, %v1350
        %v1383 = vadd.f32 %v1315, %v1351
        %v1384 = vadd.f32 %v1316, %v1352
        %v1385 = vadd.f32 %v1317, %v1353
        %v1386 = vadd.f32 %v1318, %v1354
        %v1387 = vadd.f32 %v1319, %v1355
        %v1388 = vadd.f32 %v1320, %v1356
        %v1389 = vadd.f32 %v1321, %v1357
        %v1390 = vadd.f32 %v1322, %v1358
        %v1391 = vadd.f32 %v1323, %v1359
        %v1392 = vadd.f32 %v1324, %v1360
        %v1393 = vadd.f32 %v1325, %v1361
        %v1394 = vadd.f32 %v1326, %v1362
        %v1395 = vlaneseq
        %v1396 = vshrl.u32 %v1395, 7
        %v1397 = vsub.s32 3, %v1396
        %v1398 = vrot.slane %v367, %v1397
        %v1399 = vmul.f32 %v949, %v1398
        %v1400 = vmul.f32 %v927, %v1398
        %v1401 = vmul.f32 %v950, %v1398
        %v1402 = vmul.f32 %v928, %v1398
        %v1403 = vmul.f32 %v951, %v1398
        %v1404 = vmul.f32 %v929, %v1398
        %v1405 = vmul.f32 %v952, %v1398
        %v1406 = vmul.f32 %v930, %v1398
        %v1407 = vmul.f32 %v953, %v1398
        %v1408 = vmul.f32 %v931, %v1398
        %v1409 = vmul.f32 %v954, %v1398
        %v1410 = vmul.f32 %v932, %v1398
        %v1411 = vmul.f32 %v955, %v1398
        %v1412 = vmul.f32 %v933, %v1398
        %v1413 = vmul.f32 %v956, %v1398
        %v1414 = vmul.f32 %v934, %v1398
        %v1415 = vmul.f32 %v957, %v1398
        %v1416 = vmul.f32 %v935, %v1398
        %v1417 = vmul.f32 %v958, %v1398
        %v1418 = vmul.f32 %v936, %v1398
        %v1419 = vmul.f32 %v959, %v1398
        %v1420 = vmul.f32 %v937, %v1398
        %v1421 = vmul.f32 %v960, %v1398
        %v1422 = vmul.f32 %v938, %v1398
        %v1423 = vmul.f32 %v961, %v1398
        %v1424 = vmul.f32 %v939, %v1398
        %v1425 = vmul.f32 %v962, %v1398
        %v1426 = vmul.f32 %v940, %v1398
        %v1427 = vmul.f32 %v963, %v1398
        %v1428 = vmul.f32 %v941, %v1398
        %v1429 = vmul.f32 %v964, %v1398
        %v1430 = vmul.f32 %v942, %v1398
        %v1431 = vadd.f32 %v1363, %v1399
        %v1432 = vadd.f32 %v1364, %v1400
        %v1433 = vadd.f32 %v1365, %v1401
        %v1434 = vadd.f32 %v1366, %v1402
        %v1435 = vadd.f32 %v1367, %v1403
        %v1436 = vadd.f32 %v1368, %v1404
        %v1437 = vadd.f32 %v1369, %v1405
        %v1438 = vadd.f32 %v1370, %v1406
        %v1439 = vadd.f32 %v1371, %v1407
        %v1440 = vadd.f32 %v1372, %v1408
        %v1441 = vadd.f32 %v1373, %v1409
        %v1442 = vadd.f32 %v1374, %v1410
        %v1443 = vadd.f32 %v1375, %v1411
        %v1444 = vadd.f32 %v1376, %v1412
        %v1445 = vadd.f32 %v1377, %v1413
        %v1446 = vadd.f32 %v1378, %v1414
        %v1447 = vadd.f32 %v1379, %v1415
        %v1448 = vadd.f32 %v1380, %v1416
        %v1449 = vadd.f32 %v1381, %v1417
        %v1450 = vadd.f32 %v1382, %v1418
        %v1451 = vadd.f32 %v1383, %v1419
        %v1452 = vadd.f32 %v1384, %v1420
        %v1453 = vadd.f32 %v1385, %v1421
        %v1454 = vadd.f32 %v1386, %v1422
        %v1455 = vadd.f32 %v1387, %v1423
        %v1456 = vadd.f32 %v1388, %v1424
        %v1457 = vadd.f32 %v1389, %v1425
        %v1458 = vadd.f32 %v1390, %v1426
        %v1459 = vadd.f32 %v1391, %v1427
        %v1460 = vadd.f32 %v1392, %v1428
        %v1461 = vadd.f32 %v1393, %v1429
        %v1462 = vadd.f32 %v1394, %v1430
        %v1463 = vrot.slane %v943, 1
        %v1464 = vrot.slane %v944, 1
        %v1465 = vrot.slane %v945, 1
        %v1466 = vrot.slane %v946, 1
        %v1467 = vrot.slane %v947, 1
        %v1468 = vrot.slane %v948, 1
        %v1469 = vrot.slane %v949, 1
        %v1470 = vrot.slane %v950, 1
        %v1471 = vrot.slane %v951, 1
        %v1472 = vrot.slane %v952, 1
        %v1473 = vrot.slane %v953, 1
        %v1474 = vrot.slane %v954, 1
        %v1475 = vrot.slane %v955, 1
        %v1476 = vrot.slane %v956, 1
        %v1477 = vrot.slane %v957, 1
        %v1478 = vrot.slane %v958, 1
        %v1479 = vrot.slane %v959, 1
        %v1480 = vrot.slane %v960, 1
        %v1481 = vrot.slane %v961, 1
        %v1482 = vrot.slane %v962, 1
        %v1483 = vrot.slane %v963, 1
        %v1484 = vrot.slane %v964, 1
        %v1485 = vrot.slane %v921, 1
        %v1486 = vrot.slane %v922, 1
        %v1487 = vrot.slane %v923, 1
        %v1488 = vrot.slane %v924, 1
        %v1489 = vrot.slane %v925, 1
        %v1490 = vrot.slane %v926, 1
        %v1491 = vrot.slane %v927, 1
        %v1492 = vrot.slane %v928, 1
        %v1493 = vrot.slane %v929, 1
        %v1494 = vrot.slane %v930, 1
        %v1495 = vrot.slane %v931, 1
        %v1496 = vrot.slane %v932, 1
        %v1497 = vrot.slane %v933, 1
        %v1498 = vrot.slane %v934, 1
        %v1499 = vrot.slane %v935, 1
        %v1500 = vrot.slane %v936, 1
        %v1501 = vrot.slane %v937, 1
        %v1502 = vrot.slane %v938, 1
        %v1503 = vrot.slane %v939, 1
        %v1504 = vrot.slane %v940, 1
        %v1505 = vrot.slane %v941, 1
        %v1506 = vrot.slane %v942, 1
        %v1507 = vrot.slane %v965, 1
        %v1508 = vrot.slane %v966, 1
        %v1509 = vrot.slane %v967, 1
        %v1510 = vrot.slane %v968, 1
        %v1511 = vrot.slane %v969, 1
        %v1512 = vrot.slane %v970, 1
        %v1513 = vrot.slane %v971, 1
        %v1514 = vrot.slane %v972, 1
        %v1515 = vrot.slane %v973, 1
        %v1516 = vrot.slane %v974, 1
        %v1517 = vrot.slane %v975, 1
        %v1518 = vrot.slane %v976, 1
        %v1519 = vrot.slane %v977, 1
        %v1520 = vrot.slane %v978, 1
        %v1521 = vrot.slane %v979, 1
        %v1522 = vrot.slane %v980, 1
        %v1523 = vrot.slane %v981, 1
        %v1524 = vrot.slane %v982, 1
        %v1525 = vrot.slane %v983, 1
        %v1526 = vrot.slane %v984, 1
        %v1527 = vrot.slane %v985, 1
        %v1528 = vrot.slane %v986, 1
        %v1529 = vsel %vm920, %v1485, %v1507
        %v1530 = vsel %vm920, %v1486, %v1508
        %v1531 = vsel %vm920, %v1487, %v1509
        %v1532 = vsel %vm920, %v1488, %v1510
        %v1533 = vsel %vm920, %v1489, %v1511
        %v1534 = vsel %vm920, %v1490, %v1512
        %v1535 = vsel %vm920, %v1491, %v1513
        %v1536 = vsel %vm920, %v1492, %v1514
        %v1537 = vsel %vm920, %v1493, %v1515
        %v1538 = vsel %vm920, %v1494, %v1516
        %v1539 = vsel %vm920, %v1495, %v1517
        %v1540 = vsel %vm920, %v1496, %v1518
        %v1541 = vsel %vm920, %v1497, %v1519
        %v1542 = vsel %vm920, %v1498, %v1520
        %v1543 = vsel %vm920, %v1499, %v1521
        %v1544 = vsel %vm920, %v1500, %v1522
        %v1545 = vsel %vm920, %v1501, %v1523
        %v1546 = vsel %vm920, %v1502, %v1524
        %v1547 = vsel %vm920, %v1503, %v1525
        %v1548 = vsel %vm920, %v1504, %v1526
        %v1549 = vsel %vm920, %v1505, %v1527
        %v1550 = vsel %vm920, %v1506, %v1528
        %v1551 = vsel %vm920, %v1463, %v1485
        %v1552 = vsel %vm920, %v1464, %v1486
        %v1553 = vsel %vm920, %v1465, %v1487
        %v1554 = vsel %vm920, %v1466, %v1488
        %v1555 = vsel %vm920, %v1467, %v1489
        %v1556 = vsel %vm920, %v1468, %v1490
        %v1557 = vsel %vm920, %v1469, %v1491
        %v1558 = vsel %vm920, %v1470, %v1492
        %v1559 = vsel %vm920, %v1471, %v1493
        %v1560 = vsel %vm920, %v1472, %v1494
        %v1561 = vsel %vm920, %v1473, %v1495
        %v1562 = vsel %vm920, %v1474, %v1496
        %v1563 = vsel %vm920, %v1475, %v1497
        %v1564 = vsel %vm920, %v1476, %v1498
        %v1565 = vsel %vm920, %v1477, %v1499
        %v1566 = vsel %vm920, %v1478, %v1500
        %v1567 = vsel %vm920, %v1479, %v1501
        %v1568 = vsel %vm920, %v1480, %v1502
        %v1569 = vsel %vm920, %v1481, %v1503
        %v1570 = vsel %vm920, %v1482, %v1504
        %v1571 = vsel %vm920, %v1483, %v1505
        %v1572 = vsel %vm920, %v1484, %v1506
        %v1573 = vsel %vm920, %v1507, %v1463
        %v1574 = vsel %vm920, %v1508, %v1464
        %v1575 = vsel %vm920, %v1509, %v1465
        %v1576 = vsel %vm920, %v1510, %v1466
        %v1577 = vsel %vm920, %v1511, %v1467
        %v1578 = vsel %vm920, %v1512, %v1468
        %v1579 = vsel %vm920, %v1513, %v1469
        %v1580 = vsel %vm920, %v1514, %v1470
        %v1581 = vsel %vm920, %v1515, %v1471
        %v1582 = vsel %vm920, %v1516, %v1472
        %v1583 = vsel %vm920, %v1517, %v1473
        %v1584 = vsel %vm920, %v1518, %v1474
        %v1585 = vsel %vm920, %v1519, %v1475
        %v1586 = vsel %vm920, %v1520, %v1476
        %v1587 = vsel %vm920, %v1521, %v1477
        %v1588 = vsel %vm920, %v1522, %v1478
        %v1589 = vsel %vm920, %v1523, %v1479
        %v1590 = vsel %vm920, %v1524, %v1480
        %v1591 = vsel %vm920, %v1525, %v1481
        %v1592 = vsel %vm920, %v1526, %v1482
        %v1593 = vsel %vm920, %v1527, %v1483
        %v1594 = vsel %vm920, %v1528, %v1484
        %v1595 = vlaneseq
        %v1596 = vshrl.u32 %v1595, 7
        %v1597 = vsub.s32 2, %v1596
        %v1598 = vrot.slane %v362, %v1597
        %v1599 = vmul.f32 %v1551, %v1598
        %v1600 = vmul.f32 %v1529, %v1598
        %v1601 = vmul.f32 %v1552, %v1598
        %v1602 = vmul.f32 %v1530, %v1598
        %v1603 = vmul.f32 %v1553, %v1598
        %v1604 = vmul.f32 %v1531, %v1598
        %v1605 = vmul.f32 %v1554, %v1598
        %v1606 = vmul.f32 %v1532, %v1598
        %v1607 = vmul.f32 %v1555, %v1598
        %v1608 = vmul.f32 %v1533, %v1598
        %v1609 = vmul.f32 %v1556, %v1598
        %v1610 = vmul.f32 %v1534, %v1598
        %v1611 = vmul.f32 %v1557, %v1598
        %v1612 = vmul.f32 %v1535, %v1598
        %v1613 = vmul.f32 %v1558, %v1598
        %v1614 = vmul.f32 %v1536, %v1598
        %v1615 = vmul.f32 %v1559, %v1598
        %v1616 = vmul.f32 %v1537, %v1598
        %v1617 = vmul.f32 %v1560, %v1598
        %v1618 = vmul.f32 %v1538, %v1598
        %v1619 = vmul.f32 %v1561, %v1598
        %v1620 = vmul.f32 %v1539, %v1598
        %v1621 = vmul.f32 %v1562, %v1598
        %v1622 = vmul.f32 %v1540, %v1598
        %v1623 = vmul.f32 %v1563, %v1598
        %v1624 = vmul.f32 %v1541, %v1598
        %v1625 = vmul.f32 %v1564, %v1598
        %v1626 = vmul.f32 %v1542, %v1598
        %v1627 = vmul.f32 %v1565, %v1598
        %v1628 = vmul.f32 %v1543, %v1598
        %v1629 = vmul.f32 %v1566, %v1598
        %v1630 = vmul.f32 %v1544, %v1598
        %v1631 = vadd.f32 %v820, %v1599
        %v1632 = vadd.f32 %v821, %v1600
        %v1633 = vadd.f32 %v822, %v1601
        %v1634 = vadd.f32 %v823, %v1602
        %v1635 = vadd.f32 %v824, %v1603
        %v1636 = vadd.f32 %v825, %v1604
        %v1637 = vadd.f32 %v826, %v1605
        %v1638 = vadd.f32 %v827, %v1606
        %v1639 = vadd.f32 %v828, %v1607
        %v1640 = vadd.f32 %v829, %v1608
        %v1641 = vadd.f32 %v830, %v1609
        %v1642 = vadd.f32 %v831, %v1610
        %v1643 = vadd.f32 %v832, %v1611
        %v1644 = vadd.f32 %v833, %v1612
        %v1645 = vadd.f32 %v834, %v1613
        %v1646 = vadd.f32 %v835, %v1614
        %v1647 = vadd.f32 %v836, %v1615
        %v1648 = vadd.f32 %v837, %v1616
        %v1649 = vadd.f32 %v838, %v1617
        %v1650 = vadd.f32 %v839, %v1618
        %v1651 = vadd.f32 %v840, %v1619
        %v1652 = vadd.f32 %v841, %v1620
        %v1653 = vadd.f32 %v842, %v1621
        %v1654 = vadd.f32 %v843, %v1622
        %v1655 = vadd.f32 %v844, %v1623
        %v1656 = vadd.f32 %v845, %v1624
        %v1657 = vadd.f32 %v846, %v1625
        %v1658 = vadd.f32 %v847, %v1626
        %v1659 = vadd.f32 %v848, %v1627
        %v1660 = vadd.f32 %v849, %v1628
        %v1661 = vadd.f32 %v850, %v1629
        %v1662 = vadd.f32 %v851, %v1630
        %v1663 = vlaneseq
        %v1664 = vshrl.u32 %v1663, 7
        %v1665 = vsub.s32 1, %v1664
        %v1666 = vrot.slane %v363, %v1665
        %v1667 = vmul.f32 %v1552, %v1666
        %v1668 = vmul.f32 %v1530, %v1666
        %v1669 = vmul.f32 %v1553, %v1666
        %v1670 = vmul.f32 %v1531, %v1666
        %v1671 = vmul.f32 %v1554, %v1666
        %v1672 = vmul.f32 %v1532, %v1666
        %v1673 = vmul.f32 %v1555, %v1666
        %v1674 = vmul.f32 %v1533, %v1666
        %v1675 = vmul.f32 %v1556, %v1666
        %v1676 = vmul.f32 %v1534, %v1666
        %v1677 = vmul.f32 %v1557, %v1666
        %v1678 = vmul.f32 %v1535, %v1666
        %v1679 = vmul.f32 %v1558, %v1666
        %v1680 = vmul.f32 %v1536, %v1666
        %v1681 = vmul.f32 %v1559, %v1666
        %v1682 = vmul.f32 %v1537, %v1666
        %v1683 = vmul.f32 %v1560, %v1666
        %v1684 = vmul.f32 %v1538, %v1666
        %v1685 = vmul.f32 %v1561, %v1666
        %v1686 = vmul.f32 %v1539, %v1666
        %v1687 = vmul.f32 %v1562, %v1666
        %v1688 = vmul.f32 %v1540, %v1666
        %v1689 = vmul.f32 %v1563, %v1666
        %v1690 = vmul.f32 %v1541, %v1666
        %v1691 = vmul.f32 %v1564, %v1666
        %v1692 = vmul.f32 %v1542, %v1666
        %v1693 = vmul.f32 %v1565, %v1666
        %v1694 = vmul.f32 %v1543, %v1666
        %v1695 = vmul.f32 %v1566, %v1666
        %v1696 = vmul.f32 %v1544, %v1666
        %v1697 = vmul.f32 %v1567, %v1666
        %v1698 = vmul.f32 %v1545, %v1666
        %v1699 = vadd.f32 %v1631, %v1667
        %v1700 = vadd.f32 %v1632, %v1668
        %v1701 = vadd.f32 %v1633, %v1669
        %v1702 = vadd.f32 %v1634, %v1670
        %v1703 = vadd.f32 %v1635, %v1671
        %v1704 = vadd.f32 %v1636, %v1672
        %v1705 = vadd.f32 %v1637, %v1673
        %v1706 = vadd.f32 %v1638, %v1674
        %v1707 = vadd.f32 %v1639, %v1675
        %v1708 = vadd.f32 %v1640, %v1676
        %v1709 = vadd.f32 %v1641, %v1677
        %v1710 = vadd.f32 %v1642, %v1678
        %v1711 = vadd.f32 %v1643, %v1679
        %v1712 = vadd.f32 %v1644, %v1680
        %v1713 = vadd.f32 %v1645, %v1681
        %v1714 = vadd.f32 %v1646, %v1682
        %v1715 = vadd.f32 %v1647, %v1683
        %v1716 = vadd.f32 %v1648, %v1684
        %v1717 = vadd.f32 %v1649, %v1685
        %v1718 = vadd.f32 %v1650, %v1686
        %v1719 = vadd.f32 %v1651, %v1687
        %v1720 = vadd.f32 %v1652, %v1688
        %v1721 = vadd.f32 %v1653, %v1689
        %v1722 = vadd.f32 %v1654, %v1690
        %v1723 = vadd.f32 %v1655, %v1691
        %v1724 = vadd.f32 %v1656, %v1692
        %v1725 = vadd.f32 %v1657, %v1693
        %v1726 = vadd.f32 %v1658, %v1694
        %v1727 = vadd.f32 %v1659, %v1695
        %v1728 = vadd.f32 %v1660, %v1696
        %v1729 = vadd.f32 %v1661, %v1697
        %v1730 = vadd.f32 %v1662, %v1698
        %v1731 = vlaneseq
        %v1732 = vshrl.u32 %v1731, 7
        %v1733 = vsub.s32 0, %v1732
        %v1734 = vrot.slane %v364, %v1733
        %v1735 = vmul.f32 %v1553, %v1734
        %v1736 = vmul.f32 %v1531, %v1734
        %v1737 = vmul.f32 %v1554, %v1734
        %v1738 = vmul.f32 %v1532, %v1734
        %v1739 = vmul.f32 %v1555, %v1734
        %v1740 = vmul.f32 %v1533, %v1734
        %v1741 = vmul.f32 %v1556, %v1734
        %v1742 = vmul.f32 %v1534, %v1734
        %v1743 = vmul.f32 %v1557, %v1734
        %v1744 = vmul.f32 %v1535, %v1734
        %v1745 = vmul.f32 %v1558, %v1734
        %v1746 = vmul.f32 %v1536, %v1734
        %v1747 = vmul.f32 %v1559, %v1734
        %v1748 = vmul.f32 %v1537, %v1734
        %v1749 = vmul.f32 %v1560, %v1734
        %v1750 = vmul.f32 %v1538, %v1734
        %v1751 = vmul.f32 %v1561, %v1734
        %v1752 = vmul.f32 %v1539, %v1734
        %v1753 = vmul.f32 %v1562, %v1734
        %v1754 = vmul.f32 %v1540, %v1734
        %v1755 = vmul.f32 %v1563, %v1734
        %v1756 = vmul.f32 %v1541, %v1734
        %v1757 = vmul.f32 %v1564, %v1734
        %v1758 = vmul.f32 %v1542, %v1734
        %v1759 = vmul.f32 %v1565, %v1734
        %v1760 = vmul.f32 %v1543, %v1734
        %v1761 = vmul.f32 %v1566, %v1734
        %v1762 = vmul.f32 %v1544, %v1734
        %v1763 = vmul.f32 %v1567, %v1734
        %v1764 = vmul.f32 %v1545, %v1734
        %v1765 = vmul.f32 %v1568, %v1734
        %v1766 = vmul.f32 %v1546, %v1734
        %v1767 = vadd.f32 %v1699, %v1735
        %v1768 = vadd.f32 %v1700, %v1736
        %v1769 = vadd.f32 %v1701, %v1737
        %v1770 = vadd.f32 %v1702, %v1738
        %v1771 = vadd.f32 %v1703, %v1739
        %v1772 = vadd.f32 %v1704, %v1740
        %v1773 = vadd.f32 %v1705, %v1741
        %v1774 = vadd.f32 %v1706, %v1742
        %v1775 = vadd.f32 %v1707, %v1743
        %v1776 = vadd.f32 %v1708, %v1744
        %v1777 = vadd.f32 %v1709, %v1745
        %v1778 = vadd.f32 %v1710, %v1746
        %v1779 = vadd.f32 %v1711, %v1747
        %v1780 = vadd.f32 %v1712, %v1748
        %v1781 = vadd.f32 %v1713, %v1749
        %v1782 = vadd.f32 %v1714, %v1750
        %v1783 = vadd.f32 %v1715, %v1751
        %v1784 = vadd.f32 %v1716, %v1752
        %v1785 = vadd.f32 %v1717, %v1753
        %v1786 = vadd.f32 %v1718, %v1754
        %v1787 = vadd.f32 %v1719, %v1755
        %v1788 = vadd.f32 %v1720, %v1756
        %v1789 = vadd.f32 %v1721, %v1757
        %v1790 = vadd.f32 %v1722, %v1758
        %v1791 = vadd.f32 %v1723, %v1759
        %v1792 = vadd.f32 %v1724, %v1760
        %v1793 = vadd.f32 %v1725, %v1761
        %v1794 = vadd.f32 %v1726, %v1762
        %v1795 = vadd.f32 %v1727, %v1763
        %v1796 = vadd.f32 %v1728, %v1764
        %v1797 = vadd.f32 %v1729, %v1765
        %v1798 = vadd.f32 %v1730, %v1766
        %v1799 = vlaneseq
        %v1800 = vshrl.u32 %v1799, 7
        %v1801 = vsub.s32 7, %v1800
        %v1802 = vrot.slane %v364, %v1801
        %v1803 = vmul.f32 %v1554, %v1802
        %v1804 = vmul.f32 %v1532, %v1802
        %v1805 = vmul.f32 %v1555, %v1802
        %v1806 = vmul.f32 %v1533, %v1802
        %v1807 = vmul.f32 %v1556, %v1802
        %v1808 = vmul.f32 %v1534, %v1802
        %v1809 = vmul.f32 %v1557, %v1802
        %v1810 = vmul.f32 %v1535, %v1802
        %v1811 = vmul.f32 %v1558, %v1802
        %v1812 = vmul.f32 %v1536, %v1802
        %v1813 = vmul.f32 %v1559, %v1802
        %v1814 = vmul.f32 %v1537, %v1802
        %v1815 = vmul.f32 %v1560, %v1802
        %v1816 = vmul.f32 %v1538, %v1802
        %v1817 = vmul.f32 %v1561, %v1802
        %v1818 = vmul.f32 %v1539, %v1802
        %v1819 = vmul.f32 %v1562, %v1802
        %v1820 = vmul.f32 %v1540, %v1802
        %v1821 = vmul.f32 %v1563, %v1802
        %v1822 = vmul.f32 %v1541, %v1802
        %v1823 = vmul.f32 %v1564, %v1802
        %v1824 = vmul.f32 %v1542, %v1802
        %v1825 = vmul.f32 %v1565, %v1802
        %v1826 = vmul.f32 %v1543, %v1802
        %v1827 = vmul.f32 %v1566, %v1802
        %v1828 = vmul.f32 %v1544, %v1802
        %v1829 = vmul.f32 %v1567, %v1802
        %v1830 = vmul.f32 %v1545, %v1802
        %v1831 = vmul.f32 %v1568, %v1802
        %v1832 = vmul.f32 %v1546, %v1802
        %v1833 = vmul.f32 %v1569, %v1802
        %v1834 = vmul.f32 %v1547, %v1802
        %v1835 = vadd.f32 %v1767, %v1803
        %v1836 = vadd.f32 %v1768, %v1804
        %v1837 = vadd.f32 %v1769, %v1805
        %v1838 = vadd.f32 %v1770, %v1806
        %v1839 = vadd.f32 %v1771, %v1807
        %v1840 = vadd.f32 %v1772, %v1808
        %v1841 = vadd.f32 %v1773, %v1809
        %v1842 = vadd.f32 %v1774, %v1810
        %v1843 = vadd.f32 %v1775, %v1811
        %v1844 = vadd.f32 %v1776, %v1812
        %v1845 = vadd.f32 %v1777, %v1813
        %v1846 = vadd.f32 %v1778, %v1814
        %v1847 = vadd.f32 %v1779, %v1815
        %v1848 = vadd.f32 %v1780, %v1816
        %v1849 = vadd.f32 %v1781, %v1817
        %v1850 = vadd.f32 %v1782, %v1818
        %v1851 = vadd.f32 %v1783, %v1819
        %v1852 = vadd.f32 %v1784, %v1820
        %v1853 = vadd.f32 %v1785, %v1821
        %v1854 = vadd.f32 %v1786, %v1822
        %v1855 = vadd.f32 %v1787, %v1823
        %v1856 = vadd.f32 %v1788, %v1824
        %v1857 = vadd.f32 %v1789, %v1825
        %v1858 = vadd.f32 %v1790, %v1826
        %v1859 = vadd.f32 %v1791, %v1827
        %v1860 = vadd.f32 %v1792, %v1828
        %v1861 = vadd.f32 %v1793, %v1829
        %v1862 = vadd.f32 %v1794, %v1830
        %v1863 = vadd.f32 %v1795, %v1831
        %v1864 = vadd.f32 %v1796, %v1832
        %v1865 = vadd.f32 %v1797, %v1833
        %v1866 = vadd.f32 %v1798, %v1834
        %v1867 = vlaneseq
        %v1868 = vshrl.u32 %v1867, 7
        %v1869 = vsub.s32 6, %v1868
        %v1870 = vrot.slane %v365, %v1869
        %v1871 = vmul.f32 %v1555, %v1870
        %v1872 = vmul.f32 %v1533, %v1870
        %v1873 = vmul.f32 %v1556, %v1870
        %v1874 = vmul.f32 %v1534, %v1870
        %v1875 = vmul.f32 %v1557, %v1870
        %v1876 = vmul.f32 %v1535, %v1870
        %v1877 = vmul.f32 %v1558, %v1870
        %v1878 = vmul.f32 %v1536, %v1870
        %v1879 = vmul.f32 %v1559, %v1870
        %v1880 = vmul.f32 %v1537, %v1870
        %v1881 = vmul.f32 %v1560, %v1870
        %v1882 = vmul.f32 %v1538, %v1870
        %v1883 = vmul.f32 %v1561, %v1870
        %v1884 = vmul.f32 %v1539, %v1870
        %v1885 = vmul.f32 %v1562, %v1870
        %v1886 = vmul.f32 %v1540, %v1870
        %v1887 = vmul.f32 %v1563, %v1870
        %v1888 = vmul.f32 %v1541, %v1870
        %v1889 = vmul.f32 %v1564, %v1870
        %v1890 = vmul.f32 %v1542, %v1870
        %v1891 = vmul.f32 %v1565, %v1870
        %v1892 = vmul.f32 %v1543, %v1870
        %v1893 = vmul.f32 %v1566, %v1870
        %v1894 = vmul.f32 %v1544, %v1870
        %v1895 = vmul.f32 %v1567, %v1870
        %v1896 = vmul.f32 %v1545, %v1870
        %v1897 = vmul.f32 %v1568, %v1870
        %v1898 = vmul.f32 %v1546, %v1870
        %v1899 = vmul.f32 %v1569, %v1870
        %v1900 = vmul.f32 %v1547, %v1870
        %v1901 = vmul.f32 %v1570, %v1870
        %v1902 = vmul.f32 %v1548, %v1870
        %v1903 = vadd.f32 %v1835, %v1871
        %v1904 = vadd.f32 %v1836, %v1872
        %v1905 = vadd.f32 %v1837, %v1873
        %v1906 = vadd.f32 %v1838, %v1874
        %v1907 = vadd.f32 %v1839, %v1875
        %v1908 = vadd.f32 %v1840, %v1876
        %v1909 = vadd.f32 %v1841, %v1877
        %v1910 = vadd.f32 %v1842, %v1878
        %v1911 = vadd.f32 %v1843, %v1879
        %v1912 = vadd.f32 %v1844, %v1880
        %v1913 = vadd.f32 %v1845, %v1881
        %v1914 = vadd.f32 %v1846, %v1882
        %v1915 = vadd.f32 %v1847, %v1883
        %v1916 = vadd.f32 %v1848, %v1884
        %v1917 = vadd.f32 %v1849, %v1885
        %v1918 = vadd.f32 %v1850, %v1886
        %v1919 = vadd.f32 %v1851, %v1887
        %v1920 = vadd.f32 %v1852, %v1888
        %v1921 = vadd.f32 %v1853, %v1889
        %v1922 = vadd.f32 %v1854, %v1890
        %v1923 = vadd.f32 %v1855, %v1891
        %v1924 = vadd.f32 %v1856, %v1892
        %v1925 = vadd.f32 %v1857, %v1893
        %v1926 = vadd.f32 %v1858, %v1894
        %v1927 = vadd.f32 %v1859, %v1895
        %v1928 = vadd.f32 %v1860, %v1896
        %v1929 = vadd.f32 %v1861, %v1897
        %v1930 = vadd.f32 %v1862, %v1898
        %v1931 = vadd.f32 %v1863, %v1899
        %v1932 = vadd.f32 %v1864, %v1900
        %v1933 = vadd.f32 %v1865, %v1901
        %v1934 = vadd.f32 %v1866, %v1902
        %v1935 = vlaneseq
        %v1936 = vshrl.u32 %v1935, 7
        %v1937 = vsub.s32 5, %v1936
        %v1938 = vrot.slane %v366, %v1937
        %v1939 = vmul.f32 %v1556, %v1938
        %v1940 = vmul.f32 %v1534, %v1938
        %v1941 = vmul.f32 %v1557, %v1938
        %v1942 = vmul.f32 %v1535, %v1938
        %v1943 = vmul.f32 %v1558, %v1938
        %v1944 = vmul.f32 %v1536, %v1938
        %v1945 = vmul.f32 %v1559, %v1938
        %v1946 = vmul.f32 %v1537, %v1938
        %v1947 = vmul.f32 %v1560, %v1938
        %v1948 = vmul.f32 %v1538, %v1938
        %v1949 = vmul.f32 %v1561, %v1938
        %v1950 = vmul.f32 %v1539, %v1938
        %v1951 = vmul.f32 %v1562, %v1938
        %v1952 = vmul.f32 %v1540, %v1938
        %v1953 = vmul.f32 %v1563, %v1938
        %v1954 = vmul.f32 %v1541, %v1938
        %v1955 = vmul.f32 %v1564, %v1938
        %v1956 = vmul.f32 %v1542, %v1938
        %v1957 = vmul.f32 %v1565, %v1938
        %v1958 = vmul.f32 %v1543, %v1938
        %v1959 = vmul.f32 %v1566, %v1938
        %v1960 = vmul.f32 %v1544, %v1938
        %v1961 = vmul.f32 %v1567, %v1938
        %v1962 = vmul.f32 %v1545, %v1938
        %v1963 = vmul.f32 %v1568, %v1938
        %v1964 = vmul.f32 %v1546, %v1938
        %v1965 = vmul.f32 %v1569, %v1938
        %v1966 = vmul.f32 %v1547, %v1938
        %v1967 = vmul.f32 %v1570, %v1938
        %v1968 = vmul.f32 %v1548, %v1938
        %v1969 = vmul.f32 %v1571, %v1938
        %v1970 = vmul.f32 %v1549, %v1938
        %v1971 = vadd.f32 %v1903, %v1939
        %v1972 = vadd.f32 %v1904, %v1940
        %v1973 = vadd.f32 %v1905, %v1941
        %v1974 = vadd.f32 %v1906, %v1942
        %v1975 = vadd.f32 %v1907, %v1943
        %v1976 = vadd.f32 %v1908, %v1944
        %v1977 = vadd.f32 %v1909, %v1945
        %v1978 = vadd.f32 %v1910, %v1946
        %v1979 = vadd.f32 %v1911, %v1947
        %v1980 = vadd.f32 %v1912, %v1948
        %v1981 = vadd.f32 %v1913, %v1949
        %v1982 = vadd.f32 %v1914, %v1950
        %v1983 = vadd.f32 %v1915, %v1951
        %v1984 = vadd.f32 %v1916, %v1952
        %v1985 = vadd.f32 %v1917, %v1953
        %v1986 = vadd.f32 %v1918, %v1954
        %v1987 = vadd.f32 %v1919, %v1955
        %v1988 = vadd.f32 %v1920, %v1956
        %v1989 = vadd.f32 %v1921, %v1957
        %v1990 = vadd.f32 %v1922, %v1958
        %v1991 = vadd.f32 %v1923, %v1959
        %v1992 = vadd.f32 %v1924, %v1960
        %v1993 = vadd.f32 %v1925, %v1961
        %v1994 = vadd.f32 %v1926, %v1962
        %v1995 = vadd.f32 %v1927, %v1963
        %v1996 = vadd.f32 %v1928, %v1964
        %v1997 = vadd.f32 %v1929, %v1965
        %v1998 = vadd.f32 %v1930, %v1966
        %v1999 = vadd.f32 %v1931, %v1967
        %v2000 = vadd.f32 %v1932, %v1968
        %v2001 = vadd.f32 %v1933, %v1969
        %v2002 = vadd.f32 %v1934, %v1970
        %v2003 = vlaneseq
        %v2004 = vshrl.u32 %v2003, 7
        %v2005 = vsub.s32 4, %v2004
        %v2006 = vrot.slane %v367, %v2005
        %v2007 = vmul.f32 %v1557, %v2006
        %v2008 = vmul.f32 %v1535, %v2006
        %v2009 = vmul.f32 %v1558, %v2006
        %v2010 = vmul.f32 %v1536, %v2006
        %v2011 = vmul.f32 %v1559, %v2006
        %v2012 = vmul.f32 %v1537, %v2006
        %v2013 = vmul.f32 %v1560, %v2006
        %v2014 = vmul.f32 %v1538, %v2006
        %v2015 = vmul.f32 %v1561, %v2006
        %v2016 = vmul.f32 %v1539, %v2006
        %v2017 = vmul.f32 %v1562, %v2006
        %v2018 = vmul.f32 %v1540, %v2006
        %v2019 = vmul.f32 %v1563, %v2006
        %v2020 = vmul.f32 %v1541, %v2006
        %v2021 = vmul.f32 %v1564, %v2006
        %v2022 = vmul.f32 %v1542, %v2006
        %v2023 = vmul.f32 %v1565, %v2006
        %v2024 = vmul.f32 %v1543, %v2006
        %v2025 = vmul.f32 %v1566, %v2006
        %v2026 = vmul.f32 %v1544, %v2006
        %v2027 = vmul.f32 %v1567, %v2006
        %v2028 = vmul.f32 %v1545, %v2006
        %v2029 = vmul.f32 %v1568, %v2006
        %v2030 = vmul.f32 %v1546, %v2006
        %v2031 = vmul.f32 %v1569, %v2006
        %v2032 = vmul.f32 %v1547, %v2006
        %v2033 = vmul.f32 %v1570, %v2006
        %v2034 = vmul.f32 %v1548, %v2006
        %v2035 = vmul.f32 %v1571, %v2006
        %v2036 = vmul.f32 %v1549, %v2006
        %v2037 = vmul.f32 %v1572, %v2006
        %v2038 = vmul.f32 %v1550, %v2006
        %v2039 = vadd.f32 %v1971, %v2007
        %v2040 = vadd.f32 %v1972, %v2008
        %v2041 = vadd.f32 %v1973, %v2009
        %v2042 = vadd.f32 %v1974, %v2010
        %v2043 = vadd.f32 %v1975, %v2011
        %v2044 = vadd.f32 %v1976, %v2012
        %v2045 = vadd.f32 %v1977, %v2013
        %v2046 = vadd.f32 %v1978, %v2014
        %v2047 = vadd.f32 %v1979, %v2015
        %v2048 = vadd.f32 %v1980, %v2016
        %v2049 = vadd.f32 %v1981, %v2017
        %v2050 = vadd.f32 %v1982, %v2018
        %v2051 = vadd.f32 %v1983, %v2019
        %v2052 = vadd.f32 %v1984, %v2020
        %v2053 = vadd.f32 %v1985, %v2021
        %v2054 = vadd.f32 %v1986, %v2022
        %v2055 = vadd.f32 %v1987, %v2023
        %v2056 = vadd.f32 %v1988, %v2024
        %v2057 = vadd.f32 %v1989, %v2025
        %v2058 = vadd.f32 %v1990, %v2026
        %v2059 = vadd.f32 %v1991, %v2027
        %v2060 = vadd.f32 %v1992, %v2028
        %v2061 = vadd.f32 %v1993, %v2029
        %v2062 = vadd.f32 %v1994, %v2030
        %v2063 = vadd.f32 %v1995, %v2031
        %v2064 = vadd.f32 %v1996, %v2032
        %v2065 = vadd.f32 %v1997, %v2033
        %v2066 = vadd.f32 %v1998, %v2034
        %v2067 = vadd.f32 %v1999, %v2035
        %v2068 = vadd.f32 %v2000, %v2036
        %v2069 = vadd.f32 %v2001, %v2037
        %v2070 = vadd.f32 %v2002, %v2038
        %v2071 = vrot.slane %v1551, 1
        %v2072 = vrot.slane %v1552, 1
        %v2073 = vrot.slane %v1553, 1
        %v2074 = vrot.slane %v1554, 1
        %v2075 = vrot.slane %v1555, 1
        %v2076 = vrot.slane %v1556, 1
        %v2077 = vrot.slane %v1557, 1
        %v2078 = vrot.slane %v1558, 1
        %v2079 = vrot.slane %v1559, 1
        %v2080 = vrot.slane %v1560, 1
        %v2081 = vrot.slane %v1561, 1
        %v2082 = vrot.slane %v1562, 1
        %v2083 = vrot.slane %v1563, 1
        %v2084 = vrot.slane %v1564, 1
        %v2085 = vrot.slane %v1565, 1
        %v2086 = vrot.slane %v1566, 1
        %v2087 = vrot.slane %v1567, 1
        %v2088 = vrot.slane %v1568, 1
        %v2089 = vrot.slane %v1569, 1
        %v2090 = vrot.slane %v1570, 1
        %v2091 = vrot.slane %v1571, 1
        %v2092 = vrot.slane %v1572, 1
        %v2093 = vrot.slane %v1529, 1
        %v2094 = vrot.slane %v1530, 1
        %v2095 = vrot.slane %v1531, 1
        %v2096 = vrot.slane %v1532, 1
        %v2097 = vrot.slane %v1533, 1
        %v2098 = vrot.slane %v1534, 1
        %v2099 = vrot.slane %v1535, 1
        %v2100 = vrot.slane %v1536, 1
        %v2101 = vrot.slane %v1537, 1
        %v2102 = vrot.slane %v1538, 1
        %v2103 = vrot.slane %v1539, 1
        %v2104 = vrot.slane %v1540, 1
        %v2105 = vrot.slane %v1541, 1
        %v2106 = vrot.slane %v1542, 1
        %v2107 = vrot.slane %v1543, 1
        %v2108 = vrot.slane %v1544, 1
        %v2109 = vrot.slane %v1545, 1
        %v2110 = vrot.slane %v1546, 1
        %v2111 = vrot.slane %v1547, 1
        %v2112 = vrot.slane %v1548, 1
        %v2113 = vrot.slane %v1549, 1
        %v2114 = vrot.slane %v1550, 1
        %v2115 = vrot.slane %v1573, 1
        %v2116 = vrot.slane %v1574, 1
        %v2117 = vrot.slane %v1575, 1
        %v2118 = vrot.slane %v1576, 1
        %v2119 = vrot.slane %v1577, 1
        %v2120 = vrot.slane %v1578, 1
        %v2121 = vrot.slane %v1579, 1
        %v2122 = vrot.slane %v1580, 1
        %v2123 = vrot.slane %v1581, 1
        %v2124 = vrot.slane %v1582, 1
        %v2125 = vrot.slane %v1583, 1
        %v2126 = vrot.slane %v1584, 1
        %v2127 = vrot.slane %v1585, 1
        %v2128 = vrot.slane %v1586, 1
        %v2129 = vrot.slane %v1587, 1
        %v2130 = vrot.slane %v1588, 1
        %v2131 = vrot.slane %v1589, 1
        %v2132 = vrot.slane %v1590, 1
        %v2133 = vrot.slane %v1591, 1
        %v2134 = vrot.slane %v1592, 1
        %v2135 = vrot.slane %v1593, 1
        %v2136 = vrot.slane %v1594, 1
        %v2137 = vsel %vm920, %v2093, %v2115
        %v2138 = vsel %vm920, %v2094, %v2116
        %v2139 = vsel %vm920, %v2095, %v2117
        %v2140 = vsel %vm920, %v2096, %v2118
        %v2141 = vsel %vm920, %v2097, %v2119
        %v2142 = vsel %vm920, %v2098, %v2120
        %v2143 = vsel %vm920, %v2099, %v2121
        %v2144 = vsel %vm920, %v2100, %v2122
        %v2145 = vsel %vm920, %v2101, %v2123
        %v2146 = vsel %vm920, %v2102, %v2124
        %v2147 = vsel %vm920, %v2103, %v2125
        %v2148 = vsel %vm920, %v2104, %v2126
        %v2149 = vsel %vm920, %v2105, %v2127
        %v2150 = vsel %vm920, %v2106, %v2128
        %v2151 = vsel %vm920, %v2107, %v2129
        %v2152 = vsel %vm920, %v2108, %v2130
        %v2153 = vsel %vm920, %v2109, %v2131
        %v2154 = vsel %vm920, %v2110, %v2132
        %v2155 = vsel %vm920, %v2111, %v2133
        %v2156 = vsel %vm920, %v2112, %v2134
        %v2157 = vsel %vm920, %v2113, %v2135
        %v2158 = vsel %vm920, %v2114, %v2136
        %v2159 = vsel %vm920, %v2071, %v2093
        %v2160 = vsel %vm920, %v2072, %v2094
        %v2161 = vsel %vm920, %v2073, %v2095
        %v2162 = vsel %vm920, %v2074, %v2096
        %v2163 = vsel %vm920, %v2075, %v2097
        %v2164 = vsel %vm920, %v2076, %v2098
        %v2165 = vsel %vm920, %v2077, %v2099
        %v2166 = vsel %vm920, %v2078, %v2100
        %v2167 = vsel %vm920, %v2079, %v2101
        %v2168 = vsel %vm920, %v2080, %v2102
        %v2169 = vsel %vm920, %v2081, %v2103
        %v2170 = vsel %vm920, %v2082, %v2104
        %v2171 = vsel %vm920, %v2083, %v2105
        %v2172 = vsel %vm920, %v2084, %v2106
        %v2173 = vsel %vm920, %v2085, %v2107
        %v2174 = vsel %vm920, %v2086, %v2108
        %v2175 = vsel %vm920, %v2087, %v2109
        %v2176 = vsel %vm920, %v2088, %v2110
        %v2177 = vsel %vm920, %v2089, %v2111
        %v2178 = vsel %vm920, %v2090, %v2112
        %v2179 = vsel %vm920, %v2091, %v2113
        %v2180 = vsel %vm920, %v2092, %v2114
        %v2181 = vsel %vm920, %v2115, %v2071
        %v2182 = vsel %vm920, %v2116, %v2072
        %v2183 = vsel %vm920, %v2117, %v2073
        %v2184 = vsel %vm920, %v2118, %v2074
        %v2185 = vsel %vm920, %v2119, %v2075
        %v2186 = vsel %vm920, %v2120, %v2076
        %v2187 = vsel %vm920, %v2121, %v2077
        %v2188 = vsel %vm920, %v2122, %v2078
        %v2189 = vsel %vm920, %v2123, %v2079
        %v2190 = vsel %vm920, %v2124, %v2080
        %v2191 = vsel %vm920, %v2125, %v2081
        %v2192 = vsel %vm920, %v2126, %v2082
        %v2193 = vsel %vm920, %v2127, %v2083
        %v2194 = vsel %vm920, %v2128, %v2084
        %v2195 = vsel %vm920, %v2129, %v2085
        %v2196 = vsel %vm920, %v2130, %v2086
        %v2197 = vsel %vm920, %v2131, %v2087
        %v2198 = vsel %vm920, %v2132, %v2088
        %v2199 = vsel %vm920, %v2133, %v2089
        %v2200 = vsel %vm920, %v2134, %v2090
        %v2201 = vsel %vm920, %v2135, %v2091
        %v2202 = vsel %vm920, %v2136, %v2092
        %vm2203 = vcmask 523264
        %2204 = vst.msk [vmem:[#allocation2] sm:$0xff] %vm2203, %v2162
        %2205 = vst.msk [vmem:[#allocation2 + $0x8] sm:$0xff] %vm2203, %v2140
        %2206 = vst.msk [vmem:[#allocation2 + $0x10] sm:$0xff] %vm2203, %v2163
        %2207 = vst.msk [vmem:[#allocation2 + $0x18] sm:$0xff] %vm2203, %v2141
        %2208 = vst.msk [vmem:[#allocation2 + $0x20] sm:$0xff] %vm2203, %v2164
        %2209 = vst.msk [vmem:[#allocation2 + $0x28] sm:$0xff] %vm2203, %v2142
        %2210 = vst.msk [vmem:[#allocation2 + $0x30] sm:$0xff] %vm2203, %v2165
        %2211 = vst.msk [vmem:[#allocation2 + $0x38] sm:$0xff] %vm2203, %v2143
        %2212 = vst.msk [vmem:[#allocation2 + $0x40] sm:$0xff] %vm2203, %v2166
        %2213 = vst.msk [vmem:[#allocation2 + $0x48] sm:$0xff] %vm2203, %v2144
        %2214 = vst.msk [vmem:[#allocation2 + $0x50] sm:$0xff] %vm2203, %v2167
        %2215 = vst.msk [vmem:[#allocation2 + $0x58] sm:$0xff] %vm2203, %v2145
        %2216 = vst.msk [vmem:[#allocation2 + $0x60] sm:$0xff] %vm2203, %v2168
        %2217 = vst.msk [vmem:[#allocation2 + $0x68] sm:$0xff] %vm2203, %v2146
        %2218 = vst.msk [vmem:[#allocation2 + $0x70] sm:$0xff] %vm2203, %v2169
        %2219 = vst.msk [vmem:[#allocation2 + $0x78] sm:$0xff] %vm2203, %v2147
        %2220 = vst.msk [vmem:[#allocation2 + $0x80] sm:$0xff] %vm2203, %v2170
        %2221 = vst.msk [vmem:[#allocation2 + $0x88] sm:$0xff] %vm2203, %v2148
        %2222 = vst.msk [vmem:[#allocation2 + $0x90] sm:$0xff] %vm2203, %v2171
        %2223 = vst.msk [vmem:[#allocation2 + $0x98] sm:$0xff] %vm2203, %v2149
        %2224 = vst.msk [vmem:[#allocation2 + $0xa0] sm:$0xff] %vm2203, %v2172
        %2225 = vst.msk [vmem:[#allocation2 + $0xa8] sm:$0xff] %vm2203, %v2150
        %2226 = vst.msk [vmem:[#allocation2 + $0xb0] sm:$0xff] %vm2203, %v2173
        %2227 = vst.msk [vmem:[#allocation2 + $0xb8] sm:$0xff] %vm2203, %v2151
        %2228 = vst.msk [vmem:[#allocation2 + $0xc0] sm:$0xff] %vm2203, %v2174
        %2229 = vst.msk [vmem:[#allocation2 + $0xc8] sm:$0xff] %vm2203, %v2152
        %2230 = vst.msk [vmem:[#allocation2 + $0xd0] sm:$0xff] %vm2203, %v2175
        %2231 = vst.msk [vmem:[#allocation2 + $0xd8] sm:$0xff] %vm2203, %v2153
        %2232 = vst.msk [vmem:[#allocation2 + $0xe0] sm:$0xff] %vm2203, %v2176
        %2233 = vst.msk [vmem:[#allocation2 + $0xe8] sm:$0xff] %vm2203, %v2154
        %2234 = vst.msk [vmem:[#allocation2 + $0xf0] sm:$0xff] %vm2203, %v2177
        %2235 = vst.msk [vmem:[#allocation2 + $0xf8] sm:$0xff] %vm2203, %v2155
        %v2236 = vlaneseq
        %v2237 = vshrl.u32 %v2236, 7
        %v2238 = vsub.s32 3, %v2237
        %v2239 = vrot.slane %v362, %v2238
        %v2240 = vmul.f32 %v2159, %v2239
        %v2241 = vmul.f32 %v2137, %v2239
        %v2242 = vmul.f32 %v2160, %v2239
        %v2243 = vmul.f32 %v2138, %v2239
        %v2244 = vmul.f32 %v2161, %v2239
        %v2245 = vmul.f32 %v2139, %v2239
        %v2246 = vmul.f32 %v2162, %v2239
        %v2247 = vmul.f32 %v2140, %v2239
        %v2248 = vmul.f32 %v2163, %v2239
        %v2249 = vmul.f32 %v2141, %v2239
        %v2250 = vmul.f32 %v2164, %v2239
        %v2251 = vmul.f32 %v2142, %v2239
        %v2252 = vmul.f32 %v2165, %v2239
        %v2253 = vmul.f32 %v2143, %v2239
        %v2254 = vmul.f32 %v2166, %v2239
        %v2255 = vmul.f32 %v2144, %v2239
        %v2256 = vmul.f32 %v2167, %v2239
        %v2257 = vmul.f32 %v2145, %v2239
        %v2258 = vmul.f32 %v2168, %v2239
        %v2259 = vmul.f32 %v2146, %v2239
        %v2260 = vmul.f32 %v2169, %v2239
        %v2261 = vmul.f32 %v2147, %v2239
        %v2262 = vmul.f32 %v2170, %v2239
        %v2263 = vmul.f32 %v2148, %v2239
        %v2264 = vmul.f32 %v2171, %v2239
        %v2265 = vmul.f32 %v2149, %v2239
        %v2266 = vmul.f32 %v2172, %v2239
        %v2267 = vmul.f32 %v2150, %v2239
        %v2268 = vmul.f32 %v2173, %v2239
        %v2269 = vmul.f32 %v2151, %v2239
        %v2270 = vmul.f32 %v2174, %v2239
        %v2271 = vmul.f32 %v2152, %v2239
        %v2272 = vadd.f32 %v1431, %v2240
        %v2273 = vadd.f32 %v1432, %v2241
        %v2274 = vadd.f32 %v1433, %v2242
        %v2275 = vadd.f32 %v1434, %v2243
        %v2276 = vadd.f32 %v1435, %v2244
        %v2277 = vadd.f32 %v1436, %v2245
        %v2278 = vadd.f32 %v1437, %v2246
        %v2279 = vadd.f32 %v1438, %v2247
        %v2280 = vadd.f32 %v1439, %v2248
        %v2281 = vadd.f32 %v1440, %v2249
        %v2282 = vadd.f32 %v1441, %v2250
        %v2283 = vadd.f32 %v1442, %v2251
        %v2284 = vadd.f32 %v1443, %v2252
        %v2285 = vadd.f32 %v1444, %v2253
        %v2286 = vadd.f32 %v1445, %v2254
        %v2287 = vadd.f32 %v1446, %v2255
        %v2288 = vadd.f32 %v1447, %v2256
        %v2289 = vadd.f32 %v1448, %v2257
        %v2290 = vadd.f32 %v1449, %v2258
        %v2291 = vadd.f32 %v1450, %v2259
        %v2292 = vadd.f32 %v1451, %v2260
        %v2293 = vadd.f32 %v1452, %v2261
        %v2294 = vadd.f32 %v1453, %v2262
        %v2295 = vadd.f32 %v1454, %v2263
        %v2296 = vadd.f32 %v1455, %v2264
        %v2297 = vadd.f32 %v1456, %v2265
        %v2298 = vadd.f32 %v1457, %v2266
        %v2299 = vadd.f32 %v1458, %v2267
        %v2300 = vadd.f32 %v1459, %v2268
        %v2301 = vadd.f32 %v1460, %v2269
        %v2302 = vadd.f32 %v1461, %v2270
        %v2303 = vadd.f32 %v1462, %v2271
        %v2304 = vlaneseq
        %v2305 = vshrl.u32 %v2304, 7
        %v2306 = vsub.s32 2, %v2305
        %v2307 = vrot.slane %v363, %v2306
        %v2308 = vmul.f32 %v2160, %v2307
        %v2309 = vmul.f32 %v2138, %v2307
        %v2310 = vmul.f32 %v2161, %v2307
        %v2311 = vmul.f32 %v2139, %v2307
        %v2312 = vmul.f32 %v2162, %v2307
        %v2313 = vmul.f32 %v2140, %v2307
        %v2314 = vmul.f32 %v2163, %v2307
        %v2315 = vmul.f32 %v2141, %v2307
        %v2316 = vmul.f32 %v2164, %v2307
        %v2317 = vmul.f32 %v2142, %v2307
        %v2318 = vmul.f32 %v2165, %v2307
        %v2319 = vmul.f32 %v2143, %v2307
        %v2320 = vmul.f32 %v2166, %v2307
        %v2321 = vmul.f32 %v2144, %v2307
        %v2322 = vmul.f32 %v2167, %v2307
        %v2323 = vmul.f32 %v2145, %v2307
        %v2324 = vmul.f32 %v2168, %v2307
        %v2325 = vmul.f32 %v2146, %v2307
        %v2326 = vmul.f32 %v2169, %v2307
        %v2327 = vmul.f32 %v2147, %v2307
        %v2328 = vmul.f32 %v2170, %v2307
        %v2329 = vmul.f32 %v2148, %v2307
        %v2330 = vmul.f32 %v2171, %v2307
        %v2331 = vmul.f32 %v2149, %v2307
        %v2332 = vmul.f32 %v2172, %v2307
        %v2333 = vmul.f32 %v2150, %v2307
        %v2334 = vmul.f32 %v2173, %v2307
        %v2335 = vmul.f32 %v2151, %v2307
        %v2336 = vmul.f32 %v2174, %v2307
        %v2337 = vmul.f32 %v2152, %v2307
        %v2338 = vmul.f32 %v2175, %v2307
        %v2339 = vmul.f32 %v2153, %v2307
        %v2340 = vadd.f32 %v2272, %v2308
        %v2341 = vadd.f32 %v2273, %v2309
        %v2342 = vadd.f32 %v2274, %v2310
        %v2343 = vadd.f32 %v2275, %v2311
        %v2344 = vadd.f32 %v2276, %v2312
        %v2345 = vadd.f32 %v2277, %v2313
        %v2346 = vadd.f32 %v2278, %v2314
        %v2347 = vadd.f32 %v2279, %v2315
        %v2348 = vadd.f32 %v2280, %v2316
        %v2349 = vadd.f32 %v2281, %v2317
        %v2350 = vadd.f32 %v2282, %v2318
        %v2351 = vadd.f32 %v2283, %v2319
        %v2352 = vadd.f32 %v2284, %v2320
        %v2353 = vadd.f32 %v2285, %v2321
        %v2354 = vadd.f32 %v2286, %v2322
        %v2355 = vadd.f32 %v2287, %v2323
        %v2356 = vadd.f32 %v2288, %v2324
        %v2357 = vadd.f32 %v2289, %v2325
        %v2358 = vadd.f32 %v2290, %v2326
        %v2359 = vadd.f32 %v2291, %v2327
        %v2360 = vadd.f32 %v2292, %v2328
        %v2361 = vadd.f32 %v2293, %v2329
        %v2362 = vadd.f32 %v2294, %v2330
        %v2363 = vadd.f32 %v2295, %v2331
        %v2364 = vadd.f32 %v2296, %v2332
        %v2365 = vadd.f32 %v2297, %v2333
        %v2366 = vadd.f32 %v2298, %v2334
        %v2367 = vadd.f32 %v2299, %v2335
        %v2368 = vadd.f32 %v2300, %v2336
        %v2369 = vadd.f32 %v2301, %v2337
        %v2370 = vadd.f32 %v2302, %v2338
        %v2371 = vadd.f32 %v2303, %v2339
        %v2372 = vlaneseq
        %v2373 = vshrl.u32 %v2372, 7
        %v2374 = vsub.s32 1, %v2373
        %v2375 = vrot.slane %v364, %v2374
        %v2376 = vmul.f32 %v2161, %v2375
        %v2377 = vmul.f32 %v2139, %v2375
        %v2378 = vmul.f32 %v2162, %v2375
        %v2379 = vmul.f32 %v2140, %v2375
        %v2380 = vmul.f32 %v2163, %v2375
        %v2381 = vmul.f32 %v2141, %v2375
        %v2382 = vmul.f32 %v2164, %v2375
        %v2383 = vmul.f32 %v2142, %v2375
        %v2384 = vmul.f32 %v2165, %v2375
        %v2385 = vmul.f32 %v2143, %v2375
        %v2386 = vmul.f32 %v2166, %v2375
        %v2387 = vmul.f32 %v2144, %v2375
        %v2388 = vmul.f32 %v2167, %v2375
        %v2389 = vmul.f32 %v2145, %v2375
        %v2390 = vmul.f32 %v2168, %v2375
        %v2391 = vmul.f32 %v2146, %v2375
        %v2392 = vmul.f32 %v2169, %v2375
        %v2393 = vmul.f32 %v2147, %v2375
        %v2394 = vmul.f32 %v2170, %v2375
        %v2395 = vmul.f32 %v2148, %v2375
        %v2396 = vmul.f32 %v2171, %v2375
        %v2397 = vmul.f32 %v2149, %v2375
        %v2398 = vmul.f32 %v2172, %v2375
        %v2399 = vmul.f32 %v2150, %v2375
        %v2400 = vmul.f32 %v2173, %v2375
        %v2401 = vmul.f32 %v2151, %v2375
        %v2402 = vmul.f32 %v2174, %v2375
        %v2403 = vmul.f32 %v2152, %v2375
        %v2404 = vmul.f32 %v2175, %v2375
        %v2405 = vmul.f32 %v2153, %v2375
        %v2406 = vmul.f32 %v2176, %v2375
        %v2407 = vmul.f32 %v2154, %v2375
        %v2408 = vadd.f32 %v2340, %v2376
        %v2409 = vadd.f32 %v2341, %v2377
        %v2410 = vadd.f32 %v2342, %v2378
        %v2411 = vadd.f32 %v2343, %v2379
        %v2412 = vadd.f32 %v2344, %v2380
        %v2413 = vadd.f32 %v2345, %v2381
        %v2414 = vadd.f32 %v2346, %v2382
        %v2415 = vadd.f32 %v2347, %v2383
        %v2416 = vadd.f32 %v2348, %v2384
        %v2417 = vadd.f32 %v2349, %v2385
        %v2418 = vadd.f32 %v2350, %v2386
        %v2419 = vadd.f32 %v2351, %v2387
        %v2420 = vadd.f32 %v2352, %v2388
        %v2421 = vadd.f32 %v2353, %v2389
        %v2422 = vadd.f32 %v2354, %v2390
        %v2423 = vadd.f32 %v2355, %v2391
        %v2424 = vadd.f32 %v2356, %v2392
        %v2425 = vadd.f32 %v2357, %v2393
        %v2426 = vadd.f32 %v2358, %v2394
        %v2427 = vadd.f32 %v2359, %v2395
        %v2428 = vadd.f32 %v2360, %v2396
        %v2429 = vadd.f32 %v2361, %v2397
        %v2430 = vadd.f32 %v2362, %v2398
        %v2431 = vadd.f32 %v2363, %v2399
        %v2432 = vadd.f32 %v2364, %v2400
        %v2433 = vadd.f32 %v2365, %v2401
        %v2434 = vadd.f32 %v2366, %v2402
        %v2435 = vadd.f32 %v2367, %v2403
        %v2436 = vadd.f32 %v2368, %v2404
        %v2437 = vadd.f32 %v2369, %v2405
        %v2438 = vadd.f32 %v2370, %v2406
        %v2439 = vadd.f32 %v2371, %v2407
        %v2440 = vlaneseq
        %v2441 = vshrl.u32 %v2440, 7
        %v2442 = vsub.s32 0, %v2441
        %v2443 = vrot.slane %v365, %v2442
        %v2444 = vmul.f32 %v2162, %v2443
        %v2445 = vmul.f32 %v2140, %v2443
        %v2446 = vmul.f32 %v2163, %v2443
        %v2447 = vmul.f32 %v2141, %v2443
        %v2448 = vmul.f32 %v2164, %v2443
        %v2449 = vmul.f32 %v2142, %v2443
        %v2450 = vmul.f32 %v2165, %v2443
        %v2451 = vmul.f32 %v2143, %v2443
        %v2452 = vmul.f32 %v2166, %v2443
        %v2453 = vmul.f32 %v2144, %v2443
        %v2454 = vmul.f32 %v2167, %v2443
        %v2455 = vmul.f32 %v2145, %v2443
        %v2456 = vmul.f32 %v2168, %v2443
        %v2457 = vmul.f32 %v2146, %v2443
        %v2458 = vmul.f32 %v2169, %v2443
        %v2459 = vmul.f32 %v2147, %v2443
        %v2460 = vmul.f32 %v2170, %v2443
        %v2461 = vmul.f32 %v2148, %v2443
        %v2462 = vmul.f32 %v2171, %v2443
        %v2463 = vmul.f32 %v2149, %v2443
        %v2464 = vmul.f32 %v2172, %v2443
        %v2465 = vmul.f32 %v2150, %v2443
        %v2466 = vmul.f32 %v2173, %v2443
        %v2467 = vmul.f32 %v2151, %v2443
        %v2468 = vmul.f32 %v2174, %v2443
        %v2469 = vmul.f32 %v2152, %v2443
        %v2470 = vmul.f32 %v2175, %v2443
        %v2471 = vmul.f32 %v2153, %v2443
        %v2472 = vmul.f32 %v2176, %v2443
        %v2473 = vmul.f32 %v2154, %v2443
        %v2474 = vmul.f32 %v2177, %v2443
        %v2475 = vmul.f32 %v2155, %v2443
        %v2476 = vadd.f32 %v2408, %v2444
        %v2477 = vadd.f32 %v2409, %v2445
        %v2478 = vadd.f32 %v2410, %v2446
        %v2479 = vadd.f32 %v2411, %v2447
        %v2480 = vadd.f32 %v2412, %v2448
        %v2481 = vadd.f32 %v2413, %v2449
        %v2482 = vadd.f32 %v2414, %v2450
        %v2483 = vadd.f32 %v2415, %v2451
        %v2484 = vadd.f32 %v2416, %v2452
        %v2485 = vadd.f32 %v2417, %v2453
        %v2486 = vadd.f32 %v2418, %v2454
        %v2487 = vadd.f32 %v2419, %v2455
        %v2488 = vadd.f32 %v2420, %v2456
        %v2489 = vadd.f32 %v2421, %v2457
        %v2490 = vadd.f32 %v2422, %v2458
        %v2491 = vadd.f32 %v2423, %v2459
        %v2492 = vadd.f32 %v2424, %v2460
        %v2493 = vadd.f32 %v2425, %v2461
        %v2494 = vadd.f32 %v2426, %v2462
        %v2495 = vadd.f32 %v2427, %v2463
        %v2496 = vadd.f32 %v2428, %v2464
        %v2497 = vadd.f32 %v2429, %v2465
        %v2498 = vadd.f32 %v2430, %v2466
        %v2499 = vadd.f32 %v2431, %v2467
        %v2500 = vadd.f32 %v2432, %v2468
        %v2501 = vadd.f32 %v2433, %v2469
        %v2502 = vadd.f32 %v2434, %v2470
        %v2503 = vadd.f32 %v2435, %v2471
        %v2504 = vadd.f32 %v2436, %v2472
        %v2505 = vadd.f32 %v2437, %v2473
        %v2506 = vadd.f32 %v2438, %v2474
        %v2507 = vadd.f32 %v2439, %v2475
        %v2508 = vlaneseq
        %v2509 = vshrl.u32 %v2508, 7
        %v2510 = vsub.s32 7, %v2509
        %v2511 = vrot.slane %v365, %v2510
        %v2512 = vmul.f32 %v2163, %v2511
        %v2513 = vmul.f32 %v2141, %v2511
        %v2514 = vmul.f32 %v2164, %v2511
        %v2515 = vmul.f32 %v2142, %v2511
        %v2516 = vmul.f32 %v2165, %v2511
        %v2517 = vmul.f32 %v2143, %v2511
        %v2518 = vmul.f32 %v2166, %v2511
        %v2519 = vmul.f32 %v2144, %v2511
        %v2520 = vmul.f32 %v2167, %v2511
        %v2521 = vmul.f32 %v2145, %v2511
        %v2522 = vmul.f32 %v2168, %v2511
        %v2523 = vmul.f32 %v2146, %v2511
        %v2524 = vmul.f32 %v2169, %v2511
        %v2525 = vmul.f32 %v2147, %v2511
        %v2526 = vmul.f32 %v2170, %v2511
        %v2527 = vmul.f32 %v2148, %v2511
        %v2528 = vmul.f32 %v2171, %v2511
        %v2529 = vmul.f32 %v2149, %v2511
        %v2530 = vmul.f32 %v2172, %v2511
        %v2531 = vmul.f32 %v2150, %v2511
        %v2532 = vmul.f32 %v2173, %v2511
        %v2533 = vmul.f32 %v2151, %v2511
        %v2534 = vmul.f32 %v2174, %v2511
        %v2535 = vmul.f32 %v2152, %v2511
        %v2536 = vmul.f32 %v2175, %v2511
        %v2537 = vmul.f32 %v2153, %v2511
        %v2538 = vmul.f32 %v2176, %v2511
        %v2539 = vmul.f32 %v2154, %v2511
        %v2540 = vmul.f32 %v2177, %v2511
        %v2541 = vmul.f32 %v2155, %v2511
        %v2542 = vmul.f32 %v2178, %v2511
        %v2543 = vmul.f32 %v2156, %v2511
        %v2544 = vadd.f32 %v2476, %v2512
        %v2545 = vadd.f32 %v2477, %v2513
        %v2546 = vadd.f32 %v2478, %v2514
        %v2547 = vadd.f32 %v2479, %v2515
        %v2548 = vadd.f32 %v2480, %v2516
        %v2549 = vadd.f32 %v2481, %v2517
        %v2550 = vadd.f32 %v2482, %v2518
        %v2551 = vadd.f32 %v2483, %v2519
        %v2552 = vadd.f32 %v2484, %v2520
        %v2553 = vadd.f32 %v2485, %v2521
        %v2554 = vadd.f32 %v2486, %v2522
        %v2555 = vadd.f32 %v2487, %v2523
        %v2556 = vadd.f32 %v2488, %v2524
        %v2557 = vadd.f32 %v2489, %v2525
        %v2558 = vadd.f32 %v2490, %v2526
        %v2559 = vadd.f32 %v2491, %v2527
        %v2560 = vadd.f32 %v2492, %v2528
        %v2561 = vadd.f32 %v2493, %v2529
        %v2562 = vadd.f32 %v2494, %v2530
        %v2563 = vadd.f32 %v2495, %v2531
        %v2564 = vadd.f32 %v2496, %v2532
        %v2565 = vadd.f32 %v2497, %v2533
        %v2566 = vadd.f32 %v2498, %v2534
        %v2567 = vadd.f32 %v2499, %v2535
        %v2568 = vadd.f32 %v2500, %v2536
        %v2569 = vadd.f32 %v2501, %v2537
        %v2570 = vadd.f32 %v2502, %v2538
        %v2571 = vadd.f32 %v2503, %v2539
        %v2572 = vadd.f32 %v2504, %v2540
        %v2573 = vadd.f32 %v2505, %v2541
        %v2574 = vadd.f32 %v2506, %v2542
        %v2575 = vadd.f32 %v2507, %v2543
        %v2576 = vlaneseq
        %v2577 = vshrl.u32 %v2576, 7
        %v2578 = vsub.s32 6, %v2577
        %v2579 = vrot.slane %v366, %v2578
        %v2580 = vmul.f32 %v2164, %v2579
        %v2581 = vmul.f32 %v2142, %v2579
        %v2582 = vmul.f32 %v2165, %v2579
        %v2583 = vmul.f32 %v2143, %v2579
        %v2584 = vmul.f32 %v2166, %v2579
        %v2585 = vmul.f32 %v2144, %v2579
        %v2586 = vmul.f32 %v2167, %v2579
        %v2587 = vmul.f32 %v2145, %v2579
        %v2588 = vmul.f32 %v2168, %v2579
        %v2589 = vmul.f32 %v2146, %v2579
        %v2590 = vmul.f32 %v2169, %v2579
        %v2591 = vmul.f32 %v2147, %v2579
        %v2592 = vmul.f32 %v2170, %v2579
        %v2593 = vmul.f32 %v2148, %v2579
        %v2594 = vmul.f32 %v2171, %v2579
        %v2595 = vmul.f32 %v2149, %v2579
        %v2596 = vmul.f32 %v2172, %v2579
        %v2597 = vmul.f32 %v2150, %v2579
        %v2598 = vmul.f32 %v2173, %v2579
        %v2599 = vmul.f32 %v2151, %v2579
        %v2600 = vmul.f32 %v2174, %v2579
        %v2601 = vmul.f32 %v2152, %v2579
        %v2602 = vmul.f32 %v2175, %v2579
        %v2603 = vmul.f32 %v2153, %v2579
        %v2604 = vmul.f32 %v2176, %v2579
        %v2605 = vmul.f32 %v2154, %v2579
        %v2606 = vmul.f32 %v2177, %v2579
        %v2607 = vmul.f32 %v2155, %v2579
        %v2608 = vmul.f32 %v2178, %v2579
        %v2609 = vmul.f32 %v2156, %v2579
        %v2610 = vmul.f32 %v2179, %v2579
        %v2611 = vmul.f32 %v2157, %v2579
        %v2612 = vadd.f32 %v2544, %v2580
        %v2613 = vadd.f32 %v2545, %v2581
        %v2614 = vadd.f32 %v2546, %v2582
        %v2615 = vadd.f32 %v2547, %v2583
        %v2616 = vadd.f32 %v2548, %v2584
        %v2617 = vadd.f32 %v2549, %v2585
        %v2618 = vadd.f32 %v2550, %v2586
        %v2619 = vadd.f32 %v2551, %v2587
        %v2620 = vadd.f32 %v2552, %v2588
        %v2621 = vadd.f32 %v2553, %v2589
        %v2622 = vadd.f32 %v2554, %v2590
        %v2623 = vadd.f32 %v2555, %v2591
        %v2624 = vadd.f32 %v2556, %v2592
        %v2625 = vadd.f32 %v2557, %v2593
        %v2626 = vadd.f32 %v2558, %v2594
        %v2627 = vadd.f32 %v2559, %v2595
        %v2628 = vadd.f32 %v2560, %v2596
        %v2629 = vadd.f32 %v2561, %v2597
        %v2630 = vadd.f32 %v2562, %v2598
        %v2631 = vadd.f32 %v2563, %v2599
        %v2632 = vadd.f32 %v2564, %v2600
        %v2633 = vadd.f32 %v2565, %v2601
        %v2634 = vadd.f32 %v2566, %v2602
        %v2635 = vadd.f32 %v2567, %v2603
        %v2636 = vadd.f32 %v2568, %v2604
        %v2637 = vadd.f32 %v2569, %v2605
        %v2638 = vadd.f32 %v2570, %v2606
        %v2639 = vadd.f32 %v2571, %v2607
        %v2640 = vadd.f32 %v2572, %v2608
        %v2641 = vadd.f32 %v2573, %v2609
        %v2642 = vadd.f32 %v2574, %v2610
        %v2643 = vadd.f32 %v2575, %v2611
        %v2644 = vlaneseq
        %v2645 = vshrl.u32 %v2644, 7
        %v2646 = vsub.s32 5, %v2645
        %v2647 = vrot.slane %v367, %v2646
        %v2648 = vmul.f32 %v2165, %v2647
        %v2649 = vmul.f32 %v2143, %v2647
        %v2650 = vmul.f32 %v2166, %v2647
        %v2651 = vmul.f32 %v2144, %v2647
        %v2652 = vmul.f32 %v2167, %v2647
        %v2653 = vmul.f32 %v2145, %v2647
        %v2654 = vmul.f32 %v2168, %v2647
        %v2655 = vmul.f32 %v2146, %v2647
        %v2656 = vmul.f32 %v2169, %v2647
        %v2657 = vmul.f32 %v2147, %v2647
        %v2658 = vmul.f32 %v2170, %v2647
        %v2659 = vmul.f32 %v2148, %v2647
        %v2660 = vmul.f32 %v2171, %v2647
        %v2661 = vmul.f32 %v2149, %v2647
        %v2662 = vmul.f32 %v2172, %v2647
        %v2663 = vmul.f32 %v2150, %v2647
        %v2664 = vmul.f32 %v2173, %v2647
        %v2665 = vmul.f32 %v2151, %v2647
        %v2666 = vmul.f32 %v2174, %v2647
        %v2667 = vmul.f32 %v2152, %v2647
        %v2668 = vmul.f32 %v2175, %v2647
        %v2669 = vmul.f32 %v2153, %v2647
        %v2670 = vmul.f32 %v2176, %v2647
        %v2671 = vmul.f32 %v2154, %v2647
        %v2672 = vmul.f32 %v2177, %v2647
        %v2673 = vmul.f32 %v2155, %v2647
        %v2674 = vmul.f32 %v2178, %v2647
        %v2675 = vmul.f32 %v2156, %v2647
        %v2676 = vmul.f32 %v2179, %v2647
        %v2677 = vmul.f32 %v2157, %v2647
        %v2678 = vmul.f32 %v2180, %v2647
        %v2679 = vmul.f32 %v2158, %v2647
        %v2680 = vadd.f32 %v2612, %v2648
        %v2681 = vadd.f32 %v2613, %v2649
        %v2682 = vadd.f32 %v2614, %v2650
        %v2683 = vadd.f32 %v2615, %v2651
        %v2684 = vadd.f32 %v2616, %v2652
        %v2685 = vadd.f32 %v2617, %v2653
        %v2686 = vadd.f32 %v2618, %v2654
        %v2687 = vadd.f32 %v2619, %v2655
        %v2688 = vadd.f32 %v2620, %v2656
        %v2689 = vadd.f32 %v2621, %v2657
        %v2690 = vadd.f32 %v2622, %v2658
        %v2691 = vadd.f32 %v2623, %v2659
        %v2692 = vadd.f32 %v2624, %v2660
        %v2693 = vadd.f32 %v2625, %v2661
        %v2694 = vadd.f32 %v2626, %v2662
        %v2695 = vadd.f32 %v2627, %v2663
        %v2696 = vadd.f32 %v2628, %v2664
        %v2697 = vadd.f32 %v2629, %v2665
        %v2698 = vadd.f32 %v2630, %v2666
        %v2699 = vadd.f32 %v2631, %v2667
        %v2700 = vadd.f32 %v2632, %v2668
        %v2701 = vadd.f32 %v2633, %v2669
        %v2702 = vadd.f32 %v2634, %v2670
        %v2703 = vadd.f32 %v2635, %v2671
        %v2704 = vadd.f32 %v2636, %v2672
        %v2705 = vadd.f32 %v2637, %v2673
        %v2706 = vadd.f32 %v2638, %v2674
        %v2707 = vadd.f32 %v2639, %v2675
        %v2708 = vadd.f32 %v2640, %v2676
        %v2709 = vadd.f32 %v2641, %v2677
        %v2710 = vadd.f32 %v2642, %v2678
        %v2711 = vadd.f32 %v2643, %v2679
        %v2712 = vrot.slane %v2159, 1
        %v2713 = vrot.slane %v2160, 1
        %v2714 = vrot.slane %v2161, 1
        %v2715 = vrot.slane %v2162, 1
        %v2716 = vrot.slane %v2163, 1
        %v2717 = vrot.slane %v2164, 1
        %v2718 = vrot.slane %v2165, 1
        %v2719 = vrot.slane %v2166, 1
        %v2720 = vrot.slane %v2167, 1
        %v2721 = vrot.slane %v2168, 1
        %v2722 = vrot.slane %v2169, 1
        %v2723 = vrot.slane %v2170, 1
        %v2724 = vrot.slane %v2171, 1
        %v2725 = vrot.slane %v2172, 1
        %v2726 = vrot.slane %v2173, 1
        %v2727 = vrot.slane %v2174, 1
        %v2728 = vrot.slane %v2175, 1
        %v2729 = vrot.slane %v2176, 1
        %v2730 = vrot.slane %v2177, 1
        %v2731 = vrot.slane %v2178, 1
        %v2732 = vrot.slane %v2179, 1
        %v2733 = vrot.slane %v2180, 1
        %v2734 = vrot.slane %v2137, 1
        %v2735 = vrot.slane %v2138, 1
        %v2736 = vrot.slane %v2139, 1
        %v2737 = vrot.slane %v2140, 1
        %v2738 = vrot.slane %v2141, 1
        %v2739 = vrot.slane %v2142, 1
        %v2740 = vrot.slane %v2143, 1
        %v2741 = vrot.slane %v2144, 1
        %v2742 = vrot.slane %v2145, 1
        %v2743 = vrot.slane %v2146, 1
        %v2744 = vrot.slane %v2147, 1
        %v2745 = vrot.slane %v2148, 1
        %v2746 = vrot.slane %v2149, 1
        %v2747 = vrot.slane %v2150, 1
        %v2748 = vrot.slane %v2151, 1
        %v2749 = vrot.slane %v2152, 1
        %v2750 = vrot.slane %v2153, 1
        %v2751 = vrot.slane %v2154, 1
        %v2752 = vrot.slane %v2155, 1
        %v2753 = vrot.slane %v2156, 1
        %v2754 = vrot.slane %v2157, 1
        %v2755 = vrot.slane %v2158, 1
        %v2756 = vrot.slane %v2181, 1
        %v2757 = vrot.slane %v2182, 1
        %v2758 = vrot.slane %v2183, 1
        %v2759 = vrot.slane %v2184, 1
        %v2760 = vrot.slane %v2185, 1
        %v2761 = vrot.slane %v2186, 1
        %v2762 = vrot.slane %v2187, 1
        %v2763 = vrot.slane %v2188, 1
        %v2764 = vrot.slane %v2189, 1
        %v2765 = vrot.slane %v2190, 1
        %v2766 = vrot.slane %v2191, 1
        %v2767 = vrot.slane %v2192, 1
        %v2768 = vrot.slane %v2193, 1
        %v2769 = vrot.slane %v2194, 1
        %v2770 = vrot.slane %v2195, 1
        %v2771 = vrot.slane %v2196, 1
        %v2772 = vrot.slane %v2197, 1
        %v2773 = vrot.slane %v2198, 1
        %v2774 = vrot.slane %v2199, 1
        %v2775 = vrot.slane %v2200, 1
        %v2776 = vrot.slane %v2201, 1
        %v2777 = vrot.slane %v2202, 1
        %v2778 = vsel %vm920, %v2734, %v2756
        %v2779 = vsel %vm920, %v2735, %v2757
        %v2780 = vsel %vm920, %v2736, %v2758
        %v2781 = vsel %vm920, %v2737, %v2759
        %v2782 = vsel %vm920, %v2738, %v2760
        %v2783 = vsel %vm920, %v2739, %v2761
        %v2784 = vsel %vm920, %v2740, %v2762
        %v2785 = vsel %vm920, %v2741, %v2763
        %v2786 = vsel %vm920, %v2742, %v2764
        %v2787 = vsel %vm920, %v2743, %v2765
        %v2788 = vsel %vm920, %v2744, %v2766
        %v2789 = vsel %vm920, %v2745, %v2767
        %v2790 = vsel %vm920, %v2746, %v2768
        %v2791 = vsel %vm920, %v2747, %v2769
        %v2792 = vsel %vm920, %v2748, %v2770
        %v2793 = vsel %vm920, %v2749, %v2771
        %v2794 = vsel %vm920, %v2750, %v2772
        %v2795 = vsel %vm920, %v2751, %v2773
        %v2796 = vsel %vm920, %v2752, %v2774
        %v2797 = vsel %vm920, %v2753, %v2775
        %v2798 = vsel %vm920, %v2754, %v2776
        %v2799 = vsel %vm920, %v2755, %v2777
        %v2800 = vsel %vm920, %v2712, %v2734
        %v2801 = vsel %vm920, %v2713, %v2735
        %v2802 = vsel %vm920, %v2714, %v2736
        %v2803 = vsel %vm920, %v2715, %v2737
        %v2804 = vsel %vm920, %v2716, %v2738
        %v2805 = vsel %vm920, %v2717, %v2739
        %v2806 = vsel %vm920, %v2718, %v2740
        %v2807 = vsel %vm920, %v2719, %v2741
        %v2808 = vsel %vm920, %v2720, %v2742
        %v2809 = vsel %vm920, %v2721, %v2743
        %v2810 = vsel %vm920, %v2722, %v2744
        %v2811 = vsel %vm920, %v2723, %v2745
        %v2812 = vsel %vm920, %v2724, %v2746
        %v2813 = vsel %vm920, %v2725, %v2747
        %v2814 = vsel %vm920, %v2726, %v2748
        %v2815 = vsel %vm920, %v2727, %v2749
        %v2816 = vsel %vm920, %v2728, %v2750
        %v2817 = vsel %vm920, %v2729, %v2751
        %v2818 = vsel %vm920, %v2730, %v2752
        %v2819 = vsel %vm920, %v2731, %v2753
        %v2820 = vsel %vm920, %v2732, %v2754
        %v2821 = vsel %vm920, %v2733, %v2755
        %v2822 = vsel %vm920, %v2756, %v2712
        %v2823 = vsel %vm920, %v2757, %v2713
        %v2824 = vsel %vm920, %v2758, %v2714
        %v2825 = vsel %vm920, %v2759, %v2715
        %v2826 = vsel %vm920, %v2760, %v2716
        %v2827 = vsel %vm920, %v2761, %v2717
        %v2828 = vsel %vm920, %v2762, %v2718
        %v2829 = vsel %vm920, %v2763, %v2719
        %v2830 = vsel %vm920, %v2764, %v2720
        %v2831 = vsel %vm920, %v2765, %v2721
        %v2832 = vsel %vm920, %v2766, %v2722
        %v2833 = vsel %vm920, %v2767, %v2723
        %v2834 = vsel %vm920, %v2768, %v2724
        %v2835 = vsel %vm920, %v2769, %v2725
        %v2836 = vsel %vm920, %v2770, %v2726
        %v2837 = vsel %vm920, %v2771, %v2727
        %v2838 = vsel %vm920, %v2772, %v2728
        %v2839 = vsel %vm920, %v2773, %v2729
        %v2840 = vsel %vm920, %v2774, %v2730
        %v2841 = vsel %vm920, %v2775, %v2731
        %v2842 = vsel %vm920, %v2776, %v2732
        %v2843 = vsel %vm920, %v2777, %v2733
        %v2844 = vlaneseq
        %v2845 = vshrl.u32 %v2844, 7
        %v2846 = vsub.s32 4, %v2845
        %v2847 = vrot.slane %v362, %v2846
        %v2848 = vmul.f32 %v2800, %v2847
        %v2849 = vmul.f32 %v2778, %v2847
        %v2850 = vmul.f32 %v2801, %v2847
        %v2851 = vmul.f32 %v2779, %v2847
        %v2852 = vmul.f32 %v2802, %v2847
        %v2853 = vmul.f32 %v2780, %v2847
        %v2854 = vmul.f32 %v2803, %v2847
        %v2855 = vmul.f32 %v2781, %v2847
        %v2856 = vmul.f32 %v2804, %v2847
        %v2857 = vmul.f32 %v2782, %v2847
        %v2858 = vmul.f32 %v2805, %v2847
        %v2859 = vmul.f32 %v2783, %v2847
        %v2860 = vmul.f32 %v2806, %v2847
        %v2861 = vmul.f32 %v2784, %v2847
        %v2862 = vmul.f32 %v2807, %v2847
        %v2863 = vmul.f32 %v2785, %v2847
        %v2864 = vmul.f32 %v2808, %v2847
        %v2865 = vmul.f32 %v2786, %v2847
        %v2866 = vmul.f32 %v2809, %v2847
        %v2867 = vmul.f32 %v2787, %v2847
        %v2868 = vmul.f32 %v2810, %v2847
        %v2869 = vmul.f32 %v2788, %v2847
        %v2870 = vmul.f32 %v2811, %v2847
        %v2871 = vmul.f32 %v2789, %v2847
        %v2872 = vmul.f32 %v2812, %v2847
        %v2873 = vmul.f32 %v2790, %v2847
        %v2874 = vmul.f32 %v2813, %v2847
        %v2875 = vmul.f32 %v2791, %v2847
        %v2876 = vmul.f32 %v2814, %v2847
        %v2877 = vmul.f32 %v2792, %v2847
        %v2878 = vmul.f32 %v2815, %v2847
        %v2879 = vmul.f32 %v2793, %v2847
        %v2880 = vadd.f32 %v2039, %v2848
        %v2881 = vadd.f32 %v2040, %v2849
        %v2882 = vadd.f32 %v2041, %v2850
        %v2883 = vadd.f32 %v2042, %v2851
        %v2884 = vadd.f32 %v2043, %v2852
        %v2885 = vadd.f32 %v2044, %v2853
        %v2886 = vadd.f32 %v2045, %v2854
        %v2887 = vadd.f32 %v2046, %v2855
        %v2888 = vadd.f32 %v2047, %v2856
        %v2889 = vadd.f32 %v2048, %v2857
        %v2890 = vadd.f32 %v2049, %v2858
        %v2891 = vadd.f32 %v2050, %v2859
        %v2892 = vadd.f32 %v2051, %v2860
        %v2893 = vadd.f32 %v2052, %v2861
        %v2894 = vadd.f32 %v2053, %v2862
        %v2895 = vadd.f32 %v2054, %v2863
        %v2896 = vadd.f32 %v2055, %v2864
        %v2897 = vadd.f32 %v2056, %v2865
        %v2898 = vadd.f32 %v2057, %v2866
        %v2899 = vadd.f32 %v2058, %v2867
        %v2900 = vadd.f32 %v2059, %v2868
        %v2901 = vadd.f32 %v2060, %v2869
        %v2902 = vadd.f32 %v2061, %v2870
        %v2903 = vadd.f32 %v2062, %v2871
        %v2904 = vadd.f32 %v2063, %v2872
        %v2905 = vadd.f32 %v2064, %v2873
        %v2906 = vadd.f32 %v2065, %v2874
        %v2907 = vadd.f32 %v2066, %v2875
        %v2908 = vadd.f32 %v2067, %v2876
        %v2909 = vadd.f32 %v2068, %v2877
        %v2910 = vadd.f32 %v2069, %v2878
        %v2911 = vadd.f32 %v2070, %v2879
        %v2912 = vlaneseq
        %v2913 = vshrl.u32 %v2912, 7
        %v2914 = vsub.s32 3, %v2913
        %v2915 = vrot.slane %v363, %v2914
        %v2916 = vmul.f32 %v2801, %v2915
        %v2917 = vmul.f32 %v2779, %v2915
        %v2918 = vmul.f32 %v2802, %v2915
        %v2919 = vmul.f32 %v2780, %v2915
        %v2920 = vmul.f32 %v2803, %v2915
        %v2921 = vmul.f32 %v2781, %v2915
        %v2922 = vmul.f32 %v2804, %v2915
        %v2923 = vmul.f32 %v2782, %v2915
        %v2924 = vmul.f32 %v2805, %v2915
        %v2925 = vmul.f32 %v2783, %v2915
        %v2926 = vmul.f32 %v2806, %v2915
        %v2927 = vmul.f32 %v2784, %v2915
        %v2928 = vmul.f32 %v2807, %v2915
        %v2929 = vmul.f32 %v2785, %v2915
        %v2930 = vmul.f32 %v2808, %v2915
        %v2931 = vmul.f32 %v2786, %v2915
        %v2932 = vmul.f32 %v2809, %v2915
        %v2933 = vmul.f32 %v2787, %v2915
        %v2934 = vmul.f32 %v2810, %v2915
        %v2935 = vmul.f32 %v2788, %v2915
        %v2936 = vmul.f32 %v2811, %v2915
        %v2937 = vmul.f32 %v2789, %v2915
        %v2938 = vmul.f32 %v2812, %v2915
        %v2939 = vmul.f32 %v2790, %v2915
        %v2940 = vmul.f32 %v2813, %v2915
        %v2941 = vmul.f32 %v2791, %v2915
        %v2942 = vmul.f32 %v2814, %v2915
        %v2943 = vmul.f32 %v2792, %v2915
        %v2944 = vmul.f32 %v2815, %v2915
        %v2945 = vmul.f32 %v2793, %v2915
        %v2946 = vmul.f32 %v2816, %v2915
        %v2947 = vmul.f32 %v2794, %v2915
        %v2948 = vadd.f32 %v2880, %v2916
        %v2949 = vadd.f32 %v2881, %v2917
        %v2950 = vadd.f32 %v2882, %v2918
        %v2951 = vadd.f32 %v2883, %v2919
        %v2952 = vadd.f32 %v2884, %v2920
        %v2953 = vadd.f32 %v2885, %v2921
        %v2954 = vadd.f32 %v2886, %v2922
        %v2955 = vadd.f32 %v2887, %v2923
        %v2956 = vadd.f32 %v2888, %v2924
        %v2957 = vadd.f32 %v2889, %v2925
        %v2958 = vadd.f32 %v2890, %v2926
        %v2959 = vadd.f32 %v2891, %v2927
        %v2960 = vadd.f32 %v2892, %v2928
        %v2961 = vadd.f32 %v2893, %v2929
        %v2962 = vadd.f32 %v2894, %v2930
        %v2963 = vadd.f32 %v2895, %v2931
        %v2964 = vadd.f32 %v2896, %v2932
        %v2965 = vadd.f32 %v2897, %v2933
        %v2966 = vadd.f32 %v2898, %v2934
        %v2967 = vadd.f32 %v2899, %v2935
        %v2968 = vadd.f32 %v2900, %v2936
        %v2969 = vadd.f32 %v2901, %v2937
        %v2970 = vadd.f32 %v2902, %v2938
        %v2971 = vadd.f32 %v2903, %v2939
        %v2972 = vadd.f32 %v2904, %v2940
        %v2973 = vadd.f32 %v2905, %v2941
        %v2974 = vadd.f32 %v2906, %v2942
        %v2975 = vadd.f32 %v2907, %v2943
        %v2976 = vadd.f32 %v2908, %v2944
        %v2977 = vadd.f32 %v2909, %v2945
        %v2978 = vadd.f32 %v2910, %v2946
        %v2979 = vadd.f32 %v2911, %v2947
        %v2980 = vlaneseq
        %v2981 = vshrl.u32 %v2980, 7
        %v2982 = vsub.s32 2, %v2981
        %v2983 = vrot.slane %v364, %v2982
        %v2984 = vmul.f32 %v2802, %v2983
        %v2985 = vmul.f32 %v2780, %v2983
        %v2986 = vmul.f32 %v2803, %v2983
        %v2987 = vmul.f32 %v2781, %v2983
        %v2988 = vmul.f32 %v2804, %v2983
        %v2989 = vmul.f32 %v2782, %v2983
        %v2990 = vmul.f32 %v2805, %v2983
        %v2991 = vmul.f32 %v2783, %v2983
        %v2992 = vmul.f32 %v2806, %v2983
        %v2993 = vmul.f32 %v2784, %v2983
        %v2994 = vmul.f32 %v2807, %v2983
        %v2995 = vmul.f32 %v2785, %v2983
        %v2996 = vmul.f32 %v2808, %v2983
        %v2997 = vmul.f32 %v2786, %v2983
        %v2998 = vmul.f32 %v2809, %v2983
        %v2999 = vmul.f32 %v2787, %v2983
        %v3000 = vmul.f32 %v2810, %v2983
        %v3001 = vmul.f32 %v2788, %v2983
        %v3002 = vmul.f32 %v2811, %v2983
        %v3003 = vmul.f32 %v2789, %v2983
        %v3004 = vmul.f32 %v2812, %v2983
        %v3005 = vmul.f32 %v2790, %v2983
        %v3006 = vmul.f32 %v2813, %v2983
        %v3007 = vmul.f32 %v2791, %v2983
        %v3008 = vmul.f32 %v2814, %v2983
        %v3009 = vmul.f32 %v2792, %v2983
        %v3010 = vmul.f32 %v2815, %v2983
        %v3011 = vmul.f32 %v2793, %v2983
        %v3012 = vmul.f32 %v2816, %v2983
        %v3013 = vmul.f32 %v2794, %v2983
        %v3014 = vmul.f32 %v2817, %v2983
        %v3015 = vmul.f32 %v2795, %v2983
        %v3016 = vadd.f32 %v2948, %v2984
        %v3017 = vadd.f32 %v2949, %v2985
        %v3018 = vadd.f32 %v2950, %v2986
        %v3019 = vadd.f32 %v2951, %v2987
        %v3020 = vadd.f32 %v2952, %v2988
        %v3021 = vadd.f32 %v2953, %v2989
        %v3022 = vadd.f32 %v2954, %v2990
        %v3023 = vadd.f32 %v2955, %v2991
        %v3024 = vadd.f32 %v2956, %v2992
        %v3025 = vadd.f32 %v2957, %v2993
        %v3026 = vadd.f32 %v2958, %v2994
        %v3027 = vadd.f32 %v2959, %v2995
        %v3028 = vadd.f32 %v2960, %v2996
        %v3029 = vadd.f32 %v2961, %v2997
        %v3030 = vadd.f32 %v2962, %v2998
        %v3031 = vadd.f32 %v2963, %v2999
        %v3032 = vadd.f32 %v2964, %v3000
        %v3033 = vadd.f32 %v2965, %v3001
        %v3034 = vadd.f32 %v2966, %v3002
        %v3035 = vadd.f32 %v2967, %v3003
        %v3036 = vadd.f32 %v2968, %v3004
        %v3037 = vadd.f32 %v2969, %v3005
        %v3038 = vadd.f32 %v2970, %v3006
        %v3039 = vadd.f32 %v2971, %v3007
        %v3040 = vadd.f32 %v2972, %v3008
        %v3041 = vadd.f32 %v2973, %v3009
        %v3042 = vadd.f32 %v2974, %v3010
        %v3043 = vadd.f32 %v2975, %v3011
        %v3044 = vadd.f32 %v2976, %v3012
        %v3045 = vadd.f32 %v2977, %v3013
        %v3046 = vadd.f32 %v2978, %v3014
        %v3047 = vadd.f32 %v2979, %v3015
        %v3048 = vlaneseq
        %v3049 = vshrl.u32 %v3048, 7
        %v3050 = vsub.s32 1, %v3049
        %v3051 = vrot.slane %v365, %v3050
        %v3052 = vmul.f32 %v2803, %v3051
        %v3053 = vmul.f32 %v2781, %v3051
        %v3054 = vmul.f32 %v2804, %v3051
        %v3055 = vmul.f32 %v2782, %v3051
        %v3056 = vmul.f32 %v2805, %v3051
        %v3057 = vmul.f32 %v2783, %v3051
        %v3058 = vmul.f32 %v2806, %v3051
        %v3059 = vmul.f32 %v2784, %v3051
        %v3060 = vmul.f32 %v2807, %v3051
        %v3061 = vmul.f32 %v2785, %v3051
        %v3062 = vmul.f32 %v2808, %v3051
        %v3063 = vmul.f32 %v2786, %v3051
        %v3064 = vmul.f32 %v2809, %v3051
        %v3065 = vmul.f32 %v2787, %v3051
        %v3066 = vmul.f32 %v2810, %v3051
        %v3067 = vmul.f32 %v2788, %v3051
        %v3068 = vmul.f32 %v2811, %v3051
        %v3069 = vmul.f32 %v2789, %v3051
        %v3070 = vmul.f32 %v2812, %v3051
        %v3071 = vmul.f32 %v2790, %v3051
        %v3072 = vmul.f32 %v2813, %v3051
        %v3073 = vmul.f32 %v2791, %v3051
        %v3074 = vmul.f32 %v2814, %v3051
        %v3075 = vmul.f32 %v2792, %v3051
        %v3076 = vmul.f32 %v2815, %v3051
        %v3077 = vmul.f32 %v2793, %v3051
        %v3078 = vmul.f32 %v2816, %v3051
        %v3079 = vmul.f32 %v2794, %v3051
        %v3080 = vmul.f32 %v2817, %v3051
        %v3081 = vmul.f32 %v2795, %v3051
        %v3082 = vmul.f32 %v2818, %v3051
        %v3083 = vmul.f32 %v2796, %v3051
        %v3084 = vadd.f32 %v3016, %v3052
        %v3085 = vadd.f32 %v3017, %v3053
        %v3086 = vadd.f32 %v3018, %v3054
        %v3087 = vadd.f32 %v3019, %v3055
        %v3088 = vadd.f32 %v3020, %v3056
        %v3089 = vadd.f32 %v3021, %v3057
        %v3090 = vadd.f32 %v3022, %v3058
        %v3091 = vadd.f32 %v3023, %v3059
        %v3092 = vadd.f32 %v3024, %v3060
        %v3093 = vadd.f32 %v3025, %v3061
        %v3094 = vadd.f32 %v3026, %v3062
        %v3095 = vadd.f32 %v3027, %v3063
        %v3096 = vadd.f32 %v3028, %v3064
        %v3097 = vadd.f32 %v3029, %v3065
        %v3098 = vadd.f32 %v3030, %v3066
        %v3099 = vadd.f32 %v3031, %v3067
        %v3100 = vadd.f32 %v3032, %v3068
        %v3101 = vadd.f32 %v3033, %v3069
        %v3102 = vadd.f32 %v3034, %v3070
        %v3103 = vadd.f32 %v3035, %v3071
        %v3104 = vadd.f32 %v3036, %v3072
        %v3105 = vadd.f32 %v3037, %v3073
        %v3106 = vadd.f32 %v3038, %v3074
        %v3107 = vadd.f32 %v3039, %v3075
        %v3108 = vadd.f32 %v3040, %v3076
        %v3109 = vadd.f32 %v3041, %v3077
        %v3110 = vadd.f32 %v3042, %v3078
        %v3111 = vadd.f32 %v3043, %v3079
        %v3112 = vadd.f32 %v3044, %v3080
        %v3113 = vadd.f32 %v3045, %v3081
        %v3114 = vadd.f32 %v3046, %v3082
        %v3115 = vadd.f32 %v3047, %v3083
        %v3116 = vlaneseq
        %v3117 = vshrl.u32 %v3116, 7
        %v3118 = vsub.s32 0, %v3117
        %v3119 = vrot.slane %v366, %v3118
        %v3120 = vmul.f32 %v2804, %v3119
        %v3121 = vmul.f32 %v2782, %v3119
        %v3122 = vmul.f32 %v2805, %v3119
        %v3123 = vmul.f32 %v2783, %v3119
        %v3124 = vmul.f32 %v2806, %v3119
        %v3125 = vmul.f32 %v2784, %v3119
        %v3126 = vmul.f32 %v2807, %v3119
        %v3127 = vmul.f32 %v2785, %v3119
        %v3128 = vmul.f32 %v2808, %v3119
        %v3129 = vmul.f32 %v2786, %v3119
        %v3130 = vmul.f32 %v2809, %v3119
        %v3131 = vmul.f32 %v2787, %v3119
        %v3132 = vmul.f32 %v2810, %v3119
        %v3133 = vmul.f32 %v2788, %v3119
        %v3134 = vmul.f32 %v2811, %v3119
        %v3135 = vmul.f32 %v2789, %v3119
        %v3136 = vmul.f32 %v2812, %v3119
        %v3137 = vmul.f32 %v2790, %v3119
        %v3138 = vmul.f32 %v2813, %v3119
        %v3139 = vmul.f32 %v2791, %v3119
        %v3140 = vmul.f32 %v2814, %v3119
        %v3141 = vmul.f32 %v2792, %v3119
        %v3142 = vmul.f32 %v2815, %v3119
        %v3143 = vmul.f32 %v2793, %v3119
        %v3144 = vmul.f32 %v2816, %v3119
        %v3145 = vmul.f32 %v2794, %v3119
        %v3146 = vmul.f32 %v2817, %v3119
        %v3147 = vmul.f32 %v2795, %v3119
        %v3148 = vmul.f32 %v2818, %v3119
        %v3149 = vmul.f32 %v2796, %v3119
        %v3150 = vmul.f32 %v2819, %v3119
        %v3151 = vmul.f32 %v2797, %v3119
        %v3152 = vadd.f32 %v3084, %v3120
        %v3153 = vadd.f32 %v3085, %v3121
        %v3154 = vadd.f32 %v3086, %v3122
        %v3155 = vadd.f32 %v3087, %v3123
        %v3156 = vadd.f32 %v3088, %v3124
        %v3157 = vadd.f32 %v3089, %v3125
        %v3158 = vadd.f32 %v3090, %v3126
        %v3159 = vadd.f32 %v3091, %v3127
        %v3160 = vadd.f32 %v3092, %v3128
        %v3161 = vadd.f32 %v3093, %v3129
        %v3162 = vadd.f32 %v3094, %v3130
        %v3163 = vadd.f32 %v3095, %v3131
        %v3164 = vadd.f32 %v3096, %v3132
        %v3165 = vadd.f32 %v3097, %v3133
        %v3166 = vadd.f32 %v3098, %v3134
        %v3167 = vadd.f32 %v3099, %v3135
        %v3168 = vadd.f32 %v3100, %v3136
        %v3169 = vadd.f32 %v3101, %v3137
        %v3170 = vadd.f32 %v3102, %v3138
        %v3171 = vadd.f32 %v3103, %v3139
        %v3172 = vadd.f32 %v3104, %v3140
        %v3173 = vadd.f32 %v3105, %v3141
        %v3174 = vadd.f32 %v3106, %v3142
        %v3175 = vadd.f32 %v3107, %v3143
        %v3176 = vadd.f32 %v3108, %v3144
        %v3177 = vadd.f32 %v3109, %v3145
        %v3178 = vadd.f32 %v3110, %v3146
        %v3179 = vadd.f32 %v3111, %v3147
        %v3180 = vadd.f32 %v3112, %v3148
        %v3181 = vadd.f32 %v3113, %v3149
        %v3182 = vadd.f32 %v3114, %v3150
        %v3183 = vadd.f32 %v3115, %v3151
        %v3184 = vlaneseq
        %v3185 = vshrl.u32 %v3184, 7
        %v3186 = vsub.s32 7, %v3185
        %v3187 = vrot.slane %v366, %v3186
        %v3188 = vmul.f32 %v2805, %v3187
        %v3189 = vmul.f32 %v2783, %v3187
        %v3190 = vmul.f32 %v2806, %v3187
        %v3191 = vmul.f32 %v2784, %v3187
        %v3192 = vmul.f32 %v2807, %v3187
        %v3193 = vmul.f32 %v2785, %v3187
        %v3194 = vmul.f32 %v2808, %v3187
        %v3195 = vmul.f32 %v2786, %v3187
        %v3196 = vmul.f32 %v2809, %v3187
        %v3197 = vmul.f32 %v2787, %v3187
        %v3198 = vmul.f32 %v2810, %v3187
        %v3199 = vmul.f32 %v2788, %v3187
        %v3200 = vmul.f32 %v2811, %v3187
        %v3201 = vmul.f32 %v2789, %v3187
        %v3202 = vmul.f32 %v2812, %v3187
        %v3203 = vmul.f32 %v2790, %v3187
        %v3204 = vmul.f32 %v2813, %v3187
        %v3205 = vmul.f32 %v2791, %v3187
        %v3206 = vmul.f32 %v2814, %v3187
        %v3207 = vmul.f32 %v2792, %v3187
        %v3208 = vmul.f32 %v2815, %v3187
        %v3209 = vmul.f32 %v2793, %v3187
        %v3210 = vmul.f32 %v2816, %v3187
        %v3211 = vmul.f32 %v2794, %v3187
        %v3212 = vmul.f32 %v2817, %v3187
        %v3213 = vmul.f32 %v2795, %v3187
        %v3214 = vmul.f32 %v2818, %v3187
        %v3215 = vmul.f32 %v2796, %v3187
        %v3216 = vmul.f32 %v2819, %v3187
        %v3217 = vmul.f32 %v2797, %v3187
        %v3218 = vmul.f32 %v2820, %v3187
        %v3219 = vmul.f32 %v2798, %v3187
        %v3220 = vadd.f32 %v3152, %v3188
        %v3221 = vadd.f32 %v3153, %v3189
        %v3222 = vadd.f32 %v3154, %v3190
        %v3223 = vadd.f32 %v3155, %v3191
        %v3224 = vadd.f32 %v3156, %v3192
        %v3225 = vadd.f32 %v3157, %v3193
        %v3226 = vadd.f32 %v3158, %v3194
        %v3227 = vadd.f32 %v3159, %v3195
        %v3228 = vadd.f32 %v3160, %v3196
        %v3229 = vadd.f32 %v3161, %v3197
        %v3230 = vadd.f32 %v3162, %v3198
        %v3231 = vadd.f32 %v3163, %v3199
        %v3232 = vadd.f32 %v3164, %v3200
        %v3233 = vadd.f32 %v3165, %v3201
        %v3234 = vadd.f32 %v3166, %v3202
        %v3235 = vadd.f32 %v3167, %v3203
        %v3236 = vadd.f32 %v3168, %v3204
        %v3237 = vadd.f32 %v3169, %v3205
        %v3238 = vadd.f32 %v3170, %v3206
        %v3239 = vadd.f32 %v3171, %v3207
        %v3240 = vadd.f32 %v3172, %v3208
        %v3241 = vadd.f32 %v3173, %v3209
        %v3242 = vadd.f32 %v3174, %v3210
        %v3243 = vadd.f32 %v3175, %v3211
        %v3244 = vadd.f32 %v3176, %v3212
        %v3245 = vadd.f32 %v3177, %v3213
        %v3246 = vadd.f32 %v3178, %v3214
        %v3247 = vadd.f32 %v3179, %v3215
        %v3248 = vadd.f32 %v3180, %v3216
        %v3249 = vadd.f32 %v3181, %v3217
        %v3250 = vadd.f32 %v3182, %v3218
        %v3251 = vadd.f32 %v3183, %v3219
        %v3252 = vlaneseq
        %v3253 = vshrl.u32 %v3252, 7
        %v3254 = vsub.s32 6, %v3253
        %v3255 = vrot.slane %v367, %v3254
        %v3256 = vmul.f32 %v2806, %v3255
        %v3257 = vmul.f32 %v2784, %v3255
        %v3258 = vmul.f32 %v2807, %v3255
        %v3259 = vmul.f32 %v2785, %v3255
        %v3260 = vmul.f32 %v2808, %v3255
        %v3261 = vmul.f32 %v2786, %v3255
        %v3262 = vmul.f32 %v2809, %v3255
        %v3263 = vmul.f32 %v2787, %v3255
        %v3264 = vmul.f32 %v2810, %v3255
        %v3265 = vmul.f32 %v2788, %v3255
        %v3266 = vmul.f32 %v2811, %v3255
        %v3267 = vmul.f32 %v2789, %v3255
        %v3268 = vmul.f32 %v2812, %v3255
        %v3269 = vmul.f32 %v2790, %v3255
        %v3270 = vmul.f32 %v2813, %v3255
        %v3271 = vmul.f32 %v2791, %v3255
        %v3272 = vmul.f32 %v2814, %v3255
        %v3273 = vmul.f32 %v2792, %v3255
        %v3274 = vmul.f32 %v2815, %v3255
        %v3275 = vmul.f32 %v2793, %v3255
        %v3276 = vmul.f32 %v2816, %v3255
        %v3277 = vmul.f32 %v2794, %v3255
        %v3278 = vmul.f32 %v2817, %v3255
        %v3279 = vmul.f32 %v2795, %v3255
        %v3280 = vmul.f32 %v2818, %v3255
        %v3281 = vmul.f32 %v2796, %v3255
        %v3282 = vmul.f32 %v2819, %v3255
        %v3283 = vmul.f32 %v2797, %v3255
        %v3284 = vmul.f32 %v2820, %v3255
        %v3285 = vmul.f32 %v2798, %v3255
        %v3286 = vmul.f32 %v2821, %v3255
        %v3287 = vmul.f32 %v2799, %v3255
        %v3288 = vadd.f32 %v3220, %v3256
        %v3289 = vadd.f32 %v3221, %v3257
        %v3290 = vadd.f32 %v3222, %v3258
        %v3291 = vadd.f32 %v3223, %v3259
        %v3292 = vadd.f32 %v3224, %v3260
        %v3293 = vadd.f32 %v3225, %v3261
        %v3294 = vadd.f32 %v3226, %v3262
        %v3295 = vadd.f32 %v3227, %v3263
        %v3296 = vadd.f32 %v3228, %v3264
        %v3297 = vadd.f32 %v3229, %v3265
        %v3298 = vadd.f32 %v3230, %v3266
        %v3299 = vadd.f32 %v3231, %v3267
        %v3300 = vadd.f32 %v3232, %v3268
        %v3301 = vadd.f32 %v3233, %v3269
        %v3302 = vadd.f32 %v3234, %v3270
        %v3303 = vadd.f32 %v3235, %v3271
        %v3304 = vadd.f32 %v3236, %v3272
        %v3305 = vadd.f32 %v3237, %v3273
        %v3306 = vadd.f32 %v3238, %v3274
        %v3307 = vadd.f32 %v3239, %v3275
        %v3308 = vadd.f32 %v3240, %v3276
        %v3309 = vadd.f32 %v3241, %v3277
        %v3310 = vadd.f32 %v3242, %v3278
        %v3311 = vadd.f32 %v3243, %v3279
        %v3312 = vadd.f32 %v3244, %v3280
        %v3313 = vadd.f32 %v3245, %v3281
        %v3314 = vadd.f32 %v3246, %v3282
        %v3315 = vadd.f32 %v3247, %v3283
        %v3316 = vadd.f32 %v3248, %v3284
        %v3317 = vadd.f32 %v3249, %v3285
        %v3318 = vadd.f32 %v3250, %v3286
        %v3319 = vadd.f32 %v3251, %v3287
        %v3320 = vrot.slane %v2800, 1
        %v3321 = vrot.slane %v2801, 1
        %v3322 = vrot.slane %v2802, 1
        %v3323 = vrot.slane %v2803, 1
        %v3324 = vrot.slane %v2804, 1
        %v3325 = vrot.slane %v2805, 1
        %v3326 = vrot.slane %v2806, 1
        %v3327 = vrot.slane %v2807, 1
        %v3328 = vrot.slane %v2808, 1
        %v3329 = vrot.slane %v2809, 1
        %v3330 = vrot.slane %v2810, 1
        %v3331 = vrot.slane %v2811, 1
        %v3332 = vrot.slane %v2812, 1
        %v3333 = vrot.slane %v2813, 1
        %v3334 = vrot.slane %v2814, 1
        %v3335 = vrot.slane %v2815, 1
        %v3336 = vrot.slane %v2816, 1
        %v3337 = vrot.slane %v2817, 1
        %v3338 = vrot.slane %v2818, 1
        %v3339 = vrot.slane %v2819, 1
        %v3340 = vrot.slane %v2820, 1
        %v3341 = vrot.slane %v2821, 1
        %v3342 = vrot.slane %v2778, 1
        %v3343 = vrot.slane %v2779, 1
        %v3344 = vrot.slane %v2780, 1
        %v3345 = vrot.slane %v2781, 1
        %v3346 = vrot.slane %v2782, 1
        %v3347 = vrot.slane %v2783, 1
        %v3348 = vrot.slane %v2784, 1
        %v3349 = vrot.slane %v2785, 1
        %v3350 = vrot.slane %v2786, 1
        %v3351 = vrot.slane %v2787, 1
        %v3352 = vrot.slane %v2788, 1
        %v3353 = vrot.slane %v2789, 1
        %v3354 = vrot.slane %v2790, 1
        %v3355 = vrot.slane %v2791, 1
        %v3356 = vrot.slane %v2792, 1
        %v3357 = vrot.slane %v2793, 1
        %v3358 = vrot.slane %v2794, 1
        %v3359 = vrot.slane %v2795, 1
        %v3360 = vrot.slane %v2796, 1
        %v3361 = vrot.slane %v2797, 1
        %v3362 = vrot.slane %v2798, 1
        %v3363 = vrot.slane %v2799, 1
        %v3364 = vrot.slane %v2822, 1
        %v3365 = vrot.slane %v2823, 1
        %v3366 = vrot.slane %v2824, 1
        %v3367 = vrot.slane %v2825, 1
        %v3368 = vrot.slane %v2826, 1
        %v3369 = vrot.slane %v2827, 1
        %v3370 = vrot.slane %v2828, 1
        %v3371 = vrot.slane %v2829, 1
        %v3372 = vrot.slane %v2830, 1
        %v3373 = vrot.slane %v2831, 1
        %v3374 = vrot.slane %v2832, 1
        %v3375 = vrot.slane %v2833, 1
        %v3376 = vrot.slane %v2834, 1
        %v3377 = vrot.slane %v2835, 1
        %v3378 = vrot.slane %v2836, 1
        %v3379 = vrot.slane %v2837, 1
        %v3380 = vrot.slane %v2838, 1
        %v3381 = vrot.slane %v2839, 1
        %v3382 = vrot.slane %v2840, 1
        %v3383 = vrot.slane %v2841, 1
        %v3384 = vrot.slane %v2842, 1
        %v3385 = vrot.slane %v2843, 1
        %v3386 = vsel %vm920, %v3342, %v3364
        %v3387 = vsel %vm920, %v3343, %v3365
        %v3388 = vsel %vm920, %v3344, %v3366
        %v3389 = vsel %vm920, %v3345, %v3367
        %v3390 = vsel %vm920, %v3346, %v3368
        %v3391 = vsel %vm920, %v3347, %v3369
        %v3392 = vsel %vm920, %v3348, %v3370
        %v3393 = vsel %vm920, %v3349, %v3371
        %v3394 = vsel %vm920, %v3350, %v3372
        %v3395 = vsel %vm920, %v3351, %v3373
        %v3396 = vsel %vm920, %v3352, %v3374
        %v3397 = vsel %vm920, %v3353, %v3375
        %v3398 = vsel %vm920, %v3354, %v3376
        %v3399 = vsel %vm920, %v3355, %v3377
        %v3400 = vsel %vm920, %v3356, %v3378
        %v3401 = vsel %vm920, %v3357, %v3379
        %v3402 = vsel %vm920, %v3358, %v3380
        %v3403 = vsel %vm920, %v3359, %v3381
        %v3404 = vsel %vm920, %v3360, %v3382
        %v3405 = vsel %vm920, %v3361, %v3383
        %v3406 = vsel %vm920, %v3362, %v3384
        %v3407 = vsel %vm920, %v3363, %v3385
        %v3408 = vsel %vm920, %v3320, %v3342
        %v3409 = vsel %vm920, %v3321, %v3343
        %v3410 = vsel %vm920, %v3322, %v3344
        %v3411 = vsel %vm920, %v3323, %v3345
        %v3412 = vsel %vm920, %v3324, %v3346
        %v3413 = vsel %vm920, %v3325, %v3347
        %v3414 = vsel %vm920, %v3326, %v3348
        %v3415 = vsel %vm920, %v3327, %v3349
        %v3416 = vsel %vm920, %v3328, %v3350
        %v3417 = vsel %vm920, %v3329, %v3351
        %v3418 = vsel %vm920, %v3330, %v3352
        %v3419 = vsel %vm920, %v3331, %v3353
        %v3420 = vsel %vm920, %v3332, %v3354
        %v3421 = vsel %vm920, %v3333, %v3355
        %v3422 = vsel %vm920, %v3334, %v3356
        %v3423 = vsel %vm920, %v3335, %v3357
        %v3424 = vsel %vm920, %v3336, %v3358
        %v3425 = vsel %vm920, %v3337, %v3359
        %v3426 = vsel %vm920, %v3338, %v3360
        %v3427 = vsel %vm920, %v3339, %v3361
        %v3428 = vsel %vm920, %v3340, %v3362
        %v3429 = vsel %vm920, %v3341, %v3363
        %v3430 = vsel %vm920, %v3364, %v3320
        %v3431 = vsel %vm920, %v3365, %v3321
        %v3432 = vsel %vm920, %v3366, %v3322
        %v3433 = vsel %vm920, %v3367, %v3323
        %v3434 = vsel %vm920, %v3368, %v3324
        %v3435 = vsel %vm920, %v3369, %v3325
        %v3436 = vsel %vm920, %v3370, %v3326
        %v3437 = vsel %vm920, %v3371, %v3327
        %v3438 = vsel %vm920, %v3372, %v3328
        %v3439 = vsel %vm920, %v3373, %v3329
        %v3440 = vsel %vm920, %v3374, %v3330
        %v3441 = vsel %vm920, %v3375, %v3331
        %v3442 = vsel %vm920, %v3376, %v3332
        %v3443 = vsel %vm920, %v3377, %v3333
        %v3444 = vsel %vm920, %v3378, %v3334
        %v3445 = vsel %vm920, %v3379, %v3335
        %v3446 = vsel %vm920, %v3380, %v3336
        %v3447 = vsel %vm920, %v3381, %v3337
        %v3448 = vsel %vm920, %v3382, %v3338
        %v3449 = vsel %vm920, %v3383, %v3339
        %v3450 = vsel %vm920, %v3384, %v3340
        %v3451 = vsel %vm920, %v3385, %v3341
        %v3452 = vlaneseq
        %v3453 = vshrl.u32 %v3452, 7
        %v3454 = vsub.s32 5, %v3453
        %v3455 = vrot.slane %v362, %v3454
        %v3456 = vmul.f32 %v3408, %v3455
        %v3457 = vmul.f32 %v3386, %v3455
        %v3458 = vmul.f32 %v3409, %v3455
        %v3459 = vmul.f32 %v3387, %v3455
        %v3460 = vmul.f32 %v3410, %v3455
        %v3461 = vmul.f32 %v3388, %v3455
        %v3462 = vmul.f32 %v3411, %v3455
        %v3463 = vmul.f32 %v3389, %v3455
        %v3464 = vmul.f32 %v3412, %v3455
        %v3465 = vmul.f32 %v3390, %v3455
        %v3466 = vmul.f32 %v3413, %v3455
        %v3467 = vmul.f32 %v3391, %v3455
        %v3468 = vmul.f32 %v3414, %v3455
        %v3469 = vmul.f32 %v3392, %v3455
        %v3470 = vmul.f32 %v3415, %v3455
        %v3471 = vmul.f32 %v3393, %v3455
        %v3472 = vmul.f32 %v3416, %v3455
        %v3473 = vmul.f32 %v3394, %v3455
        %v3474 = vmul.f32 %v3417, %v3455
        %v3475 = vmul.f32 %v3395, %v3455
        %v3476 = vmul.f32 %v3418, %v3455
        %v3477 = vmul.f32 %v3396, %v3455
        %v3478 = vmul.f32 %v3419, %v3455
        %v3479 = vmul.f32 %v3397, %v3455
        %v3480 = vmul.f32 %v3420, %v3455
        %v3481 = vmul.f32 %v3398, %v3455
        %v3482 = vmul.f32 %v3421, %v3455
        %v3483 = vmul.f32 %v3399, %v3455
        %v3484 = vmul.f32 %v3422, %v3455
        %v3485 = vmul.f32 %v3400, %v3455
        %v3486 = vmul.f32 %v3423, %v3455
        %v3487 = vmul.f32 %v3401, %v3455
        %v3488 = vadd.f32 %v2680, %v3456
        %v3489 = vadd.f32 %v2681, %v3457
        %v3490 = vadd.f32 %v2682, %v3458
        %v3491 = vadd.f32 %v2683, %v3459
        %v3492 = vadd.f32 %v2684, %v3460
        %v3493 = vadd.f32 %v2685, %v3461
        %v3494 = vadd.f32 %v2686, %v3462
        %v3495 = vadd.f32 %v2687, %v3463
        %v3496 = vadd.f32 %v2688, %v3464
        %v3497 = vadd.f32 %v2689, %v3465
        %v3498 = vadd.f32 %v2690, %v3466
        %v3499 = vadd.f32 %v2691, %v3467
        %v3500 = vadd.f32 %v2692, %v3468
        %v3501 = vadd.f32 %v2693, %v3469
        %v3502 = vadd.f32 %v2694, %v3470
        %v3503 = vadd.f32 %v2695, %v3471
        %v3504 = vadd.f32 %v2696, %v3472
        %v3505 = vadd.f32 %v2697, %v3473
        %v3506 = vadd.f32 %v2698, %v3474
        %v3507 = vadd.f32 %v2699, %v3475
        %v3508 = vadd.f32 %v2700, %v3476
        %v3509 = vadd.f32 %v2701, %v3477
        %v3510 = vadd.f32 %v2702, %v3478
        %v3511 = vadd.f32 %v2703, %v3479
        %v3512 = vadd.f32 %v2704, %v3480
        %v3513 = vadd.f32 %v2705, %v3481
        %v3514 = vadd.f32 %v2706, %v3482
        %v3515 = vadd.f32 %v2707, %v3483
        %v3516 = vadd.f32 %v2708, %v3484
        %v3517 = vadd.f32 %v2709, %v3485
        %v3518 = vadd.f32 %v2710, %v3486
        %v3519 = vadd.f32 %v2711, %v3487
        %v3520 = vlaneseq
        %v3521 = vshrl.u32 %v3520, 7
        %v3522 = vsub.s32 4, %v3521
        %v3523 = vrot.slane %v363, %v3522
        %v3524 = vmul.f32 %v3409, %v3523
        %v3525 = vmul.f32 %v3387, %v3523
        %v3526 = vmul.f32 %v3410, %v3523
        %v3527 = vmul.f32 %v3388, %v3523
        %v3528 = vmul.f32 %v3411, %v3523
        %v3529 = vmul.f32 %v3389, %v3523
        %v3530 = vmul.f32 %v3412, %v3523
        %v3531 = vmul.f32 %v3390, %v3523
        %v3532 = vmul.f32 %v3413, %v3523
        %v3533 = vmul.f32 %v3391, %v3523
        %v3534 = vmul.f32 %v3414, %v3523
        %v3535 = vmul.f32 %v3392, %v3523
        %v3536 = vmul.f32 %v3415, %v3523
        %v3537 = vmul.f32 %v3393, %v3523
        %v3538 = vmul.f32 %v3416, %v3523
        %v3539 = vmul.f32 %v3394, %v3523
        %v3540 = vmul.f32 %v3417, %v3523
        %v3541 = vmul.f32 %v3395, %v3523
        %v3542 = vmul.f32 %v3418, %v3523
        %v3543 = vmul.f32 %v3396, %v3523
        %v3544 = vmul.f32 %v3419, %v3523
        %v3545 = vmul.f32 %v3397, %v3523
        %v3546 = vmul.f32 %v3420, %v3523
        %v3547 = vmul.f32 %v3398, %v3523
        %v3548 = vmul.f32 %v3421, %v3523
        %v3549 = vmul.f32 %v3399, %v3523
        %v3550 = vmul.f32 %v3422, %v3523
        %v3551 = vmul.f32 %v3400, %v3523
        %v3552 = vmul.f32 %v3423, %v3523
        %v3553 = vmul.f32 %v3401, %v3523
        %v3554 = vmul.f32 %v3424, %v3523
        %v3555 = vmul.f32 %v3402, %v3523
        %v3556 = vadd.f32 %v3488, %v3524
        %v3557 = vadd.f32 %v3489, %v3525
        %v3558 = vadd.f32 %v3490, %v3526
        %v3559 = vadd.f32 %v3491, %v3527
        %v3560 = vadd.f32 %v3492, %v3528
        %v3561 = vadd.f32 %v3493, %v3529
        %v3562 = vadd.f32 %v3494, %v3530
        %v3563 = vadd.f32 %v3495, %v3531
        %v3564 = vadd.f32 %v3496, %v3532
        %v3565 = vadd.f32 %v3497, %v3533
        %v3566 = vadd.f32 %v3498, %v3534
        %v3567 = vadd.f32 %v3499, %v3535
        %v3568 = vadd.f32 %v3500, %v3536
        %v3569 = vadd.f32 %v3501, %v3537
        %v3570 = vadd.f32 %v3502, %v3538
        %v3571 = vadd.f32 %v3503, %v3539
        %v3572 = vadd.f32 %v3504, %v3540
        %v3573 = vadd.f32 %v3505, %v3541
        %v3574 = vadd.f32 %v3506, %v3542
        %v3575 = vadd.f32 %v3507, %v3543
        %v3576 = vadd.f32 %v3508, %v3544
        %v3577 = vadd.f32 %v3509, %v3545
        %v3578 = vadd.f32 %v3510, %v3546
        %v3579 = vadd.f32 %v3511, %v3547
        %v3580 = vadd.f32 %v3512, %v3548
        %v3581 = vadd.f32 %v3513, %v3549
        %v3582 = vadd.f32 %v3514, %v3550
        %v3583 = vadd.f32 %v3515, %v3551
        %v3584 = vadd.f32 %v3516, %v3552
        %v3585 = vadd.f32 %v3517, %v3553
        %v3586 = vadd.f32 %v3518, %v3554
        %v3587 = vadd.f32 %v3519, %v3555
        %v3588 = vlaneseq
        %v3589 = vshrl.u32 %v3588, 7
        %v3590 = vsub.s32 3, %v3589
        %v3591 = vrot.slane %v364, %v3590
        %v3592 = vmul.f32 %v3410, %v3591
        %v3593 = vmul.f32 %v3388, %v3591
        %v3594 = vmul.f32 %v3411, %v3591
        %v3595 = vmul.f32 %v3389, %v3591
        %v3596 = vmul.f32 %v3412, %v3591
        %v3597 = vmul.f32 %v3390, %v3591
        %v3598 = vmul.f32 %v3413, %v3591
        %v3599 = vmul.f32 %v3391, %v3591
        %v3600 = vmul.f32 %v3414, %v3591
        %v3601 = vmul.f32 %v3392, %v3591
        %v3602 = vmul.f32 %v3415, %v3591
        %v3603 = vmul.f32 %v3393, %v3591
        %v3604 = vmul.f32 %v3416, %v3591
        %v3605 = vmul.f32 %v3394, %v3591
        %v3606 = vmul.f32 %v3417, %v3591
        %v3607 = vmul.f32 %v3395, %v3591
        %v3608 = vmul.f32 %v3418, %v3591
        %v3609 = vmul.f32 %v3396, %v3591
        %v3610 = vmul.f32 %v3419, %v3591
        %v3611 = vmul.f32 %v3397, %v3591
        %v3612 = vmul.f32 %v3420, %v3591
        %v3613 = vmul.f32 %v3398, %v3591
        %v3614 = vmul.f32 %v3421, %v3591
        %v3615 = vmul.f32 %v3399, %v3591
        %v3616 = vmul.f32 %v3422, %v3591
        %v3617 = vmul.f32 %v3400, %v3591
        %v3618 = vmul.f32 %v3423, %v3591
        %v3619 = vmul.f32 %v3401, %v3591
        %v3620 = vmul.f32 %v3424, %v3591
        %v3621 = vmul.f32 %v3402, %v3591
        %v3622 = vmul.f32 %v3425, %v3591
        %v3623 = vmul.f32 %v3403, %v3591
        %v3624 = vadd.f32 %v3556, %v3592
        %v3625 = vadd.f32 %v3557, %v3593
        %v3626 = vadd.f32 %v3558, %v3594
        %v3627 = vadd.f32 %v3559, %v3595
        %v3628 = vadd.f32 %v3560, %v3596
        %v3629 = vadd.f32 %v3561, %v3597
        %v3630 = vadd.f32 %v3562, %v3598
        %v3631 = vadd.f32 %v3563, %v3599
        %v3632 = vadd.f32 %v3564, %v3600
        %v3633 = vadd.f32 %v3565, %v3601
        %v3634 = vadd.f32 %v3566, %v3602
        %v3635 = vadd.f32 %v3567, %v3603
        %v3636 = vadd.f32 %v3568, %v3604
        %v3637 = vadd.f32 %v3569, %v3605
        %v3638 = vadd.f32 %v3570, %v3606
        %v3639 = vadd.f32 %v3571, %v3607
        %v3640 = vadd.f32 %v3572, %v3608
        %v3641 = vadd.f32 %v3573, %v3609
        %v3642 = vadd.f32 %v3574, %v3610
        %v3643 = vadd.f32 %v3575, %v3611
        %v3644 = vadd.f32 %v3576, %v3612
        %v3645 = vadd.f32 %v3577, %v3613
        %v3646 = vadd.f32 %v3578, %v3614
        %v3647 = vadd.f32 %v3579, %v3615
        %v3648 = vadd.f32 %v3580, %v3616
        %v3649 = vadd.f32 %v3581, %v3617
        %v3650 = vadd.f32 %v3582, %v3618
        %v3651 = vadd.f32 %v3583, %v3619
        %v3652 = vadd.f32 %v3584, %v3620
        %v3653 = vadd.f32 %v3585, %v3621
        %v3654 = vadd.f32 %v3586, %v3622
        %v3655 = vadd.f32 %v3587, %v3623
        %v3656 = vlaneseq
        %v3657 = vshrl.u32 %v3656, 7
        %v3658 = vsub.s32 2, %v3657
        %v3659 = vrot.slane %v365, %v3658
        %v3660 = vmul.f32 %v3411, %v3659
        %v3661 = vmul.f32 %v3389, %v3659
        %v3662 = vmul.f32 %v3412, %v3659
        %v3663 = vmul.f32 %v3390, %v3659
        %v3664 = vmul.f32 %v3413, %v3659
        %v3665 = vmul.f32 %v3391, %v3659
        %v3666 = vmul.f32 %v3414, %v3659
        %v3667 = vmul.f32 %v3392, %v3659
        %v3668 = vmul.f32 %v3415, %v3659
        %v3669 = vmul.f32 %v3393, %v3659
        %v3670 = vmul.f32 %v3416, %v3659
        %v3671 = vmul.f32 %v3394, %v3659
        %v3672 = vmul.f32 %v3417, %v3659
        %v3673 = vmul.f32 %v3395, %v3659
        %v3674 = vmul.f32 %v3418, %v3659
        %v3675 = vmul.f32 %v3396, %v3659
        %v3676 = vmul.f32 %v3419, %v3659
        %v3677 = vmul.f32 %v3397, %v3659
        %v3678 = vmul.f32 %v3420, %v3659
        %v3679 = vmul.f32 %v3398, %v3659
        %v3680 = vmul.f32 %v3421, %v3659
        %v3681 = vmul.f32 %v3399, %v3659
        %v3682 = vmul.f32 %v3422, %v3659
        %v3683 = vmul.f32 %v3400, %v3659
        %v3684 = vmul.f32 %v3423, %v3659
        %v3685 = vmul.f32 %v3401, %v3659
        %v3686 = vmul.f32 %v3424, %v3659
        %v3687 = vmul.f32 %v3402, %v3659
        %v3688 = vmul.f32 %v3425, %v3659
        %v3689 = vmul.f32 %v3403, %v3659
        %v3690 = vmul.f32 %v3426, %v3659
        %v3691 = vmul.f32 %v3404, %v3659
        %v3692 = vadd.f32 %v3624, %v3660
        %v3693 = vadd.f32 %v3625, %v3661
        %v3694 = vadd.f32 %v3626, %v3662
        %v3695 = vadd.f32 %v3627, %v3663
        %v3696 = vadd.f32 %v3628, %v3664
        %v3697 = vadd.f32 %v3629, %v3665
        %v3698 = vadd.f32 %v3630, %v3666
        %v3699 = vadd.f32 %v3631, %v3667
        %v3700 = vadd.f32 %v3632, %v3668
        %v3701 = vadd.f32 %v3633, %v3669
        %v3702 = vadd.f32 %v3634, %v3670
        %v3703 = vadd.f32 %v3635, %v3671
        %v3704 = vadd.f32 %v3636, %v3672
        %v3705 = vadd.f32 %v3637, %v3673
        %v3706 = vadd.f32 %v3638, %v3674
        %v3707 = vadd.f32 %v3639, %v3675
        %v3708 = vadd.f32 %v3640, %v3676
        %v3709 = vadd.f32 %v3641, %v3677
        %v3710 = vadd.f32 %v3642, %v3678
        %v3711 = vadd.f32 %v3643, %v3679
        %v3712 = vadd.f32 %v3644, %v3680
        %v3713 = vadd.f32 %v3645, %v3681
        %v3714 = vadd.f32 %v3646, %v3682
        %v3715 = vadd.f32 %v3647, %v3683
        %v3716 = vadd.f32 %v3648, %v3684
        %v3717 = vadd.f32 %v3649, %v3685
        %v3718 = vadd.f32 %v3650, %v3686
        %v3719 = vadd.f32 %v3651, %v3687
        %v3720 = vadd.f32 %v3652, %v3688
        %v3721 = vadd.f32 %v3653, %v3689
        %v3722 = vadd.f32 %v3654, %v3690
        %v3723 = vadd.f32 %v3655, %v3691
        %v3724 = vlaneseq
        %v3725 = vshrl.u32 %v3724, 7
        %v3726 = vsub.s32 1, %v3725
        %v3727 = vrot.slane %v366, %v3726
        %v3728 = vmul.f32 %v3412, %v3727
        %v3729 = vmul.f32 %v3390, %v3727
        %v3730 = vmul.f32 %v3413, %v3727
        %v3731 = vmul.f32 %v3391, %v3727
        %v3732 = vmul.f32 %v3414, %v3727
        %v3733 = vmul.f32 %v3392, %v3727
        %v3734 = vmul.f32 %v3415, %v3727
        %v3735 = vmul.f32 %v3393, %v3727
        %v3736 = vmul.f32 %v3416, %v3727
        %v3737 = vmul.f32 %v3394, %v3727
        %v3738 = vmul.f32 %v3417, %v3727
        %v3739 = vmul.f32 %v3395, %v3727
        %v3740 = vmul.f32 %v3418, %v3727
        %v3741 = vmul.f32 %v3396, %v3727
        %v3742 = vmul.f32 %v3419, %v3727
        %v3743 = vmul.f32 %v3397, %v3727
        %v3744 = vmul.f32 %v3420, %v3727
        %v3745 = vmul.f32 %v3398, %v3727
        %v3746 = vmul.f32 %v3421, %v3727
        %v3747 = vmul.f32 %v3399, %v3727
        %v3748 = vmul.f32 %v3422, %v3727
        %v3749 = vmul.f32 %v3400, %v3727
        %v3750 = vmul.f32 %v3423, %v3727
        %v3751 = vmul.f32 %v3401, %v3727
        %v3752 = vmul.f32 %v3424, %v3727
        %v3753 = vmul.f32 %v3402, %v3727
        %v3754 = vmul.f32 %v3425, %v3727
        %v3755 = vmul.f32 %v3403, %v3727
        %v3756 = vmul.f32 %v3426, %v3727
        %v3757 = vmul.f32 %v3404, %v3727
        %v3758 = vmul.f32 %v3427, %v3727
        %v3759 = vmul.f32 %v3405, %v3727
        %v3760 = vadd.f32 %v3692, %v3728
        %v3761 = vadd.f32 %v3693, %v3729
        %v3762 = vadd.f32 %v3694, %v3730
        %v3763 = vadd.f32 %v3695, %v3731
        %v3764 = vadd.f32 %v3696, %v3732
        %v3765 = vadd.f32 %v3697, %v3733
        %v3766 = vadd.f32 %v3698, %v3734
        %v3767 = vadd.f32 %v3699, %v3735
        %v3768 = vadd.f32 %v3700, %v3736
        %v3769 = vadd.f32 %v3701, %v3737
        %v3770 = vadd.f32 %v3702, %v3738
        %v3771 = vadd.f32 %v3703, %v3739
        %v3772 = vadd.f32 %v3704, %v3740
        %v3773 = vadd.f32 %v3705, %v3741
        %v3774 = vadd.f32 %v3706, %v3742
        %v3775 = vadd.f32 %v3707, %v3743
        %v3776 = vadd.f32 %v3708, %v3744
        %v3777 = vadd.f32 %v3709, %v3745
        %v3778 = vadd.f32 %v3710, %v3746
        %v3779 = vadd.f32 %v3711, %v3747
        %v3780 = vadd.f32 %v3712, %v3748
        %v3781 = vadd.f32 %v3713, %v3749
        %v3782 = vadd.f32 %v3714, %v3750
        %v3783 = vadd.f32 %v3715, %v3751
        %v3784 = vadd.f32 %v3716, %v3752
        %v3785 = vadd.f32 %v3717, %v3753
        %v3786 = vadd.f32 %v3718, %v3754
        %v3787 = vadd.f32 %v3719, %v3755
        %v3788 = vadd.f32 %v3720, %v3756
        %v3789 = vadd.f32 %v3721, %v3757
        %v3790 = vadd.f32 %v3722, %v3758
        %v3791 = vadd.f32 %v3723, %v3759
        %v3792 = vlaneseq
        %v3793 = vshrl.u32 %v3792, 7
        %v3794 = vsub.s32 0, %v3793
        %v3795 = vrot.slane %v367, %v3794
        %v3796 = vmul.f32 %v3413, %v3795
        %v3797 = vmul.f32 %v3391, %v3795
        %v3798 = vmul.f32 %v3414, %v3795
        %v3799 = vmul.f32 %v3392, %v3795
        %v3800 = vmul.f32 %v3415, %v3795
        %v3801 = vmul.f32 %v3393, %v3795
        %v3802 = vmul.f32 %v3416, %v3795
        %v3803 = vmul.f32 %v3394, %v3795
        %v3804 = vmul.f32 %v3417, %v3795
        %v3805 = vmul.f32 %v3395, %v3795
        %v3806 = vmul.f32 %v3418, %v3795
        %v3807 = vmul.f32 %v3396, %v3795
        %v3808 = vmul.f32 %v3419, %v3795
        %v3809 = vmul.f32 %v3397, %v3795
        %v3810 = vmul.f32 %v3420, %v3795
        %v3811 = vmul.f32 %v3398, %v3795
        %v3812 = vmul.f32 %v3421, %v3795
        %v3813 = vmul.f32 %v3399, %v3795
        %v3814 = vmul.f32 %v3422, %v3795
        %v3815 = vmul.f32 %v3400, %v3795
        %v3816 = vmul.f32 %v3423, %v3795
        %v3817 = vmul.f32 %v3401, %v3795
        %v3818 = vmul.f32 %v3424, %v3795
        %v3819 = vmul.f32 %v3402, %v3795
        %v3820 = vmul.f32 %v3425, %v3795
        %v3821 = vmul.f32 %v3403, %v3795
        %v3822 = vmul.f32 %v3426, %v3795
        %v3823 = vmul.f32 %v3404, %v3795
        %v3824 = vmul.f32 %v3427, %v3795
        %v3825 = vmul.f32 %v3405, %v3795
        %v3826 = vmul.f32 %v3428, %v3795
        %v3827 = vmul.f32 %v3406, %v3795
        %v3828 = vadd.f32 %v3760, %v3796
        %v3829 = vadd.f32 %v3761, %v3797
        %v3830 = vadd.f32 %v3762, %v3798
        %v3831 = vadd.f32 %v3763, %v3799
        %v3832 = vadd.f32 %v3764, %v3800
        %v3833 = vadd.f32 %v3765, %v3801
        %v3834 = vadd.f32 %v3766, %v3802
        %v3835 = vadd.f32 %v3767, %v3803
        %v3836 = vadd.f32 %v3768, %v3804
        %v3837 = vadd.f32 %v3769, %v3805
        %v3838 = vadd.f32 %v3770, %v3806
        %v3839 = vadd.f32 %v3771, %v3807
        %v3840 = vadd.f32 %v3772, %v3808
        %v3841 = vadd.f32 %v3773, %v3809
        %v3842 = vadd.f32 %v3774, %v3810
        %v3843 = vadd.f32 %v3775, %v3811
        %v3844 = vadd.f32 %v3776, %v3812
        %v3845 = vadd.f32 %v3777, %v3813
        %v3846 = vadd.f32 %v3778, %v3814
        %v3847 = vadd.f32 %v3779, %v3815
        %v3848 = vadd.f32 %v3780, %v3816
        %v3849 = vadd.f32 %v3781, %v3817
        %v3850 = vadd.f32 %v3782, %v3818
        %v3851 = vadd.f32 %v3783, %v3819
        %v3852 = vadd.f32 %v3784, %v3820
        %v3853 = vadd.f32 %v3785, %v3821
        %v3854 = vadd.f32 %v3786, %v3822
        %v3855 = vadd.f32 %v3787, %v3823
        %v3856 = vadd.f32 %v3788, %v3824
        %v3857 = vadd.f32 %v3789, %v3825
        %v3858 = vadd.f32 %v3790, %v3826
        %v3859 = vadd.f32 %v3791, %v3827
        %v3860 = vlaneseq
        %v3861 = vshrl.u32 %v3860, 7
        %v3862 = vsub.s32 7, %v3861
        %v3863 = vrot.slane %v367, %v3862
        %v3864 = vmul.f32 %v3414, %v3863
        %v3865 = vmul.f32 %v3392, %v3863
        %v3866 = vmul.f32 %v3415, %v3863
        %v3867 = vmul.f32 %v3393, %v3863
        %v3868 = vmul.f32 %v3416, %v3863
        %v3869 = vmul.f32 %v3394, %v3863
        %v3870 = vmul.f32 %v3417, %v3863
        %v3871 = vmul.f32 %v3395, %v3863
        %v3872 = vmul.f32 %v3418, %v3863
        %v3873 = vmul.f32 %v3396, %v3863
        %v3874 = vmul.f32 %v3419, %v3863
        %v3875 = vmul.f32 %v3397, %v3863
        %v3876 = vmul.f32 %v3420, %v3863
        %v3877 = vmul.f32 %v3398, %v3863
        %v3878 = vmul.f32 %v3421, %v3863
        %v3879 = vmul.f32 %v3399, %v3863
        %v3880 = vmul.f32 %v3422, %v3863
        %v3881 = vmul.f32 %v3400, %v3863
        %v3882 = vmul.f32 %v3423, %v3863
        %v3883 = vmul.f32 %v3401, %v3863
        %v3884 = vmul.f32 %v3424, %v3863
        %v3885 = vmul.f32 %v3402, %v3863
        %v3886 = vmul.f32 %v3425, %v3863
        %v3887 = vmul.f32 %v3403, %v3863
        %v3888 = vmul.f32 %v3426, %v3863
        %v3889 = vmul.f32 %v3404, %v3863
        %v3890 = vmul.f32 %v3427, %v3863
        %v3891 = vmul.f32 %v3405, %v3863
        %v3892 = vmul.f32 %v3428, %v3863
        %v3893 = vmul.f32 %v3406, %v3863
        %v3894 = vmul.f32 %v3429, %v3863
        %v3895 = vmul.f32 %v3407, %v3863
        %v3896 = vadd.f32 %v3828, %v3864
        %v3897 = vadd.f32 %v3829, %v3865
        %v3898 = vadd.f32 %v3830, %v3866
        %v3899 = vadd.f32 %v3831, %v3867
        %v3900 = vadd.f32 %v3832, %v3868
        %v3901 = vadd.f32 %v3833, %v3869
        %v3902 = vadd.f32 %v3834, %v3870
        %v3903 = vadd.f32 %v3835, %v3871
        %v3904 = vadd.f32 %v3836, %v3872
        %v3905 = vadd.f32 %v3837, %v3873
        %v3906 = vadd.f32 %v3838, %v3874
        %v3907 = vadd.f32 %v3839, %v3875
        %v3908 = vadd.f32 %v3840, %v3876
        %v3909 = vadd.f32 %v3841, %v3877
        %v3910 = vadd.f32 %v3842, %v3878
        %v3911 = vadd.f32 %v3843, %v3879
        %v3912 = vadd.f32 %v3844, %v3880
        %v3913 = vadd.f32 %v3845, %v3881
        %v3914 = vadd.f32 %v3846, %v3882
        %v3915 = vadd.f32 %v3847, %v3883
        %v3916 = vadd.f32 %v3848, %v3884
        %v3917 = vadd.f32 %v3849, %v3885
        %v3918 = vadd.f32 %v3850, %v3886
        %v3919 = vadd.f32 %v3851, %v3887
        %v3920 = vadd.f32 %v3852, %v3888
        %v3921 = vadd.f32 %v3853, %v3889
        %v3922 = vadd.f32 %v3854, %v3890
        %v3923 = vadd.f32 %v3855, %v3891
        %v3924 = vadd.f32 %v3856, %v3892
        %v3925 = vadd.f32 %v3857, %v3893
        %v3926 = vadd.f32 %v3858, %v3894
        %v3927 = vadd.f32 %v3859, %v3895
        %v3928 = vrot.slane %v3408, 1
        %v3929 = vrot.slane %v3409, 1
        %v3930 = vrot.slane %v3410, 1
        %v3931 = vrot.slane %v3411, 1
        %v3932 = vrot.slane %v3412, 1
        %v3933 = vrot.slane %v3413, 1
        %v3934 = vrot.slane %v3414, 1
        %v3935 = vrot.slane %v3415, 1
        %v3936 = vrot.slane %v3416, 1
        %v3937 = vrot.slane %v3417, 1
        %v3938 = vrot.slane %v3418, 1
        %v3939 = vrot.slane %v3419, 1
        %v3940 = vrot.slane %v3420, 1
        %v3941 = vrot.slane %v3421, 1
        %v3942 = vrot.slane %v3422, 1
        %v3943 = vrot.slane %v3423, 1
        %v3944 = vrot.slane %v3424, 1
        %v3945 = vrot.slane %v3425, 1
        %v3946 = vrot.slane %v3426, 1
        %v3947 = vrot.slane %v3427, 1
        %v3948 = vrot.slane %v3428, 1
        %v3949 = vrot.slane %v3429, 1
        %v3950 = vrot.slane %v3386, 1
        %v3951 = vrot.slane %v3387, 1
        %v3952 = vrot.slane %v3388, 1
        %v3953 = vrot.slane %v3389, 1
        %v3954 = vrot.slane %v3390, 1
        %v3955 = vrot.slane %v3391, 1
        %v3956 = vrot.slane %v3392, 1
        %v3957 = vrot.slane %v3393, 1
        %v3958 = vrot.slane %v3394, 1
        %v3959 = vrot.slane %v3395, 1
        %v3960 = vrot.slane %v3396, 1
        %v3961 = vrot.slane %v3397, 1
        %v3962 = vrot.slane %v3398, 1
        %v3963 = vrot.slane %v3399, 1
        %v3964 = vrot.slane %v3400, 1
        %v3965 = vrot.slane %v3401, 1
        %v3966 = vrot.slane %v3402, 1
        %v3967 = vrot.slane %v3403, 1
        %v3968 = vrot.slane %v3404, 1
        %v3969 = vrot.slane %v3405, 1
        %v3970 = vrot.slane %v3406, 1
        %v3971 = vrot.slane %v3407, 1
        %v3972 = vrot.slane %v3430, 1
        %v3973 = vrot.slane %v3431, 1
        %v3974 = vrot.slane %v3432, 1
        %v3975 = vrot.slane %v3433, 1
        %v3976 = vrot.slane %v3434, 1
        %v3977 = vrot.slane %v3435, 1
        %v3978 = vrot.slane %v3436, 1
        %v3979 = vrot.slane %v3437, 1
        %v3980 = vrot.slane %v3438, 1
        %v3981 = vrot.slane %v3439, 1
        %v3982 = vrot.slane %v3440, 1
        %v3983 = vrot.slane %v3441, 1
        %v3984 = vrot.slane %v3442, 1
        %v3985 = vrot.slane %v3443, 1
        %v3986 = vrot.slane %v3444, 1
        %v3987 = vrot.slane %v3445, 1
        %v3988 = vrot.slane %v3446, 1
        %v3989 = vrot.slane %v3447, 1
        %v3990 = vrot.slane %v3448, 1
        %v3991 = vrot.slane %v3449, 1
        %v3992 = vrot.slane %v3450, 1
        %v3993 = vrot.slane %v3451, 1
        %v3994 = vsel %vm920, %v3950, %v3972
        %v3995 = vsel %vm920, %v3951, %v3973
        %v3996 = vsel %vm920, %v3952, %v3974
        %v3997 = vsel %vm920, %v3953, %v3975
        %v3998 = vsel %vm920, %v3954, %v3976
        %v3999 = vsel %vm920, %v3955, %v3977
        %v4000 = vsel %vm920, %v3956, %v3978
        %v4001 = vsel %vm920, %v3957, %v3979
        %v4002 = vsel %vm920, %v3958, %v3980
        %v4003 = vsel %vm920, %v3959, %v3981
        %v4004 = vsel %vm920, %v3960, %v3982
        %v4005 = vsel %vm920, %v3961, %v3983
        %v4006 = vsel %vm920, %v3962, %v3984
        %v4007 = vsel %vm920, %v3963, %v3985
        %v4008 = vsel %vm920, %v3964, %v3986
        %v4009 = vsel %vm920, %v3965, %v3987
        %v4010 = vsel %vm920, %v3966, %v3988
        %v4011 = vsel %vm920, %v3967, %v3989
        %v4012 = vsel %vm920, %v3968, %v3990
        %v4013 = vsel %vm920, %v3969, %v3991
        %v4014 = vsel %vm920, %v3970, %v3992
        %v4015 = vsel %vm920, %v3971, %v3993
        %v4016 = vsel %vm920, %v3928, %v3950
        %v4017 = vsel %vm920, %v3929, %v3951
        %v4018 = vsel %vm920, %v3930, %v3952
        %v4019 = vsel %vm920, %v3931, %v3953
        %v4020 = vsel %vm920, %v3932, %v3954
        %v4021 = vsel %vm920, %v3933, %v3955
        %v4022 = vsel %vm920, %v3934, %v3956
        %v4023 = vsel %vm920, %v3935, %v3957
        %v4024 = vsel %vm920, %v3936, %v3958
        %v4025 = vsel %vm920, %v3937, %v3959
        %v4026 = vsel %vm920, %v3938, %v3960
        %v4027 = vsel %vm920, %v3939, %v3961
        %v4028 = vsel %vm920, %v3940, %v3962
        %v4029 = vsel %vm920, %v3941, %v3963
        %v4030 = vsel %vm920, %v3942, %v3964
        %v4031 = vsel %vm920, %v3943, %v3965
        %v4032 = vsel %vm920, %v3944, %v3966
        %v4033 = vsel %vm920, %v3945, %v3967
        %v4034 = vsel %vm920, %v3946, %v3968
        %v4035 = vsel %vm920, %v3947, %v3969
        %v4036 = vsel %vm920, %v3948, %v3970
        %v4037 = vsel %vm920, %v3949, %v3971
        %v4038 = vlaneseq
        %v4039 = vshrl.u32 %v4038, 7
        %v4040 = vsub.s32 6, %v4039
        %v4041 = vrot.slane %v362, %v4040
        %v4042 = vmul.f32 %v4016, %v4041
        %v4043 = vmul.f32 %v3994, %v4041
        %v4044 = vmul.f32 %v4017, %v4041
        %v4045 = vmul.f32 %v3995, %v4041
        %v4046 = vmul.f32 %v4018, %v4041
        %v4047 = vmul.f32 %v3996, %v4041
        %v4048 = vmul.f32 %v4019, %v4041
        %v4049 = vmul.f32 %v3997, %v4041
        %v4050 = vmul.f32 %v4020, %v4041
        %v4051 = vmul.f32 %v3998, %v4041
        %v4052 = vmul.f32 %v4021, %v4041
        %v4053 = vmul.f32 %v3999, %v4041
        %v4054 = vmul.f32 %v4022, %v4041
        %v4055 = vmul.f32 %v4000, %v4041
        %v4056 = vmul.f32 %v4023, %v4041
        %v4057 = vmul.f32 %v4001, %v4041
        %v4058 = vmul.f32 %v4024, %v4041
        %v4059 = vmul.f32 %v4002, %v4041
        %v4060 = vmul.f32 %v4025, %v4041
        %v4061 = vmul.f32 %v4003, %v4041
        %v4062 = vmul.f32 %v4026, %v4041
        %v4063 = vmul.f32 %v4004, %v4041
        %v4064 = vmul.f32 %v4027, %v4041
        %v4065 = vmul.f32 %v4005, %v4041
        %v4066 = vmul.f32 %v4028, %v4041
        %v4067 = vmul.f32 %v4006, %v4041
        %v4068 = vmul.f32 %v4029, %v4041
        %v4069 = vmul.f32 %v4007, %v4041
        %v4070 = vmul.f32 %v4030, %v4041
        %v4071 = vmul.f32 %v4008, %v4041
        %v4072 = vmul.f32 %v4031, %v4041
        %v4073 = vmul.f32 %v4009, %v4041
        %v4074 = vadd.f32 %v3288, %v4042
        %v4075 = vadd.f32 %v3289, %v4043
        %v4076 = vadd.f32 %v3290, %v4044
        %v4077 = vadd.f32 %v3291, %v4045
        %v4078 = vadd.f32 %v3292, %v4046
        %v4079 = vadd.f32 %v3293, %v4047
        %v4080 = vadd.f32 %v3294, %v4048
        %v4081 = vadd.f32 %v3295, %v4049
        %v4082 = vadd.f32 %v3296, %v4050
        %v4083 = vadd.f32 %v3297, %v4051
        %v4084 = vadd.f32 %v3298, %v4052
        %v4085 = vadd.f32 %v3299, %v4053
        %v4086 = vadd.f32 %v3300, %v4054
        %v4087 = vadd.f32 %v3301, %v4055
        %v4088 = vadd.f32 %v3302, %v4056
        %v4089 = vadd.f32 %v3303, %v4057
        %v4090 = vadd.f32 %v3304, %v4058
        %v4091 = vadd.f32 %v3305, %v4059
        %v4092 = vadd.f32 %v3306, %v4060
        %v4093 = vadd.f32 %v3307, %v4061
        %v4094 = vadd.f32 %v3308, %v4062
        %v4095 = vadd.f32 %v3309, %v4063
        %v4096 = vadd.f32 %v3310, %v4064
        %v4097 = vadd.f32 %v3311, %v4065
        %v4098 = vadd.f32 %v3312, %v4066
        %v4099 = vadd.f32 %v3313, %v4067
        %v4100 = vadd.f32 %v3314, %v4068
        %v4101 = vadd.f32 %v3315, %v4069
        %v4102 = vadd.f32 %v3316, %v4070
        %v4103 = vadd.f32 %v3317, %v4071
        %v4104 = vadd.f32 %v3318, %v4072
        %v4105 = vadd.f32 %v3319, %v4073
        %v4106 = vlaneseq
        %v4107 = vshrl.u32 %v4106, 7
        %v4108 = vsub.s32 5, %v4107
        %v4109 = vrot.slane %v363, %v4108
        %v4110 = vmul.f32 %v4017, %v4109
        %v4111 = vmul.f32 %v3995, %v4109
        %v4112 = vmul.f32 %v4018, %v4109
        %v4113 = vmul.f32 %v3996, %v4109
        %v4114 = vmul.f32 %v4019, %v4109
        %v4115 = vmul.f32 %v3997, %v4109
        %v4116 = vmul.f32 %v4020, %v4109
        %v4117 = vmul.f32 %v3998, %v4109
        %v4118 = vmul.f32 %v4021, %v4109
        %v4119 = vmul.f32 %v3999, %v4109
        %v4120 = vmul.f32 %v4022, %v4109
        %v4121 = vmul.f32 %v4000, %v4109
        %v4122 = vmul.f32 %v4023, %v4109
        %v4123 = vmul.f32 %v4001, %v4109
        %v4124 = vmul.f32 %v4024, %v4109
        %v4125 = vmul.f32 %v4002, %v4109
        %v4126 = vmul.f32 %v4025, %v4109
        %v4127 = vmul.f32 %v4003, %v4109
        %v4128 = vmul.f32 %v4026, %v4109
        %v4129 = vmul.f32 %v4004, %v4109
        %v4130 = vmul.f32 %v4027, %v4109
        %v4131 = vmul.f32 %v4005, %v4109
        %v4132 = vmul.f32 %v4028, %v4109
        %v4133 = vmul.f32 %v4006, %v4109
        %v4134 = vmul.f32 %v4029, %v4109
        %v4135 = vmul.f32 %v4007, %v4109
        %v4136 = vmul.f32 %v4030, %v4109
        %v4137 = vmul.f32 %v4008, %v4109
        %v4138 = vmul.f32 %v4031, %v4109
        %v4139 = vmul.f32 %v4009, %v4109
        %v4140 = vmul.f32 %v4032, %v4109
        %v4141 = vmul.f32 %v4010, %v4109
        %v4142 = vadd.f32 %v4074, %v4110
        %v4143 = vadd.f32 %v4075, %v4111
        %v4144 = vadd.f32 %v4076, %v4112
        %v4145 = vadd.f32 %v4077, %v4113
        %v4146 = vadd.f32 %v4078, %v4114
        %v4147 = vadd.f32 %v4079, %v4115
        %v4148 = vadd.f32 %v4080, %v4116
        %v4149 = vadd.f32 %v4081, %v4117
        %v4150 = vadd.f32 %v4082, %v4118
        %v4151 = vadd.f32 %v4083, %v4119
        %v4152 = vadd.f32 %v4084, %v4120
        %v4153 = vadd.f32 %v4085, %v4121
        %v4154 = vadd.f32 %v4086, %v4122
        %v4155 = vadd.f32 %v4087, %v4123
        %v4156 = vadd.f32 %v4088, %v4124
        %v4157 = vadd.f32 %v4089, %v4125
        %v4158 = vadd.f32 %v4090, %v4126
        %v4159 = vadd.f32 %v4091, %v4127
        %v4160 = vadd.f32 %v4092, %v4128
        %v4161 = vadd.f32 %v4093, %v4129
        %v4162 = vadd.f32 %v4094, %v4130
        %v4163 = vadd.f32 %v4095, %v4131
        %v4164 = vadd.f32 %v4096, %v4132
        %v4165 = vadd.f32 %v4097, %v4133
        %v4166 = vadd.f32 %v4098, %v4134
        %v4167 = vadd.f32 %v4099, %v4135
        %v4168 = vadd.f32 %v4100, %v4136
        %v4169 = vadd.f32 %v4101, %v4137
        %v4170 = vadd.f32 %v4102, %v4138
        %v4171 = vadd.f32 %v4103, %v4139
        %v4172 = vadd.f32 %v4104, %v4140
        %v4173 = vadd.f32 %v4105, %v4141
        %v4174 = vlaneseq
        %v4175 = vshrl.u32 %v4174, 7
        %v4176 = vsub.s32 4, %v4175
        %v4177 = vrot.slane %v364, %v4176
        %v4178 = vmul.f32 %v4018, %v4177
        %v4179 = vmul.f32 %v3996, %v4177
        %v4180 = vmul.f32 %v4019, %v4177
        %v4181 = vmul.f32 %v3997, %v4177
        %v4182 = vmul.f32 %v4020, %v4177
        %v4183 = vmul.f32 %v3998, %v4177
        %v4184 = vmul.f32 %v4021, %v4177
        %v4185 = vmul.f32 %v3999, %v4177
        %v4186 = vmul.f32 %v4022, %v4177
        %v4187 = vmul.f32 %v4000, %v4177
        %v4188 = vmul.f32 %v4023, %v4177
        %v4189 = vmul.f32 %v4001, %v4177
        %v4190 = vmul.f32 %v4024, %v4177
        %v4191 = vmul.f32 %v4002, %v4177
        %v4192 = vmul.f32 %v4025, %v4177
        %v4193 = vmul.f32 %v4003, %v4177
        %v4194 = vmul.f32 %v4026, %v4177
        %v4195 = vmul.f32 %v4004, %v4177
        %v4196 = vmul.f32 %v4027, %v4177
        %v4197 = vmul.f32 %v4005, %v4177
        %v4198 = vmul.f32 %v4028, %v4177
        %v4199 = vmul.f32 %v4006, %v4177
        %v4200 = vmul.f32 %v4029, %v4177
        %v4201 = vmul.f32 %v4007, %v4177
        %v4202 = vmul.f32 %v4030, %v4177
        %v4203 = vmul.f32 %v4008, %v4177
        %v4204 = vmul.f32 %v4031, %v4177
        %v4205 = vmul.f32 %v4009, %v4177
        %v4206 = vmul.f32 %v4032, %v4177
        %v4207 = vmul.f32 %v4010, %v4177
        %v4208 = vmul.f32 %v4033, %v4177
        %v4209 = vmul.f32 %v4011, %v4177
        %v4210 = vadd.f32 %v4142, %v4178
        %v4211 = vadd.f32 %v4143, %v4179
        %v4212 = vadd.f32 %v4144, %v4180
        %v4213 = vadd.f32 %v4145, %v4181
        %v4214 = vadd.f32 %v4146, %v4182
        %v4215 = vadd.f32 %v4147, %v4183
        %v4216 = vadd.f32 %v4148, %v4184
        %v4217 = vadd.f32 %v4149, %v4185
        %v4218 = vadd.f32 %v4150, %v4186
        %v4219 = vadd.f32 %v4151, %v4187
        %v4220 = vadd.f32 %v4152, %v4188
        %v4221 = vadd.f32 %v4153, %v4189
        %v4222 = vadd.f32 %v4154, %v4190
        %v4223 = vadd.f32 %v4155, %v4191
        %v4224 = vadd.f32 %v4156, %v4192
        %v4225 = vadd.f32 %v4157, %v4193
        %v4226 = vadd.f32 %v4158, %v4194
        %v4227 = vadd.f32 %v4159, %v4195
        %v4228 = vadd.f32 %v4160, %v4196
        %v4229 = vadd.f32 %v4161, %v4197
        %v4230 = vadd.f32 %v4162, %v4198
        %v4231 = vadd.f32 %v4163, %v4199
        %v4232 = vadd.f32 %v4164, %v4200
        %v4233 = vadd.f32 %v4165, %v4201
        %v4234 = vadd.f32 %v4166, %v4202
        %v4235 = vadd.f32 %v4167, %v4203
        %v4236 = vadd.f32 %v4168, %v4204
        %v4237 = vadd.f32 %v4169, %v4205
        %v4238 = vadd.f32 %v4170, %v4206
        %v4239 = vadd.f32 %v4171, %v4207
        %v4240 = vadd.f32 %v4172, %v4208
        %v4241 = vadd.f32 %v4173, %v4209
        %v4242 = vlaneseq
        %v4243 = vshrl.u32 %v4242, 7
        %v4244 = vsub.s32 3, %v4243
        %v4245 = vrot.slane %v365, %v4244
        %v4246 = vmul.f32 %v4019, %v4245
        %v4247 = vmul.f32 %v3997, %v4245
        %v4248 = vmul.f32 %v4020, %v4245
        %v4249 = vmul.f32 %v3998, %v4245
        %v4250 = vmul.f32 %v4021, %v4245
        %v4251 = vmul.f32 %v3999, %v4245
        %v4252 = vmul.f32 %v4022, %v4245
        %v4253 = vmul.f32 %v4000, %v4245
        %v4254 = vmul.f32 %v4023, %v4245
        %v4255 = vmul.f32 %v4001, %v4245
        %v4256 = vmul.f32 %v4024, %v4245
        %v4257 = vmul.f32 %v4002, %v4245
        %v4258 = vmul.f32 %v4025, %v4245
        %v4259 = vmul.f32 %v4003, %v4245
        %v4260 = vmul.f32 %v4026, %v4245
        %v4261 = vmul.f32 %v4004, %v4245
        %v4262 = vmul.f32 %v4027, %v4245
        %v4263 = vmul.f32 %v4005, %v4245
        %v4264 = vmul.f32 %v4028, %v4245
        %v4265 = vmul.f32 %v4006, %v4245
        %v4266 = vmul.f32 %v4029, %v4245
        %v4267 = vmul.f32 %v4007, %v4245
        %v4268 = vmul.f32 %v4030, %v4245
        %v4269 = vmul.f32 %v4008, %v4245
        %v4270 = vmul.f32 %v4031, %v4245
        %v4271 = vmul.f32 %v4009, %v4245
        %v4272 = vmul.f32 %v4032, %v4245
        %v4273 = vmul.f32 %v4010, %v4245
        %v4274 = vmul.f32 %v4033, %v4245
        %v4275 = vmul.f32 %v4011, %v4245
        %v4276 = vmul.f32 %v4034, %v4245
        %v4277 = vmul.f32 %v4012, %v4245
        %v4278 = vadd.f32 %v4210, %v4246
        %v4279 = vadd.f32 %v4211, %v4247
        %v4280 = vadd.f32 %v4212, %v4248
        %v4281 = vadd.f32 %v4213, %v4249
        %v4282 = vadd.f32 %v4214, %v4250
        %v4283 = vadd.f32 %v4215, %v4251
        %v4284 = vadd.f32 %v4216, %v4252
        %v4285 = vadd.f32 %v4217, %v4253
        %v4286 = vadd.f32 %v4218, %v4254
        %v4287 = vadd.f32 %v4219, %v4255
        %v4288 = vadd.f32 %v4220, %v4256
        %v4289 = vadd.f32 %v4221, %v4257
        %v4290 = vadd.f32 %v4222, %v4258
        %v4291 = vadd.f32 %v4223, %v4259
        %v4292 = vadd.f32 %v4224, %v4260
        %v4293 = vadd.f32 %v4225, %v4261
        %v4294 = vadd.f32 %v4226, %v4262
        %v4295 = vadd.f32 %v4227, %v4263
        %v4296 = vadd.f32 %v4228, %v4264
        %v4297 = vadd.f32 %v4229, %v4265
        %v4298 = vadd.f32 %v4230, %v4266
        %v4299 = vadd.f32 %v4231, %v4267
        %v4300 = vadd.f32 %v4232, %v4268
        %v4301 = vadd.f32 %v4233, %v4269
        %v4302 = vadd.f32 %v4234, %v4270
        %v4303 = vadd.f32 %v4235, %v4271
        %v4304 = vadd.f32 %v4236, %v4272
        %v4305 = vadd.f32 %v4237, %v4273
        %v4306 = vadd.f32 %v4238, %v4274
        %v4307 = vadd.f32 %v4239, %v4275
        %v4308 = vadd.f32 %v4240, %v4276
        %v4309 = vadd.f32 %v4241, %v4277
        %v4310 = vlaneseq
        %v4311 = vshrl.u32 %v4310, 7
        %v4312 = vsub.s32 2, %v4311
        %v4313 = vrot.slane %v366, %v4312
        %v4314 = vmul.f32 %v4020, %v4313
        %v4315 = vmul.f32 %v3998, %v4313
        %v4316 = vmul.f32 %v4021, %v4313
        %v4317 = vmul.f32 %v3999, %v4313
        %v4318 = vmul.f32 %v4022, %v4313
        %v4319 = vmul.f32 %v4000, %v4313
        %v4320 = vmul.f32 %v4023, %v4313
        %v4321 = vmul.f32 %v4001, %v4313
        %v4322 = vmul.f32 %v4024, %v4313
        %v4323 = vmul.f32 %v4002, %v4313
        %v4324 = vmul.f32 %v4025, %v4313
        %v4325 = vmul.f32 %v4003, %v4313
        %v4326 = vmul.f32 %v4026, %v4313
        %v4327 = vmul.f32 %v4004, %v4313
        %v4328 = vmul.f32 %v4027, %v4313
        %v4329 = vmul.f32 %v4005, %v4313
        %v4330 = vmul.f32 %v4028, %v4313
        %v4331 = vmul.f32 %v4006, %v4313
        %v4332 = vmul.f32 %v4029, %v4313
        %v4333 = vmul.f32 %v4007, %v4313
        %v4334 = vmul.f32 %v4030, %v4313
        %v4335 = vmul.f32 %v4008, %v4313
        %v4336 = vmul.f32 %v4031, %v4313
        %v4337 = vmul.f32 %v4009, %v4313
        %v4338 = vmul.f32 %v4032, %v4313
        %v4339 = vmul.f32 %v4010, %v4313
        %v4340 = vmul.f32 %v4033, %v4313
        %v4341 = vmul.f32 %v4011, %v4313
        %v4342 = vmul.f32 %v4034, %v4313
        %v4343 = vmul.f32 %v4012, %v4313
        %v4344 = vmul.f32 %v4035, %v4313
        %v4345 = vmul.f32 %v4013, %v4313
        %v4346 = vadd.f32 %v4278, %v4314
        %v4347 = vadd.f32 %v4279, %v4315
        %v4348 = vadd.f32 %v4280, %v4316
        %v4349 = vadd.f32 %v4281, %v4317
        %v4350 = vadd.f32 %v4282, %v4318
        %v4351 = vadd.f32 %v4283, %v4319
        %v4352 = vadd.f32 %v4284, %v4320
        %v4353 = vadd.f32 %v4285, %v4321
        %v4354 = vadd.f32 %v4286, %v4322
        %v4355 = vadd.f32 %v4287, %v4323
        %v4356 = vadd.f32 %v4288, %v4324
        %v4357 = vadd.f32 %v4289, %v4325
        %v4358 = vadd.f32 %v4290, %v4326
        %v4359 = vadd.f32 %v4291, %v4327
        %v4360 = vadd.f32 %v4292, %v4328
        %v4361 = vadd.f32 %v4293, %v4329
        %v4362 = vadd.f32 %v4294, %v4330
        %v4363 = vadd.f32 %v4295, %v4331
        %v4364 = vadd.f32 %v4296, %v4332
        %v4365 = vadd.f32 %v4297, %v4333
        %v4366 = vadd.f32 %v4298, %v4334
        %v4367 = vadd.f32 %v4299, %v4335
        %v4368 = vadd.f32 %v4300, %v4336
        %v4369 = vadd.f32 %v4301, %v4337
        %v4370 = vadd.f32 %v4302, %v4338
        %v4371 = vadd.f32 %v4303, %v4339
        %v4372 = vadd.f32 %v4304, %v4340
        %v4373 = vadd.f32 %v4305, %v4341
        %v4374 = vadd.f32 %v4306, %v4342
        %v4375 = vadd.f32 %v4307, %v4343
        %v4376 = vadd.f32 %v4308, %v4344
        %v4377 = vadd.f32 %v4309, %v4345
        %v4378 = vlaneseq
        %v4379 = vshrl.u32 %v4378, 7
        %v4380 = vsub.s32 1, %v4379
        %v4381 = vrot.slane %v367, %v4380
        %v4382 = vmul.f32 %v4021, %v4381
        %v4383 = vmul.f32 %v3999, %v4381
        %v4384 = vmul.f32 %v4022, %v4381
        %v4385 = vmul.f32 %v4000, %v4381
        %v4386 = vmul.f32 %v4023, %v4381
        %v4387 = vmul.f32 %v4001, %v4381
        %v4388 = vmul.f32 %v4024, %v4381
        %v4389 = vmul.f32 %v4002, %v4381
        %v4390 = vmul.f32 %v4025, %v4381
        %v4391 = vmul.f32 %v4003, %v4381
        %v4392 = vmul.f32 %v4026, %v4381
        %v4393 = vmul.f32 %v4004, %v4381
        %v4394 = vmul.f32 %v4027, %v4381
        %v4395 = vmul.f32 %v4005, %v4381
        %v4396 = vmul.f32 %v4028, %v4381
        %v4397 = vmul.f32 %v4006, %v4381
        %v4398 = vmul.f32 %v4029, %v4381
        %v4399 = vmul.f32 %v4007, %v4381
        %v4400 = vmul.f32 %v4030, %v4381
        %v4401 = vmul.f32 %v4008, %v4381
        %v4402 = vmul.f32 %v4031, %v4381
        %v4403 = vmul.f32 %v4009, %v4381
        %v4404 = vmul.f32 %v4032, %v4381
        %v4405 = vmul.f32 %v4010, %v4381
        %v4406 = vmul.f32 %v4033, %v4381
        %v4407 = vmul.f32 %v4011, %v4381
        %v4408 = vmul.f32 %v4034, %v4381
        %v4409 = vmul.f32 %v4012, %v4381
        %v4410 = vmul.f32 %v4035, %v4381
        %v4411 = vmul.f32 %v4013, %v4381
        %v4412 = vmul.f32 %v4036, %v4381
        %v4413 = vmul.f32 %v4014, %v4381
        %v4414 = vadd.f32 %v4346, %v4382
        %v4415 = vadd.f32 %v4347, %v4383
        %v4416 = vadd.f32 %v4348, %v4384
        %v4417 = vadd.f32 %v4349, %v4385
        %v4418 = vadd.f32 %v4350, %v4386
        %v4419 = vadd.f32 %v4351, %v4387
        %v4420 = vadd.f32 %v4352, %v4388
        %v4421 = vadd.f32 %v4353, %v4389
        %v4422 = vadd.f32 %v4354, %v4390
        %v4423 = vadd.f32 %v4355, %v4391
        %v4424 = vadd.f32 %v4356, %v4392
        %v4425 = vadd.f32 %v4357, %v4393
        %v4426 = vadd.f32 %v4358, %v4394
        %v4427 = vadd.f32 %v4359, %v4395
        %v4428 = vadd.f32 %v4360, %v4396
        %v4429 = vadd.f32 %v4361, %v4397
        %v4430 = vadd.f32 %v4362, %v4398
        %v4431 = vadd.f32 %v4363, %v4399
        %v4432 = vadd.f32 %v4364, %v4400
        %v4433 = vadd.f32 %v4365, %v4401
        %v4434 = vadd.f32 %v4366, %v4402
        %v4435 = vadd.f32 %v4367, %v4403
        %v4436 = vadd.f32 %v4368, %v4404
        %v4437 = vadd.f32 %v4369, %v4405
        %v4438 = vadd.f32 %v4370, %v4406
        %v4439 = vadd.f32 %v4371, %v4407
        %v4440 = vadd.f32 %v4372, %v4408
        %v4441 = vadd.f32 %v4373, %v4409
        %v4442 = vadd.f32 %v4374, %v4410
        %v4443 = vadd.f32 %v4375, %v4411
        %v4444 = vadd.f32 %v4376, %v4412
        %v4445 = vadd.f32 %v4377, %v4413
        %v4446 = vlaneseq
        %v4447 = vshrl.u32 %v4446, 7
        %v4448 = vsub.s32 0, %v4447
        %v4449 = vrot.slane %v368, %v4448
        %v4450 = vmul.f32 %v4022, %v4449
        %v4451 = vmul.f32 %v4000, %v4449
        %v4452 = vmul.f32 %v4023, %v4449
        %v4453 = vmul.f32 %v4001, %v4449
        %v4454 = vmul.f32 %v4024, %v4449
        %v4455 = vmul.f32 %v4002, %v4449
        %v4456 = vmul.f32 %v4025, %v4449
        %v4457 = vmul.f32 %v4003, %v4449
        %v4458 = vmul.f32 %v4026, %v4449
        %v4459 = vmul.f32 %v4004, %v4449
        %v4460 = vmul.f32 %v4027, %v4449
        %v4461 = vmul.f32 %v4005, %v4449
        %v4462 = vmul.f32 %v4028, %v4449
        %v4463 = vmul.f32 %v4006, %v4449
        %v4464 = vmul.f32 %v4029, %v4449
        %v4465 = vmul.f32 %v4007, %v4449
        %v4466 = vmul.f32 %v4030, %v4449
        %v4467 = vmul.f32 %v4008, %v4449
        %v4468 = vmul.f32 %v4031, %v4449
        %v4469 = vmul.f32 %v4009, %v4449
        %v4470 = vmul.f32 %v4032, %v4449
        %v4471 = vmul.f32 %v4010, %v4449
        %v4472 = vmul.f32 %v4033, %v4449
        %v4473 = vmul.f32 %v4011, %v4449
        %v4474 = vmul.f32 %v4034, %v4449
        %v4475 = vmul.f32 %v4012, %v4449
        %v4476 = vmul.f32 %v4035, %v4449
        %v4477 = vmul.f32 %v4013, %v4449
        %v4478 = vmul.f32 %v4036, %v4449
        %v4479 = vmul.f32 %v4014, %v4449
        %v4480 = vmul.f32 %v4037, %v4449
        %v4481 = vmul.f32 %v4015, %v4449
        %v4482 = vadd.f32 %v4414, %v4450
        %v4483 = vadd.f32 %v4415, %v4451
        %v4484 = vadd.f32 %v4416, %v4452
        %v4485 = vadd.f32 %v4417, %v4453
        %v4486 = vadd.f32 %v4418, %v4454
        %v4487 = vadd.f32 %v4419, %v4455
        %v4488 = vadd.f32 %v4420, %v4456
        %v4489 = vadd.f32 %v4421, %v4457
        %v4490 = vadd.f32 %v4422, %v4458
        %v4491 = vadd.f32 %v4423, %v4459
        %v4492 = vadd.f32 %v4424, %v4460
        %v4493 = vadd.f32 %v4425, %v4461
        %v4494 = vadd.f32 %v4426, %v4462
        %v4495 = vadd.f32 %v4427, %v4463
        %v4496 = vadd.f32 %v4428, %v4464
        %v4497 = vadd.f32 %v4429, %v4465
        %v4498 = vadd.f32 %v4430, %v4466
        %v4499 = vadd.f32 %v4431, %v4467
        %v4500 = vadd.f32 %v4432, %v4468
        %v4501 = vadd.f32 %v4433, %v4469
        %v4502 = vadd.f32 %v4434, %v4470
        %v4503 = vadd.f32 %v4435, %v4471
        %v4504 = vadd.f32 %v4436, %v4472
        %v4505 = vadd.f32 %v4437, %v4473
        %v4506 = vadd.f32 %v4438, %v4474
        %v4507 = vadd.f32 %v4439, %v4475
        %v4508 = vadd.f32 %v4440, %v4476
        %v4509 = vadd.f32 %v4441, %v4477
        %v4510 = vadd.f32 %v4442, %v4478
        %v4511 = vadd.f32 %v4443, %v4479
        %v4512 = vadd.f32 %v4444, %v4480
        %v4513 = vadd.f32 %v4445, %v4481
        %v4514 = vadd.f32 %v4482, %v3896
        %v4515 = vadd.f32 %v4483, %v3897
        %v4516 = vadd.f32 %v4484, %v3898
        %v4517 = vadd.f32 %v4485, %v3899
        %v4518 = vadd.f32 %v4486, %v3900
        %v4519 = vadd.f32 %v4487, %v3901
        %v4520 = vadd.f32 %v4488, %v3902
        %v4521 = vadd.f32 %v4489, %v3903
        %v4522 = vadd.f32 %v4490, %v3904
        %v4523 = vadd.f32 %v4491, %v3905
        %v4524 = vadd.f32 %v4492, %v3906
        %v4525 = vadd.f32 %v4493, %v3907
        %v4526 = vadd.f32 %v4494, %v3908
        %v4527 = vadd.f32 %v4495, %v3909
        %v4528 = vadd.f32 %v4496, %v3910
        %v4529 = vadd.f32 %v4497, %v3911
        %v4530 = vadd.f32 %v4498, %v3912
        %v4531 = vadd.f32 %v4499, %v3913
        %v4532 = vadd.f32 %v4500, %v3914
        %v4533 = vadd.f32 %v4501, %v3915
        %v4534 = vadd.f32 %v4502, %v3916
        %v4535 = vadd.f32 %v4503, %v3917
        %v4536 = vadd.f32 %v4504, %v3918
        %v4537 = vadd.f32 %v4505, %v3919
        %v4538 = vadd.f32 %v4506, %v3920
        %v4539 = vadd.f32 %v4507, %v3921
        %v4540 = vadd.f32 %v4508, %v3922
        %v4541 = vadd.f32 %v4509, %v3923
        %v4542 = vadd.f32 %v4510, %v3924
        %v4543 = vadd.f32 %v4511, %v3925
        %v4544 = vadd.f32 %v4512, %v3926
        %v4545 = vadd.f32 %v4513, %v3927
        %v4546 = vsel %vm2203, %v4514, 0.0
        %4547 = vadd.xlane.f32.xlu0 %v4546
        %v4548 = vpop.xlane.xlu0 %4547
        %v4549 = vsel %vm2203, %v4515, 0.0
        %4550 = vadd.xlane.f32.xlu0 %v4549
        %v4551 = vpop.xlane.xlu0 %4550
        %v4552 = vsel %vm2203, %v4516, 0.0
        %4553 = vadd.xlane.f32.xlu0 %v4552
        %v4554 = vpop.xlane.xlu0 %4553
        %v4555 = vsel %vm2203, %v4517, 0.0
        %4556 = vadd.xlane.f32.xlu0 %v4555
        %v4557 = vpop.xlane.xlu0 %4556
        %v4558 = vsel %vm2203, %v4518, 0.0
        %4559 = vadd.xlane.f32.xlu0 %v4558
        %v4560 = vpop.xlane.xlu0 %4559
        %v4561 = vsel %vm2203, %v4519, 0.0
        %4562 = vadd.xlane.f32.xlu0 %v4561
        %v4563 = vpop.xlane.xlu0 %4562
        %v4564 = vsel %vm2203, %v4520, 0.0
        %4565 = vadd.xlane.f32.xlu0 %v4564
        %v4566 = vpop.xlane.xlu0 %4565
        %v4567 = vsel %vm2203, %v4521, 0.0
        %4568 = vadd.xlane.f32.xlu0 %v4567
        %v4569 = vpop.xlane.xlu0 %4568
        %v4570 = vsel %vm2203, %v4522, 0.0
        %4571 = vadd.xlane.f32.xlu0 %v4570
        %v4572 = vpop.xlane.xlu0 %4571
        %v4573 = vsel %vm2203, %v4523, 0.0
        %4574 = vadd.xlane.f32.xlu0 %v4573
        %v4575 = vpop.xlane.xlu0 %4574
        %v4576 = vsel %vm2203, %v4524, 0.0
        %4577 = vadd.xlane.f32.xlu0 %v4576
        %v4578 = vpop.xlane.xlu0 %4577
        %v4579 = vsel %vm2203, %v4525, 0.0
        %4580 = vadd.xlane.f32.xlu0 %v4579
        %v4581 = vpop.xlane.xlu0 %4580
        %v4582 = vsel %vm2203, %v4526, 0.0
        %4583 = vadd.xlane.f32.xlu0 %v4582
        %v4584 = vpop.xlane.xlu0 %4583
        %v4585 = vsel %vm2203, %v4527, 0.0
        %4586 = vadd.xlane.f32.xlu0 %v4585
        %v4587 = vpop.xlane.xlu0 %4586
        %v4588 = vsel %vm2203, %v4528, 0.0
        %4589 = vadd.xlane.f32.xlu0 %v4588
        %v4590 = vpop.xlane.xlu0 %4589
        %v4591 = vsel %vm2203, %v4529, 0.0
        %4592 = vadd.xlane.f32.xlu0 %v4591
        %v4593 = vpop.xlane.xlu0 %4592
        %v4594 = vsel %vm2203, %v4530, 0.0
        %4595 = vadd.xlane.f32.xlu0 %v4594
        %v4596 = vpop.xlane.xlu0 %4595
        %v4597 = vsel %vm2203, %v4531, 0.0
        %4598 = vadd.xlane.f32.xlu0 %v4597
        %v4599 = vpop.xlane.xlu0 %4598
        %v4600 = vsel %vm2203, %v4532, 0.0
        %4601 = vadd.xlane.f32.xlu0 %v4600
        %v4602 = vpop.xlane.xlu0 %4601
        %v4603 = vsel %vm2203, %v4533, 0.0
        %4604 = vadd.xlane.f32.xlu0 %v4603
        %v4605 = vpop.xlane.xlu0 %4604
        %v4606 = vsel %vm2203, %v4534, 0.0
        %4607 = vadd.xlane.f32.xlu0 %v4606
        %v4608 = vpop.xlane.xlu0 %4607
        %v4609 = vsel %vm2203, %v4535, 0.0
        %4610 = vadd.xlane.f32.xlu0 %v4609
        %v4611 = vpop.xlane.xlu0 %4610
        %v4612 = vsel %vm2203, %v4536, 0.0
        %4613 = vadd.xlane.f32.xlu0 %v4612
        %v4614 = vpop.xlane.xlu0 %4613
        %v4615 = vsel %vm2203, %v4537, 0.0
        %4616 = vadd.xlane.f32.xlu0 %v4615
        %v4617 = vpop.xlane.xlu0 %4616
        %v4618 = vsel %vm2203, %v4538, 0.0
        %4619 = vadd.xlane.f32.xlu0 %v4618
        %v4620 = vpop.xlane.xlu0 %4619
        %v4621 = vsel %vm2203, %v4539, 0.0
        %4622 = vadd.xlane.f32.xlu0 %v4621
        %v4623 = vpop.xlane.xlu0 %4622
        %v4624 = vsel %vm2203, %v4540, 0.0
        %4625 = vadd.xlane.f32.xlu0 %v4624
        %v4626 = vpop.xlane.xlu0 %4625
        %v4627 = vsel %vm2203, %v4541, 0.0
        %4628 = vadd.xlane.f32.xlu0 %v4627
        %v4629 = vpop.xlane.xlu0 %4628
        %v4630 = vsel %vm2203, %v4542, 0.0
        %4631 = vadd.xlane.f32.xlu0 %v4630
        %v4632 = vpop.xlane.xlu0 %4631
        %v4633 = vsel %vm2203, %v4543, 0.0
        %4634 = vadd.xlane.f32.xlu0 %v4633
        %v4635 = vpop.xlane.xlu0 %4634
        %v4636 = vsel %vm2203, %v4544, 0.0
        %4637 = vadd.xlane.f32.xlu0 %v4636
        %v4638 = vpop.xlane.xlu0 %4637
        %v4639 = vsel %vm2203, %v4545, 0.0
        %4640 = vadd.xlane.f32.xlu0 %v4639
        %v4641 = vpop.xlane.xlu0 %4640
        %v4642 = vrcp.pop 64.0
        %v4643 = vmul.f32 %v4548, %v4642
        %v4644 = vmul.f32 %v4551, %v4642
        %v4645 = vmul.f32 %v4554, %v4642
        %v4646 = vmul.f32 %v4557, %v4642
        %v4647 = vmul.f32 %v4560, %v4642
        %v4648 = vmul.f32 %v4563, %v4642
        %v4649 = vmul.f32 %v4566, %v4642
        %v4650 = vmul.f32 %v4569, %v4642
        %v4651 = vmul.f32 %v4572, %v4642
        %v4652 = vmul.f32 %v4575, %v4642
        %v4653 = vmul.f32 %v4578, %v4642
        %v4654 = vmul.f32 %v4581, %v4642
        %v4655 = vmul.f32 %v4584, %v4642
        %v4656 = vmul.f32 %v4587, %v4642
        %v4657 = vmul.f32 %v4590, %v4642
        %v4658 = vmul.f32 %v4593, %v4642
        %v4659 = vmul.f32 %v4596, %v4642
        %v4660 = vmul.f32 %v4599, %v4642
        %v4661 = vmul.f32 %v4602, %v4642
        %v4662 = vmul.f32 %v4605, %v4642
        %v4663 = vmul.f32 %v4608, %v4642
        %v4664 = vmul.f32 %v4611, %v4642
        %v4665 = vmul.f32 %v4614, %v4642
        %v4666 = vmul.f32 %v4617, %v4642
        %v4667 = vmul.f32 %v4620, %v4642
        %v4668 = vmul.f32 %v4623, %v4642
        %v4669 = vmul.f32 %v4626, %v4642
        %v4670 = vmul.f32 %v4629, %v4642
        %v4671 = vmul.f32 %v4632, %v4642
        %v4672 = vmul.f32 %v4635, %v4642
        %v4673 = vmul.f32 %v4638, %v4642
        %v4674 = vmul.f32 %v4641, %v4642
        %v4675 = vsub.f32 %v4514, %v4643
        %v4676 = vsub.f32 %v4515, %v4644
        %v4677 = vsub.f32 %v4516, %v4645
        %v4678 = vsub.f32 %v4517, %v4646
        %v4679 = vsub.f32 %v4518, %v4647
        %v4680 = vsub.f32 %v4519, %v4648
        %v4681 = vsub.f32 %v4520, %v4649
        %v4682 = vsub.f32 %v4521, %v4650
        %v4683 = vsub.f32 %v4522, %v4651
        %v4684 = vsub.f32 %v4523, %v4652
        %v4685 = vsub.f32 %v4524, %v4653
        %v4686 = vsub.f32 %v4525, %v4654
        %v4687 = vsub.f32 %v4526, %v4655
        %v4688 = vsub.f32 %v4527, %v4656
        %v4689 = vsub.f32 %v4528, %v4657
        %v4690 = vsub.f32 %v4529, %v4658
        %v4691 = vsub.f32 %v4530, %v4659
        %v4692 = vsub.f32 %v4531, %v4660
        %v4693 = vsub.f32 %v4532, %v4661
        %v4694 = vsub.f32 %v4533, %v4662
        %v4695 = vsub.f32 %v4534, %v4663
        %v4696 = vsub.f32 %v4535, %v4664
        %v4697 = vsub.f32 %v4536, %v4665
        %v4698 = vsub.f32 %v4537, %v4666
        %v4699 = vsub.f32 %v4538, %v4667
        %v4700 = vsub.f32 %v4539, %v4668
        %v4701 = vsub.f32 %v4540, %v4669
        %v4702 = vsub.f32 %v4541, %v4670
        %v4703 = vsub.f32 %v4542, %v4671
        %v4704 = vsub.f32 %v4543, %v4672
        %v4705 = vsub.f32 %v4544, %v4673
        %v4706 = vsub.f32 %v4545, %v4674
        %v4707 = vmul.f32 %v4675, %v4675
        %v4708 = vmul.f32 %v4676, %v4676
        %v4709 = vmul.f32 %v4677, %v4677
        %v4710 = vmul.f32 %v4678, %v4678
        %v4711 = vmul.f32 %v4679, %v4679
        %v4712 = vmul.f32 %v4680, %v4680
        %v4713 = vmul.f32 %v4681, %v4681
        %v4714 = vmul.f32 %v4682, %v4682
        %v4715 = vmul.f32 %v4683, %v4683
        %v4716 = vmul.f32 %v4684, %v4684
        %v4717 = vmul.f32 %v4685, %v4685
        %v4718 = vmul.f32 %v4686, %v4686
        %v4719 = vmul.f32 %v4687, %v4687
        %v4720 = vmul.f32 %v4688, %v4688
        %v4721 = vmul.f32 %v4689, %v4689
        %v4722 = vmul.f32 %v4690, %v4690
        %v4723 = vmul.f32 %v4691, %v4691
        %v4724 = vmul.f32 %v4692, %v4692
        %v4725 = vmul.f32 %v4693, %v4693
        %v4726 = vmul.f32 %v4694, %v4694
        %v4727 = vmul.f32 %v4695, %v4695
        %v4728 = vmul.f32 %v4696, %v4696
        %v4729 = vmul.f32 %v4697, %v4697
        %v4730 = vmul.f32 %v4698, %v4698
        %v4731 = vmul.f32 %v4699, %v4699
        %v4732 = vmul.f32 %v4700, %v4700
        %v4733 = vmul.f32 %v4701, %v4701
        %v4734 = vmul.f32 %v4702, %v4702
        %v4735 = vmul.f32 %v4703, %v4703
        %v4736 = vmul.f32 %v4704, %v4704
        %v4737 = vmul.f32 %v4705, %v4705
        %v4738 = vmul.f32 %v4706, %v4706
        %v4739 = vsel %vm2203, %v4707, 0.0
        %4740 = vadd.xlane.f32.xlu0 %v4739
        %v4741 = vpop.xlane.xlu0 %4740
        %v4742 = vsel %vm2203, %v4708, 0.0
        %4743 = vadd.xlane.f32.xlu0 %v4742
        %v4744 = vpop.xlane.xlu0 %4743
        %v4745 = vsel %vm2203, %v4709, 0.0
        %4746 = vadd.xlane.f32.xlu0 %v4745
        %v4747 = vpop.xlane.xlu0 %4746
        %v4748 = vsel %vm2203, %v4710, 0.0
        %4749 = vadd.xlane.f32.xlu0 %v4748
        %v4750 = vpop.xlane.xlu0 %4749
        %v4751 = vsel %vm2203, %v4711, 0.0
        %4752 = vadd.xlane.f32.xlu0 %v4751
        %v4753 = vpop.xlane.xlu0 %4752
        %v4754 = vsel %vm2203, %v4712, 0.0
        %4755 = vadd.xlane.f32.xlu0 %v4754
        %v4756 = vpop.xlane.xlu0 %4755
        %v4757 = vsel %vm2203, %v4713, 0.0
        %4758 = vadd.xlane.f32.xlu0 %v4757
        %v4759 = vpop.xlane.xlu0 %4758
        %v4760 = vsel %vm2203, %v4714, 0.0
        %4761 = vadd.xlane.f32.xlu0 %v4760
        %v4762 = vpop.xlane.xlu0 %4761
        %v4763 = vsel %vm2203, %v4715, 0.0
        %4764 = vadd.xlane.f32.xlu0 %v4763
        %v4765 = vpop.xlane.xlu0 %4764
        %v4766 = vsel %vm2203, %v4716, 0.0
        %4767 = vadd.xlane.f32.xlu0 %v4766
        %v4768 = vpop.xlane.xlu0 %4767
        %v4769 = vsel %vm2203, %v4717, 0.0
        %4770 = vadd.xlane.f32.xlu0 %v4769
        %v4771 = vpop.xlane.xlu0 %4770
        %v4772 = vsel %vm2203, %v4718, 0.0
        %4773 = vadd.xlane.f32.xlu0 %v4772
        %v4774 = vpop.xlane.xlu0 %4773
        %v4775 = vsel %vm2203, %v4719, 0.0
        %4776 = vadd.xlane.f32.xlu0 %v4775
        %v4777 = vpop.xlane.xlu0 %4776
        %v4778 = vsel %vm2203, %v4720, 0.0
        %4779 = vadd.xlane.f32.xlu0 %v4778
        %v4780 = vpop.xlane.xlu0 %4779
        %v4781 = vsel %vm2203, %v4721, 0.0
        %4782 = vadd.xlane.f32.xlu0 %v4781
        %v4783 = vpop.xlane.xlu0 %4782
        %v4784 = vsel %vm2203, %v4722, 0.0
        %4785 = vadd.xlane.f32.xlu0 %v4784
        %v4786 = vpop.xlane.xlu0 %4785
        %v4787 = vsel %vm2203, %v4723, 0.0
        %4788 = vadd.xlane.f32.xlu0 %v4787
        %v4789 = vpop.xlane.xlu0 %4788
        %v4790 = vsel %vm2203, %v4724, 0.0
        %4791 = vadd.xlane.f32.xlu0 %v4790
        %v4792 = vpop.xlane.xlu0 %4791
        %v4793 = vsel %vm2203, %v4725, 0.0
        %4794 = vadd.xlane.f32.xlu0 %v4793
        %v4795 = vpop.xlane.xlu0 %4794
        %v4796 = vsel %vm2203, %v4726, 0.0
        %4797 = vadd.xlane.f32.xlu0 %v4796
        %v4798 = vpop.xlane.xlu0 %4797
        %v4799 = vsel %vm2203, %v4727, 0.0
        %4800 = vadd.xlane.f32.xlu0 %v4799
        %v4801 = vpop.xlane.xlu0 %4800
        %v4802 = vsel %vm2203, %v4728, 0.0
        %4803 = vadd.xlane.f32.xlu0 %v4802
        %v4804 = vpop.xlane.xlu0 %4803
        %v4805 = vsel %vm2203, %v4729, 0.0
        %4806 = vadd.xlane.f32.xlu0 %v4805
        %v4807 = vpop.xlane.xlu0 %4806
        %v4808 = vsel %vm2203, %v4730, 0.0
        %4809 = vadd.xlane.f32.xlu0 %v4808
        %v4810 = vpop.xlane.xlu0 %4809
        %v4811 = vsel %vm2203, %v4731, 0.0
        %4812 = vadd.xlane.f32.xlu0 %v4811
        %v4813 = vpop.xlane.xlu0 %4812
        %v4814 = vsel %vm2203, %v4732, 0.0
        %4815 = vadd.xlane.f32.xlu0 %v4814
        %v4816 = vpop.xlane.xlu0 %4815
        %v4817 = vsel %vm2203, %v4733, 0.0
        %4818 = vadd.xlane.f32.xlu0 %v4817
        %v4819 = vpop.xlane.xlu0 %4818
        %v4820 = vsel %vm2203, %v4734, 0.0
        %4821 = vadd.xlane.f32.xlu0 %v4820
        %v4822 = vpop.xlane.xlu0 %4821
        %v4823 = vsel %vm2203, %v4735, 0.0
        %4824 = vadd.xlane.f32.xlu0 %v4823
        %v4825 = vpop.xlane.xlu0 %4824
        %v4826 = vsel %vm2203, %v4736, 0.0
        %4827 = vadd.xlane.f32.xlu0 %v4826
        %v4828 = vpop.xlane.xlu0 %4827
        %v4829 = vsel %vm2203, %v4737, 0.0
        %4830 = vadd.xlane.f32.xlu0 %v4829
        %v4831 = vpop.xlane.xlu0 %4830
        %v4832 = vsel %vm2203, %v4738, 0.0
        %4833 = vadd.xlane.f32.xlu0 %v4832
        %v4834 = vpop.xlane.xlu0 %4833
        %v4835 = vmul.f32 %v4741, %v4642
        %v4836 = vmul.f32 %v4744, %v4642
        %v4837 = vmul.f32 %v4747, %v4642
        %v4838 = vmul.f32 %v4750, %v4642
        %v4839 = vmul.f32 %v4753, %v4642
        %v4840 = vmul.f32 %v4756, %v4642
        %v4841 = vmul.f32 %v4759, %v4642
        %v4842 = vmul.f32 %v4762, %v4642
        %v4843 = vmul.f32 %v4765, %v4642
        %v4844 = vmul.f32 %v4768, %v4642
        %v4845 = vmul.f32 %v4771, %v4642
        %v4846 = vmul.f32 %v4774, %v4642
        %v4847 = vmul.f32 %v4777, %v4642
        %v4848 = vmul.f32 %v4780, %v4642
        %v4849 = vmul.f32 %v4783, %v4642
        %v4850 = vmul.f32 %v4786, %v4642
        %v4851 = vmul.f32 %v4789, %v4642
        %v4852 = vmul.f32 %v4792, %v4642
        %v4853 = vmul.f32 %v4795, %v4642
        %v4854 = vmul.f32 %v4798, %v4642
        %v4855 = vmul.f32 %v4801, %v4642
        %v4856 = vmul.f32 %v4804, %v4642
        %v4857 = vmul.f32 %v4807, %v4642
        %v4858 = vmul.f32 %v4810, %v4642
        %v4859 = vmul.f32 %v4813, %v4642
        %v4860 = vmul.f32 %v4816, %v4642
        %v4861 = vmul.f32 %v4819, %v4642
        %v4862 = vmul.f32 %v4822, %v4642
        %v4863 = vmul.f32 %v4825, %v4642
        %v4864 = vmul.f32 %v4828, %v4642
        %v4865 = vmul.f32 %v4831, %v4642
        %v4866 = vmul.f32 %v4834, %v4642
        %v4867 = vadd.f32 %v4835, 1e-06
        %v4868 = vadd.f32 %v4836, 1e-06
        %v4869 = vadd.f32 %v4837, 1e-06
        %v4870 = vadd.f32 %v4838, 1e-06
        %v4871 = vadd.f32 %v4839, 1e-06
        %v4872 = vadd.f32 %v4840, 1e-06
        %v4873 = vadd.f32 %v4841, 1e-06
        %v4874 = vadd.f32 %v4842, 1e-06
        %v4875 = vadd.f32 %v4843, 1e-06
        %v4876 = vadd.f32 %v4844, 1e-06
        %v4877 = vadd.f32 %v4845, 1e-06
        %v4878 = vadd.f32 %v4846, 1e-06
        %v4879 = vadd.f32 %v4847, 1e-06
        %v4880 = vadd.f32 %v4848, 1e-06
        %v4881 = vadd.f32 %v4849, 1e-06
        %v4882 = vadd.f32 %v4850, 1e-06
        %v4883 = vadd.f32 %v4851, 1e-06
        %v4884 = vadd.f32 %v4852, 1e-06
        %v4885 = vadd.f32 %v4853, 1e-06
        %v4886 = vadd.f32 %v4854, 1e-06
        %v4887 = vadd.f32 %v4855, 1e-06
        %v4888 = vadd.f32 %v4856, 1e-06
        %v4889 = vadd.f32 %v4857, 1e-06
        %v4890 = vadd.f32 %v4858, 1e-06
        %v4891 = vadd.f32 %v4859, 1e-06
        %v4892 = vadd.f32 %v4860, 1e-06
        %v4893 = vadd.f32 %v4861, 1e-06
        %v4894 = vadd.f32 %v4862, 1e-06
        %v4895 = vadd.f32 %v4863, 1e-06
        %v4896 = vadd.f32 %v4864, 1e-06
        %v4897 = vadd.f32 %v4865, 1e-06
        %v4898 = vadd.f32 %v4866, 1e-06
        %v4899 = vrsqrt.pop %v4867
        %v4900 = vrsqrt.pop %v4868
        %v4901 = vrsqrt.pop %v4869
        %v4902 = vrsqrt.pop %v4870
        %v4903 = vrsqrt.pop %v4871
        %v4904 = vrsqrt.pop %v4872
        %v4905 = vrsqrt.pop %v4873
        %v4906 = vrsqrt.pop %v4874
        %v4907 = vrsqrt.pop %v4875
        %v4908 = vrsqrt.pop %v4876
        %v4909 = vrsqrt.pop %v4877
        %v4910 = vrsqrt.pop %v4878
        %v4911 = vrsqrt.pop %v4879
        %v4912 = vrsqrt.pop %v4880
        %v4913 = vrsqrt.pop %v4881
        %v4914 = vrsqrt.pop %v4882
        %v4915 = vrsqrt.pop %v4883
        %v4916 = vrsqrt.pop %v4884
        %v4917 = vrsqrt.pop %v4885
        %v4918 = vrsqrt.pop %v4886
        %v4919 = vrsqrt.pop %v4887
        %v4920 = vrsqrt.pop %v4888
        %v4921 = vrsqrt.pop %v4889
        %v4922 = vrsqrt.pop %v4890
        %v4923 = vrsqrt.pop %v4891
        %v4924 = vrsqrt.pop %v4892
        %v4925 = vrsqrt.pop %v4893
        %v4926 = vrsqrt.pop %v4894
        %v4927 = vrsqrt.pop %v4895
        %v4928 = vrsqrt.pop %v4896
        %v4929 = vrsqrt.pop %v4897
        %v4930 = vrsqrt.pop %v4898
        %v4931 = vmul.f32 %v4675, %v4899
        %v4932 = vmul.f32 %v4676, %v4900
        %v4933 = vmul.f32 %v4677, %v4901
        %v4934 = vmul.f32 %v4678, %v4902
        %v4935 = vmul.f32 %v4679, %v4903
        %v4936 = vmul.f32 %v4680, %v4904
        %v4937 = vmul.f32 %v4681, %v4905
        %v4938 = vmul.f32 %v4682, %v4906
        %v4939 = vmul.f32 %v4683, %v4907
        %v4940 = vmul.f32 %v4684, %v4908
        %v4941 = vmul.f32 %v4685, %v4909
        %v4942 = vmul.f32 %v4686, %v4910
        %v4943 = vmul.f32 %v4687, %v4911
        %v4944 = vmul.f32 %v4688, %v4912
        %v4945 = vmul.f32 %v4689, %v4913
        %v4946 = vmul.f32 %v4690, %v4914
        %v4947 = vmul.f32 %v4691, %v4915
        %v4948 = vmul.f32 %v4692, %v4916
        %v4949 = vmul.f32 %v4693, %v4917
        %v4950 = vmul.f32 %v4694, %v4918
        %v4951 = vmul.f32 %v4695, %v4919
        %v4952 = vmul.f32 %v4696, %v4920
        %v4953 = vmul.f32 %v4697, %v4921
        %v4954 = vmul.f32 %v4698, %v4922
        %v4955 = vmul.f32 %v4699, %v4923
        %v4956 = vmul.f32 %v4700, %v4924
        %v4957 = vmul.f32 %v4701, %v4925
        %v4958 = vmul.f32 %v4702, %v4926
        %v4959 = vmul.f32 %v4703, %v4927
        %v4960 = vmul.f32 %v4704, %v4928
        %v4961 = vmul.f32 %v4705, %v4929
        %v4962 = vmul.f32 %v4706, %v4930
        %v4963 = vpack.c.bf16 %v4932, %v4931
        %v4964 = vpack.c.bf16 %v4934, %v4933
        %v4965 = vpack.c.bf16 %v4936, %v4935
        %v4966 = vpack.c.bf16 %v4938, %v4937
        %v4967 = vpack.c.bf16 %v4940, %v4939
        %v4968 = vpack.c.bf16 %v4942, %v4941
        %v4969 = vpack.c.bf16 %v4944, %v4943
        %v4970 = vpack.c.bf16 %v4946, %v4945
        %v4971 = vpack.c.bf16 %v4948, %v4947
        %v4972 = vpack.c.bf16 %v4950, %v4949
        %v4973 = vpack.c.bf16 %v4952, %v4951
        %v4974 = vpack.c.bf16 %v4954, %v4953
        %v4975 = vpack.c.bf16 %v4956, %v4955
        %v4976 = vpack.c.bf16 %v4958, %v4957
        %v4977 = vpack.c.bf16 %v4960, %v4959
        %v4978 = vpack.c.bf16 %v4962, %v4961
        %v4979 = vld [vmem:[%s3] sm:$0xff]
        %v4980 = vld [vmem:[%s3 + $0x8] sm:$0xff]
        %v4981 = vld [vmem:[%s3 + $0x10] sm:$0xff]
        %v4982 = vld [vmem:[%s3 + $0x18] sm:$0xff]
        %v4983 = vld [vmem:[%s3 + $0x20] sm:$0xff]
        %v4984 = vld [vmem:[%s3 + $0x28] sm:$0xff]
        %v4985 = vld [vmem:[%s3 + $0x30] sm:$0xff]
        %v4986 = vld [vmem:[%s3 + $0x38] sm:$0xff]
        %v4987 = vld [vmem:[%s4] sm:$0x3]
        %v4989 = vlaneseq
        %v4990 = vshrl.u32 %v4989, 7
        %v4991 = vsub.s32 0, %v4990
        %v4992 = vrot.slane %v4987, %v4991
        %v4993 = vlaneseq
        %v4994 = vshrl.u32 %v4993, 7
        %v4995 = vsub.s32 1, %v4994
        %v4996 = vrot.slane %v4987, %v4995
        %v5007 = vunpack.c.l.b16 %v4979
        %v5008 = vunpack.c.h.b16 %v4979
        %v5009 = vunpack.c.l.b16 %v4980
        %v5010 = vunpack.c.h.b16 %v4980
        %v5011 = vunpack.c.l.b16 %v4981
        %v5012 = vunpack.c.h.b16 %v4981
        %v5013 = vunpack.c.l.b16 %v4982
        %v5014 = vunpack.c.h.b16 %v4982
        %v5015 = vunpack.c.l.b16 %v4983
        %v5016 = vunpack.c.h.b16 %v4983
        %v5017 = vunpack.c.l.b16 %v4984
        %v5018 = vunpack.c.h.b16 %v4984
        %v5019 = vunpack.c.l.b16 %v4985
        %v5020 = vunpack.c.h.b16 %v4985
        %v5021 = vunpack.c.l.b16 %v4986
        %v5022 = vunpack.c.h.b16 %v4986
        %v5023 = vpack.c.b16 %v5009, %v5007
        %v5024 = vpack.c.b16 %v5010, %v5008
        %v5025 = vpack.c.b16 %v5013, %v5011
        %v5026 = vpack.c.b16 %v5014, %v5012
        %v5027 = vpack.c.b16 %v5017, %v5015
        %v5028 = vpack.c.b16 %v5018, %v5016
        %v5029 = vpack.c.b16 %v5021, %v5019
        %v5030 = vpack.c.b16 %v5022, %v5020
        %v5040 = vsel %vm2203, %v4963, 0
        %v5043 = vsel %vm2203, %v4964, 0
        %v5046 = vsel %vm2203, %v4965, 0
        %v5049 = vsel %vm2203, %v4966, 0
        %v5052 = vsel %vm2203, %v4967, 0
        %v5055 = vsel %vm2203, %v4968, 0
        %v5058 = vsel %vm2203, %v4969, 0
        %v5061 = vsel %vm2203, %v4970, 0
        %v5064 = vsel %vm2203, %v4971, 0
        %v5067 = vsel %vm2203, %v4972, 0
        %v5070 = vsel %vm2203, %v4973, 0
        %v5073 = vsel %vm2203, %v4974, 0
        %v5076 = vsel %vm2203, %v4975, 0
        %v5079 = vsel %vm2203, %v4976, 0
        %v5082 = vsel %vm2203, %v4977, 0
        %v5085 = vsel %vm2203, %v4978, 0
        %5087 = vmatprep.subr.bf16.mxu0 %v5024
        %5088 = vmatpush1.bf16.msra.mxu0 %v5023
        %5089 = vmatprep.subr.bf16.mxu0 %v5026
        %5090 = vmatpush1.bf16.msra.mxu0 %v5025
        %5091 = vmatprep.subr.bf16.mxu0 %v5028
        %5092 = vmatpush1.bf16.msra.mxu0 %v5027
        %5093 = vmatprep.subr.bf16.mxu0 %v5030
        %5094 = vmatpush1.bf16.msra.mxu0 %v5029
        %5095 = vmatprep.subr.bf16.mxu0 0
        %5096 = vmatpush1.bf16.msra.mxu0 0
        %5097 = vmatprep.subr.bf16.mxu0 0
        %5098 = vmatpush1.bf16.msra.mxu0 0
        %5099 = vmatprep.subr.bf16.mxu0 0
        %5100 = vmatpush1.bf16.msra.mxu0 0
        %5101 = vmatprep.subr.bf16.mxu0 0
        %5102 = vmatpush1.bf16.msra.mxu0 0
        %5103 = vmatprep.subr.bf16.mxu0 0
        %5104 = vmatpush1.bf16.msra.mxu0 0
        %5105 = vmatprep.subr.bf16.mxu0 0
        %5106 = vmatpush1.bf16.msra.mxu0 0
        %5107 = vmatprep.subr.bf16.mxu0 0
        %5108 = vmatpush1.bf16.msra.mxu0 0
        %5109 = vmatprep.subr.bf16.mxu0 0
        %5110 = vmatpush1.bf16.msra.mxu0 0
        %5111 = vmatprep.subr.bf16.mxu0 0
        %5112 = vmatpush1.bf16.msra.mxu0 0
        %5113 = vmatprep.subr.bf16.mxu0 0
        %5114 = vmatpush1.bf16.msra.mxu0 0
        %5115 = vmatprep.subr.bf16.mxu0 0
        %5116 = vmatpush1.bf16.msra.mxu0 0
        %5117 = vmatprep.subr.bf16.mxu0 0
        %5118 = vmatpush1.bf16.msra.mxu0 0
        %5119 = vmatprep.mubr.bf16.mxu0 0
        %5120 = vmatmul.mubr.bf16.gmra.mrb[0].mxu0 %v5040
        %v5121 = vpop.f32.mrb[0].mxu0
        %v5122 = vadd.f32 %v4992, %v5121
        %v5123 = vpop.f32.mrb[0].mxu0
        %v5124 = vadd.f32 %v4996, %v5123
        %v5125 = vpop.f32.mrb[0].mxu0
        %v5126 = vadd.f32 %v4992, %v5125
        %v5127 = vpop.f32.mrb[0].mxu0
        %v5128 = vadd.f32 %v4996, %v5127
        %5129 = vmatprep.mubr.bf16.mxu0 0
        %5130 = vmatmul.mubr.bf16.gmra.mrb[0].mxu0 %v5043
        %v5131 = vpop.f32.mrb[0].mxu0
        %v5132 = vadd.f32 %v4992, %v5131
        %v5133 = vpop.f32.mrb[0].mxu0
        %v5134 = vadd.f32 %v4996, %v5133
        %v5135 = vpop.f32.mrb[0].mxu0
        %v5136 = vadd.f32 %v4992, %v5135
        %v5137 = vpop.f32.mrb[0].mxu0
        %v5138 = vadd.f32 %v4996, %v5137
        %5139 = vmatprep.mubr.bf16.mxu0 0
        %5140 = vmatmul.mubr.bf16.gmra.mrb[0].mxu0 %v5046
        %v5141 = vpop.f32.mrb[0].mxu0
        %v5142 = vadd.f32 %v4992, %v5141
        %v5143 = vpop.f32.mrb[0].mxu0
        %v5144 = vadd.f32 %v4996, %v5143
        %v5145 = vpop.f32.mrb[0].mxu0
        %v5146 = vadd.f32 %v4992, %v5145
        %v5147 = vpop.f32.mrb[0].mxu0
        %v5148 = vadd.f32 %v4996, %v5147
        %5149 = vmatprep.mubr.bf16.mxu0 0
        %5150 = vmatmul.mubr.bf16.gmra.mrb[0].mxu0 %v5049
        %v5151 = vpop.f32.mrb[0].mxu0
        %v5152 = vadd.f32 %v4992, %v5151
        %v5153 = vpop.f32.mrb[0].mxu0
        %v5154 = vadd.f32 %v4996, %v5153
        %v5155 = vpop.f32.mrb[0].mxu0
        %v5156 = vadd.f32 %v4992, %v5155
        %v5157 = vpop.f32.mrb[0].mxu0
        %v5158 = vadd.f32 %v4996, %v5157
        %5159 = vmatprep.mubr.bf16.mxu0 0
        %5160 = vmatmul.mubr.bf16.gmra.mrb[0].mxu0 %v5052
        %v5161 = vpop.f32.mrb[0].mxu0
        %v5162 = vadd.f32 %v4992, %v5161
        %v5163 = vpop.f32.mrb[0].mxu0
        %v5164 = vadd.f32 %v4996, %v5163
        %v5165 = vpop.f32.mrb[0].mxu0
        %v5166 = vadd.f32 %v4992, %v5165
        %v5167 = vpop.f32.mrb[0].mxu0
        %v5168 = vadd.f32 %v4996, %v5167
        %5169 = vmatprep.mubr.bf16.mxu0 0
        %5170 = vmatmul.mubr.bf16.gmra.mrb[0].mxu0 %v5055
        %v5171 = vpop.f32.mrb[0].mxu0
        %v5172 = vadd.f32 %v4992, %v5171
        %v5173 = vpop.f32.mrb[0].mxu0
        %v5174 = vadd.f32 %v4996, %v5173
        %v5175 = vpop.f32.mrb[0].mxu0
        %v5176 = vadd.f32 %v4992, %v5175
        %v5177 = vpop.f32.mrb[0].mxu0
        %v5178 = vadd.f32 %v4996, %v5177
        %5179 = vmatprep.mubr.bf16.mxu0 0
        %5180 = vmatmul.mubr.bf16.gmra.mrb[0].mxu0 %v5058
        %v5181 = vpop.f32.mrb[0].mxu0
        %v5182 = vadd.f32 %v4992, %v5181
        %v5183 = vpop.f32.mrb[0].mxu0
        %v5184 = vadd.f32 %v4996, %v5183
        %v5185 = vpop.f32.mrb[0].mxu0
        %v5186 = vadd.f32 %v4992, %v5185
        %v5187 = vpop.f32.mrb[0].mxu0
        %v5188 = vadd.f32 %v4996, %v5187
        %5189 = vmatprep.mubr.bf16.mxu0 0
        %5190 = vmatmul.mubr.bf16.gmra.mrb[0].mxu0 %v5061
        %v5191 = vpop.f32.mrb[0].mxu0
        %v5192 = vadd.f32 %v4992, %v5191
        %v5193 = vpop.f32.mrb[0].mxu0
        %v5194 = vadd.f32 %v4996, %v5193
        %v5195 = vpop.f32.mrb[0].mxu0
        %v5196 = vadd.f32 %v4992, %v5195
        %v5197 = vpop.f32.mrb[0].mxu0
        %v5198 = vadd.f32 %v4996, %v5197
        %5199 = vmatprep.mubr.bf16.mxu0 0
        %5200 = vmatmul.mubr.bf16.gmra.mrb[0].mxu0 %v5064
        %v5201 = vpop.f32.mrb[0].mxu0
        %v5202 = vadd.f32 %v4992, %v5201
        %v5203 = vpop.f32.mrb[0].mxu0
        %v5204 = vadd.f32 %v4996, %v5203
        %v5205 = vpop.f32.mrb[0].mxu0
        %v5206 = vadd.f32 %v4992, %v5205
        %v5207 = vpop.f32.mrb[0].mxu0
        %v5208 = vadd.f32 %v4996, %v5207
        %5209 = vmatprep.mubr.bf16.mxu0 0
        %5210 = vmatmul.mubr.bf16.gmra.mrb[0].mxu0 %v5067
        %v5211 = vpop.f32.mrb[0].mxu0
        %v5212 = vadd.f32 %v4992, %v5211
        %v5213 = vpop.f32.mrb[0].mxu0
        %v5214 = vadd.f32 %v4996, %v5213
        %v5215 = vpop.f32.mrb[0].mxu0
        %v5216 = vadd.f32 %v4992, %v5215
        %v5217 = vpop.f32.mrb[0].mxu0
        %v5218 = vadd.f32 %v4996, %v5217
        %5219 = vmatprep.mubr.bf16.mxu0 0
        %5220 = vmatmul.mubr.bf16.gmra.mrb[0].mxu0 %v5070
        %v5221 = vpop.f32.mrb[0].mxu0
        %v5222 = vadd.f32 %v4992, %v5221
        %v5223 = vpop.f32.mrb[0].mxu0
        %v5224 = vadd.f32 %v4996, %v5223
        %v5225 = vpop.f32.mrb[0].mxu0
        %v5226 = vadd.f32 %v4992, %v5225
        %v5227 = vpop.f32.mrb[0].mxu0
        %v5228 = vadd.f32 %v4996, %v5227
        %5229 = vmatprep.mubr.bf16.mxu0 0
        %5230 = vmatmul.mubr.bf16.gmra.mrb[0].mxu0 %v5073
        %v5231 = vpop.f32.mrb[0].mxu0
        %v5232 = vadd.f32 %v4992, %v5231
        %v5233 = vpop.f32.mrb[0].mxu0
        %v5234 = vadd.f32 %v4996, %v5233
        %v5235 = vpop.f32.mrb[0].mxu0
        %v5236 = vadd.f32 %v4992, %v5235
        %v5237 = vpop.f32.mrb[0].mxu0
        %v5238 = vadd.f32 %v4996, %v5237
        %5239 = vmatprep.mubr.bf16.mxu0 0
        %5240 = vmatmul.mubr.bf16.gmra.mrb[0].mxu0 %v5076
        %v5241 = vpop.f32.mrb[0].mxu0
        %v5242 = vadd.f32 %v4992, %v5241
        %v5243 = vpop.f32.mrb[0].mxu0
        %v5244 = vadd.f32 %v4996, %v5243
        %v5245 = vpop.f32.mrb[0].mxu0
        %v5246 = vadd.f32 %v4992, %v5245
        %v5247 = vpop.f32.mrb[0].mxu0
        %v5248 = vadd.f32 %v4996, %v5247
        %5249 = vmatprep.mubr.bf16.mxu0 0
        %5250 = vmatmul.mubr.bf16.gmra.mrb[0].mxu0 %v5079
        %v5251 = vpop.f32.mrb[0].mxu0
        %v5252 = vadd.f32 %v4992, %v5251
        %v5253 = vpop.f32.mrb[0].mxu0
        %v5254 = vadd.f32 %v4996, %v5253
        %v5255 = vpop.f32.mrb[0].mxu0
        %v5256 = vadd.f32 %v4992, %v5255
        %v5257 = vpop.f32.mrb[0].mxu0
        %v5258 = vadd.f32 %v4996, %v5257
        %5259 = vmatprep.mubr.bf16.mxu0 0
        %5260 = vmatmul.mubr.bf16.gmra.mrb[0].mxu0 %v5082
        %v5261 = vpop.f32.mrb[0].mxu0
        %v5262 = vadd.f32 %v4992, %v5261
        %v5263 = vpop.f32.mrb[0].mxu0
        %v5264 = vadd.f32 %v4996, %v5263
        %v5265 = vpop.f32.mrb[0].mxu0
        %v5266 = vadd.f32 %v4992, %v5265
        %v5267 = vpop.f32.mrb[0].mxu0
        %v5268 = vadd.f32 %v4996, %v5267
        %5269 = vmatprep.mubr.bf16.mxu0 0
        %5270 = vmatmul.mubr.bf16.gmra.mrb[0].mxu0 %v5085
        %v5271 = vpop.f32.mrb[0].mxu0
        %v5272 = vadd.f32 %v4992, %v5271
        %v5273 = vpop.f32.mrb[0].mxu0
        %v5274 = vadd.f32 %v4996, %v5273
        %v5275 = vpop.f32.mrb[0].mxu0
        %v5276 = vadd.f32 %v4992, %v5275
        %v5277 = vpop.f32.mrb[0].mxu0
        %v5278 = vadd.f32 %v4996, %v5277
        %5279 = vdwg.mxu0
        %v5280 = vmul.f32 %v5122, %v5122
        %v5281 = vmul.f32 %v5124, %v5124
        %v5282 = vmul.f32 %v5126, %v5126
        %v5283 = vmul.f32 %v5128, %v5128
        %v5284 = vmul.f32 %v5132, %v5132
        %v5285 = vmul.f32 %v5134, %v5134
        %v5286 = vmul.f32 %v5136, %v5136
        %v5287 = vmul.f32 %v5138, %v5138
        %v5288 = vmul.f32 %v5142, %v5142
        %v5289 = vmul.f32 %v5144, %v5144
        %v5290 = vmul.f32 %v5146, %v5146
        %v5291 = vmul.f32 %v5148, %v5148
        %v5292 = vmul.f32 %v5152, %v5152
        %v5293 = vmul.f32 %v5154, %v5154
        %v5294 = vmul.f32 %v5156, %v5156
        %v5295 = vmul.f32 %v5158, %v5158
        %v5296 = vmul.f32 %v5162, %v5162
        %v5297 = vmul.f32 %v5164, %v5164
        %v5298 = vmul.f32 %v5166, %v5166
        %v5299 = vmul.f32 %v5168, %v5168
        %v5300 = vmul.f32 %v5172, %v5172
        %v5301 = vmul.f32 %v5174, %v5174
        %v5302 = vmul.f32 %v5176, %v5176
        %v5303 = vmul.f32 %v5178, %v5178
        %v5304 = vmul.f32 %v5182, %v5182
        %v5305 = vmul.f32 %v5184, %v5184
        %v5306 = vmul.f32 %v5186, %v5186
        %v5307 = vmul.f32 %v5188, %v5188
        %v5308 = vmul.f32 %v5192, %v5192
        %v5309 = vmul.f32 %v5194, %v5194
        %v5310 = vmul.f32 %v5196, %v5196
        %v5311 = vmul.f32 %v5198, %v5198
        %v5312 = vmul.f32 %v5202, %v5202
        %v5313 = vmul.f32 %v5204, %v5204
        %v5314 = vmul.f32 %v5206, %v5206
        %v5315 = vmul.f32 %v5208, %v5208
        %v5316 = vmul.f32 %v5212, %v5212
        %v5317 = vmul.f32 %v5214, %v5214
        %v5318 = vmul.f32 %v5216, %v5216
        %v5319 = vmul.f32 %v5218, %v5218
        %v5320 = vmul.f32 %v5222, %v5222
        %v5321 = vmul.f32 %v5224, %v5224
        %v5322 = vmul.f32 %v5226, %v5226
        %v5323 = vmul.f32 %v5228, %v5228
        %v5324 = vmul.f32 %v5232, %v5232
        %v5325 = vmul.f32 %v5234, %v5234
        %v5326 = vmul.f32 %v5236, %v5236
        %v5327 = vmul.f32 %v5238, %v5238
        %v5328 = vmul.f32 %v5242, %v5242
        %v5329 = vmul.f32 %v5244, %v5244
        %v5330 = vmul.f32 %v5246, %v5246
        %v5331 = vmul.f32 %v5248, %v5248
        %v5332 = vmul.f32 %v5252, %v5252
        %v5333 = vmul.f32 %v5254, %v5254
        %v5334 = vmul.f32 %v5256, %v5256
        %v5335 = vmul.f32 %v5258, %v5258
        %v5336 = vmul.f32 %v5262, %v5262
        %v5337 = vmul.f32 %v5264, %v5264
        %v5338 = vmul.f32 %v5266, %v5266
        %v5339 = vmul.f32 %v5268, %v5268
        %v5340 = vmul.f32 %v5272, %v5272
        %v5341 = vmul.f32 %v5274, %v5274
        %v5342 = vmul.f32 %v5276, %v5276
        %v5343 = vmul.f32 %v5278, %v5278
        %v5344 = vmul.f32 %v5122, %v5280
        %v5345 = vmul.f32 %v5124, %v5281
        %v5346 = vmul.f32 %v5126, %v5282
        %v5347 = vmul.f32 %v5128, %v5283
        %v5348 = vmul.f32 %v5132, %v5284
        %v5349 = vmul.f32 %v5134, %v5285
        %v5350 = vmul.f32 %v5136, %v5286
        %v5351 = vmul.f32 %v5138, %v5287
        %v5352 = vmul.f32 %v5142, %v5288
        %v5353 = vmul.f32 %v5144, %v5289
        %v5354 = vmul.f32 %v5146, %v5290
        %v5355 = vmul.f32 %v5148, %v5291
        %v5356 = vmul.f32 %v5152, %v5292
        %v5357 = vmul.f32 %v5154, %v5293
        %v5358 = vmul.f32 %v5156, %v5294
        %v5359 = vmul.f32 %v5158, %v5295
        %v5360 = vmul.f32 %v5162, %v5296
        %v5361 = vmul.f32 %v5164, %v5297
        %v5362 = vmul.f32 %v5166, %v5298
        %v5363 = vmul.f32 %v5168, %v5299
        %v5364 = vmul.f32 %v5172, %v5300
        %v5365 = vmul.f32 %v5174, %v5301
        %v5366 = vmul.f32 %v5176, %v5302
        %v5367 = vmul.f32 %v5178, %v5303
        %v5368 = vmul.f32 %v5182, %v5304
        %v5369 = vmul.f32 %v5184, %v5305
        %v5370 = vmul.f32 %v5186, %v5306
        %v5371 = vmul.f32 %v5188, %v5307
        %v5372 = vmul.f32 %v5192, %v5308
        %v5373 = vmul.f32 %v5194, %v5309
        %v5374 = vmul.f32 %v5196, %v5310
        %v5375 = vmul.f32 %v5198, %v5311
        %v5376 = vmul.f32 %v5202, %v5312
        %v5377 = vmul.f32 %v5204, %v5313
        %v5378 = vmul.f32 %v5206, %v5314
        %v5379 = vmul.f32 %v5208, %v5315
        %v5380 = vmul.f32 %v5212, %v5316
        %v5381 = vmul.f32 %v5214, %v5317
        %v5382 = vmul.f32 %v5216, %v5318
        %v5383 = vmul.f32 %v5218, %v5319
        %v5384 = vmul.f32 %v5222, %v5320
        %v5385 = vmul.f32 %v5224, %v5321
        %v5386 = vmul.f32 %v5226, %v5322
        %v5387 = vmul.f32 %v5228, %v5323
        %v5388 = vmul.f32 %v5232, %v5324
        %v5389 = vmul.f32 %v5234, %v5325
        %v5390 = vmul.f32 %v5236, %v5326
        %v5391 = vmul.f32 %v5238, %v5327
        %v5392 = vmul.f32 %v5242, %v5328
        %v5393 = vmul.f32 %v5244, %v5329
        %v5394 = vmul.f32 %v5246, %v5330
        %v5395 = vmul.f32 %v5248, %v5331
        %v5396 = vmul.f32 %v5252, %v5332
        %v5397 = vmul.f32 %v5254, %v5333
        %v5398 = vmul.f32 %v5256, %v5334
        %v5399 = vmul.f32 %v5258, %v5335
        %v5400 = vmul.f32 %v5262, %v5336
        %v5401 = vmul.f32 %v5264, %v5337
        %v5402 = vmul.f32 %v5266, %v5338
        %v5403 = vmul.f32 %v5268, %v5339
        %v5404 = vmul.f32 %v5272, %v5340
        %v5405 = vmul.f32 %v5274, %v5341
        %v5406 = vmul.f32 %v5276, %v5342
        %v5407 = vmul.f32 %v5278, %v5343
        %v5408 = vmul.f32 %v5344, 0.044715
        %v5409 = vmul.f32 %v5345, 0.044715
        %v5410 = vmul.f32 %v5346, 0.044715
        %v5411 = vmul.f32 %v5347, 0.044715
        %v5412 = vmul.f32 %v5348, 0.044715
        %v5413 = vmul.f32 %v5349, 0.044715
        %v5414 = vmul.f32 %v5350, 0.044715
        %v5415 = vmul.f32 %v5351, 0.044715
        %v5416 = vmul.f32 %v5352, 0.044715
        %v5417 = vmul.f32 %v5353, 0.044715
        %v5418 = vmul.f32 %v5354, 0.044715
        %v5419 = vmul.f32 %v5355, 0.044715
        %v5420 = vmul.f32 %v5356, 0.044715
        %v5421 = vmul.f32 %v5357, 0.044715
        %v5422 = vmul.f32 %v5358, 0.044715
        %v5423 = vmul.f32 %v5359, 0.044715
        %v5424 = vmul.f32 %v5360, 0.044715
        %v5425 = vmul.f32 %v5361, 0.044715
        %v5426 = vmul.f32 %v5362, 0.044715
        %v5427 = vmul.f32 %v5363, 0.044715
        %v5428 = vmul.f32 %v5364, 0.044715
        %v5429 = vmul.f32 %v5365, 0.044715
        %v5430 = vmul.f32 %v5366, 0.044715
        %v5431 = vmul.f32 %v5367, 0.044715
        %v5432 = vmul.f32 %v5368, 0.044715
        %v5433 = vmul.f32 %v5369, 0.044715
        %v5434 = vmul.f32 %v5370, 0.044715
        %v5435 = vmul.f32 %v5371, 0.044715
        %v5436 = vmul.f32 %v5372, 0.044715
        %v5437 = vmul.f32 %v5373, 0.044715
        %v5438 = vmul.f32 %v5374, 0.044715
        %v5439 = vmul.f32 %v5375, 0.044715
        %v5440 = vmul.f32 %v5376, 0.044715
        %v5441 = vmul.f32 %v5377, 0.044715
        %v5442 = vmul.f32 %v5378, 0.044715
        %v5443 = vmul.f32 %v5379, 0.044715
        %v5444 = vmul.f32 %v5380, 0.044715
        %v5445 = vmul.f32 %v5381, 0.044715
        %v5446 = vmul.f32 %v5382, 0.044715
        %v5447 = vmul.f32 %v5383, 0.044715
        %v5448 = vmul.f32 %v5384, 0.044715
        %v5449 = vmul.f32 %v5385, 0.044715
        %v5450 = vmul.f32 %v5386, 0.044715
        %v5451 = vmul.f32 %v5387, 0.044715
        %v5452 = vmul.f32 %v5388, 0.044715
        %v5453 = vmul.f32 %v5389, 0.044715
        %v5454 = vmul.f32 %v5390, 0.044715
        %v5455 = vmul.f32 %v5391, 0.044715
        %v5456 = vmul.f32 %v5392, 0.044715
        %v5457 = vmul.f32 %v5393, 0.044715
        %v5458 = vmul.f32 %v5394, 0.044715
        %v5459 = vmul.f32 %v5395, 0.044715
        %v5460 = vmul.f32 %v5396, 0.044715
        %v5461 = vmul.f32 %v5397, 0.044715
        %v5462 = vmul.f32 %v5398, 0.044715
        %v5463 = vmul.f32 %v5399, 0.044715
        %v5464 = vmul.f32 %v5400, 0.044715
        %v5465 = vmul.f32 %v5401, 0.044715
        %v5466 = vmul.f32 %v5402, 0.044715
        %v5467 = vmul.f32 %v5403, 0.044715
        %v5468 = vmul.f32 %v5404, 0.044715
        %v5469 = vmul.f32 %v5405, 0.044715
        %v5470 = vmul.f32 %v5406, 0.044715
        %v5471 = vmul.f32 %v5407, 0.044715
        %v5472 = vadd.f32 %v5122, %v5408
        %v5473 = vadd.f32 %v5124, %v5409
        %v5474 = vadd.f32 %v5126, %v5410
        %v5475 = vadd.f32 %v5128, %v5411
        %v5476 = vadd.f32 %v5132, %v5412
        %v5477 = vadd.f32 %v5134, %v5413
        %v5478 = vadd.f32 %v5136, %v5414
        %v5479 = vadd.f32 %v5138, %v5415
        %v5480 = vadd.f32 %v5142, %v5416
        %v5481 = vadd.f32 %v5144, %v5417
        %v5482 = vadd.f32 %v5146, %v5418
        %v5483 = vadd.f32 %v5148, %v5419
        %v5484 = vadd.f32 %v5152, %v5420
        %v5485 = vadd.f32 %v5154, %v5421
        %v5486 = vadd.f32 %v5156, %v5422
        %v5487 = vadd.f32 %v5158, %v5423
        %v5488 = vadd.f32 %v5162, %v5424
        %v5489 = vadd.f32 %v5164, %v5425
        %v5490 = vadd.f32 %v5166, %v5426
        %v5491 = vadd.f32 %v5168, %v5427
        %v5492 = vadd.f32 %v5172, %v5428
        %v5493 = vadd.f32 %v5174, %v5429
        %v5494 = vadd.f32 %v5176, %v5430
        %v5495 = vadd.f32 %v5178, %v5431
        %v5496 = vadd.f32 %v5182, %v5432
        %v5497 = vadd.f32 %v5184, %v5433
        %v5498 = vadd.f32 %v5186, %v5434
        %v5499 = vadd.f32 %v5188, %v5435
        %v5500 = vadd.f32 %v5192, %v5436
        %v5501 = vadd.f32 %v5194, %v5437
        %v5502 = vadd.f32 %v5196, %v5438
        %v5503 = vadd.f32 %v5198, %v5439
        %v5504 = vadd.f32 %v5202, %v5440
        %v5505 = vadd.f32 %v5204, %v5441
        %v5506 = vadd.f32 %v5206, %v5442
        %v5507 = vadd.f32 %v5208, %v5443
        %v5508 = vadd.f32 %v5212, %v5444
        %v5509 = vadd.f32 %v5214, %v5445
        %v5510 = vadd.f32 %v5216, %v5446
        %v5511 = vadd.f32 %v5218, %v5447
        %v5512 = vadd.f32 %v5222, %v5448
        %v5513 = vadd.f32 %v5224, %v5449
        %v5514 = vadd.f32 %v5226, %v5450
        %v5515 = vadd.f32 %v5228, %v5451
        %v5516 = vadd.f32 %v5232, %v5452
        %v5517 = vadd.f32 %v5234, %v5453
        %v5518 = vadd.f32 %v5236, %v5454
        %v5519 = vadd.f32 %v5238, %v5455
        %v5520 = vadd.f32 %v5242, %v5456
        %v5521 = vadd.f32 %v5244, %v5457
        %v5522 = vadd.f32 %v5246, %v5458
        %v5523 = vadd.f32 %v5248, %v5459
        %v5524 = vadd.f32 %v5252, %v5460
        %v5525 = vadd.f32 %v5254, %v5461
        %v5526 = vadd.f32 %v5256, %v5462
        %v5527 = vadd.f32 %v5258, %v5463
        %v5528 = vadd.f32 %v5262, %v5464
        %v5529 = vadd.f32 %v5264, %v5465
        %v5530 = vadd.f32 %v5266, %v5466
        %v5531 = vadd.f32 %v5268, %v5467
        %v5532 = vadd.f32 %v5272, %v5468
        %v5533 = vadd.f32 %v5274, %v5469
        %v5534 = vadd.f32 %v5276, %v5470
        %v5535 = vadd.f32 %v5278, %v5471
        %v5536 = vmul.f32 %v5472, 0.7978846
        %v5537 = vmul.f32 %v5473, 0.7978846
        %v5538 = vmul.f32 %v5474, 0.7978846
        %v5539 = vmul.f32 %v5475, 0.7978846
        %v5540 = vmul.f32 %v5476, 0.7978846
        %v5541 = vmul.f32 %v5477, 0.7978846
        %v5542 = vmul.f32 %v5478, 0.7978846
        %v5543 = vmul.f32 %v5479, 0.7978846
        %v5544 = vmul.f32 %v5480, 0.7978846
        %v5545 = vmul.f32 %v5481, 0.7978846
        %v5546 = vmul.f32 %v5482, 0.7978846
        %v5547 = vmul.f32 %v5483, 0.7978846
        %v5548 = vmul.f32 %v5484, 0.7978846
        %v5549 = vmul.f32 %v5485, 0.7978846
        %v5550 = vmul.f32 %v5486, 0.7978846
        %v5551 = vmul.f32 %v5487, 0.7978846
        %v5552 = vmul.f32 %v5488, 0.7978846
        %v5553 = vmul.f32 %v5489, 0.7978846
        %v5554 = vmul.f32 %v5490, 0.7978846
        %v5555 = vmul.f32 %v5491, 0.7978846
        %v5556 = vmul.f32 %v5492, 0.7978846
        %v5557 = vmul.f32 %v5493, 0.7978846
        %v5558 = vmul.f32 %v5494, 0.7978846
        %v5559 = vmul.f32 %v5495, 0.7978846
        %v5560 = vmul.f32 %v5496, 0.7978846
        %v5561 = vmul.f32 %v5497, 0.7978846
        %v5562 = vmul.f32 %v5498, 0.7978846
        %v5563 = vmul.f32 %v5499, 0.7978846
        %v5564 = vmul.f32 %v5500, 0.7978846
        %v5565 = vmul.f32 %v5501, 0.7978846
        %v5566 = vmul.f32 %v5502, 0.7978846
        %v5567 = vmul.f32 %v5503, 0.7978846
        %v5568 = vmul.f32 %v5504, 0.7978846
        %v5569 = vmul.f32 %v5505, 0.7978846
        %v5570 = vmul.f32 %v5506, 0.7978846
        %v5571 = vmul.f32 %v5507, 0.7978846
        %v5572 = vmul.f32 %v5508, 0.7978846
        %v5573 = vmul.f32 %v5509, 0.7978846
        %v5574 = vmul.f32 %v5510, 0.7978846
        %v5575 = vmul.f32 %v5511, 0.7978846
        %v5576 = vmul.f32 %v5512, 0.7978846
        %v5577 = vmul.f32 %v5513, 0.7978846
        %v5578 = vmul.f32 %v5514, 0.7978846
        %v5579 = vmul.f32 %v5515, 0.7978846
        %v5580 = vmul.f32 %v5516, 0.7978846
        %v5581 = vmul.f32 %v5517, 0.7978846
        %v5582 = vmul.f32 %v5518, 0.7978846
        %v5583 = vmul.f32 %v5519, 0.7978846
        %v5584 = vmul.f32 %v5520, 0.7978846
        %v5585 = vmul.f32 %v5521, 0.7978846
        %v5586 = vmul.f32 %v5522, 0.7978846
        %v5587 = vmul.f32 %v5523, 0.7978846
        %v5588 = vmul.f32 %v5524, 0.7978846
        %v5589 = vmul.f32 %v5525, 0.7978846
        %v5590 = vmul.f32 %v5526, 0.7978846
        %v5591 = vmul.f32 %v5527, 0.7978846
        %v5592 = vmul.f32 %v5528, 0.7978846
        %v5593 = vmul.f32 %v5529, 0.7978846
        %v5594 = vmul.f32 %v5530, 0.7978846
        %v5595 = vmul.f32 %v5531, 0.7978846
        %v5596 = vmul.f32 %v5532, 0.7978846
        %v5597 = vmul.f32 %v5533, 0.7978846
        %v5598 = vmul.f32 %v5534, 0.7978846
        %v5599 = vmul.f32 %v5535, 0.7978846
        %v5600 = vtanh.pop %v5536
        %v5601 = vtanh.pop %v5537
        %v5602 = vtanh.pop %v5538
        %v5603 = vtanh.pop %v5539
        %v5604 = vtanh.pop %v5540
        %v5605 = vtanh.pop %v5541
        %v5606 = vtanh.pop %v5542
        %v5607 = vtanh.pop %v5543
        %v5608 = vtanh.pop %v5544
        %v5609 = vtanh.pop %v5545
        %v5610 = vtanh.pop %v5546
        %v5611 = vtanh.pop %v5547
        %v5612 = vtanh.pop %v5548
        %v5613 = vtanh.pop %v5549
        %v5614 = vtanh.pop %v5550
        %v5615 = vtanh.pop %v5551
        %v5616 = vtanh.pop %v5552
        %v5617 = vtanh.pop %v5553
        %v5618 = vtanh.pop %v5554
        %v5619 = vtanh.pop %v5555
        %v5620 = vtanh.pop %v5556
        %v5621 = vtanh.pop %v5557
        %v5622 = vtanh.pop %v5558
        %v5623 = vtanh.pop %v5559
        %v5624 = vtanh.pop %v5560
        %v5625 = vtanh.pop %v5561
        %v5626 = vtanh.pop %v5562
        %v5627 = vtanh.pop %v5563
        %v5628 = vtanh.pop %v5564
        %v5629 = vtanh.pop %v5565
        %v5630 = vtanh.pop %v5566
        %v5631 = vtanh.pop %v5567
        %v5632 = vtanh.pop %v5568
        %v5633 = vtanh.pop %v5569
        %v5634 = vtanh.pop %v5570
        %v5635 = vtanh.pop %v5571
        %v5636 = vtanh.pop %v5572
        %v5637 = vtanh.pop %v5573
        %v5638 = vtanh.pop %v5574
        %v5639 = vtanh.pop %v5575
        %v5640 = vtanh.pop %v5576
        %v5641 = vtanh.pop %v5577
        %v5642 = vtanh.pop %v5578
        %v5643 = vtanh.pop %v5579
        %v5644 = vtanh.pop %v5580
        %v5645 = vtanh.pop %v5581
        %v5646 = vtanh.pop %v5582
        %v5647 = vtanh.pop %v5583
        %v5648 = vtanh.pop %v5584
        %v5649 = vtanh.pop %v5585
        %v5650 = vtanh.pop %v5586
        %v5651 = vtanh.pop %v5587
        %v5652 = vtanh.pop %v5588
        %v5653 = vtanh.pop %v5589
        %v5654 = vtanh.pop %v5590
        %v5655 = vtanh.pop %v5591
        %v5656 = vtanh.pop %v5592
        %v5657 = vtanh.pop %v5593
        %v5658 = vtanh.pop %v5594
        %v5659 = vtanh.pop %v5595
        %v5660 = vtanh.pop %v5596
        %v5661 = vtanh.pop %v5597
        %v5662 = vtanh.pop %v5598
        %v5663 = vtanh.pop %v5599
        %v5664 = vadd.f32 %v5600, 1.0
        %v5665 = vadd.f32 %v5601, 1.0
        %v5666 = vadd.f32 %v5602, 1.0
        %v5667 = vadd.f32 %v5603, 1.0
        %v5668 = vadd.f32 %v5604, 1.0
        %v5669 = vadd.f32 %v5605, 1.0
        %v5670 = vadd.f32 %v5606, 1.0
        %v5671 = vadd.f32 %v5607, 1.0
        %v5672 = vadd.f32 %v5608, 1.0
        %v5673 = vadd.f32 %v5609, 1.0
        %v5674 = vadd.f32 %v5610, 1.0
        %v5675 = vadd.f32 %v5611, 1.0
        %v5676 = vadd.f32 %v5612, 1.0
        %v5677 = vadd.f32 %v5613, 1.0
        %v5678 = vadd.f32 %v5614, 1.0
        %v5679 = vadd.f32 %v5615, 1.0
        %v5680 = vadd.f32 %v5616, 1.0
        %v5681 = vadd.f32 %v5617, 1.0
        %v5682 = vadd.f32 %v5618, 1.0
        %v5683 = vadd.f32 %v5619, 1.0
        %v5684 = vadd.f32 %v5620, 1.0
        %v5685 = vadd.f32 %v5621, 1.0
        %v5686 = vadd.f32 %v5622, 1.0
        %v5687 = vadd.f32 %v5623, 1.0
        %v5688 = vadd.f32 %v5624, 1.0
        %v5689 = vadd.f32 %v5625, 1.0
        %v5690 = vadd.f32 %v5626, 1.0
        %v5691 = vadd.f32 %v5627, 1.0
        %v5692 = vadd.f32 %v5628, 1.0
        %v5693 = vadd.f32 %v5629, 1.0
        %v5694 = vadd.f32 %v5630, 1.0
        %v5695 = vadd.f32 %v5631, 1.0
        %v5696 = vadd.f32 %v5632, 1.0
        %v5697 = vadd.f32 %v5633, 1.0
        %v5698 = vadd.f32 %v5634, 1.0
        %v5699 = vadd.f32 %v5635, 1.0
        %v5700 = vadd.f32 %v5636, 1.0
        %v5701 = vadd.f32 %v5637, 1.0
        %v5702 = vadd.f32 %v5638, 1.0
        %v5703 = vadd.f32 %v5639, 1.0
        %v5704 = vadd.f32 %v5640, 1.0
        %v5705 = vadd.f32 %v5641, 1.0
        %v5706 = vadd.f32 %v5642, 1.0
        %v5707 = vadd.f32 %v5643, 1.0
        %v5708 = vadd.f32 %v5644, 1.0
        %v5709 = vadd.f32 %v5645, 1.0
        %v5710 = vadd.f32 %v5646, 1.0
        %v5711 = vadd.f32 %v5647, 1.0
        %v5712 = vadd.f32 %v5648, 1.0
        %v5713 = vadd.f32 %v5649, 1.0
        %v5714 = vadd.f32 %v5650, 1.0
        %v5715 = vadd.f32 %v5651, 1.0
        %v5716 = vadd.f32 %v5652, 1.0
        %v5717 = vadd.f32 %v5653, 1.0
        %v5718 = vadd.f32 %v5654, 1.0
        %v5719 = vadd.f32 %v5655, 1.0
        %v5720 = vadd.f32 %v5656, 1.0
        %v5721 = vadd.f32 %v5657, 1.0
        %v5722 = vadd.f32 %v5658, 1.0
        %v5723 = vadd.f32 %v5659, 1.0
        %v5724 = vadd.f32 %v5660, 1.0
        %v5725 = vadd.f32 %v5661, 1.0
        %v5726 = vadd.f32 %v5662, 1.0
        %v5727 = vadd.f32 %v5663, 1.0
        %v5728 = vmul.f32 %v5664, 0.5
        %v5729 = vmul.f32 %v5665, 0.5
        %v5730 = vmul.f32 %v5666, 0.5
        %v5731 = vmul.f32 %v5667, 0.5
        %v5732 = vmul.f32 %v5668, 0.5
        %v5733 = vmul.f32 %v5669, 0.5
        %v5734 = vmul.f32 %v5670, 0.5
        %v5735 = vmul.f32 %v5671, 0.5
        %v5736 = vmul.f32 %v5672, 0.5
        %v5737 = vmul.f32 %v5673, 0.5
        %v5738 = vmul.f32 %v5674, 0.5
        %v5739 = vmul.f32 %v5675, 0.5
        %v5740 = vmul.f32 %v5676, 0.5
        %v5741 = vmul.f32 %v5677, 0.5
        %v5742 = vmul.f32 %v5678, 0.5
        %v5743 = vmul.f32 %v5679, 0.5
        %v5744 = vmul.f32 %v5680, 0.5
        %v5745 = vmul.f32 %v5681, 0.5
        %v5746 = vmul.f32 %v5682, 0.5
        %v5747 = vmul.f32 %v5683, 0.5
        %v5748 = vmul.f32 %v5684, 0.5
        %v5749 = vmul.f32 %v5685, 0.5
        %v5750 = vmul.f32 %v5686, 0.5
        %v5751 = vmul.f32 %v5687, 0.5
        %v5752 = vmul.f32 %v5688, 0.5
        %v5753 = vmul.f32 %v5689, 0.5
        %v5754 = vmul.f32 %v5690, 0.5
        %v5755 = vmul.f32 %v5691, 0.5
        %v5756 = vmul.f32 %v5692, 0.5
        %v5757 = vmul.f32 %v5693, 0.5
        %v5758 = vmul.f32 %v5694, 0.5
        %v5759 = vmul.f32 %v5695, 0.5
        %v5760 = vmul.f32 %v5696, 0.5
        %v5761 = vmul.f32 %v5697, 0.5
        %v5762 = vmul.f32 %v5698, 0.5
        %v5763 = vmul.f32 %v5699, 0.5
        %v5764 = vmul.f32 %v5700, 0.5
        %v5765 = vmul.f32 %v5701, 0.5
        %v5766 = vmul.f32 %v5702, 0.5
        %v5767 = vmul.f32 %v5703, 0.5
        %v5768 = vmul.f32 %v5704, 0.5
        %v5769 = vmul.f32 %v5705, 0.5
        %v5770 = vmul.f32 %v5706, 0.5
        %v5771 = vmul.f32 %v5707, 0.5
        %v5772 = vmul.f32 %v5708, 0.5
        %v5773 = vmul.f32 %v5709, 0.5
        %v5774 = vmul.f32 %v5710, 0.5
        %v5775 = vmul.f32 %v5711, 0.5
        %v5776 = vmul.f32 %v5712, 0.5
        %v5777 = vmul.f32 %v5713, 0.5
        %v5778 = vmul.f32 %v5714, 0.5
        %v5779 = vmul.f32 %v5715, 0.5
        %v5780 = vmul.f32 %v5716, 0.5
        %v5781 = vmul.f32 %v5717, 0.5
        %v5782 = vmul.f32 %v5718, 0.5
        %v5783 = vmul.f32 %v5719, 0.5
        %v5784 = vmul.f32 %v5720, 0.5
        %v5785 = vmul.f32 %v5721, 0.5
        %v5786 = vmul.f32 %v5722, 0.5
        %v5787 = vmul.f32 %v5723, 0.5
        %v5788 = vmul.f32 %v5724, 0.5
        %v5789 = vmul.f32 %v5725, 0.5
        %v5790 = vmul.f32 %v5726, 0.5
        %v5791 = vmul.f32 %v5727, 0.5
        %v5792 = vmul.f32 %v5122, %v5728
        %v5793 = vmul.f32 %v5124, %v5729
        %v5794 = vmul.f32 %v5126, %v5730
        %v5795 = vmul.f32 %v5128, %v5731
        %v5796 = vmul.f32 %v5132, %v5732
        %v5797 = vmul.f32 %v5134, %v5733
        %v5798 = vmul.f32 %v5136, %v5734
        %v5799 = vmul.f32 %v5138, %v5735
        %v5800 = vmul.f32 %v5142, %v5736
        %v5801 = vmul.f32 %v5144, %v5737
        %v5802 = vmul.f32 %v5146, %v5738
        %v5803 = vmul.f32 %v5148, %v5739
        %v5804 = vmul.f32 %v5152, %v5740
        %v5805 = vmul.f32 %v5154, %v5741
        %v5806 = vmul.f32 %v5156, %v5742
        %v5807 = vmul.f32 %v5158, %v5743
        %v5808 = vmul.f32 %v5162, %v5744
        %v5809 = vmul.f32 %v5164, %v5745
        %v5810 = vmul.f32 %v5166, %v5746
        %v5811 = vmul.f32 %v5168, %v5747
        %v5812 = vmul.f32 %v5172, %v5748
        %v5813 = vmul.f32 %v5174, %v5749
        %v5814 = vmul.f32 %v5176, %v5750
        %v5815 = vmul.f32 %v5178, %v5751
        %v5816 = vmul.f32 %v5182, %v5752
        %v5817 = vmul.f32 %v5184, %v5753
        %v5818 = vmul.f32 %v5186, %v5754
        %v5819 = vmul.f32 %v5188, %v5755
        %v5820 = vmul.f32 %v5192, %v5756
        %v5821 = vmul.f32 %v5194, %v5757
        %v5822 = vmul.f32 %v5196, %v5758
        %v5823 = vmul.f32 %v5198, %v5759
        %v5824 = vmul.f32 %v5202, %v5760
        %v5825 = vmul.f32 %v5204, %v5761
        %v5826 = vmul.f32 %v5206, %v5762
        %v5827 = vmul.f32 %v5208, %v5763
        %v5828 = vmul.f32 %v5212, %v5764
        %v5829 = vmul.f32 %v5214, %v5765
        %v5830 = vmul.f32 %v5216, %v5766
        %v5831 = vmul.f32 %v5218, %v5767
        %v5832 = vmul.f32 %v5222, %v5768
        %v5833 = vmul.f32 %v5224, %v5769
        %v5834 = vmul.f32 %v5226, %v5770
        %v5835 = vmul.f32 %v5228, %v5771
        %v5836 = vmul.f32 %v5232, %v5772
        %v5837 = vmul.f32 %v5234, %v5773
        %v5838 = vmul.f32 %v5236, %v5774
        %v5839 = vmul.f32 %v5238, %v5775
        %v5840 = vmul.f32 %v5242, %v5776
        %v5841 = vmul.f32 %v5244, %v5777
        %v5842 = vmul.f32 %v5246, %v5778
        %v5843 = vmul.f32 %v5248, %v5779
        %v5844 = vmul.f32 %v5252, %v5780
        %v5845 = vmul.f32 %v5254, %v5781
        %v5846 = vmul.f32 %v5256, %v5782
        %v5847 = vmul.f32 %v5258, %v5783
        %v5848 = vmul.f32 %v5262, %v5784
        %v5849 = vmul.f32 %v5264, %v5785
        %v5850 = vmul.f32 %v5266, %v5786
        %v5851 = vmul.f32 %v5268, %v5787
        %v5852 = vmul.f32 %v5272, %v5788
        %v5853 = vmul.f32 %v5274, %v5789
        %v5854 = vmul.f32 %v5276, %v5790
        %v5855 = vmul.f32 %v5278, %v5791
        %v5856 = vpack.c.bf16 %v5794, %v5792
        %v5857 = vpack.c.bf16 %v5795, %v5793
        %v5858 = vpack.c.bf16 %v5798, %v5796
        %v5859 = vpack.c.bf16 %v5799, %v5797
        %v5860 = vpack.c.bf16 %v5802, %v5800
        %v5861 = vpack.c.bf16 %v5803, %v5801
        %v5862 = vpack.c.bf16 %v5806, %v5804
        %v5863 = vpack.c.bf16 %v5807, %v5805
        %v5864 = vpack.c.bf16 %v5810, %v5808
        %v5865 = vpack.c.bf16 %v5811, %v5809
        %v5866 = vpack.c.bf16 %v5814, %v5812
        %v5867 = vpack.c.bf16 %v5815, %v5813
        %v5868 = vpack.c.bf16 %v5818, %v5816
        %v5869 = vpack.c.bf16 %v5819, %v5817
        %v5870 = vpack.c.bf16 %v5822, %v5820
        %v5871 = vpack.c.bf16 %v5823, %v5821
        %v5872 = vpack.c.bf16 %v5826, %v5824
        %v5873 = vpack.c.bf16 %v5827, %v5825
        %v5874 = vpack.c.bf16 %v5830, %v5828
        %v5875 = vpack.c.bf16 %v5831, %v5829
        %v5876 = vpack.c.bf16 %v5834, %v5832
        %v5877 = vpack.c.bf16 %v5835, %v5833
        %v5878 = vpack.c.bf16 %v5838, %v5836
        %v5879 = vpack.c.bf16 %v5839, %v5837
        %v5880 = vpack.c.bf16 %v5842, %v5840
        %v5881 = vpack.c.bf16 %v5843, %v5841
        %v5882 = vpack.c.bf16 %v5846, %v5844
        %v5883 = vpack.c.bf16 %v5847, %v5845
        %v5884 = vpack.c.bf16 %v5850, %v5848
        %v5885 = vpack.c.bf16 %v5851, %v5849
        %v5886 = vpack.c.bf16 %v5854, %v5852
        %v5887 = vpack.c.bf16 %v5855, %v5853
        %v5888 = vld [vmem:[%s5] sm:$0xf]
        %v5889 = vld [vmem:[%s5 + $0x4] sm:$0xf]
        %v5890 = vld [vmem:[%s5 + $0x8] sm:$0xf]
        %v5891 = vld [vmem:[%s5 + $0xc] sm:$0xf]
        %v5892 = vld [vmem:[%s5 + $0x10] sm:$0xf]
        %v5893 = vld [vmem:[%s5 + $0x14] sm:$0xf]
        %v5894 = vld [vmem:[%s5 + $0x18] sm:$0xf]
        %v5895 = vld [vmem:[%s5 + $0x1c] sm:$0xf]
        %v5896 = vld [vmem:[%s5 + $0x20] sm:$0xf]
        %v5897 = vld [vmem:[%s5 + $0x24] sm:$0xf]
        %v5898 = vld [vmem:[%s5 + $0x28] sm:$0xf]
        %v5899 = vld [vmem:[%s5 + $0x2c] sm:$0xf]
        %v5900 = vld [vmem:[%s5 + $0x30] sm:$0xf]
        %v5901 = vld [vmem:[%s5 + $0x34] sm:$0xf]
        %v5902 = vld [vmem:[%s5 + $0x38] sm:$0xf]
        %v5903 = vld [vmem:[%s5 + $0x3c] sm:$0xf]
        %v5904 = vld [vmem:[%s5 + $0x40] sm:$0xf]
        %v5905 = vld [vmem:[%s5 + $0x44] sm:$0xf]
        %v5906 = vld [vmem:[%s5 + $0x48] sm:$0xf]
        %v5907 = vld [vmem:[%s5 + $0x4c] sm:$0xf]
        %v5908 = vld [vmem:[%s5 + $0x50] sm:$0xf]
        %v5909 = vld [vmem:[%s5 + $0x54] sm:$0xf]
        %v5910 = vld [vmem:[%s5 + $0x58] sm:$0xf]
        %v5911 = vld [vmem:[%s5 + $0x5c] sm:$0xf]
        %v5912 = vld [vmem:[%s5 + $0x60] sm:$0xf]
        %v5913 = vld [vmem:[%s5 + $0x64] sm:$0xf]
        %v5914 = vld [vmem:[%s5 + $0x68] sm:$0xf]
        %v5915 = vld [vmem:[%s5 + $0x6c] sm:$0xf]
        %v5916 = vld [vmem:[%s5 + $0x70] sm:$0xf]
        %v5917 = vld [vmem:[%s5 + $0x74] sm:$0xf]
        %v5918 = vld [vmem:[%s5 + $0x78] sm:$0xf]
        %v5919 = vld [vmem:[%s5 + $0x7c] sm:$0xf]
        %v5920 = vld [vmem:[%s6] sm:$0x1]
        %v5922 = vlaneseq
        %v5923 = vshrl.u32 %v5922, 7
        %v5924 = vsub.s32 0, %v5923
        %v5925 = vrot.slane %v5920, %v5924
        %v5959 = vunpack.c.l.b16 %v5888
        %v5960 = vunpack.c.l.b16 %v5889
        %v5961 = vunpack.c.l.b16 %v5890
        %v5962 = vunpack.c.l.b16 %v5891
        %v5963 = vunpack.c.l.b16 %v5892
        %v5964 = vunpack.c.l.b16 %v5893
        %v5965 = vunpack.c.l.b16 %v5894
        %v5966 = vunpack.c.l.b16 %v5895
        %v5967 = vunpack.c.l.b16 %v5896
        %v5968 = vunpack.c.l.b16 %v5897
        %v5969 = vunpack.c.l.b16 %v5898
        %v5970 = vunpack.c.l.b16 %v5899
        %v5971 = vunpack.c.l.b16 %v5900
        %v5972 = vunpack.c.l.b16 %v5901
        %v5973 = vunpack.c.l.b16 %v5902
        %v5974 = vunpack.c.l.b16 %v5903
        %v5975 = vunpack.c.l.b16 %v5904
        %v5976 = vunpack.c.l.b16 %v5905
        %v5977 = vunpack.c.l.b16 %v5906
        %v5978 = vunpack.c.l.b16 %v5907
        %v5979 = vunpack.c.l.b16 %v5908
        %v5980 = vunpack.c.l.b16 %v5909
        %v5981 = vunpack.c.l.b16 %v5910
        %v5982 = vunpack.c.l.b16 %v5911
        %v5983 = vunpack.c.l.b16 %v5912
        %v5984 = vunpack.c.l.b16 %v5913
        %v5985 = vunpack.c.l.b16 %v5914
        %v5986 = vunpack.c.l.b16 %v5915
        %v5987 = vunpack.c.l.b16 %v5916
        %v5988 = vunpack.c.l.b16 %v5917
        %v5989 = vunpack.c.l.b16 %v5918
        %v5990 = vunpack.c.l.b16 %v5919
        %v5991 = vpack.c.b16 %v5960, %v5959
        %v5992 = vpack.c.b16 %v5962, %v5961
        %v5993 = vpack.c.b16 %v5964, %v5963
        %v5994 = vpack.c.b16 %v5966, %v5965
        %v5995 = vpack.c.b16 %v5968, %v5967
        %v5996 = vpack.c.b16 %v5970, %v5969
        %v5997 = vpack.c.b16 %v5972, %v5971
        %v5998 = vpack.c.b16 %v5974, %v5973
        %v5999 = vpack.c.b16 %v5976, %v5975
        %v6000 = vpack.c.b16 %v5978, %v5977
        %v6001 = vpack.c.b16 %v5980, %v5979
        %v6002 = vpack.c.b16 %v5982, %v5981
        %v6003 = vpack.c.b16 %v5984, %v5983
        %v6004 = vpack.c.b16 %v5986, %v5985
        %v6005 = vpack.c.b16 %v5988, %v5987
        %v6006 = vpack.c.b16 %v5990, %v5989
        %6023 = vmatprep.subr.bf16.mxu0 0
        %6024 = vmatpush1.bf16.msra.mxu0 %v5991
        %6025 = vmatprep.subr.bf16.mxu0 0
        %6026 = vmatpush1.bf16.msra.mxu0 %v5992
        %6027 = vmatprep.subr.bf16.mxu0 0
        %6028 = vmatpush1.bf16.msra.mxu0 %v5993
        %6029 = vmatprep.subr.bf16.mxu0 0
        %6030 = vmatpush1.bf16.msra.mxu0 %v5994
        %6031 = vmatprep.subr.bf16.mxu0 0
        %6032 = vmatpush1.bf16.msra.mxu0 %v5995
        %6033 = vmatprep.subr.bf16.mxu0 0
        %6034 = vmatpush1.bf16.msra.mxu0 %v5996
        %6035 = vmatprep.subr.bf16.mxu0 0
        %6036 = vmatpush1.bf16.msra.mxu0 %v5997
        %6037 = vmatprep.subr.bf16.mxu0 0
        %6038 = vmatpush1.bf16.msra.mxu0 %v5998
        %6039 = vmatprep.subr.bf16.mxu0 0
        %6040 = vmatpush1.bf16.msra.mxu0 %v5999
        %6041 = vmatprep.subr.bf16.mxu0 0
        %6042 = vmatpush1.bf16.msra.mxu0 %v6000
        %6043 = vmatprep.subr.bf16.mxu0 0
        %6044 = vmatpush1.bf16.msra.mxu0 %v6001
        %6045 = vmatprep.subr.bf16.mxu0 0
        %6046 = vmatpush1.bf16.msra.mxu0 %v6002
        %6047 = vmatprep.subr.bf16.mxu0 0
        %6048 = vmatpush1.bf16.msra.mxu0 %v6003
        %6049 = vmatprep.subr.bf16.mxu0 0
        %6050 = vmatpush1.bf16.msra.mxu0 %v6004
        %6051 = vmatprep.subr.bf16.mxu0 0
        %6052 = vmatpush1.bf16.msra.mxu0 %v6005
        %6053 = vmatprep.subr.bf16.mxu0 0
        %6054 = vmatpush1.bf16.msra.mxu0 %v6006
        %6055 = vmatprep.mubr.bf16.mxu0 %v5857
        %6056 = vmatmul.mubr.bf16.gmra.mrb[0].mxu0 %v5856
        %v6057 = vpop.f32.mrb[0].mxu0
        %v6058 = vadd.f32 %v5925, %v6057
        %v6059 = vpop.f32.mrb[0].mxu0
        %v6060 = vpop.f32.mrb[0].mxu0
        %v6061 = vadd.f32 %v5925, %v6060
        %v6062 = vpop.f32.mrb[0].mxu0
        %6063 = vmatprep.mubr.bf16.mxu0 %v5859
        %6064 = vmatmul.mubr.bf16.gmra.mrb[0].mxu0 %v5858
        %v6065 = vpop.f32.mrb[0].mxu0
        %v6066 = vadd.f32 %v5925, %v6065
        %v6067 = vpop.f32.mrb[0].mxu0
        %v6068 = vpop.f32.mrb[0].mxu0
        %v6069 = vadd.f32 %v5925, %v6068
        %v6070 = vpop.f32.mrb[0].mxu0
        %6071 = vmatprep.mubr.bf16.mxu0 %v5861
        %6072 = vmatmul.mubr.bf16.gmra.mrb[0].mxu0 %v5860
        %v6073 = vpop.f32.mrb[0].mxu0
        %v6074 = vadd.f32 %v5925, %v6073
        %v6075 = vpop.f32.mrb[0].mxu0
        %v6076 = vpop.f32.mrb[0].mxu0
        %v6077 = vadd.f32 %v5925, %v6076
        %v6078 = vpop.f32.mrb[0].mxu0
        %6079 = vmatprep.mubr.bf16.mxu0 %v5863
        %6080 = vmatmul.mubr.bf16.gmra.mrb[0].mxu0 %v5862
        %v6081 = vpop.f32.mrb[0].mxu0
        %v6082 = vadd.f32 %v5925, %v6081
        %v6083 = vpop.f32.mrb[0].mxu0
        %v6084 = vpop.f32.mrb[0].mxu0
        %v6085 = vadd.f32 %v5925, %v6084
        %v6086 = vpop.f32.mrb[0].mxu0
        %6087 = vmatprep.mubr.bf16.mxu0 %v5865
        %6088 = vmatmul.mubr.bf16.gmra.mrb[0].mxu0 %v5864
        %v6089 = vpop.f32.mrb[0].mxu0
        %v6090 = vadd.f32 %v5925, %v6089
        %v6091 = vpop.f32.mrb[0].mxu0
        %v6092 = vpop.f32.mrb[0].mxu0
        %v6093 = vadd.f32 %v5925, %v6092
        %v6094 = vpop.f32.mrb[0].mxu0
        %6095 = vmatprep.mubr.bf16.mxu0 %v5867
        %6096 = vmatmul.mubr.bf16.gmra.mrb[0].mxu0 %v5866
        %v6097 = vpop.f32.mrb[0].mxu0
        %v6098 = vadd.f32 %v5925, %v6097
        %v6099 = vpop.f32.mrb[0].mxu0
        %v6100 = vpop.f32.mrb[0].mxu0
        %v6101 = vadd.f32 %v5925, %v6100
        %v6102 = vpop.f32.mrb[0].mxu0
        %6103 = vmatprep.mubr.bf16.mxu0 %v5869
        %6104 = vmatmul.mubr.bf16.gmra.mrb[0].mxu0 %v5868
        %v6105 = vpop.f32.mrb[0].mxu0
        %v6106 = vadd.f32 %v5925, %v6105
        %v6107 = vpop.f32.mrb[0].mxu0
        %v6108 = vpop.f32.mrb[0].mxu0
        %v6109 = vadd.f32 %v5925, %v6108
        %v6110 = vpop.f32.mrb[0].mxu0
        %6111 = vmatprep.mubr.bf16.mxu0 %v5871
        %6112 = vmatmul.mubr.bf16.gmra.mrb[0].mxu0 %v5870
        %v6113 = vpop.f32.mrb[0].mxu0
        %v6114 = vadd.f32 %v5925, %v6113
        %v6115 = vpop.f32.mrb[0].mxu0
        %v6116 = vpop.f32.mrb[0].mxu0
        %v6117 = vadd.f32 %v5925, %v6116
        %v6118 = vpop.f32.mrb[0].mxu0
        %6119 = vmatprep.mubr.bf16.mxu0 %v5873
        %6120 = vmatmul.mubr.bf16.gmra.mrb[0].mxu0 %v5872
        %v6121 = vpop.f32.mrb[0].mxu0
        %v6122 = vadd.f32 %v5925, %v6121
        %v6123 = vpop.f32.mrb[0].mxu0
        %v6124 = vpop.f32.mrb[0].mxu0
        %v6125 = vadd.f32 %v5925, %v6124
        %v6126 = vpop.f32.mrb[0].mxu0
        %6127 = vmatprep.mubr.bf16.mxu0 %v5875
        %6128 = vmatmul.mubr.bf16.gmra.mrb[0].mxu0 %v5874
        %v6129 = vpop.f32.mrb[0].mxu0
        %v6130 = vadd.f32 %v5925, %v6129
        %v6131 = vpop.f32.mrb[0].mxu0
        %v6132 = vpop.f32.mrb[0].mxu0
        %v6133 = vadd.f32 %v5925, %v6132
        %v6134 = vpop.f32.mrb[0].mxu0
        %6135 = vmatprep.mubr.bf16.mxu0 %v5877
        %6136 = vmatmul.mubr.bf16.gmra.mrb[0].mxu0 %v5876
        %v6137 = vpop.f32.mrb[0].mxu0
        %v6138 = vadd.f32 %v5925, %v6137
        %v6139 = vpop.f32.mrb[0].mxu0
        %v6140 = vpop.f32.mrb[0].mxu0
        %v6141 = vadd.f32 %v5925, %v6140
        %v6142 = vpop.f32.mrb[0].mxu0
        %6143 = vmatprep.mubr.bf16.mxu0 %v5879
        %6144 = vmatmul.mubr.bf16.gmra.mrb[0].mxu0 %v5878
        %v6145 = vpop.f32.mrb[0].mxu0
        %v6146 = vadd.f32 %v5925, %v6145
        %v6147 = vpop.f32.mrb[0].mxu0
        %v6148 = vpop.f32.mrb[0].mxu0
        %v6149 = vadd.f32 %v5925, %v6148
        %v6150 = vpop.f32.mrb[0].mxu0
        %6151 = vmatprep.mubr.bf16.mxu0 %v5881
        %6152 = vmatmul.mubr.bf16.gmra.mrb[0].mxu0 %v5880
        %v6153 = vpop.f32.mrb[0].mxu0
        %v6154 = vadd.f32 %v5925, %v6153
        %v6155 = vpop.f32.mrb[0].mxu0
        %v6156 = vpop.f32.mrb[0].mxu0
        %v6157 = vadd.f32 %v5925, %v6156
        %v6158 = vpop.f32.mrb[0].mxu0
        %6159 = vmatprep.mubr.bf16.mxu0 %v5883
        %6160 = vmatmul.mubr.bf16.gmra.mrb[0].mxu0 %v5882
        %v6161 = vpop.f32.mrb[0].mxu0
        %v6162 = vadd.f32 %v5925, %v6161
        %v6163 = vpop.f32.mrb[0].mxu0
        %v6164 = vpop.f32.mrb[0].mxu0
        %v6165 = vadd.f32 %v5925, %v6164
        %v6166 = vpop.f32.mrb[0].mxu0
        %6167 = vmatprep.mubr.bf16.mxu0 %v5885
        %6168 = vmatmul.mubr.bf16.gmra.mrb[0].mxu0 %v5884
        %v6169 = vpop.f32.mrb[0].mxu0
        %v6170 = vadd.f32 %v5925, %v6169
        %v6171 = vpop.f32.mrb[0].mxu0
        %v6172 = vpop.f32.mrb[0].mxu0
        %v6173 = vadd.f32 %v5925, %v6172
        %v6174 = vpop.f32.mrb[0].mxu0
        %6175 = vmatprep.mubr.bf16.mxu0 %v5887
        %6176 = vmatmul.mubr.bf16.gmra.mrb[0].mxu0 %v5886
        %v6177 = vpop.f32.mrb[0].mxu0
        %v6178 = vadd.f32 %v5925, %v6177
        %v6179 = vpop.f32.mrb[0].mxu0
        %v6180 = vpop.f32.mrb[0].mxu0
        %v6181 = vadd.f32 %v5925, %v6180
        %v6182 = vpop.f32.mrb[0].mxu0
        %6183 = vdwg.mxu0
        %v6184 = vld [vmem:[#allocation2] sm:$0xff]
        %v6185 = vld [vmem:[#allocation2 + $0x8] sm:$0xff]
        %v6186 = vld [vmem:[#allocation2 + $0x10] sm:$0xff]
        %v6187 = vld [vmem:[#allocation2 + $0x18] sm:$0xff]
        %v6188 = vld [vmem:[#allocation2 + $0x20] sm:$0xff]
        %v6189 = vld [vmem:[#allocation2 + $0x28] sm:$0xff]
        %v6190 = vld [vmem:[#allocation2 + $0x30] sm:$0xff]
        %v6191 = vld [vmem:[#allocation2 + $0x38] sm:$0xff]
        %v6192 = vld [vmem:[#allocation2 + $0x40] sm:$0xff]
        %v6193 = vld [vmem:[#allocation2 + $0x48] sm:$0xff]
        %v6194 = vld [vmem:[#allocation2 + $0x50] sm:$0xff]
        %v6195 = vld [vmem:[#allocation2 + $0x58] sm:$0xff]
        %v6196 = vld [vmem:[#allocation2 + $0x60] sm:$0xff]
        %v6197 = vld [vmem:[#allocation2 + $0x68] sm:$0xff]
        %v6198 = vld [vmem:[#allocation2 + $0x70] sm:$0xff]
        %v6199 = vld [vmem:[#allocation2 + $0x78] sm:$0xff]
        %v6200 = vld [vmem:[#allocation2 + $0x80] sm:$0xff]
        %v6201 = vld [vmem:[#allocation2 + $0x88] sm:$0xff]
        %v6202 = vld [vmem:[#allocation2 + $0x90] sm:$0xff]
        %v6203 = vld [vmem:[#allocation2 + $0x98] sm:$0xff]
        %v6204 = vld [vmem:[#allocation2 + $0xa0] sm:$0xff]
        %v6205 = vld [vmem:[#allocation2 + $0xa8] sm:$0xff]
        %v6206 = vld [vmem:[#allocation2 + $0xb0] sm:$0xff]
        %v6207 = vld [vmem:[#allocation2 + $0xb8] sm:$0xff]
        %v6208 = vld [vmem:[#allocation2 + $0xc0] sm:$0xff]
        %v6209 = vld [vmem:[#allocation2 + $0xc8] sm:$0xff]
        %v6210 = vld [vmem:[#allocation2 + $0xd0] sm:$0xff]
        %v6211 = vld [vmem:[#allocation2 + $0xd8] sm:$0xff]
        %v6212 = vld [vmem:[#allocation2 + $0xe0] sm:$0xff]
        %v6213 = vld [vmem:[#allocation2 + $0xe8] sm:$0xff]
        %v6214 = vld [vmem:[#allocation2 + $0xf0] sm:$0xff]
        %v6215 = vld [vmem:[#allocation2 + $0xf8] sm:$0xff]
        %v6216 = vadd.f32 %v6184, %v6058
        %v6217 = vadd.f32 %v6185, %v6061
        %v6218 = vadd.f32 %v6186, %v6066
        %v6219 = vadd.f32 %v6187, %v6069
        %v6220 = vadd.f32 %v6188, %v6074
        %v6221 = vadd.f32 %v6189, %v6077
        %v6222 = vadd.f32 %v6190, %v6082
        %v6223 = vadd.f32 %v6191, %v6085
        %v6224 = vadd.f32 %v6192, %v6090
        %v6225 = vadd.f32 %v6193, %v6093
        %v6226 = vadd.f32 %v6194, %v6098
        %v6227 = vadd.f32 %v6195, %v6101
        %v6228 = vadd.f32 %v6196, %v6106
        %v6229 = vadd.f32 %v6197, %v6109
        %v6230 = vadd.f32 %v6198, %v6114
        %v6231 = vadd.f32 %v6199, %v6117
        %v6232 = vadd.f32 %v6200, %v6122
        %v6233 = vadd.f32 %v6201, %v6125
        %v6234 = vadd.f32 %v6202, %v6130
        %v6235 = vadd.f32 %v6203, %v6133
        %v6236 = vadd.f32 %v6204, %v6138
        %v6237 = vadd.f32 %v6205, %v6141
        %v6238 = vadd.f32 %v6206, %v6146
        %v6239 = vadd.f32 %v6207, %v6149
        %v6240 = vadd.f32 %v6208, %v6154
        %v6241 = vadd.f32 %v6209, %v6157
        %v6242 = vadd.f32 %v6210, %v6162
        %v6243 = vadd.f32 %v6211, %v6165
        %v6244 = vadd.f32 %v6212, %v6170
        %v6245 = vadd.f32 %v6213, %v6173
        %v6246 = vadd.f32 %v6214, %v6178
        %v6247 = vadd.f32 %v6215, %v6181
        %6248 = vst.msk [vmem:[%s285] sm:$0xff] %vm2203, %v6216
        %6249 = vst.msk [vmem:[%s285 + $0x8] sm:$0xff] %vm2203, %v6217
        %6250 = vst.msk [vmem:[%s285 + $0x10] sm:$0xff] %vm2203, %v6218
        %6251 = vst.msk [vmem:[%s285 + $0x18] sm:$0xff] %vm2203, %v6219
        %6252 = vst.msk [vmem:[%s285 + $0x20] sm:$0xff] %vm2203, %v6220
        %6253 = vst.msk [vmem:[%s285 + $0x28] sm:$0xff] %vm2203, %v6221
        %6254 = vst.msk [vmem:[%s285 + $0x30] sm:$0xff] %vm2203, %v6222
        %6255 = vst.msk [vmem:[%s285 + $0x38] sm:$0xff] %vm2203, %v6223
        %6256 = vst.msk [vmem:[%s285 + $0x40] sm:$0xff] %vm2203, %v6224
        %6257 = vst.msk [vmem:[%s285 + $0x48] sm:$0xff] %vm2203, %v6225
        %6258 = vst.msk [vmem:[%s285 + $0x50] sm:$0xff] %vm2203, %v6226
        %6259 = vst.msk [vmem:[%s285 + $0x58] sm:$0xff] %vm2203, %v6227
        %6260 = vst.msk [vmem:[%s285 + $0x60] sm:$0xff] %vm2203, %v6228
        %6261 = vst.msk [vmem:[%s285 + $0x68] sm:$0xff] %vm2203, %v6229
        %6262 = vst.msk [vmem:[%s285 + $0x70] sm:$0xff] %vm2203, %v6230
        %6263 = vst.msk [vmem:[%s285 + $0x78] sm:$0xff] %vm2203, %v6231
        %6264 = vst.msk [vmem:[%s285 + $0x80] sm:$0xff] %vm2203, %v6232
        %6265 = vst.msk [vmem:[%s285 + $0x88] sm:$0xff] %vm2203, %v6233
        %6266 = vst.msk [vmem:[%s285 + $0x90] sm:$0xff] %vm2203, %v6234
        %6267 = vst.msk [vmem:[%s285 + $0x98] sm:$0xff] %vm2203, %v6235
        %6268 = vst.msk [vmem:[%s285 + $0xa0] sm:$0xff] %vm2203, %v6236
        %6269 = vst.msk [vmem:[%s285 + $0xa8] sm:$0xff] %vm2203, %v6237
        %6270 = vst.msk [vmem:[%s285 + $0xb0] sm:$0xff] %vm2203, %v6238
        %6271 = vst.msk [vmem:[%s285 + $0xb8] sm:$0xff] %vm2203, %v6239
        %6272 = vst.msk [vmem:[%s285 + $0xc0] sm:$0xff] %vm2203, %v6240
        %6273 = vst.msk [vmem:[%s285 + $0xc8] sm:$0xff] %vm2203, %v6241
        %6274 = vst.msk [vmem:[%s285 + $0xd0] sm:$0xff] %vm2203, %v6242
        %6275 = vst.msk [vmem:[%s285 + $0xd8] sm:$0xff] %vm2203, %v6243
        %6276 = vst.msk [vmem:[%s285 + $0xe0] sm:$0xff] %vm2203, %v6244
        %6277 = vst.msk [vmem:[%s285 + $0xe8] sm:$0xff] %vm2203, %v6245
        %6278 = vst.msk [vmem:[%s285 + $0xf0] sm:$0xff] %vm2203, %v6246
        %6279 = vst.msk [vmem:[%s285 + $0xf8] sm:$0xff] %vm2203, %v6247
        %s6280 = sand.u32 %s195, 1
        %s6281 = scalar_lea.sflag [#allocation4], %s6280
        %s6282 = sand.u32 %s195, 1
        %s6283 = smul.addr %s6282, 256
        %s6284 = scalar_lea.vmem [#allocation3], %s6283
        // Predicated region
        $region49: #{convnext_block.1} parent=47 // pred_check
          %p6285 = pneg %p205
        $region50: #{convnext_block.1} parent=47 // pred_check_branch
          %6287 = sbr.rel (%p6285) target = $region52
        $region51: #{convnext_block.1} parent=47 // pred_region
          %s6288 = smul.u32 16, %s26
          %s6290 = ssub.s32 4096, 4096
          %6291 = vsyncadd %s6281, %s6290
          %s6292 = smul.addr %s6288, 2
          %s6293 = smul.addr %s25, 32
          %s6294 = sadd.s32 %s6292, %s6293
          %s6295 = smul.addr %s6294, 128
          %s6296 = scalar_lea.hbm %s7, %s6295
          %s6297 = sshll.u32 %s6284, 4
          %s6298 = int_to_ptr.vmem [resolvable:$true] %s6297
          %6303 = dma.vmem_to_hbm [thread:$0]  %s6298, 4096, %s6296, %s6281, 128, 128, 8
        $region52: #{convnext_block.1} parent=47 // pred_fallthru
          _
      $region48: #{convnext_block.1} parent=5 // pred_fallthru
        _
      %p6304 = scmp.le.s32.totalorder 2, %s16
      // Predicated region
      $region53: #{convnext_block.1} parent=5 // pred_check
        %p6305 = pneg %p6304
      $region54: #{convnext_block.1} parent=5 // pred_check_branch
        %6307 = sbr.rel (%p6305) target = $region56
      $region55: #{convnext_block.1} parent=5 // pred_region
        %s6308 = ssub.s32 %s16, 2
        // Predicated region
        $region57: #{convnext_block.1} parent=55 // pred_check
          %p6309 = pneg %p211
        $region58: #{convnext_block.1} parent=55 // pred_check_branch
          %6311 = sbr.rel (%p6309) target = $region60
        $region59: #{convnext_block.1} parent=55 // pred_region
          %s6312 = sand.u32 %s196, 1
          %s6313 = scalar_lea.sflag [#allocation4], %s6312
          %s6314 = sand.u32 %s196, 1
          %s6315 = smul.addr %s6314, 256
          %s6316 = scalar_lea.vmem [#allocation3], %s6315
          %6317 = dma.done %s6313, 4096
        $region60: #{convnext_block.1} parent=55 // pred_fallthru
          _
      $region56: #{convnext_block.1} parent=5 // pred_fallthru
        _
    $region6: #{convnext_block.1} parent=1 // loop_footer
      %s20 = sadd.s32 1, %s16
    $region7: #{convnext_block.1} parent=1 // loop_footer_branch
      %15 = sbr.rel target = $region3
    $region8: #{convnext_block.1} parent=1 // loop_exit
      _
    %6318 = vsyncpa [#allocation4], 1
    %s6319 = scalar_lea.sflag [#allocation4], 1
    %6320 = vsyncpa %s6319, 1

</llo_original>
